<compile_context>
chip_gen: v7x
topology: tpu7x:2x2x1
jax: 0.10.0
libtpu: 0.0.40
codegen_flags: <defaults>
</compile_context>

<pallas_src>
import functools

import jax
import jax.numpy as jnp
from jax.experimental import pallas as pl
from jax.experimental.pallas import tpu as pltpu


def _pick_tb(n):
    """Batch-tile size: as large as 64, but keep >= 2 grid steps when possible."""
    for tb in (64, 32, 16, 8):
        if n >= 2 * tb:
            return tb
    return 8


# ---------------------------------------------------------------------------
# Fused kernel: conv1+pool1+relu -> conv2+relu+pool2 -> fc1+relu -> fc2+softmax
# Row layout inside a tile: row = spatial_row * TB + image  ("ph-major").
# ---------------------------------------------------------------------------
def _fused_kernel(lhs_ref, w1e_ref, w1o_ref, g2_ref, wf1_ref, wf2_ref,
                  b1_ref, b2_ref, bf1_ref, bf2_ref,
                  out_ref, a1_scr, *, tb):
    dot = functools.partial(jnp.dot, preferred_element_type=jnp.float32)
    bf16 = jnp.bfloat16

    # ---- conv1 (4x4, pad 1) + 2x2/2 max-pool + bias + ReLU ------------------
    # lhs rows hold the 5 padded image rows 2ph..2ph+4 flattened (K = 150).
    lhs1 = lhs_ref[...]                                   # (13*tb, 150) bf16
    acc_e = dot(lhs1, w1e_ref[...])                       # even conv rows, (13*tb, 1024)
    m = jnp.maximum(acc_e[:, :512], acc_e[:, 512:])       # pool over column parity
    acc_o = dot(lhs1, w1o_ref[...])                       # odd conv rows
    m = jnp.maximum(m, jnp.maximum(acc_o[:, :512], acc_o[:, 512:]))
    # pool(relu(x + b)) == relu(pool(x) + b) for monotone relu / +b.
    a1 = jnp.maximum(m + b1_ref[...], 0.0)                # (13*tb, 512), col = pw*32+ci
    a1_scr[...] = a1.astype(bf16)                         # row = ph*tb + image

    # ---- conv2 (5x5, valid) + bias + ReLU ------------------------------------
    m2 = 9 * tb
    acc2 = dot(a1_scr[pl.ds(0, m2), :], g2_ref[0])        # (9*tb, 768)
    for kh in range(1, 5):                                # sublane-aligned shifts (kh*tb)
        acc2 = acc2 + dot(a1_scr[pl.ds(kh * tb, m2), :], g2_ref[kh])
    z2 = jnp.maximum(acc2 + b2_ref[...], 0.0)             # row = oh2*tb + image
                                                          # col = dj*256 + pw2*64 + co
    # ---- 3x3 / stride-3 max-pool ---------------------------------------------
    cm = jnp.maximum(jnp.maximum(z2[:, 0:256], z2[:, 256:512]), z2[:, 512:768])
    p0 = jnp.maximum(jnp.maximum(cm[0 * tb:1 * tb], cm[1 * tb:2 * tb]), cm[2 * tb:3 * tb])
    p1 = jnp.maximum(jnp.maximum(cm[3 * tb:4 * tb], cm[4 * tb:5 * tb]), cm[5 * tb:6 * tb])
    p2 = jnp.maximum(jnp.maximum(cm[6 * tb:7 * tb], cm[7 * tb:8 * tb]), cm[8 * tb:9 * tb])
    feat = jnp.concatenate([p0, p1, p2], axis=1).astype(bf16)   # (tb, 768)

    # ---- fc1 + ReLU, fc2 + softmax (lane-dense 128-col output) ---------------
    h = jnp.maximum(dot(feat, wf1_ref[...]) + bf1_ref[...], 0.0)   # (tb, 256)
    scores = dot(h.astype(bf16), wf2_ref[...]) + bf2_ref[...]      # (tb, 128); pad cols ~ -1e30
    mx = jnp.max(scores, axis=-1, keepdims=True)
    e = jnp.exp(scores - mx)
    out_ref[...] = e / jnp.sum(e, axis=-1, keepdims=True)


# ---------------------------------------------------------------------------
# Wrapper-side weight repacking (plain JAX, tiny, done under jit)
# ---------------------------------------------------------------------------
def _conv1_weights(w1):
    """(32,1,4,4) -> even/odd-row slabs (150, 1024); col = cp*512 + pw*32 + co."""
    wk = jnp.transpose(w1[:, 0], (1, 2, 0))               # (kh, kw, co)
    win = jnp.arange(30)[:, None, None]                   # padded input column
    pw = jnp.arange(13)[None, :, None]                    # pooled output column
    cp = jnp.arange(2)[None, None, :]                      # column parity in the pool
    kw = win - (2 * pw + cp)                               # (30, 13, 2)
    valid = (kw >= 0) & (kw <= 3)
    vals = wk[:, jnp.clip(kw, 0, 3), :]                    # (4, 30, 13, 2, 32)
    t = jnp.where(valid[None, :, :, :, None], vals, 0.0)
    t = jnp.transpose(t, (0, 1, 3, 2, 4)).reshape(4, 30, 2, 416)   # (kh, win, cp, pw*32+co)
    t = jnp.pad(t, ((0, 0), (0, 0), (0, 0), (0, 96))).reshape(4, 30, 1024)
    flat = t.reshape(120, 1024)                            # row = kh*30 + win
    zeros = jnp.zeros((30, 1024), t.dtype)
    w1e = jnp.concatenate([flat, zeros], axis=0)           # even rows use window rows 0..3
    w1o = jnp.concatenate([zeros, flat], axis=0)           # odd rows use window rows 1..4
    return w1e, w1o


def _conv2_weights(w2):
    """(64,32,5,5) -> G[kh] (512, 768); row = w*32+ci, col = dj*256 + pw2*64 + co."""
    wp = jnp.transpose(w2, (2, 3, 1, 0))                   # (kh, kw, ci, co)
    w = jnp.arange(13)[:, None, None]
    pw2 = jnp.arange(3)[None, :, None]
    dj = jnp.arange(3)[None, None, :]
    kw = w - (3 * pw2 + dj)                                # (13, 3, 3)
    valid = (kw >= 0) & (kw <= 4)
    vals = wp[:, jnp.clip(kw, 0, 4), :, :]                 # (5, 13, 3, 3, 32, 64)
    g = jnp.where(valid[None, :, :, :, None, None], vals, 0.0)
    g = jnp.transpose(g, (0, 1, 4, 3, 2, 5))               # (kh, w, ci, dj, pw2, co)
    g = g.reshape(5, 13, 32, 3, 192)
    g = jnp.pad(g, ((0, 0), (0, 0), (0, 0), (0, 0), (0, 64)))   # pw2*64+co padded to 256
    g = g.reshape(5, 416, 768)
    g = jnp.pad(g, ((0, 0), (0, 96), (0, 0)))               # K rows padded 416 -> 512
    return g


def _fc1_weights(wf1):
    """(150, 576) NCHW-flatten -> (768, 256); row = ph2*256 + pw2*64 + co."""
    w = wf1.reshape(150, 64, 3, 3)                          # (o, co, ph2, pw2)
    w = jnp.transpose(w, (2, 3, 1, 0)).reshape(3, 192, 150)
    w = jnp.pad(w, ((0, 0), (0, 64), (0, 0))).reshape(768, 150)
    return jnp.pad(w, ((0, 0), (0, 106)))                   # hidden padded 150 -> 256


def _full(shape):
    nd = len(shape)
    return pl.BlockSpec(shape, lambda i, _nd=nd: (0,) * _nd)


# ---------------------------------------------------------------------------
# Model
# ---------------------------------------------------------------------------
def init_params(key):
    ks = jax.random.split(key, 8)
    return {
        "w1": 0.01 * jax.random.normal(ks[0], (32, 1, 4, 4), jnp.float32),
        "b1": 0.01 * jax.random.normal(ks[1], (32,), jnp.float32),
        "w2": 0.01 * jax.random.normal(ks[2], (64, 32, 5, 5), jnp.float32),
        "b2": 0.01 * jax.random.normal(ks[3], (64,), jnp.float32),
        "wf1": 0.1 * jax.random.normal(ks[4], (150, 576), jnp.float32),
        "bf1": 0.1 * jax.random.normal(ks[5], (150,), jnp.float32),
        "wf2": 0.1 * jax.random.normal(ks[6], (10, 150), jnp.float32),
        "bf2": 0.1 * jax.random.normal(ks[7], (10,), jnp.float32),
    }


@jax.jit
def forward(params, x):
    n = x.shape[0]
    tb = _pick_tb(n)
    n_pad = -(-n // tb) * tb
    g = n_pad // tb

    # Zero-pad the images (conv1 padding + batch padding) and pre-assemble the
    # conv1 LHS slab in bf16: row = tile*(13*tb) + ph*tb + image, K = 5 rows x 30 cols.
    xp = jnp.pad(x[:, 0], ((0, n_pad - n), (1, 1), (1, 1)))            # (n_pad, 30, 30)
    rows = 2 * jnp.arange(13)[:, None] + jnp.arange(5)[None, :]        # (13, 5)
    win = xp[:, rows, :].reshape(n_pad, 13, 150)
    lhs1 = (win.reshape(g, tb, 13, 150).transpose(0, 2, 1, 3)
               .reshape(g * 13 * tb, 150).astype(jnp.bfloat16))

    w1e, w1o = _conv1_weights(params["w1"])
    w1e = w1e.astype(jnp.bfloat16)
    w1o = w1o.astype(jnp.bfloat16)
    g2 = _conv2_weights(params["w2"]).astype(jnp.bfloat16)             # (5, 512, 768)
    wf1p = _fc1_weights(params["wf1"]).astype(jnp.bfloat16)            # (768, 256)
    wf2p = jnp.pad(params["wf2"].T, ((0, 106), (0, 118))).astype(jnp.bfloat16)   # (256, 128)

    b1p = jnp.pad(jnp.tile(params["b1"], 13), (0, 96))[None, :].astype(jnp.float32)      # (1, 512)
    b2p = jnp.tile(jnp.pad(jnp.tile(params["b2"], 3), (0, 64)), 3)[None, :].astype(jnp.float32)  # (1, 768)
    bf1p = jnp.pad(params["bf1"], (0, 106))[None, :].astype(jnp.float32)                 # (1, 256)
    bf2p = jnp.concatenate([params["bf2"],
                            jnp.full((118,), -1e30, jnp.float32)])[None, :]              # (1, 128)

    out = pl.pallas_call(
        functools.partial(_fused_kernel, tb=tb),
        out_shape=jax.ShapeDtypeStruct((n_pad, 128), jnp.float32),
        grid=(g,),
        in_specs=[
            pl.BlockSpec((tb * 13, 150), lambda i: (i, 0)),
            _full((150, 1024)),
            _full((150, 1024)),
            _full((5, 512, 768)),
            _full((768, 256)),
            _full((256, 128)),
            _full((1, 512)),
            _full((1, 768)),
            _full((1, 256)),
            _full((1, 128)),
        ],
        out_specs=pl.BlockSpec((tb, 128), lambda i: (i, 0)),
        scratch_shapes=[pltpu.VMEM((13 * tb, 512), jnp.bfloat16)],
        compiler_params=pltpu.CompilerParams(
            dimension_semantics=("parallel",),
            vmem_limit_bytes=48 * 1024 * 1024,
        ),
    )(lhs1, w1e, w1o, g2, wf1p, wf2p, b1p, b2p, bf1p, bf2p)
    return out[:n, :10]


# Pure-JAX (XLA) reference for validation.
def reference_forward(params, x):
    y = jax.lax.conv_general_dilated(
        x, params["w1"], window_strides=(1, 1), padding=((1, 1), (1, 1)),
        dimension_numbers=("NCHW", "OIHW", "NCHW"))
    y = jax.nn.relu(y + params["b1"][None, :, None, None])
    y = jax.lax.reduce_window(y, -jnp.inf, jax.lax.max,
                              (1, 1, 2, 2), (1, 1, 2, 2), "VALID")
    y = jax.lax.conv_general_dilated(
        y, params["w2"], window_strides=(1, 1), padding="VALID",
        dimension_numbers=("NCHW", "OIHW", "NCHW"))
    y = jax.nn.relu(y + params["b2"][None, :, None, None])
    y = jax.lax.reduce_window(y, -jnp.inf, jax.lax.max,
                              (1, 1, 3, 3), (1, 1, 3, 3), "VALID")
    y = y.reshape(y.shape[0], -1)
    y = jax.nn.relu(y @ params["wf1"].T + params["bf1"])
    s = y @ params["wf2"].T + params["bf2"]
    return jax.nn.softmax(s, axis=1)


if __name__ == "__main__":
    key = jax.random.PRNGKey(0)
    pkey, xkey = jax.random.split(key)
    params = init_params(pkey)
    x = jax.random.normal(xkey, (2, 1, 28, 28), jnp.float32)

    out = jax.block_until_ready(forward(params, x))
    ref = jax.block_until_ready(reference_forward(params, x))

    assert out.shape == (2, 10)
    assert bool(jnp.all(jnp.isfinite(out)))
    assert bool(jnp.allclose(jnp.sum(out, axis=1), 1.0, atol=1e-5))
    # bf16 matmul operands -> allow small absolute error on the probabilities.
    assert bool(jnp.allclose(out, ref, atol=2e-3)), "mismatch vs XLA reference"
    print("KERNEL_OK")
</pallas_src>

<mosaic_0001>
module attributes {stable_mosaic.version = 11 : i64} {
  func.func @_fused_kernel(%arg0: i32, %arg1: memref<104x150xbf16, #tpu.memory_space<vmem>>, %arg2: memref<150x1024xbf16, #tpu.memory_space<vmem>>, %arg3: memref<150x1024xbf16, #tpu.memory_space<vmem>>, %arg4: memref<5x512x768xbf16, #tpu.memory_space<vmem>>, %arg5: memref<768x256xbf16, #tpu.memory_space<vmem>>, %arg6: memref<256x128xbf16, #tpu.memory_space<vmem>>, %arg7: memref<1x512xf32, #tpu.memory_space<vmem>>, %arg8: memref<1x768xf32, #tpu.memory_space<vmem>>, %arg9: memref<1x256xf32, #tpu.memory_space<vmem>>, %arg10: memref<1x128xf32, #tpu.memory_space<vmem>>, %arg11: memref<8x128xf32, #tpu.memory_space<vmem>>, %arg12: memref<104x512xbf16, #tpu.memory_space<vmem>>) attributes {dimension_semantics = [#tpu.dimension_semantics<parallel>], iteration_bounds = array<i64: 1>, scalar_prefetch = 0 : i64, scratch_operands = 1 : i64, tpu.core_type = #tpu.core_type<tc>, window_params = [{transform_indices = @transform_0, window_bounds = array<i64: 104, 150>}, {pipeline_mode = #tpu.pipeline_mode<synchronous>, transform_indices = @transform_1, window_bounds = array<i64: 150, 1024>}, {pipeline_mode = #tpu.pipeline_mode<synchronous>, transform_indices = @transform_2, window_bounds = array<i64: 150, 1024>}, {pipeline_mode = #tpu.pipeline_mode<synchronous>, transform_indices = @transform_3, window_bounds = array<i64: 5, 512, 768>}, {pipeline_mode = #tpu.pipeline_mode<synchronous>, transform_indices = @transform_4, window_bounds = array<i64: 768, 256>}, {pipeline_mode = #tpu.pipeline_mode<synchronous>, transform_indices = @transform_5, window_bounds = array<i64: 256, 128>}, {pipeline_mode = #tpu.pipeline_mode<synchronous>, transform_indices = @transform_6, window_bounds = array<i64: 1, 512>}, {pipeline_mode = #tpu.pipeline_mode<synchronous>, transform_indices = @transform_7, window_bounds = array<i64: 1, 768>}, {pipeline_mode = #tpu.pipeline_mode<synchronous>, transform_indices = @transform_8, window_bounds = array<i64: 1, 256>}, {pipeline_mode = #tpu.pipeline_mode<synchronous>, transform_indices = @transform_9, window_bounds = array<i64: 1, 128>}, {transform_indices = @transform_10, window_bounds = array<i64: 8, 128>}]} {
    %c0 = arith.constant 0 : index
    %c0_0 = arith.constant 0 : index
    %0 = vector.load %arg1[%c0, %c0_0] : memref<104x150xbf16, #tpu.memory_space<vmem>>, vector<104x150xbf16>
    %c0_1 = arith.constant 0 : index
    %c0_2 = arith.constant 0 : index
    %1 = vector.load %arg2[%c0_1, %c0_2] : memref<150x1024xbf16, #tpu.memory_space<vmem>>, vector<150x1024xbf16>
    %cst = arith.constant dense<0.000000e+00> : vector<104x1024xf32>
    %2 = tpu.matmul %0, %1, %cst {dimension_numbers = #tpu.dot_dimension_numbers<[1], [0], [0], [1], [0, 0, 1, 1], [], []>} : vector<104x150xbf16>, vector<150x1024xbf16>, vector<104x1024xf32> -> vector<104x1024xf32>
    %3 = vector.extract_strided_slice %2 {offsets = [0, 0], sizes = [104, 512], strides = [1, 1]} : vector<104x1024xf32> to vector<104x512xf32>
    %4 = vector.extract_strided_slice %2 {offsets = [0, 512], sizes = [104, 512], strides = [1, 1]} : vector<104x1024xf32> to vector<104x512xf32>
    %5 = arith.maximumf %3, %4 : vector<104x512xf32>
    %c0_3 = arith.constant 0 : index
    %c0_4 = arith.constant 0 : index
    %6 = vector.load %arg3[%c0_3, %c0_4] : memref<150x1024xbf16, #tpu.memory_space<vmem>>, vector<150x1024xbf16>
    %cst_5 = arith.constant dense<0.000000e+00> : vector<104x1024xf32>
    %7 = tpu.matmul %0, %6, %cst_5 {dimension_numbers = #tpu.dot_dimension_numbers<[1], [0], [0], [1], [0, 0, 1, 1], [], []>} : vector<104x150xbf16>, vector<150x1024xbf16>, vector<104x1024xf32> -> vector<104x1024xf32>
    %8 = vector.extract_strided_slice %7 {offsets = [0, 0], sizes = [104, 512], strides = [1, 1]} : vector<104x1024xf32> to vector<104x512xf32>
    %9 = vector.extract_strided_slice %7 {offsets = [0, 512], sizes = [104, 512], strides = [1, 1]} : vector<104x1024xf32> to vector<104x512xf32>
    %10 = arith.maximumf %8, %9 : vector<104x512xf32>
    %11 = arith.maximumf %5, %10 : vector<104x512xf32>
    %c0_6 = arith.constant 0 : index
    %c0_7 = arith.constant 0 : index
    %12 = vector.load %arg7[%c0_6, %c0_7] : memref<1x512xf32, #tpu.memory_space<vmem>>, vector<1x512xf32>
    %13 = vector.broadcast %12 : vector<1x512xf32> to vector<104x512xf32>
    %14 = arith.addf %11, %13 : vector<104x512xf32>
    %cst_8 = arith.constant 0.000000e+00 : f32
    %15 = vector.broadcast %cst_8 : f32 to vector<104x512xf32>
    %16 = arith.maximumf %14, %15 : vector<104x512xf32>
    %17 = arith.truncf %16 : vector<104x512xf32> to vector<104x512xbf16>
    %c0_9 = arith.constant 0 : index
    %c0_10 = arith.constant 0 : index
    %18 = vector.load %arg12[%c0_9, %c0_10] : memref<104x512xbf16, #tpu.memory_space<vmem>>, vector<104x512xbf16>
    tpu.vector_store %arg12[%c0_9, %c0_10], %17 {strides = array<i32>} : memref<104x512xbf16, #tpu.memory_space<vmem>>, vector<104x512xbf16>,
    %c0_11 = arith.constant 0 : index
    %c0_12 = arith.constant 0 : index
    %19 = vector.load %arg12[%c0_11, %c0_12] : memref<104x512xbf16, #tpu.memory_space<vmem>>, vector<72x512xbf16>
    %c0_13 = arith.constant 0 : index
    %c0_14 = arith.constant 0 : index
    %c0_15 = arith.constant 0 : index
    %20 = vector.load %arg4[%c0_13, %c0_14, %c0_15] : memref<5x512x768xbf16, #tpu.memory_space<vmem>>, vector<1x512x768xbf16>
    %21 = vector.shape_cast %20 : vector<1x512x768xbf16> to vector<512x768xbf16>
    %cst_16 = arith.constant dense<0.000000e+00> : vector<72x768xf32>
    %22 = tpu.matmul %19, %21, %cst_16 {dimension_numbers = #tpu.dot_dimension_numbers<[1], [0], [0], [1], [0, 0, 1, 1], [], []>} : vector<72x512xbf16>, vector<512x768xbf16>, vector<72x768xf32> -> vector<72x768xf32>
    %c8 = arith.constant 8 : index
    %c0_17 = arith.constant 0 : index
    %23 = vector.load %arg12[%c8, %c0_17] : memref<104x512xbf16, #tpu.memory_space<vmem>>, vector<72x512xbf16>
    %c1 = arith.constant 1 : index
    %c0_18 = arith.constant 0 : index
    %c0_19 = arith.constant 0 : index
    %24 = vector.load %arg4[%c1, %c0_18, %c0_19] : memref<5x512x768xbf16, #tpu.memory_space<vmem>>, vector<1x512x768xbf16>
    %25 = vector.shape_cast %24 : vector<1x512x768xbf16> to vector<512x768xbf16>
    %cst_20 = arith.constant dense<0.000000e+00> : vector<72x768xf32>
    %26 = tpu.matmul %23, %25, %cst_20 {dimension_numbers = #tpu.dot_dimension_numbers<[1], [0], [0], [1], [0, 0, 1, 1], [], []>} : vector<72x512xbf16>, vector<512x768xbf16>, vector<72x768xf32> -> vector<72x768xf32>
    %27 = arith.addf %22, %26 : vector<72x768xf32>
    %c16 = arith.constant 16 : index
    %c0_21 = arith.constant 0 : index
    %28 = vector.load %arg12[%c16, %c0_21] : memref<104x512xbf16, #tpu.memory_space<vmem>>, vector<72x512xbf16>
    %c2 = arith.constant 2 : index
    %c0_22 = arith.constant 0 : index
    %c0_23 = arith.constant 0 : index
    %29 = vector.load %arg4[%c2, %c0_22, %c0_23] : memref<5x512x768xbf16, #tpu.memory_space<vmem>>, vector<1x512x768xbf16>
    %30 = vector.shape_cast %29 : vector<1x512x768xbf16> to vector<512x768xbf16>
    %cst_24 = arith.constant dense<0.000000e+00> : vector<72x768xf32>
    %31 = tpu.matmul %28, %30, %cst_24 {dimension_numbers = #tpu.dot_dimension_numbers<[1], [0], [0], [1], [0, 0, 1, 1], [], []>} : vector<72x512xbf16>, vector<512x768xbf16>, vector<72x768xf32> -> vector<72x768xf32>
    %32 = arith.addf %27, %31 : vector<72x768xf32>
    %c24 = arith.constant 24 : index
    %c0_25 = arith.constant 0 : index
    %33 = vector.load %arg12[%c24, %c0_25] : memref<104x512xbf16, #tpu.memory_space<vmem>>, vector<72x512xbf16>
    %c3 = arith.constant 3 : index
    %c0_26 = arith.constant 0 : index
    %c0_27 = arith.constant 0 : index
    %34 = vector.load %arg4[%c3, %c0_26, %c0_27] : memref<5x512x768xbf16, #tpu.memory_space<vmem>>, vector<1x512x768xbf16>
    %35 = vector.shape_cast %34 : vector<1x512x768xbf16> to vector<512x768xbf16>
    %cst_28 = arith.constant dense<0.000000e+00> : vector<72x768xf32>
    %36 = tpu.matmul %33, %35, %cst_28 {dimension_numbers = #tpu.dot_dimension_numbers<[1], [0], [0], [1], [0, 0, 1, 1], [], []>} : vector<72x512xbf16>, vector<512x768xbf16>, vector<72x768xf32> -> vector<72x768xf32>
    %37 = arith.addf %32, %36 : vector<72x768xf32>
    %c32 = arith.constant 32 : index
    %c0_29 = arith.constant 0 : index
    %38 = vector.load %arg12[%c32, %c0_29] : memref<104x512xbf16, #tpu.memory_space<vmem>>, vector<72x512xbf16>
    %c4 = arith.constant 4 : index
    %c0_30 = arith.constant 0 : index
    %c0_31 = arith.constant 0 : index
    %39 = vector.load %arg4[%c4, %c0_30, %c0_31] : memref<5x512x768xbf16, #tpu.memory_space<vmem>>, vector<1x512x768xbf16>
    %40 = vector.shape_cast %39 : vector<1x512x768xbf16> to vector<512x768xbf16>
    %cst_32 = arith.constant dense<0.000000e+00> : vector<72x768xf32>
    %41 = tpu.matmul %38, %40, %cst_32 {dimension_numbers = #tpu.dot_dimension_numbers<[1], [0], [0], [1], [0, 0, 1, 1], [], []>} : vector<72x512xbf16>, vector<512x768xbf16>, vector<72x768xf32> -> vector<72x768xf32>
    %42 = arith.addf %37, %41 : vector<72x768xf32>
    %c0_33 = arith.constant 0 : index
    %c0_34 = arith.constant 0 : index
    %43 = vector.load %arg8[%c0_33, %c0_34] : memref<1x768xf32, #tpu.memory_space<vmem>>, vector<1x768xf32>
    %44 = vector.broadcast %43 : vector<1x768xf32> to vector<72x768xf32>
    %45 = arith.addf %42, %44 : vector<72x768xf32>
    %cst_35 = arith.constant 0.000000e+00 : f32
    %46 = vector.broadcast %cst_35 : f32 to vector<72x768xf32>
    %47 = arith.maximumf %45, %46 : vector<72x768xf32>
    %48 = vector.extract_strided_slice %47 {offsets = [0, 0], sizes = [72, 256], strides = [1, 1]} : vector<72x768xf32> to vector<72x256xf32>
    %49 = vector.extract_strided_slice %47 {offsets = [0, 256], sizes = [72, 256], strides = [1, 1]} : vector<72x768xf32> to vector<72x256xf32>
    %50 = arith.maximumf %48, %49 : vector<72x256xf32>
    %51 = vector.extract_strided_slice %47 {offsets = [0, 512], sizes = [72, 256], strides = [1, 1]} : vector<72x768xf32> to vector<72x256xf32>
    %52 = arith.maximumf %50, %51 : vector<72x256xf32>
    %53 = vector.extract_strided_slice %52 {offsets = [0, 0], sizes = [8, 256], strides = [1, 1]} : vector<72x256xf32> to vector<8x256xf32>
    %54 = vector.extract_strided_slice %52 {offsets = [8, 0], sizes = [8, 256], strides = [1, 1]} : vector<72x256xf32> to vector<8x256xf32>
    %55 = arith.maximumf %53, %54 : vector<8x256xf32>
    %56 = vector.extract_strided_slice %52 {offsets = [16, 0], sizes = [8, 256], strides = [1, 1]} : vector<72x256xf32> to vector<8x256xf32>
    %57 = arith.maximumf %55, %56 : vector<8x256xf32>
    %58 = vector.extract_strided_slice %52 {offsets = [24, 0], sizes = [8, 256], strides = [1, 1]} : vector<72x256xf32> to vector<8x256xf32>
    %59 = vector.extract_strided_slice %52 {offsets = [32, 0], sizes = [8, 256], strides = [1, 1]} : vector<72x256xf32> to vector<8x256xf32>
    %60 = arith.maximumf %58, %59 : vector<8x256xf32>
    %61 = vector.extract_strided_slice %52 {offsets = [40, 0], sizes = [8, 256], strides = [1, 1]} : vector<72x256xf32> to vector<8x256xf32>
    %62 = arith.maximumf %60, %61 : vector<8x256xf32>
    %63 = vector.extract_strided_slice %52 {offsets = [48, 0], sizes = [8, 256], strides = [1, 1]} : vector<72x256xf32> to vector<8x256xf32>
    %64 = vector.extract_strided_slice %52 {offsets = [56, 0], sizes = [8, 256], strides = [1, 1]} : vector<72x256xf32> to vector<8x256xf32>
    %65 = arith.maximumf %63, %64 : vector<8x256xf32>
    %66 = vector.extract_strided_slice %52 {offsets = [64, 0], sizes = [8, 256], strides = [1, 1]} : vector<72x256xf32> to vector<8x256xf32>
    %67 = arith.maximumf %65, %66 : vector<8x256xf32>
    %68 = tpu.concatenate %57, %62, %67 in 1 : vector<8x256xf32>, vector<8x256xf32>, vector<8x256xf32> -> vector<8x768xf32>
    %69 = arith.truncf %68 : vector<8x768xf32> to vector<8x768xbf16>
    %c0_36 = arith.constant 0 : index
    %c0_37 = arith.constant 0 : index
    %70 = vector.load %arg5[%c0_36, %c0_37] : memref<768x256xbf16, #tpu.memory_space<vmem>>, vector<768x256xbf16>
    %cst_38 = arith.constant dense<0.000000e+00> : vector<8x256xf32>
    %71 = tpu.matmul %69, %70, %cst_38 {dimension_numbers = #tpu.dot_dimension_numbers<[1], [0], [0], [1], [0, 0, 1, 1], [], []>} : vector<8x768xbf16>, vector<768x256xbf16>, vector<8x256xf32> -> vector<8x256xf32>
    %c0_39 = arith.constant 0 : index
    %c0_40 = arith.constant 0 : index
    %72 = vector.load %arg9[%c0_39, %c0_40] : memref<1x256xf32, #tpu.memory_space<vmem>>, vector<1x256xf32>
    %73 = vector.broadcast %72 : vector<1x256xf32> to vector<8x256xf32>
    %74 = arith.addf %71, %73 : vector<8x256xf32>
    %cst_41 = arith.constant 0.000000e+00 : f32
    %75 = vector.broadcast %cst_41 : f32 to vector<8x256xf32>
    %76 = arith.maximumf %74, %75 : vector<8x256xf32>
    %77 = arith.truncf %76 : vector<8x256xf32> to vector<8x256xbf16>
    %c0_42 = arith.constant 0 : index
    %c0_43 = arith.constant 0 : index
    %78 = vector.load %arg6[%c0_42, %c0_43] : memref<256x128xbf16, #tpu.memory_space<vmem>>, vector<256x128xbf16>
    %cst_44 = arith.constant dense<0.000000e+00> : vector<8x128xf32>
    %79 = tpu.matmul %77, %78, %cst_44 {dimension_numbers = #tpu.dot_dimension_numbers<[1], [0], [0], [1], [0, 0, 1, 1], [], []>} : vector<8x256xbf16>, vector<256x128xbf16>, vector<8x128xf32> -> vector<8x128xf32>
    %c0_45 = arith.constant 0 : index
    %c0_46 = arith.constant 0 : index
    %80 = vector.load %arg10[%c0_45, %c0_46] : memref<1x128xf32, #tpu.memory_space<vmem>>, vector<1x128xf32>
    %81 = vector.broadcast %80 : vector<1x128xf32> to vector<8x128xf32>
    %82 = arith.addf %79, %81 : vector<8x128xf32>
    %cst_47 = arith.constant dense<0xFF800000> : vector<8xf32>
    %83 = vector.multi_reduction <maximumf>, %82, %cst_47 [1] : vector<8x128xf32> to vector<8xf32>
    %84 = vector.shape_cast %83 : vector<8xf32> to vector<8x1xf32>
    %85 = vector.broadcast %84 : vector<8x1xf32> to vector<8x128xf32>
    %86 = arith.subf %82, %85 : vector<8x128xf32>
    %87 = math.exp %86 : vector<8x128xf32>
    %cst_48 = arith.constant dense<0.000000e+00> : vector<8xf32>
    %88 = vector.multi_reduction <add>, %87, %cst_48 [1] : vector<8x128xf32> to vector<8xf32>
    %89 = vector.shape_cast %88 : vector<8xf32> to vector<8x1xf32>
    %90 = vector.broadcast %89 : vector<8x1xf32> to vector<8x128xf32>
    %91 = arith.divf %87, %90 : vector<8x128xf32>
    %c0_49 = arith.constant 0 : index
    %c0_50 = arith.constant 0 : index
    %92 = vector.load %arg11[%c0_49, %c0_50] : memref<8x128xf32, #tpu.memory_space<vmem>>, vector<8x128xf32>
    tpu.vector_store %arg11[%c0_49, %c0_50], %91 {strides = array<i32>} : memref<8x128xf32, #tpu.memory_space<vmem>>, vector<8x128xf32>,
    return
  }
  func.func @transform_0(%arg0: i32) -> (i32, i32) {
    %c0_i32 = arith.constant 0 : i32
    %c0_i32_0 = arith.constant 0 : i32
    return %arg0, %c0_i32 : i32, i32
  }
  func.func @transform_1(%arg0: i32) -> (i32, i32) {
    %c0_i32 = arith.constant 0 : i32
    %c0_i32_0 = arith.constant 0 : i32
    %c0_i32_1 = arith.constant 0 : i32
    return %c0_i32, %c0_i32_0 : i32, i32
  }
  func.func @transform_2(%arg0: i32) -> (i32, i32) {
    %c0_i32 = arith.constant 0 : i32
    %c0_i32_0 = arith.constant 0 : i32
    %c0_i32_1 = arith.constant 0 : i32
    return %c0_i32, %c0_i32_0 : i32, i32
  }
  func.func @transform_3(%arg0: i32) -> (i32, i32, i32) {
    %c0_i32 = arith.constant 0 : i32
    %c0_i32_0 = arith.constant 0 : i32
    %c0_i32_1 = arith.constant 0 : i32
    %c0_i32_2 = arith.constant 0 : i32
    return %c0_i32, %c0_i32_0, %c0_i32_1 : i32, i32, i32
  }
  func.func @transform_4(%arg0: i32) -> (i32, i32) {
    %c0_i32 = arith.constant 0 : i32
    %c0_i32_0 = arith.constant 0 : i32
    %c0_i32_1 = arith.constant 0 : i32
    return %c0_i32, %c0_i32_0 : i32, i32
  }
  func.func @transform_5(%arg0: i32) -> (i32, i32) {
    %c0_i32 = arith.constant 0 : i32
    %c0_i32_0 = arith.constant 0 : i32
    %c0_i32_1 = arith.constant 0 : i32
    return %c0_i32, %c0_i32_0 : i32, i32
  }
  func.func @transform_6(%arg0: i32) -> (i32, i32) {
    %c0_i32 = arith.constant 0 : i32
    %c0_i32_0 = arith.constant 0 : i32
    %c0_i32_1 = arith.constant 0 : i32
    return %c0_i32, %c0_i32_0 : i32, i32
  }
  func.func @transform_7(%arg0: i32) -> (i32, i32) {
    %c0_i32 = arith.constant 0 : i32
    %c0_i32_0 = arith.constant 0 : i32
    %c0_i32_1 = arith.constant 0 : i32
    return %c0_i32, %c0_i32_0 : i32, i32
  }
  func.func @transform_8(%arg0: i32) -> (i32, i32) {
    %c0_i32 = arith.constant 0 : i32
    %c0_i32_0 = arith.constant 0 : i32
    %c0_i32_1 = arith.constant 0 : i32
    return %c0_i32, %c0_i32_0 : i32, i32
  }
  func.func @transform_9(%arg0: i32) -> (i32, i32) {
    %c0_i32 = arith.constant 0 : i32
    %c0_i32_0 = arith.constant 0 : i32
    %c0_i32_1 = arith.constant 0 : i32
    return %c0_i32, %c0_i32_0 : i32, i32
  }
  func.func @transform_10(%arg0: i32) -> (i32, i32) {
    %c0_i32 = arith.constant 0 : i32
    %c0_i32_0 = arith.constant 0 : i32
    return %arg0, %c0_i32 : i32, i32
  }
}

</mosaic_0001>

<llo_original>
// kernel: tile.18
$region0: #{tile.18}
  #allocation0 [shape = 's32[1]{0}', space=sflag, size = 0x4, scoped, tag = 'scoped memory for tile.18']
  %s0 = inlined_call_operand.vmem [shape: f32[32], index: 0, kind: input, shape index: {}]
  %s1 = inlined_call_operand.vmem [shape: f32[13,32], index: 1, kind: output, shape index: {}]
  // Predicated region
  $region2: #{tile.18} parent=0 // pred_check
    _
  $region3: #{tile.18} parent=0 // pred_check_branch
    %3 = sbr.rel (0) target = $region5
  $region4: #{tile.18} parent=0 // pred_region
    _
  $region5: #{tile.18} parent=0 // pred_fallthru
    _
  %v4 = vld [vmem:[%s0] ss:$0 sm:$0xff]
  %5 = vst [vmem:[%s1] sm:$0xff] %v4
  %s6 = scalar_lea.vmem %s1, 8
  %7 = vst [vmem:[%s6] sm:$0xff] %v4

// kernel: tile.19
$region0: #{tile.19}
  %s0 = inlined_call_operand.vmem [shape: f32[13,32], index: 0, kind: input, shape index: {}]
  %s1 = inlined_call_operand.vmem [shape: f32[416], index: 1, kind: output, shape index: {}]
  $region1: #{tile.19} parent=0
    #allocation0 [shape = 'u8[4096]{0}', space=vmem, size = 0x1000, scoped, tag = 'scoped mem for output reshape']
    %v2 = vld [vmem:[%s0] ss:$4 sm:$0xf]
    %vm3 = vcmask 261120
    %4 = vst.msk [vmem:[#allocation0] sm:$0xf] %vm3, %v2
    %s5 = scalar_lea.vmem %s0, 3
    %v6 = vld [vmem:[%s5] ss:$4 sm:$0x7]
    %7 = vrot.lane.b32.xlu0 %v6, 96
    %v8 = vpop.permute.xlu0 %7
    %vm9 = vcmask 1048320
    %10 = vst.msk [vmem:[#allocation0] sm:$0x7] %vm9, %v8
    %s11 = scalar_lea.vmem %s0, 2
    %v12 = vld [vmem:[%s11] ss:$4 sm:$0x7]
    %13 = vrot.lane.b32.xlu0 %v12, 64
    %v14 = vpop.permute.xlu0 %13
    %vm15 = vcmask 785920
    %16 = vst.msk [vmem:[#allocation0] sm:$0x7] %vm15, %v14
    %s17 = scalar_lea.vmem %s0, 1
    %v18 = vld [vmem:[%s17] ss:$4 sm:$0x7]
    %19 = vrot.lane.b32.xlu0 %v18, 32
    %v20 = vpop.permute.xlu0 %19
    %vm21 = vcmask 523520
    %22 = vst.msk [vmem:[#allocation0] sm:$0x7] %vm21, %v20
    %s24 = sshllo.u32 0, 4
    %v26 = vld [vmem:[#allocation0] sm:%s24]
    %s27 = sshllo.u32 0, 4
    %28 = vst [vmem:[%s1] sm:%s27] %v26

// kernel: tile.23
$region0: #{tile.23}
  #allocation0 [shape = 's32[1]{0}', space=sflag, size = 0x4, scoped, tag = 'scoped memory for tile.23']
  %s0 = inlined_call_operand.vmem [shape: f32[64], index: 0, kind: input, shape index: {}]
  %s1 = inlined_call_operand.vmem [shape: f32[3,64], index: 1, kind: output, shape index: {}]
  // Predicated region
  $region2: #{tile.23} parent=0 // pred_check
    _
  $region3: #{tile.23} parent=0 // pred_check_branch
    %3 = sbr.rel (0) target = $region5
  $region4: #{tile.23} parent=0 // pred_region
    _
  $region5: #{tile.23} parent=0 // pred_fallthru
    _
  %v4 = vld [vmem:[%s0] ss:$0 sm:$0xff]
  %5 = vst [vmem:[%s1] sm:$0xf] %v4

// kernel: tile.24
$region0: #{tile.24}
  %s0 = inlined_call_operand.vmem [shape: f32[3,64], index: 0, kind: input, shape index: {}]
  %s1 = inlined_call_operand.vmem [shape: f32[192], index: 1, kind: output, shape index: {}]
  $region1: #{tile.24} parent=0
    #allocation0 [shape = 'u8[4096]{0}', space=vmem, size = 0x1000, scoped, tag = 'scoped mem for output reshape']
    #allocation1 [shape = 'u8[4096]{0}', space=vmem, size = 0x1000, scoped, tag = 'scoped mem for input reshape']
    %s3 = sshllo.u32 0, 4
    %v4 = vld [vmem:[%s0] sm:%s3]
    %5 = vst [vmem:[#allocation1] sm:%s3] %v4
    %s6 = smov 3
    %v7 = vld [vmem:[#allocation1] ss:$2 sm:%s6]
    %vm8 = vcmask 523264
    %9 = vst.msk [vmem:[#allocation0] sm:$0x3] %vm8, %v7
    %s10 = scalar_lea.vmem [#allocation1], 1
    %v11 = vld [vmem:[%s10] sm:$0x1]
    %12 = vrot.lane.b32.xlu0 %v11, 64
    %v13 = vpop.permute.xlu0 %12
    %vm14 = vcmask 1048064
    %15 = vst.msk [vmem:[#allocation0] sm:$0x1] %vm14, %v13
    %s17 = sshllo.u32 0, 2
    %v19 = vld [vmem:[#allocation0] sm:%s17]
    %s20 = sshllo.u32 0, 2
    %21 = vst [vmem:[%s1] sm:%s20] %v19

// kernel: forward.1
$region0: #{forward.1}
  #allocation0 [shape = 'u32[]', space=smem, size = 0x4, offset = 0x4, fixed_abs, tag = 'smem constant byte address 0x4 - core index']
  #allocation1 [shape = 'u32[144,128]{1,0:T(1,128)}', space=vmem, size = 0x12000, scoped, tag = 'internal scratch']
  #allocation2 [shape = 'bf16[104,512]{1,0:T(8,128)(2,1)}', space=vmem, size = 0x1a000, scoped, tag = 'scratch operand']
  %s0 = inlined_call_operand.vmem [shape: bf16[104,150], index: 0, kind: input, shape index: {}]
  %s1 = inlined_call_operand.vmem [shape: bf16[150,1024], index: 1, kind: input, shape index: {}]
  %s2 = inlined_call_operand.vmem [shape: bf16[150,1024], index: 2, kind: input, shape index: {}]
  %s3 = inlined_call_operand.vmem [shape: bf16[5,512,768], index: 3, kind: input, shape index: {}]
  %s4 = inlined_call_operand.vmem [shape: bf16[768,256], index: 4, kind: input, shape index: {}]
  %s5 = inlined_call_operand.vmem [shape: bf16[256,128], index: 5, kind: input, shape index: {}]
  %s6 = inlined_call_operand.vmem [shape: f32[1,512], index: 6, kind: input, shape index: {}]
  %s7 = inlined_call_operand.vmem [shape: f32[1,768], index: 7, kind: input, shape index: {}]
  %s8 = inlined_call_operand.vmem [shape: f32[1,256], index: 8, kind: input, shape index: {}]
  %s9 = inlined_call_operand.vmem [shape: f32[1,128], index: 9, kind: input, shape index: {}]
  %s10 = inlined_call_operand.vmem [shape: f32[8,128], index: 10, kind: output, shape index: {}]
  %s11 = sld [smem:[#allocation0]]
  $region50: #{forward.1} parent=0
    _
  %s13 = ssub.s32 1, %s11
  %s14 = scalar_select 0, %s13, %s11
  // Predicated region
  $region2: #{forward.1} parent=0 // pred_check
    _
  $region3: #{forward.1} parent=0 // pred_check_branch
    %16 = sbr.rel (0) target = $region5
  $region4: #{forward.1} parent=0 // pred_region
    _
  $region5: #{forward.1} parent=0 // pred_fallthru
    _
  // Predicated region
  $region6: #{forward.1} parent=0 // pred_check
    _
  $region7: #{forward.1} parent=0 // pred_check_branch
    %18 = sbr.rel (0) target = $region9
  $region8: #{forward.1} parent=0 // pred_region
    _
  $region9: #{forward.1} parent=0 // pred_fallthru
    _
  // Predicated region
  $region10: #{forward.1} parent=0 // pred_check
    _
  $region11: #{forward.1} parent=0 // pred_check_branch
    %20 = sbr.rel (0) target = $region13
  $region12: #{forward.1} parent=0 // pred_region
    _
  $region13: #{forward.1} parent=0 // pred_fallthru
    _
  // Predicated region
  $region14: #{forward.1} parent=0 // pred_check
    _
  $region15: #{forward.1} parent=0 // pred_check_branch
    %22 = sbr.rel (0) target = $region17
  $region16: #{forward.1} parent=0 // pred_region
    _
  $region17: #{forward.1} parent=0 // pred_fallthru
    _
  // Predicated region
  $region18: #{forward.1} parent=0 // pred_check
    _
  $region19: #{forward.1} parent=0 // pred_check_branch
    %24 = sbr.rel (0) target = $region21
  $region20: #{forward.1} parent=0 // pred_region
    _
  $region21: #{forward.1} parent=0 // pred_fallthru
    _
  // Predicated region
  $region22: #{forward.1} parent=0 // pred_check
    _
  $region23: #{forward.1} parent=0 // pred_check_branch
    %26 = sbr.rel (0) target = $region25
  $region24: #{forward.1} parent=0 // pred_region
    _
  $region25: #{forward.1} parent=0 // pred_fallthru
    _
  // Predicated region
  $region26: #{forward.1} parent=0 // pred_check
    _
  $region27: #{forward.1} parent=0 // pred_check_branch
    %28 = sbr.rel (0) target = $region29
  $region28: #{forward.1} parent=0 // pred_region
    _
  $region29: #{forward.1} parent=0 // pred_fallthru
    _
  // Predicated region
  $region30: #{forward.1} parent=0 // pred_check
    _
  $region31: #{forward.1} parent=0 // pred_check_branch
    %30 = sbr.rel (0) target = $region33
  $region32: #{forward.1} parent=0 // pred_region
    _
  $region33: #{forward.1} parent=0 // pred_fallthru
    _
  // Predicated region
  $region34: #{forward.1} parent=0 // pred_check
    _
  $region35: #{forward.1} parent=0 // pred_check_branch
    %32 = sbr.rel (0) target = $region37
  $region36: #{forward.1} parent=0 // pred_region
    _
  $region37: #{forward.1} parent=0 // pred_fallthru
    _
  // Predicated region
  $region38: #{forward.1} parent=0 // pred_check
    _
  $region39: #{forward.1} parent=0 // pred_check_branch
    %34 = sbr.rel (0) target = $region41
  $region40: #{forward.1} parent=0 // pred_region
    _
  $region41: #{forward.1} parent=0 // pred_fallthru
    _
  %v36 = vld [vmem:[%s0] sm:$0xff]
  %v37 = vld [vmem:[%s0 + $0x8] sm:$0xff]
  %v38 = vld [vmem:[%s0 + $0x10] sm:$0xff]
  %v39 = vld [vmem:[%s0 + $0x18] sm:$0xff]
  %v40 = vld [vmem:[%s0 + $0x20] sm:$0xff]
  %v41 = vld [vmem:[%s0 + $0x28] sm:$0xff]
  %v42 = vld [vmem:[%s0 + $0x30] sm:$0xff]
  %v43 = vld [vmem:[%s0 + $0x38] sm:$0xff]
  %v44 = vld [vmem:[%s0 + $0x40] sm:$0xff]
  %v45 = vld [vmem:[%s0 + $0x48] sm:$0xff]
  %v46 = vld [vmem:[%s0 + $0x50] sm:$0xff]
  %v47 = vld [vmem:[%s0 + $0x58] sm:$0xff]
  %v48 = vld [vmem:[%s0 + $0x60] sm:$0xff]
  %v49 = vld [vmem:[%s1] sm:$0xff]
  %v50 = vld [vmem:[%s1 + $0x8] sm:$0xff]
  %v51 = vld [vmem:[%s1 + $0x10] sm:$0xff]
  %v52 = vld [vmem:[%s1 + $0x18] sm:$0xff]
  %v53 = vld [vmem:[%s1 + $0x20] sm:$0xff]
  %v54 = vld [vmem:[%s1 + $0x28] sm:$0xff]
  %v55 = vld [vmem:[%s1 + $0x30] sm:$0xff]
  %v56 = vld [vmem:[%s1 + $0x38] sm:$0xff]
  %v57 = vld [vmem:[%s1 + $0x40] sm:$0xff]
  %v58 = vld [vmem:[%s1 + $0x48] sm:$0xff]
  %v59 = vld [vmem:[%s1 + $0x50] sm:$0xff]
  %v60 = vld [vmem:[%s1 + $0x58] sm:$0xff]
  %v61 = vld [vmem:[%s1 + $0x60] sm:$0xff]
  %v62 = vld [vmem:[%s1 + $0x68] sm:$0xff]
  %v63 = vld [vmem:[%s1 + $0x70] sm:$0xff]
  %v64 = vld [vmem:[%s1 + $0x78] sm:$0xff]
  %v65 = vld [vmem:[%s1 + $0x80] sm:$0xff]
  %v66 = vld [vmem:[%s1 + $0x88] sm:$0xff]
  %v67 = vld [vmem:[%s1 + $0x90] sm:$0xff]
  %v68 = vld [vmem:[%s1 + $0x98] sm:$0xff]
  %v69 = vld [vmem:[%s1 + $0xa0] sm:$0xff]
  %v70 = vld [vmem:[%s1 + $0xa8] sm:$0xff]
  %v71 = vld [vmem:[%s1 + $0xb0] sm:$0xff]
  %v72 = vld [vmem:[%s1 + $0xb8] sm:$0xff]
  %v73 = vld [vmem:[%s1 + $0xc0] sm:$0xff]
  %v74 = vld [vmem:[%s1 + $0xc8] sm:$0xff]
  %v75 = vld [vmem:[%s1 + $0xd0] sm:$0xff]
  %v76 = vld [vmem:[%s1 + $0xd8] sm:$0xff]
  %v77 = vld [vmem:[%s1 + $0xe0] sm:$0xff]
  %v78 = vld [vmem:[%s1 + $0xe8] sm:$0xff]
  %v79 = vld [vmem:[%s1 + $0xf0] sm:$0xff]
  %v80 = vld [vmem:[%s1 + $0xf8] sm:$0xff]
  %v81 = vld [vmem:[%s1 + $0x100] sm:$0xff]
  %v82 = vld [vmem:[%s1 + $0x108] sm:$0xff]
  %v83 = vld [vmem:[%s1 + $0x110] sm:$0xff]
  %v84 = vld [vmem:[%s1 + $0x118] sm:$0xff]
  %v85 = vld [vmem:[%s1 + $0x120] sm:$0xff]
  %v86 = vld [vmem:[%s1 + $0x128] sm:$0xff]
  %v87 = vld [vmem:[%s1 + $0x130] sm:$0xff]
  %v88 = vld [vmem:[%s1 + $0x138] sm:$0xff]
  %v89 = vld [vmem:[%s1 + $0x140] sm:$0xff]
  %v90 = vld [vmem:[%s1 + $0x148] sm:$0xff]
  %v91 = vld [vmem:[%s1 + $0x150] sm:$0xff]
  %v92 = vld [vmem:[%s1 + $0x158] sm:$0xff]
  %v93 = vld [vmem:[%s1 + $0x160] sm:$0xff]
  %v94 = vld [vmem:[%s1 + $0x168] sm:$0xff]
  %v95 = vld [vmem:[%s1 + $0x170] sm:$0xff]
  %v96 = vld [vmem:[%s1 + $0x178] sm:$0xff]
  %v97 = vld [vmem:[%s1 + $0x180] sm:$0xff]
  %v98 = vld [vmem:[%s1 + $0x188] sm:$0xff]
  %v99 = vld [vmem:[%s1 + $0x190] sm:$0xff]
  %v100 = vld [vmem:[%s1 + $0x198] sm:$0xff]
  %v101 = vld [vmem:[%s1 + $0x1a0] sm:$0xff]
  %v102 = vld [vmem:[%s1 + $0x1a8] sm:$0xff]
  %v103 = vld [vmem:[%s1 + $0x1b0] sm:$0xff]
  %v104 = vld [vmem:[%s1 + $0x1b8] sm:$0xff]
  %v105 = vld [vmem:[%s1 + $0x1c0] sm:$0xff]
  %v106 = vld [vmem:[%s1 + $0x1c8] sm:$0xff]
  %v107 = vld [vmem:[%s1 + $0x1d0] sm:$0xff]
  %v108 = vld [vmem:[%s1 + $0x1d8] sm:$0xff]
  %v109 = vld [vmem:[%s1 + $0x1e0] sm:$0xff]
  %v110 = vld [vmem:[%s1 + $0x1e8] sm:$0xff]
  %v111 = vld [vmem:[%s1 + $0x1f0] sm:$0xff]
  %v112 = vld [vmem:[%s1 + $0x1f8] sm:$0xff]
  %v113 = vld [vmem:[%s1 + $0x200] sm:$0xff]
  %v114 = vld [vmem:[%s1 + $0x208] sm:$0xff]
  %v115 = vld [vmem:[%s1 + $0x210] sm:$0xff]
  %v116 = vld [vmem:[%s1 + $0x218] sm:$0xff]
  %v117 = vld [vmem:[%s1 + $0x220] sm:$0xff]
  %v118 = vld [vmem:[%s1 + $0x228] sm:$0xff]
  %v119 = vld [vmem:[%s1 + $0x230] sm:$0xff]
  %v120 = vld [vmem:[%s1 + $0x238] sm:$0xff]
  %v121 = vld [vmem:[%s1 + $0x240] sm:$0x77]
  %v122 = vld [vmem:[%s1 + $0x248] sm:$0x77]
  %v123 = vld [vmem:[%s1 + $0x250] sm:$0x77]
  %v124 = vld [vmem:[%s1 + $0x258] sm:$0x77]
  %v138 = vunpack.c.l.b16 %v36
  %v139 = vunpack.c.h.b16 %v36
  %v140 = vunpack.c.l.b16 %v37
  %v141 = vunpack.c.h.b16 %v37
  %v142 = vunpack.c.l.b16 %v38
  %v143 = vunpack.c.h.b16 %v38
  %v144 = vunpack.c.l.b16 %v39
  %v145 = vunpack.c.h.b16 %v39
  %v146 = vunpack.c.l.b16 %v40
  %v147 = vunpack.c.h.b16 %v40
  %v148 = vunpack.c.l.b16 %v41
  %v149 = vunpack.c.h.b16 %v41
  %v150 = vunpack.c.l.b16 %v42
  %v151 = vunpack.c.h.b16 %v42
  %v152 = vunpack.c.l.b16 %v43
  %v153 = vunpack.c.h.b16 %v43
  %v154 = vunpack.c.l.b16 %v44
  %v155 = vunpack.c.h.b16 %v44
  %v156 = vunpack.c.l.b16 %v45
  %v157 = vunpack.c.h.b16 %v45
  %v158 = vunpack.c.l.b16 %v46
  %v159 = vunpack.c.h.b16 %v46
  %v160 = vunpack.c.l.b16 %v47
  %v161 = vunpack.c.h.b16 %v47
  %v162 = vunpack.c.l.b16 %v48
  %v163 = vunpack.c.h.b16 %v48
  %v164 = vpack.c.b16 %v140, %v138
  %v165 = vpack.c.b16 %v141, %v139
  %v166 = vpack.c.b16 %v144, %v142
  %v167 = vpack.c.b16 %v145, %v143
  %v168 = vpack.c.b16 %v148, %v146
  %v169 = vpack.c.b16 %v149, %v147
  %v170 = vpack.c.b16 %v152, %v150
  %v171 = vpack.c.b16 %v153, %v151
  %v172 = vpack.c.b16 %v156, %v154
  %v173 = vpack.c.b16 %v157, %v155
  %v174 = vpack.c.b16 %v160, %v158
  %v175 = vpack.c.b16 %v161, %v159
  %v176 = vpack.c.b16 %v162, %v162
  %v177 = vpack.c.b16 %v163, %v163
  %v261 = vunpack.c.l.b16 %v49
  %v262 = vunpack.c.h.b16 %v49
  %v263 = vunpack.c.l.b16 %v50
  %v264 = vunpack.c.h.b16 %v50
  %v265 = vunpack.c.l.b16 %v51
  %v266 = vunpack.c.h.b16 %v51
  %v267 = vunpack.c.l.b16 %v52
  %v268 = vunpack.c.h.b16 %v52
  %v269 = vunpack.c.l.b16 %v53
  %v270 = vunpack.c.h.b16 %v53
  %v271 = vunpack.c.l.b16 %v54
  %v272 = vunpack.c.h.b16 %v54
  %v273 = vunpack.c.l.b16 %v55
  %v274 = vunpack.c.h.b16 %v55
  %v275 = vunpack.c.l.b16 %v56
  %v276 = vunpack.c.h.b16 %v56
  %v277 = vunpack.c.l.b16 %v57
  %v278 = vunpack.c.h.b16 %v57
  %v279 = vunpack.c.l.b16 %v58
  %v280 = vunpack.c.h.b16 %v58
  %v281 = vunpack.c.l.b16 %v59
  %v282 = vunpack.c.h.b16 %v59
  %v283 = vunpack.c.l.b16 %v60
  %v284 = vunpack.c.h.b16 %v60
  %v285 = vunpack.c.l.b16 %v61
  %v286 = vunpack.c.h.b16 %v61
  %v287 = vunpack.c.l.b16 %v62
  %v288 = vunpack.c.h.b16 %v62
  %v289 = vunpack.c.l.b16 %v63
  %v290 = vunpack.c.h.b16 %v63
  %v291 = vunpack.c.l.b16 %v64
  %v292 = vunpack.c.h.b16 %v64
  %v293 = vunpack.c.l.b16 %v65
  %v294 = vunpack.c.h.b16 %v65
  %v295 = vunpack.c.l.b16 %v66
  %v296 = vunpack.c.h.b16 %v66
  %v297 = vunpack.c.l.b16 %v67
  %v298 = vunpack.c.h.b16 %v67
  %v299 = vunpack.c.l.b16 %v68
  %v300 = vunpack.c.h.b16 %v68
  %v301 = vunpack.c.l.b16 %v69
  %v302 = vunpack.c.h.b16 %v69
  %v303 = vunpack.c.l.b16 %v70
  %v304 = vunpack.c.h.b16 %v70
  %v305 = vunpack.c.l.b16 %v71
  %v306 = vunpack.c.h.b16 %v71
  %v307 = vunpack.c.l.b16 %v72
  %v308 = vunpack.c.h.b16 %v72
  %v309 = vunpack.c.l.b16 %v73
  %v310 = vunpack.c.h.b16 %v73
  %v311 = vunpack.c.l.b16 %v74
  %v312 = vunpack.c.h.b16 %v74
  %v313 = vunpack.c.l.b16 %v75
  %v314 = vunpack.c.h.b16 %v75
  %v315 = vunpack.c.l.b16 %v76
  %v316 = vunpack.c.h.b16 %v76
  %v317 = vunpack.c.l.b16 %v77
  %v318 = vunpack.c.h.b16 %v77
  %v319 = vunpack.c.l.b16 %v78
  %v320 = vunpack.c.h.b16 %v78
  %v321 = vunpack.c.l.b16 %v79
  %v322 = vunpack.c.h.b16 %v79
  %v323 = vunpack.c.l.b16 %v80
  %v324 = vunpack.c.h.b16 %v80
  %v325 = vunpack.c.l.b16 %v81
  %v326 = vunpack.c.h.b16 %v81
  %v327 = vunpack.c.l.b16 %v82
  %v328 = vunpack.c.h.b16 %v82
  %v329 = vunpack.c.l.b16 %v83
  %v330 = vunpack.c.h.b16 %v83
  %v331 = vunpack.c.l.b16 %v84
  %v332 = vunpack.c.h.b16 %v84
  %v333 = vunpack.c.l.b16 %v85
  %v334 = vunpack.c.h.b16 %v85
  %v335 = vunpack.c.l.b16 %v86
  %v336 = vunpack.c.h.b16 %v86
  %v337 = vunpack.c.l.b16 %v87
  %v338 = vunpack.c.h.b16 %v87
  %v339 = vunpack.c.l.b16 %v88
  %v340 = vunpack.c.h.b16 %v88
  %v341 = vunpack.c.l.b16 %v89
  %v342 = vunpack.c.h.b16 %v89
  %v343 = vunpack.c.l.b16 %v90
  %v344 = vunpack.c.h.b16 %v90
  %v345 = vunpack.c.l.b16 %v91
  %v346 = vunpack.c.h.b16 %v91
  %v347 = vunpack.c.l.b16 %v92
  %v348 = vunpack.c.h.b16 %v92
  %v349 = vunpack.c.l.b16 %v93
  %v350 = vunpack.c.h.b16 %v93
  %v351 = vunpack.c.l.b16 %v94
  %v352 = vunpack.c.h.b16 %v94
  %v353 = vunpack.c.l.b16 %v95
  %v354 = vunpack.c.h.b16 %v95
  %v355 = vunpack.c.l.b16 %v96
  %v356 = vunpack.c.h.b16 %v96
  %v357 = vunpack.c.l.b16 %v97
  %v358 = vunpack.c.h.b16 %v97
  %v359 = vunpack.c.l.b16 %v98
  %v360 = vunpack.c.h.b16 %v98
  %v361 = vunpack.c.l.b16 %v99
  %v362 = vunpack.c.h.b16 %v99
  %v363 = vunpack.c.l.b16 %v100
  %v364 = vunpack.c.h.b16 %v100
  %v365 = vunpack.c.l.b16 %v101
  %v366 = vunpack.c.h.b16 %v101
  %v367 = vunpack.c.l.b16 %v102
  %v368 = vunpack.c.h.b16 %v102
  %v369 = vunpack.c.l.b16 %v103
  %v370 = vunpack.c.h.b16 %v103
  %v371 = vunpack.c.l.b16 %v104
  %v372 = vunpack.c.h.b16 %v104
  %v373 = vunpack.c.l.b16 %v105
  %v374 = vunpack.c.h.b16 %v105
  %v375 = vunpack.c.l.b16 %v106
  %v376 = vunpack.c.h.b16 %v106
  %v377 = vunpack.c.l.b16 %v107
  %v378 = vunpack.c.h.b16 %v107
  %v379 = vunpack.c.l.b16 %v108
  %v380 = vunpack.c.h.b16 %v108
  %v381 = vunpack.c.l.b16 %v109
  %v382 = vunpack.c.h.b16 %v109
  %v383 = vunpack.c.l.b16 %v110
  %v384 = vunpack.c.h.b16 %v110
  %v385 = vunpack.c.l.b16 %v111
  %v386 = vunpack.c.h.b16 %v111
  %v387 = vunpack.c.l.b16 %v112
  %v388 = vunpack.c.h.b16 %v112
  %v389 = vunpack.c.l.b16 %v113
  %v390 = vunpack.c.h.b16 %v113
  %v391 = vunpack.c.l.b16 %v114
  %v392 = vunpack.c.h.b16 %v114
  %v393 = vunpack.c.l.b16 %v115
  %v394 = vunpack.c.h.b16 %v115
  %v395 = vunpack.c.l.b16 %v116
  %v396 = vunpack.c.h.b16 %v116
  %v397 = vunpack.c.l.b16 %v117
  %v398 = vunpack.c.h.b16 %v117
  %v399 = vunpack.c.l.b16 %v118
  %v400 = vunpack.c.h.b16 %v118
  %v401 = vunpack.c.l.b16 %v119
  %v402 = vunpack.c.h.b16 %v119
  %v403 = vunpack.c.l.b16 %v120
  %v404 = vunpack.c.h.b16 %v120
  %v405 = vunpack.c.l.b16 %v121
  %v406 = vunpack.c.h.b16 %v121
  %v407 = vunpack.c.l.b16 %v122
  %v408 = vunpack.c.h.b16 %v122
  %v409 = vunpack.c.l.b16 %v123
  %v410 = vunpack.c.h.b16 %v123
  %v411 = vunpack.c.l.b16 %v124
  %v412 = vunpack.c.h.b16 %v124
  %v413 = vpack.c.b16 %v269, %v261
  %v414 = vpack.c.b16 %v270, %v262
  %v415 = vpack.c.b16 %v271, %v263
  %v416 = vpack.c.b16 %v272, %v264
  %v417 = vpack.c.b16 %v273, %v265
  %v418 = vpack.c.b16 %v274, %v266
  %v419 = vpack.c.b16 %v275, %v267
  %v420 = vpack.c.b16 %v276, %v268
  %v421 = vpack.c.b16 %v285, %v277
  %v422 = vpack.c.b16 %v286, %v278
  %v423 = vpack.c.b16 %v287, %v279
  %v424 = vpack.c.b16 %v288, %v280
  %v425 = vpack.c.b16 %v289, %v281
  %v426 = vpack.c.b16 %v290, %v282
  %v427 = vpack.c.b16 %v291, %v283
  %v428 = vpack.c.b16 %v292, %v284
  %v429 = vpack.c.b16 %v301, %v293
  %v430 = vpack.c.b16 %v302, %v294
  %v431 = vpack.c.b16 %v303, %v295
  %v432 = vpack.c.b16 %v304, %v296
  %v433 = vpack.c.b16 %v305, %v297
  %v434 = vpack.c.b16 %v306, %v298
  %v435 = vpack.c.b16 %v307, %v299
  %v436 = vpack.c.b16 %v308, %v300
  %v437 = vpack.c.b16 %v317, %v309
  %v438 = vpack.c.b16 %v318, %v310
  %v439 = vpack.c.b16 %v319, %v311
  %v440 = vpack.c.b16 %v320, %v312
  %v441 = vpack.c.b16 %v321, %v313
  %v442 = vpack.c.b16 %v322, %v314
  %v443 = vpack.c.b16 %v323, %v315
  %v444 = vpack.c.b16 %v324, %v316
  %v445 = vpack.c.b16 %v333, %v325
  %v446 = vpack.c.b16 %v334, %v326
  %v447 = vpack.c.b16 %v335, %v327
  %v448 = vpack.c.b16 %v336, %v328
  %v449 = vpack.c.b16 %v337, %v329
  %v450 = vpack.c.b16 %v338, %v330
  %v451 = vpack.c.b16 %v339, %v331
  %v452 = vpack.c.b16 %v340, %v332
  %v453 = vpack.c.b16 %v349, %v341
  %v454 = vpack.c.b16 %v350, %v342
  %v455 = vpack.c.b16 %v351, %v343
  %v456 = vpack.c.b16 %v352, %v344
  %v457 = vpack.c.b16 %v353, %v345
  %v458 = vpack.c.b16 %v354, %v346
  %v459 = vpack.c.b16 %v355, %v347
  %v460 = vpack.c.b16 %v356, %v348
  %v461 = vpack.c.b16 %v365, %v357
  %v462 = vpack.c.b16 %v366, %v358
  %v463 = vpack.c.b16 %v367, %v359
  %v464 = vpack.c.b16 %v368, %v360
  %v465 = vpack.c.b16 %v369, %v361
  %v466 = vpack.c.b16 %v370, %v362
  %v467 = vpack.c.b16 %v371, %v363
  %v468 = vpack.c.b16 %v372, %v364
  %v469 = vpack.c.b16 %v381, %v373
  %v470 = vpack.c.b16 %v382, %v374
  %v471 = vpack.c.b16 %v383, %v375
  %v472 = vpack.c.b16 %v384, %v376
  %v473 = vpack.c.b16 %v385, %v377
  %v474 = vpack.c.b16 %v386, %v378
  %v475 = vpack.c.b16 %v387, %v379
  %v476 = vpack.c.b16 %v388, %v380
  %v477 = vpack.c.b16 %v397, %v389
  %v478 = vpack.c.b16 %v398, %v390
  %v479 = vpack.c.b16 %v399, %v391
  %v480 = vpack.c.b16 %v400, %v392
  %v481 = vpack.c.b16 %v401, %v393
  %v482 = vpack.c.b16 %v402, %v394
  %v483 = vpack.c.b16 %v403, %v395
  %v484 = vpack.c.b16 %v404, %v396
  %v485 = vpack.c.b16 %v405, %v405
  %v486 = vpack.c.b16 %v406, %v406
  %v487 = vpack.c.b16 %v407, %v407
  %v488 = vpack.c.b16 %v408, %v408
  %v489 = vpack.c.b16 %v409, %v409
  %v490 = vpack.c.b16 %v410, %v410
  %v491 = vpack.c.b16 %v411, %v411
  %v492 = vpack.c.b16 %v412, %v412
  %vm565 = vcmask 179200
  %v567 = vsel %vm565, %v165, 0
  %v570 = vsel %vm565, %v167, 0
  %v573 = vsel %vm565, %v169, 0
  %v576 = vsel %vm565, %v171, 0
  %v579 = vsel %vm565, %v173, 0
  %v582 = vsel %vm565, %v175, 0
  %v585 = vsel %vm565, %v177, 0
  %vm587 = vcmask 1042432
  %v589 = vsel %vm587, %v485, 0
  %v592 = vsel %vm587, %v486, 0
  %v595 = vsel %vm587, %v487, 0
  %v598 = vsel %vm587, %v488, 0
  %v601 = vsel %vm587, %v489, 0
  %v604 = vsel %vm587, %v490, 0
  %v607 = vsel %vm587, %v491, 0
  %v610 = vsel %vm587, %v492, 0
  %612 = vmatprep.subr.bf16.mxu0 %v414
  %613 = vmatpush1.bf16.msra.mxu0 %v413
  %614 = vmatprep.subr.bf16.mxu0 %v422
  %615 = vmatpush1.bf16.msra.mxu0 %v421
  %616 = vmatprep.subr.bf16.mxu0 %v430
  %617 = vmatpush1.bf16.msra.mxu0 %v429
  %618 = vmatprep.subr.bf16.mxu0 %v438
  %619 = vmatpush1.bf16.msra.mxu0 %v437
  %620 = vmatprep.subr.bf16.mxu0 %v446
  %621 = vmatpush1.bf16.msra.mxu0 %v445
  %622 = vmatprep.subr.bf16.mxu0 %v454
  %623 = vmatpush1.bf16.msra.mxu0 %v453
  %624 = vmatprep.subr.bf16.mxu0 %v462
  %625 = vmatpush1.bf16.msra.mxu0 %v461
  %626 = vmatprep.subr.bf16.mxu0 %v470
  %627 = vmatpush1.bf16.msra.mxu0 %v469
  %628 = vmatprep.subr.bf16.mxu0 %v478
  %629 = vmatpush1.bf16.msra.mxu0 %v477
  %630 = vmatprep.subr.bf16.mxu0 %v592
  %631 = vmatpush1.bf16.msra.mxu0 %v589
  %632 = vmatprep.subr.bf16.mxu0 0
  %633 = vmatpush1.bf16.msra.mxu0 0
  %634 = vmatprep.subr.bf16.mxu0 0
  %635 = vmatpush1.bf16.msra.mxu0 0
  %636 = vmatprep.subr.bf16.mxu0 0
  %637 = vmatpush1.bf16.msra.mxu0 0
  %638 = vmatprep.subr.bf16.mxu0 0
  %639 = vmatpush1.bf16.msra.mxu0 0
  %640 = vmatprep.subr.bf16.mxu0 0
  %641 = vmatpush1.bf16.msra.mxu0 0
  %642 = vmatprep.subr.bf16.mxu0 0
  %643 = vmatpush1.bf16.msra.mxu0 0
  %644 = vmatprep.mubr.bf16.mxu0 %v567
  %645 = vmatmul.mubr.bf16.gmra.mrb[0].mxu0 %v164
  %v646 = vpop.f32.mrb[0].mxu0
  %v647 = vadd.f32 0.0, %v646
  %v648 = vpop.f32.mrb[0].mxu0
  %v649 = vadd.f32 0.0, %v648
  %v650 = vpop.f32.mrb[0].mxu0
  %v651 = vadd.f32 0.0, %v650
  %v652 = vpop.f32.mrb[0].mxu0
  %v653 = vadd.f32 0.0, %v652
  %654 = vmatprep.mubr.bf16.mxu0 %v570
  %655 = vmatmul.mubr.bf16.gmra.mrb[0].mxu0 %v166
  %v656 = vpop.f32.mrb[0].mxu0
  %v657 = vadd.f32 0.0, %v656
  %v658 = vpop.f32.mrb[0].mxu0
  %v659 = vadd.f32 0.0, %v658
  %v660 = vpop.f32.mrb[0].mxu0
  %v661 = vadd.f32 0.0, %v660
  %v662 = vpop.f32.mrb[0].mxu0
  %v663 = vadd.f32 0.0, %v662
  %664 = vmatprep.mubr.bf16.mxu0 %v573
  %665 = vmatmul.mubr.bf16.gmra.mrb[0].mxu0 %v168
  %v666 = vpop.f32.mrb[0].mxu0
  %v667 = vadd.f32 0.0, %v666
  %v668 = vpop.f32.mrb[0].mxu0
  %v669 = vadd.f32 0.0, %v668
  %v670 = vpop.f32.mrb[0].mxu0
  %v671 = vadd.f32 0.0, %v670
  %v672 = vpop.f32.mrb[0].mxu0
  %v673 = vadd.f32 0.0, %v672
  %674 = vmatprep.mubr.bf16.mxu0 %v576
  %675 = vmatmul.mubr.bf16.gmra.mrb[0].mxu0 %v170
  %v676 = vpop.f32.mrb[0].mxu0
  %v677 = vadd.f32 0.0, %v676
  %v678 = vpop.f32.mrb[0].mxu0
  %v679 = vadd.f32 0.0, %v678
  %v680 = vpop.f32.mrb[0].mxu0
  %v681 = vadd.f32 0.0, %v680
  %v682 = vpop.f32.mrb[0].mxu0
  %v683 = vadd.f32 0.0, %v682
  %684 = vmatprep.mubr.bf16.mxu0 %v579
  %685 = vmatmul.mubr.bf16.gmra.mrb[0].mxu0 %v172
  %v686 = vpop.f32.mrb[0].mxu0
  %v687 = vadd.f32 0.0, %v686
  %v688 = vpop.f32.mrb[0].mxu0
  %v689 = vadd.f32 0.0, %v688
  %v690 = vpop.f32.mrb[0].mxu0
  %v691 = vadd.f32 0.0, %v690
  %v692 = vpop.f32.mrb[0].mxu0
  %v693 = vadd.f32 0.0, %v692
  %694 = vmatprep.mubr.bf16.mxu0 %v582
  %695 = vmatmul.mubr.bf16.gmra.mrb[0].mxu0 %v174
  %v696 = vpop.f32.mrb[0].mxu0
  %v697 = vadd.f32 0.0, %v696
  %v698 = vpop.f32.mrb[0].mxu0
  %v699 = vadd.f32 0.0, %v698
  %v700 = vpop.f32.mrb[0].mxu0
  %v701 = vadd.f32 0.0, %v700
  %v702 = vpop.f32.mrb[0].mxu0
  %v703 = vadd.f32 0.0, %v702
  %704 = vmatprep.mubr.bf16.mxu0 %v585
  %705 = vmatmul.mubr.bf16.gmra.mrb[0].mxu0 %v176
  %v706 = vpop.f32.mrb[0].mxu0
  %v707 = vadd.f32 0.0, %v706
  %v708 = vpop.f32.mrb[0].mxu0
  %v709 = vadd.f32 0.0, %v708
  %v710 = vpop.f32.mrb[0].mxu0
  %v711 = vpop.f32.mrb[0].mxu0
  %712 = vdwg.mxu0
  %713 = vmatprep.subr.bf16.mxu0 %v416
  %714 = vmatpush1.bf16.msra.mxu0 %v415
  %715 = vmatprep.subr.bf16.mxu0 %v424
  %716 = vmatpush1.bf16.msra.mxu0 %v423
  %717 = vmatprep.subr.bf16.mxu0 %v432
  %718 = vmatpush1.bf16.msra.mxu0 %v431
  %719 = vmatprep.subr.bf16.mxu0 %v440
  %720 = vmatpush1.bf16.msra.mxu0 %v439
  %721 = vmatprep.subr.bf16.mxu0 %v448
  %722 = vmatpush1.bf16.msra.mxu0 %v447
  %723 = vmatprep.subr.bf16.mxu0 %v456
  %724 = vmatpush1.bf16.msra.mxu0 %v455
  %725 = vmatprep.subr.bf16.mxu0 %v464
  %726 = vmatpush1.bf16.msra.mxu0 %v463
  %727 = vmatprep.subr.bf16.mxu0 %v472
  %728 = vmatpush1.bf16.msra.mxu0 %v471
  %729 = vmatprep.subr.bf16.mxu0 %v480
  %730 = vmatpush1.bf16.msra.mxu0 %v479
  %731 = vmatprep.subr.bf16.mxu0 %v598
  %732 = vmatpush1.bf16.msra.mxu0 %v595
  %733 = vmatprep.subr.bf16.mxu0 0
  %734 = vmatpush1.bf16.msra.mxu0 0
  %735 = vmatprep.subr.bf16.mxu0 0
  %736 = vmatpush1.bf16.msra.mxu0 0
  %737 = vmatprep.subr.bf16.mxu0 0
  %738 = vmatpush1.bf16.msra.mxu0 0
  %739 = vmatprep.subr.bf16.mxu0 0
  %740 = vmatpush1.bf16.msra.mxu0 0
  %741 = vmatprep.subr.bf16.mxu0 0
  %742 = vmatpush1.bf16.msra.mxu0 0
  %743 = vmatprep.subr.bf16.mxu0 0
  %744 = vmatpush1.bf16.msra.mxu0 0
  %745 = vmatprep.mubr.bf16.mxu0 %v567
  %746 = vmatmul.mubr.bf16.gmra.mrb[0].mxu0 %v164
  %v747 = vpop.f32.mrb[0].mxu0
  %v748 = vadd.f32 0.0, %v747
  %v749 = vpop.f32.mrb[0].mxu0
  %v750 = vadd.f32 0.0, %v749
  %v751 = vpop.f32.mrb[0].mxu0
  %v752 = vadd.f32 0.0, %v751
  %v753 = vpop.f32.mrb[0].mxu0
  %v754 = vadd.f32 0.0, %v753
  %755 = vmatprep.mubr.bf16.mxu0 %v570
  %756 = vmatmul.mubr.bf16.gmra.mrb[0].mxu0 %v166
  %v757 = vpop.f32.mrb[0].mxu0
  %v758 = vadd.f32 0.0, %v757
  %v759 = vpop.f32.mrb[0].mxu0
  %v760 = vadd.f32 0.0, %v759
  %v761 = vpop.f32.mrb[0].mxu0
  %v762 = vadd.f32 0.0, %v761
  %v763 = vpop.f32.mrb[0].mxu0
  %v764 = vadd.f32 0.0, %v763
  %765 = vmatprep.mubr.bf16.mxu0 %v573
  %766 = vmatmul.mubr.bf16.gmra.mrb[0].mxu0 %v168
  %v767 = vpop.f32.mrb[0].mxu0
  %v768 = vadd.f32 0.0, %v767
  %v769 = vpop.f32.mrb[0].mxu0
  %v770 = vadd.f32 0.0, %v769
  %v771 = vpop.f32.mrb[0].mxu0
  %v772 = vadd.f32 0.0, %v771
  %v773 = vpop.f32.mrb[0].mxu0
  %v774 = vadd.f32 0.0, %v773
  %775 = vmatprep.mubr.bf16.mxu0 %v576
  %776 = vmatmul.mubr.bf16.gmra.mrb[0].mxu0 %v170
  %v777 = vpop.f32.mrb[0].mxu0
  %v778 = vadd.f32 0.0, %v777
  %v779 = vpop.f32.mrb[0].mxu0
  %v780 = vadd.f32 0.0, %v779
  %v781 = vpop.f32.mrb[0].mxu0
  %v782 = vadd.f32 0.0, %v781
  %v783 = vpop.f32.mrb[0].mxu0
  %v784 = vadd.f32 0.0, %v783
  %785 = vmatprep.mubr.bf16.mxu0 %v579
  %786 = vmatmul.mubr.bf16.gmra.mrb[0].mxu0 %v172
  %v787 = vpop.f32.mrb[0].mxu0
  %v788 = vadd.f32 0.0, %v787
  %v789 = vpop.f32.mrb[0].mxu0
  %v790 = vadd.f32 0.0, %v789
  %v791 = vpop.f32.mrb[0].mxu0
  %v792 = vadd.f32 0.0, %v791
  %v793 = vpop.f32.mrb[0].mxu0
  %v794 = vadd.f32 0.0, %v793
  %795 = vmatprep.mubr.bf16.mxu0 %v582
  %796 = vmatmul.mubr.bf16.gmra.mrb[0].mxu0 %v174
  %v797 = vpop.f32.mrb[0].mxu0
  %v798 = vadd.f32 0.0, %v797
  %v799 = vpop.f32.mrb[0].mxu0
  %v800 = vadd.f32 0.0, %v799
  %v801 = vpop.f32.mrb[0].mxu0
  %v802 = vadd.f32 0.0, %v801
  %v803 = vpop.f32.mrb[0].mxu0
  %v804 = vadd.f32 0.0, %v803
  %805 = vmatprep.mubr.bf16.mxu0 %v585
  %806 = vmatmul.mubr.bf16.gmra.mrb[0].mxu0 %v176
  %v807 = vpop.f32.mrb[0].mxu0
  %v808 = vadd.f32 0.0, %v807
  %v809 = vpop.f32.mrb[0].mxu0
  %v810 = vadd.f32 0.0, %v809
  %v811 = vpop.f32.mrb[0].mxu0
  %v812 = vpop.f32.mrb[0].mxu0
  %813 = vdwg.mxu0
  %814 = vmatprep.subr.bf16.mxu0 %v418
  %815 = vmatpush1.bf16.msra.mxu0 %v417
  %816 = vmatprep.subr.bf16.mxu0 %v426
  %817 = vmatpush1.bf16.msra.mxu0 %v425
  %818 = vmatprep.subr.bf16.mxu0 %v434
  %819 = vmatpush1.bf16.msra.mxu0 %v433
  %820 = vmatprep.subr.bf16.mxu0 %v442
  %821 = vmatpush1.bf16.msra.mxu0 %v441
  %822 = vmatprep.subr.bf16.mxu0 %v450
  %823 = vmatpush1.bf16.msra.mxu0 %v449
  %824 = vmatprep.subr.bf16.mxu0 %v458
  %825 = vmatpush1.bf16.msra.mxu0 %v457
  %826 = vmatprep.subr.bf16.mxu0 %v466
  %827 = vmatpush1.bf16.msra.mxu0 %v465
  %828 = vmatprep.subr.bf16.mxu0 %v474
  %829 = vmatpush1.bf16.msra.mxu0 %v473
  %830 = vmatprep.subr.bf16.mxu0 %v482
  %831 = vmatpush1.bf16.msra.mxu0 %v481
  %832 = vmatprep.subr.bf16.mxu0 %v604
  %833 = vmatpush1.bf16.msra.mxu0 %v601
  %834 = vmatprep.subr.bf16.mxu0 0
  %835 = vmatpush1.bf16.msra.mxu0 0
  %836 = vmatprep.subr.bf16.mxu0 0
  %837 = vmatpush1.bf16.msra.mxu0 0
  %838 = vmatprep.subr.bf16.mxu0 0
  %839 = vmatpush1.bf16.msra.mxu0 0
  %840 = vmatprep.subr.bf16.mxu0 0
  %841 = vmatpush1.bf16.msra.mxu0 0
  %842 = vmatprep.subr.bf16.mxu0 0
  %843 = vmatpush1.bf16.msra.mxu0 0
  %844 = vmatprep.subr.bf16.mxu0 0
  %845 = vmatpush1.bf16.msra.mxu0 0
  %846 = vmatprep.mubr.bf16.mxu0 %v567
  %847 = vmatmul.mubr.bf16.gmra.mrb[0].mxu0 %v164
  %v848 = vpop.f32.mrb[0].mxu0
  %v849 = vadd.f32 0.0, %v848
  %v850 = vpop.f32.mrb[0].mxu0
  %v851 = vadd.f32 0.0, %v850
  %v852 = vpop.f32.mrb[0].mxu0
  %v853 = vadd.f32 0.0, %v852
  %v854 = vpop.f32.mrb[0].mxu0
  %v855 = vadd.f32 0.0, %v854
  %856 = vmatprep.mubr.bf16.mxu0 %v570
  %857 = vmatmul.mubr.bf16.gmra.mrb[0].mxu0 %v166
  %v858 = vpop.f32.mrb[0].mxu0
  %v859 = vadd.f32 0.0, %v858
  %v860 = vpop.f32.mrb[0].mxu0
  %v861 = vadd.f32 0.0, %v860
  %v862 = vpop.f32.mrb[0].mxu0
  %v863 = vadd.f32 0.0, %v862
  %v864 = vpop.f32.mrb[0].mxu0
  %v865 = vadd.f32 0.0, %v864
  %866 = vmatprep.mubr.bf16.mxu0 %v573
  %867 = vmatmul.mubr.bf16.gmra.mrb[0].mxu0 %v168
  %v868 = vpop.f32.mrb[0].mxu0
  %v869 = vadd.f32 0.0, %v868
  %v870 = vpop.f32.mrb[0].mxu0
  %v871 = vadd.f32 0.0, %v870
  %v872 = vpop.f32.mrb[0].mxu0
  %v873 = vadd.f32 0.0, %v872
  %v874 = vpop.f32.mrb[0].mxu0
  %v875 = vadd.f32 0.0, %v874
  %876 = vmatprep.mubr.bf16.mxu0 %v576
  %877 = vmatmul.mubr.bf16.gmra.mrb[0].mxu0 %v170
  %v878 = vpop.f32.mrb[0].mxu0
  %v879 = vadd.f32 0.0, %v878
  %v880 = vpop.f32.mrb[0].mxu0
  %v881 = vadd.f32 0.0, %v880
  %v882 = vpop.f32.mrb[0].mxu0
  %v883 = vadd.f32 0.0, %v882
  %v884 = vpop.f32.mrb[0].mxu0
  %v885 = vadd.f32 0.0, %v884
  %886 = vmatprep.mubr.bf16.mxu0 %v579
  %887 = vmatmul.mubr.bf16.gmra.mrb[0].mxu0 %v172
  %v888 = vpop.f32.mrb[0].mxu0
  %v889 = vadd.f32 0.0, %v888
  %v890 = vpop.f32.mrb[0].mxu0
  %v891 = vadd.f32 0.0, %v890
  %v892 = vpop.f32.mrb[0].mxu0
  %v893 = vadd.f32 0.0, %v892
  %v894 = vpop.f32.mrb[0].mxu0
  %v895 = vadd.f32 0.0, %v894
  %896 = vmatprep.mubr.bf16.mxu0 %v582
  %897 = vmatmul.mubr.bf16.gmra.mrb[0].mxu0 %v174
  %v898 = vpop.f32.mrb[0].mxu0
  %v899 = vadd.f32 0.0, %v898
  %v900 = vpop.f32.mrb[0].mxu0
  %v901 = vadd.f32 0.0, %v900
  %v902 = vpop.f32.mrb[0].mxu0
  %v903 = vadd.f32 0.0, %v902
  %v904 = vpop.f32.mrb[0].mxu0
  %v905 = vadd.f32 0.0, %v904
  %906 = vmatprep.mubr.bf16.mxu0 %v585
  %907 = vmatmul.mubr.bf16.gmra.mrb[0].mxu0 %v176
  %v908 = vpop.f32.mrb[0].mxu0
  %v909 = vadd.f32 0.0, %v908
  %v910 = vpop.f32.mrb[0].mxu0
  %v911 = vadd.f32 0.0, %v910
  %v912 = vpop.f32.mrb[0].mxu0
  %v913 = vpop.f32.mrb[0].mxu0
  %914 = vdwg.mxu0
  %915 = vmatprep.subr.bf16.mxu0 %v420
  %916 = vmatpush1.bf16.msra.mxu0 %v419
  %917 = vmatprep.subr.bf16.mxu0 %v428
  %918 = vmatpush1.bf16.msra.mxu0 %v427
  %919 = vmatprep.subr.bf16.mxu0 %v436
  %920 = vmatpush1.bf16.msra.mxu0 %v435
  %921 = vmatprep.subr.bf16.mxu0 %v444
  %922 = vmatpush1.bf16.msra.mxu0 %v443
  %923 = vmatprep.subr.bf16.mxu0 %v452
  %924 = vmatpush1.bf16.msra.mxu0 %v451
  %925 = vmatprep.subr.bf16.mxu0 %v460
  %926 = vmatpush1.bf16.msra.mxu0 %v459
  %927 = vmatprep.subr.bf16.mxu0 %v468
  %928 = vmatpush1.bf16.msra.mxu0 %v467
  %929 = vmatprep.subr.bf16.mxu0 %v476
  %930 = vmatpush1.bf16.msra.mxu0 %v475
  %931 = vmatprep.subr.bf16.mxu0 %v484
  %932 = vmatpush1.bf16.msra.mxu0 %v483
  %933 = vmatprep.subr.bf16.mxu0 %v610
  %934 = vmatpush1.bf16.msra.mxu0 %v607
  %935 = vmatprep.subr.bf16.mxu0 0
  %936 = vmatpush1.bf16.msra.mxu0 0
  %937 = vmatprep.subr.bf16.mxu0 0
  %938 = vmatpush1.bf16.msra.mxu0 0
  %939 = vmatprep.subr.bf16.mxu0 0
  %940 = vmatpush1.bf16.msra.mxu0 0
  %941 = vmatprep.subr.bf16.mxu0 0
  %942 = vmatpush1.bf16.msra.mxu0 0
  %943 = vmatprep.subr.bf16.mxu0 0
  %944 = vmatpush1.bf16.msra.mxu0 0
  %945 = vmatprep.subr.bf16.mxu0 0
  %946 = vmatpush1.bf16.msra.mxu0 0
  %947 = vmatprep.mubr.bf16.mxu0 %v567
  %948 = vmatmul.mubr.bf16.gmra.mrb[0].mxu0 %v164
  %v949 = vpop.f32.mrb[0].mxu0
  %v950 = vadd.f32 0.0, %v949
  %v951 = vpop.f32.mrb[0].mxu0
  %v952 = vadd.f32 0.0, %v951
  %v953 = vpop.f32.mrb[0].mxu0
  %v954 = vadd.f32 0.0, %v953
  %v955 = vpop.f32.mrb[0].mxu0
  %v956 = vadd.f32 0.0, %v955
  %957 = vmatprep.mubr.bf16.mxu0 %v570
  %958 = vmatmul.mubr.bf16.gmra.mrb[0].mxu0 %v166
  %v959 = vpop.f32.mrb[0].mxu0
  %v960 = vadd.f32 0.0, %v959
  %v961 = vpop.f32.mrb[0].mxu0
  %v962 = vadd.f32 0.0, %v961
  %v963 = vpop.f32.mrb[0].mxu0
  %v964 = vadd.f32 0.0, %v963
  %v965 = vpop.f32.mrb[0].mxu0
  %v966 = vadd.f32 0.0, %v965
  %967 = vmatprep.mubr.bf16.mxu0 %v573
  %968 = vmatmul.mubr.bf16.gmra.mrb[0].mxu0 %v168
  %v969 = vpop.f32.mrb[0].mxu0
  %v970 = vadd.f32 0.0, %v969
  %v971 = vpop.f32.mrb[0].mxu0
  %v972 = vadd.f32 0.0, %v971
  %v973 = vpop.f32.mrb[0].mxu0
  %v974 = vadd.f32 0.0, %v973
  %v975 = vpop.f32.mrb[0].mxu0
  %v976 = vadd.f32 0.0, %v975
  %977 = vmatprep.mubr.bf16.mxu0 %v576
  %978 = vmatmul.mubr.bf16.gmra.mrb[0].mxu0 %v170
  %v979 = vpop.f32.mrb[0].mxu0
  %v980 = vadd.f32 0.0, %v979
  %v981 = vpop.f32.mrb[0].mxu0
  %v982 = vadd.f32 0.0, %v981
  %v983 = vpop.f32.mrb[0].mxu0
  %v984 = vadd.f32 0.0, %v983
  %v985 = vpop.f32.mrb[0].mxu0
  %v986 = vadd.f32 0.0, %v985
  %987 = vmatprep.mubr.bf16.mxu0 %v579
  %988 = vmatmul.mubr.bf16.gmra.mrb[0].mxu0 %v172
  %v989 = vpop.f32.mrb[0].mxu0
  %v990 = vadd.f32 0.0, %v989
  %v991 = vpop.f32.mrb[0].mxu0
  %v992 = vadd.f32 0.0, %v991
  %v993 = vpop.f32.mrb[0].mxu0
  %v994 = vadd.f32 0.0, %v993
  %v995 = vpop.f32.mrb[0].mxu0
  %v996 = vadd.f32 0.0, %v995
  %997 = vmatprep.mubr.bf16.mxu0 %v582
  %998 = vmatmul.mubr.bf16.gmra.mrb[0].mxu0 %v174
  %v999 = vpop.f32.mrb[0].mxu0
  %v1000 = vadd.f32 0.0, %v999
  %v1001 = vpop.f32.mrb[0].mxu0
  %v1002 = vadd.f32 0.0, %v1001
  %v1003 = vpop.f32.mrb[0].mxu0
  %v1004 = vadd.f32 0.0, %v1003
  %v1005 = vpop.f32.mrb[0].mxu0
  %v1006 = vadd.f32 0.0, %v1005
  %1007 = vmatprep.mubr.bf16.mxu0 %v585
  %1008 = vmatmul.mubr.bf16.gmra.mrb[0].mxu0 %v176
  %v1009 = vpop.f32.mrb[0].mxu0
  %v1010 = vadd.f32 0.0, %v1009
  %v1011 = vpop.f32.mrb[0].mxu0
  %v1012 = vadd.f32 0.0, %v1011
  %v1013 = vpop.f32.mrb[0].mxu0
  %v1014 = vpop.f32.mrb[0].mxu0
  %1015 = vdwg.mxu0
  %v1016 = vmax.f32 %v647, %v849
  %v1017 = vmax.f32 %v649, %v851
  %v1018 = vmax.f32 %v748, %v950
  %v1019 = vmax.f32 %v750, %v952
  %v1020 = vmax.f32 %v651, %v853
  %v1021 = vmax.f32 %v653, %v855
  %v1022 = vmax.f32 %v752, %v954
  %v1023 = vmax.f32 %v754, %v956
  %v1024 = vmax.f32 %v657, %v859
  %v1025 = vmax.f32 %v659, %v861
  %v1026 = vmax.f32 %v758, %v960
  %v1027 = vmax.f32 %v760, %v962
  %v1028 = vmax.f32 %v661, %v863
  %v1029 = vmax.f32 %v663, %v865
  %v1030 = vmax.f32 %v762, %v964
  %v1031 = vmax.f32 %v764, %v966
  %v1032 = vmax.f32 %v667, %v869
  %v1033 = vmax.f32 %v669, %v871
  %v1034 = vmax.f32 %v768, %v970
  %v1035 = vmax.f32 %v770, %v972
  %v1036 = vmax.f32 %v671, %v873
  %v1037 = vmax.f32 %v673, %v875
  %v1038 = vmax.f32 %v772, %v974
  %v1039 = vmax.f32 %v774, %v976
  %v1040 = vmax.f32 %v677, %v879
  %v1041 = vmax.f32 %v679, %v881
  %v1042 = vmax.f32 %v778, %v980
  %v1043 = vmax.f32 %v780, %v982
  %v1044 = vmax.f32 %v681, %v883
  %v1045 = vmax.f32 %v683, %v885
  %v1046 = vmax.f32 %v782, %v984
  %v1047 = vmax.f32 %v784, %v986
  %v1048 = vmax.f32 %v687, %v889
  %v1049 = vmax.f32 %v689, %v891
  %v1050 = vmax.f32 %v788, %v990
  %v1051 = vmax.f32 %v790, %v992
  %v1052 = vmax.f32 %v691, %v893
  %v1053 = vmax.f32 %v693, %v895
  %v1054 = vmax.f32 %v792, %v994
  %v1055 = vmax.f32 %v794, %v996
  %v1056 = vmax.f32 %v697, %v899
  %v1057 = vmax.f32 %v699, %v901
  %v1058 = vmax.f32 %v798, %v1000
  %v1059 = vmax.f32 %v800, %v1002
  %v1060 = vmax.f32 %v701, %v903
  %v1061 = vmax.f32 %v703, %v905
  %v1062 = vmax.f32 %v802, %v1004
  %v1063 = vmax.f32 %v804, %v1006
  %v1064 = vmax.f32 %v707, %v909
  %v1065 = vmax.f32 %v709, %v911
  %v1066 = vmax.f32 %v808, %v1010
  %v1067 = vmax.f32 %v810, %v1012
  %v1068 = vld [vmem:[%s2] sm:$0xff]
  %v1069 = vld [vmem:[%s2 + $0x8] sm:$0xff]
  %v1070 = vld [vmem:[%s2 + $0x10] sm:$0xff]
  %v1071 = vld [vmem:[%s2 + $0x18] sm:$0xff]
  %v1072 = vld [vmem:[%s2 + $0x20] sm:$0xff]
  %v1073 = vld [vmem:[%s2 + $0x28] sm:$0xff]
  %v1074 = vld [vmem:[%s2 + $0x30] sm:$0xff]
  %v1075 = vld [vmem:[%s2 + $0x38] sm:$0xff]
  %v1076 = vld [vmem:[%s2 + $0x40] sm:$0xff]
  %v1077 = vld [vmem:[%s2 + $0x48] sm:$0xff]
  %v1078 = vld [vmem:[%s2 + $0x50] sm:$0xff]
  %v1079 = vld [vmem:[%s2 + $0x58] sm:$0xff]
  %v1080 = vld [vmem:[%s2 + $0x60] sm:$0xff]
  %v1081 = vld [vmem:[%s2 + $0x68] sm:$0xff]
  %v1082 = vld [vmem:[%s2 + $0x70] sm:$0xff]
  %v1083 = vld [vmem:[%s2 + $0x78] sm:$0xff]
  %v1084 = vld [vmem:[%s2 + $0x80] sm:$0xff]
  %v1085 = vld [vmem:[%s2 + $0x88] sm:$0xff]
  %v1086 = vld [vmem:[%s2 + $0x90] sm:$0xff]
  %v1087 = vld [vmem:[%s2 + $0x98] sm:$0xff]
  %v1088 = vld [vmem:[%s2 + $0xa0] sm:$0xff]
  %v1089 = vld [vmem:[%s2 + $0xa8] sm:$0xff]
  %v1090 = vld [vmem:[%s2 + $0xb0] sm:$0xff]
  %v1091 = vld [vmem:[%s2 + $0xb8] sm:$0xff]
  %v1092 = vld [vmem:[%s2 + $0xc0] sm:$0xff]
  %v1093 = vld [vmem:[%s2 + $0xc8] sm:$0xff]
  %v1094 = vld [vmem:[%s2 + $0xd0] sm:$0xff]
  %v1095 = vld [vmem:[%s2 + $0xd8] sm:$0xff]
  %v1096 = vld [vmem:[%s2 + $0xe0] sm:$0xff]
  %v1097 = vld [vmem:[%s2 + $0xe8] sm:$0xff]
  %v1098 = vld [vmem:[%s2 + $0xf0] sm:$0xff]
  %v1099 = vld [vmem:[%s2 + $0xf8] sm:$0xff]
  %v1100 = vld [vmem:[%s2 + $0x100] sm:$0xff]
  %v1101 = vld [vmem:[%s2 + $0x108] sm:$0xff]
  %v1102 = vld [vmem:[%s2 + $0x110] sm:$0xff]
  %v1103 = vld [vmem:[%s2 + $0x118] sm:$0xff]
  %v1104 = vld [vmem:[%s2 + $0x120] sm:$0xff]
  %v1105 = vld [vmem:[%s2 + $0x128] sm:$0xff]
  %v1106 = vld [vmem:[%s2 + $0x130] sm:$0xff]
  %v1107 = vld [vmem:[%s2 + $0x138] sm:$0xff]
  %v1108 = vld [vmem:[%s2 + $0x140] sm:$0xff]
  %v1109 = vld [vmem:[%s2 + $0x148] sm:$0xff]
  %v1110 = vld [vmem:[%s2 + $0x150] sm:$0xff]
  %v1111 = vld [vmem:[%s2 + $0x158] sm:$0xff]
  %v1112 = vld [vmem:[%s2 + $0x160] sm:$0xff]
  %v1113 = vld [vmem:[%s2 + $0x168] sm:$0xff]
  %v1114 = vld [vmem:[%s2 + $0x170] sm:$0xff]
  %v1115 = vld [vmem:[%s2 + $0x178] sm:$0xff]
  %v1116 = vld [vmem:[%s2 + $0x180] sm:$0xff]
  %v1117 = vld [vmem:[%s2 + $0x188] sm:$0xff]
  %v1118 = vld [vmem:[%s2 + $0x190] sm:$0xff]
  %v1119 = vld [vmem:[%s2 + $0x198] sm:$0xff]
  %v1120 = vld [vmem:[%s2 + $0x1a0] sm:$0xff]
  %v1121 = vld [vmem:[%s2 + $0x1a8] sm:$0xff]
  %v1122 = vld [vmem:[%s2 + $0x1b0] sm:$0xff]
  %v1123 = vld [vmem:[%s2 + $0x1b8] sm:$0xff]
  %v1124 = vld [vmem:[%s2 + $0x1c0] sm:$0xff]
  %v1125 = vld [vmem:[%s2 + $0x1c8] sm:$0xff]
  %v1126 = vld [vmem:[%s2 + $0x1d0] sm:$0xff]
  %v1127 = vld [vmem:[%s2 + $0x1d8] sm:$0xff]
  %v1128 = vld [vmem:[%s2 + $0x1e0] sm:$0xff]
  %v1129 = vld [vmem:[%s2 + $0x1e8] sm:$0xff]
  %v1130 = vld [vmem:[%s2 + $0x1f0] sm:$0xff]
  %v1131 = vld [vmem:[%s2 + $0x1f8] sm:$0xff]
  %v1132 = vld [vmem:[%s2 + $0x200] sm:$0xff]
  %v1133 = vld [vmem:[%s2 + $0x208] sm:$0xff]
  %v1134 = vld [vmem:[%s2 + $0x210] sm:$0xff]
  %v1135 = vld [vmem:[%s2 + $0x218] sm:$0xff]
  %v1136 = vld [vmem:[%s2 + $0x220] sm:$0xff]
  %v1137 = vld [vmem:[%s2 + $0x228] sm:$0xff]
  %v1138 = vld [vmem:[%s2 + $0x230] sm:$0xff]
  %v1139 = vld [vmem:[%s2 + $0x238] sm:$0xff]
  %v1140 = vld [vmem:[%s2 + $0x240] sm:$0x77]
  %v1141 = vld [vmem:[%s2 + $0x248] sm:$0x77]
  %v1142 = vld [vmem:[%s2 + $0x250] sm:$0x77]
  %v1143 = vld [vmem:[%s2 + $0x258] sm:$0x77]
  %v1220 = vunpack.c.l.b16 %v1068
  %v1221 = vunpack.c.h.b16 %v1068
  %v1222 = vunpack.c.l.b16 %v1069
  %v1223 = vunpack.c.h.b16 %v1069
  %v1224 = vunpack.c.l.b16 %v1070
  %v1225 = vunpack.c.h.b16 %v1070
  %v1226 = vunpack.c.l.b16 %v1071
  %v1227 = vunpack.c.h.b16 %v1071
  %v1228 = vunpack.c.l.b16 %v1072
  %v1229 = vunpack.c.h.b16 %v1072
  %v1230 = vunpack.c.l.b16 %v1073
  %v1231 = vunpack.c.h.b16 %v1073
  %v1232 = vunpack.c.l.b16 %v1074
  %v1233 = vunpack.c.h.b16 %v1074
  %v1234 = vunpack.c.l.b16 %v1075
  %v1235 = vunpack.c.h.b16 %v1075
  %v1236 = vunpack.c.l.b16 %v1076
  %v1237 = vunpack.c.h.b16 %v1076
  %v1238 = vunpack.c.l.b16 %v1077
  %v1239 = vunpack.c.h.b16 %v1077
  %v1240 = vunpack.c.l.b16 %v1078
  %v1241 = vunpack.c.h.b16 %v1078
  %v1242 = vunpack.c.l.b16 %v1079
  %v1243 = vunpack.c.h.b16 %v1079
  %v1244 = vunpack.c.l.b16 %v1080
  %v1245 = vunpack.c.h.b16 %v1080
  %v1246 = vunpack.c.l.b16 %v1081
  %v1247 = vunpack.c.h.b16 %v1081
  %v1248 = vunpack.c.l.b16 %v1082
  %v1249 = vunpack.c.h.b16 %v1082
  %v1250 = vunpack.c.l.b16 %v1083
  %v1251 = vunpack.c.h.b16 %v1083
  %v1252 = vunpack.c.l.b16 %v1084
  %v1253 = vunpack.c.h.b16 %v1084
  %v1254 = vunpack.c.l.b16 %v1085
  %v1255 = vunpack.c.h.b16 %v1085
  %v1256 = vunpack.c.l.b16 %v1086
  %v1257 = vunpack.c.h.b16 %v1086
  %v1258 = vunpack.c.l.b16 %v1087
  %v1259 = vunpack.c.h.b16 %v1087
  %v1260 = vunpack.c.l.b16 %v1088
  %v1261 = vunpack.c.h.b16 %v1088
  %v1262 = vunpack.c.l.b16 %v1089
  %v1263 = vunpack.c.h.b16 %v1089
  %v1264 = vunpack.c.l.b16 %v1090
  %v1265 = vunpack.c.h.b16 %v1090
  %v1266 = vunpack.c.l.b16 %v1091
  %v1267 = vunpack.c.h.b16 %v1091
  %v1268 = vunpack.c.l.b16 %v1092
  %v1269 = vunpack.c.h.b16 %v1092
  %v1270 = vunpack.c.l.b16 %v1093
  %v1271 = vunpack.c.h.b16 %v1093
  %v1272 = vunpack.c.l.b16 %v1094
  %v1273 = vunpack.c.h.b16 %v1094
  %v1274 = vunpack.c.l.b16 %v1095
  %v1275 = vunpack.c.h.b16 %v1095
  %v1276 = vunpack.c.l.b16 %v1096
  %v1277 = vunpack.c.h.b16 %v1096
  %v1278 = vunpack.c.l.b16 %v1097
  %v1279 = vunpack.c.h.b16 %v1097
  %v1280 = vunpack.c.l.b16 %v1098
  %v1281 = vunpack.c.h.b16 %v1098
  %v1282 = vunpack.c.l.b16 %v1099
  %v1283 = vunpack.c.h.b16 %v1099
  %v1284 = vunpack.c.l.b16 %v1100
  %v1285 = vunpack.c.h.b16 %v1100
  %v1286 = vunpack.c.l.b16 %v1101
  %v1287 = vunpack.c.h.b16 %v1101
  %v1288 = vunpack.c.l.b16 %v1102
  %v1289 = vunpack.c.h.b16 %v1102
  %v1290 = vunpack.c.l.b16 %v1103
  %v1291 = vunpack.c.h.b16 %v1103
  %v1292 = vunpack.c.l.b16 %v1104
  %v1293 = vunpack.c.h.b16 %v1104
  %v1294 = vunpack.c.l.b16 %v1105
  %v1295 = vunpack.c.h.b16 %v1105
  %v1296 = vunpack.c.l.b16 %v1106
  %v1297 = vunpack.c.h.b16 %v1106
  %v1298 = vunpack.c.l.b16 %v1107
  %v1299 = vunpack.c.h.b16 %v1107
  %v1300 = vunpack.c.l.b16 %v1108
  %v1301 = vunpack.c.h.b16 %v1108
  %v1302 = vunpack.c.l.b16 %v1109
  %v1303 = vunpack.c.h.b16 %v1109
  %v1304 = vunpack.c.l.b16 %v1110
  %v1305 = vunpack.c.h.b16 %v1110
  %v1306 = vunpack.c.l.b16 %v1111
  %v1307 = vunpack.c.h.b16 %v1111
  %v1308 = vunpack.c.l.b16 %v1112
  %v1309 = vunpack.c.h.b16 %v1112
  %v1310 = vunpack.c.l.b16 %v1113
  %v1311 = vunpack.c.h.b16 %v1113
  %v1312 = vunpack.c.l.b16 %v1114
  %v1313 = vunpack.c.h.b16 %v1114
  %v1314 = vunpack.c.l.b16 %v1115
  %v1315 = vunpack.c.h.b16 %v1115
  %v1316 = vunpack.c.l.b16 %v1116
  %v1317 = vunpack.c.h.b16 %v1116
  %v1318 = vunpack.c.l.b16 %v1117
  %v1319 = vunpack.c.h.b16 %v1117
  %v1320 = vunpack.c.l.b16 %v1118
  %v1321 = vunpack.c.h.b16 %v1118
  %v1322 = vunpack.c.l.b16 %v1119
  %v1323 = vunpack.c.h.b16 %v1119
  %v1324 = vunpack.c.l.b16 %v1120
  %v1325 = vunpack.c.h.b16 %v1120
  %v1326 = vunpack.c.l.b16 %v1121
  %v1327 = vunpack.c.h.b16 %v1121
  %v1328 = vunpack.c.l.b16 %v1122
  %v1329 = vunpack.c.h.b16 %v1122
  %v1330 = vunpack.c.l.b16 %v1123
  %v1331 = vunpack.c.h.b16 %v1123
  %v1332 = vunpack.c.l.b16 %v1124
  %v1333 = vunpack.c.h.b16 %v1124
  %v1334 = vunpack.c.l.b16 %v1125
  %v1335 = vunpack.c.h.b16 %v1125
  %v1336 = vunpack.c.l.b16 %v1126
  %v1337 = vunpack.c.h.b16 %v1126
  %v1338 = vunpack.c.l.b16 %v1127
  %v1339 = vunpack.c.h.b16 %v1127
  %v1340 = vunpack.c.l.b16 %v1128
  %v1341 = vunpack.c.h.b16 %v1128
  %v1342 = vunpack.c.l.b16 %v1129
  %v1343 = vunpack.c.h.b16 %v1129
  %v1344 = vunpack.c.l.b16 %v1130
  %v1345 = vunpack.c.h.b16 %v1130
  %v1346 = vunpack.c.l.b16 %v1131
  %v1347 = vunpack.c.h.b16 %v1131
  %v1348 = vunpack.c.l.b16 %v1132
  %v1349 = vunpack.c.h.b16 %v1132
  %v1350 = vunpack.c.l.b16 %v1133
  %v1351 = vunpack.c.h.b16 %v1133
  %v1352 = vunpack.c.l.b16 %v1134
  %v1353 = vunpack.c.h.b16 %v1134
  %v1354 = vunpack.c.l.b16 %v1135
  %v1355 = vunpack.c.h.b16 %v1135
  %v1356 = vunpack.c.l.b16 %v1136
  %v1357 = vunpack.c.h.b16 %v1136
  %v1358 = vunpack.c.l.b16 %v1137
  %v1359 = vunpack.c.h.b16 %v1137
  %v1360 = vunpack.c.l.b16 %v1138
  %v1361 = vunpack.c.h.b16 %v1138
  %v1362 = vunpack.c.l.b16 %v1139
  %v1363 = vunpack.c.h.b16 %v1139
  %v1364 = vunpack.c.l.b16 %v1140
  %v1365 = vunpack.c.h.b16 %v1140
  %v1366 = vunpack.c.l.b16 %v1141
  %v1367 = vunpack.c.h.b16 %v1141
  %v1368 = vunpack.c.l.b16 %v1142
  %v1369 = vunpack.c.h.b16 %v1142
  %v1370 = vunpack.c.l.b16 %v1143
  %v1371 = vunpack.c.h.b16 %v1143
  %v1372 = vpack.c.b16 %v1228, %v1220
  %v1373 = vpack.c.b16 %v1229, %v1221
  %v1374 = vpack.c.b16 %v1230, %v1222
  %v1375 = vpack.c.b16 %v1231, %v1223
  %v1376 = vpack.c.b16 %v1232, %v1224
  %v1377 = vpack.c.b16 %v1233, %v1225
  %v1378 = vpack.c.b16 %v1234, %v1226
  %v1379 = vpack.c.b16 %v1235, %v1227
  %v1380 = vpack.c.b16 %v1244, %v1236
  %v1381 = vpack.c.b16 %v1245, %v1237
  %v1382 = vpack.c.b16 %v1246, %v1238
  %v1383 = vpack.c.b16 %v1247, %v1239
  %v1384 = vpack.c.b16 %v1248, %v1240
  %v1385 = vpack.c.b16 %v1249, %v1241
  %v1386 = vpack.c.b16 %v1250, %v1242
  %v1387 = vpack.c.b16 %v1251, %v1243
  %v1388 = vpack.c.b16 %v1260, %v1252
  %v1389 = vpack.c.b16 %v1261, %v1253
  %v1390 = vpack.c.b16 %v1262, %v1254
  %v1391 = vpack.c.b16 %v1263, %v1255
  %v1392 = vpack.c.b16 %v1264, %v1256
  %v1393 = vpack.c.b16 %v1265, %v1257
  %v1394 = vpack.c.b16 %v1266, %v1258
  %v1395 = vpack.c.b16 %v1267, %v1259
  %v1396 = vpack.c.b16 %v1276, %v1268
  %v1397 = vpack.c.b16 %v1277, %v1269
  %v1398 = vpack.c.b16 %v1278, %v1270
  %v1399 = vpack.c.b16 %v1279, %v1271
  %v1400 = vpack.c.b16 %v1280, %v1272
  %v1401 = vpack.c.b16 %v1281, %v1273
  %v1402 = vpack.c.b16 %v1282, %v1274
  %v1403 = vpack.c.b16 %v1283, %v1275
  %v1404 = vpack.c.b16 %v1292, %v1284
  %v1405 = vpack.c.b16 %v1293, %v1285
  %v1406 = vpack.c.b16 %v1294, %v1286
  %v1407 = vpack.c.b16 %v1295, %v1287
  %v1408 = vpack.c.b16 %v1296, %v1288
  %v1409 = vpack.c.b16 %v1297, %v1289
  %v1410 = vpack.c.b16 %v1298, %v1290
  %v1411 = vpack.c.b16 %v1299, %v1291
  %v1412 = vpack.c.b16 %v1308, %v1300
  %v1413 = vpack.c.b16 %v1309, %v1301
  %v1414 = vpack.c.b16 %v1310, %v1302
  %v1415 = vpack.c.b16 %v1311, %v1303
  %v1416 = vpack.c.b16 %v1312, %v1304
  %v1417 = vpack.c.b16 %v1313, %v1305
  %v1418 = vpack.c.b16 %v1314, %v1306
  %v1419 = vpack.c.b16 %v1315, %v1307
  %v1420 = vpack.c.b16 %v1324, %v1316
  %v1421 = vpack.c.b16 %v1325, %v1317
  %v1422 = vpack.c.b16 %v1326, %v1318
  %v1423 = vpack.c.b16 %v1327, %v1319
  %v1424 = vpack.c.b16 %v1328, %v1320
  %v1425 = vpack.c.b16 %v1329, %v1321
  %v1426 = vpack.c.b16 %v1330, %v1322
  %v1427 = vpack.c.b16 %v1331, %v1323
  %v1428 = vpack.c.b16 %v1340, %v1332
  %v1429 = vpack.c.b16 %v1341, %v1333
  %v1430 = vpack.c.b16 %v1342, %v1334
  %v1431 = vpack.c.b16 %v1343, %v1335
  %v1432 = vpack.c.b16 %v1344, %v1336
  %v1433 = vpack.c.b16 %v1345, %v1337
  %v1434 = vpack.c.b16 %v1346, %v1338
  %v1435 = vpack.c.b16 %v1347, %v1339
  %v1436 = vpack.c.b16 %v1356, %v1348
  %v1437 = vpack.c.b16 %v1357, %v1349
  %v1438 = vpack.c.b16 %v1358, %v1350
  %v1439 = vpack.c.b16 %v1359, %v1351
  %v1440 = vpack.c.b16 %v1360, %v1352
  %v1441 = vpack.c.b16 %v1361, %v1353
  %v1442 = vpack.c.b16 %v1362, %v1354
  %v1443 = vpack.c.b16 %v1363, %v1355
  %v1444 = vpack.c.b16 %v1364, %v1364
  %v1445 = vpack.c.b16 %v1365, %v1365
  %v1446 = vpack.c.b16 %v1366, %v1366
  %v1447 = vpack.c.b16 %v1367, %v1367
  %v1448 = vpack.c.b16 %v1368, %v1368
  %v1449 = vpack.c.b16 %v1369, %v1369
  %v1450 = vpack.c.b16 %v1370, %v1370
  %v1451 = vpack.c.b16 %v1371, %v1371
  %v1525 = vsel %vm587, %v1444, 0
  %v1528 = vsel %vm587, %v1445, 0
  %v1531 = vsel %vm587, %v1446, 0
  %v1534 = vsel %vm587, %v1447, 0
  %v1537 = vsel %vm587, %v1448, 0
  %v1540 = vsel %vm587, %v1449, 0
  %v1543 = vsel %vm587, %v1450, 0
  %v1546 = vsel %vm587, %v1451, 0
  %1548 = vmatprep.subr.bf16.mxu0 %v1373
  %1549 = vmatpush1.bf16.msra.mxu0 %v1372
  %1550 = vmatprep.subr.bf16.mxu0 %v1381
  %1551 = vmatpush1.bf16.msra.mxu0 %v1380
  %1552 = vmatprep.subr.bf16.mxu0 %v1389
  %1553 = vmatpush1.bf16.msra.mxu0 %v1388
  %1554 = vmatprep.subr.bf16.mxu0 %v1397
  %1555 = vmatpush1.bf16.msra.mxu0 %v1396
  %1556 = vmatprep.subr.bf16.mxu0 %v1405
  %1557 = vmatpush1.bf16.msra.mxu0 %v1404
  %1558 = vmatprep.subr.bf16.mxu0 %v1413
  %1559 = vmatpush1.bf16.msra.mxu0 %v1412
  %1560 = vmatprep.subr.bf16.mxu0 %v1421
  %1561 = vmatpush1.bf16.msra.mxu0 %v1420
  %1562 = vmatprep.subr.bf16.mxu0 %v1429
  %1563 = vmatpush1.bf16.msra.mxu0 %v1428
  %1564 = vmatprep.subr.bf16.mxu0 %v1437
  %1565 = vmatpush1.bf16.msra.mxu0 %v1436
  %1566 = vmatprep.subr.bf16.mxu0 %v1528
  %1567 = vmatpush1.bf16.msra.mxu0 %v1525
  %1568 = vmatprep.subr.bf16.mxu0 0
  %1569 = vmatpush1.bf16.msra.mxu0 0
  %1570 = vmatprep.subr.bf16.mxu0 0
  %1571 = vmatpush1.bf16.msra.mxu0 0
  %1572 = vmatprep.subr.bf16.mxu0 0
  %1573 = vmatpush1.bf16.msra.mxu0 0
  %1574 = vmatprep.subr.bf16.mxu0 0
  %1575 = vmatpush1.bf16.msra.mxu0 0
  %1576 = vmatprep.subr.bf16.mxu0 0
  %1577 = vmatpush1.bf16.msra.mxu0 0
  %1578 = vmatprep.subr.bf16.mxu0 0
  %1579 = vmatpush1.bf16.msra.mxu0 0
  %1580 = vmatprep.mubr.bf16.mxu0 %v567
  %1581 = vmatmul.mubr.bf16.gmra.mrb[0].mxu0 %v164
  %v1582 = vpop.f32.mrb[0].mxu0
  %v1583 = vadd.f32 0.0, %v1582
  %v1584 = vpop.f32.mrb[0].mxu0
  %v1585 = vadd.f32 0.0, %v1584
  %v1586 = vpop.f32.mrb[0].mxu0
  %v1587 = vadd.f32 0.0, %v1586
  %v1588 = vpop.f32.mrb[0].mxu0
  %v1589 = vadd.f32 0.0, %v1588
  %1590 = vmatprep.mubr.bf16.mxu0 %v570
  %1591 = vmatmul.mubr.bf16.gmra.mrb[0].mxu0 %v166
  %v1592 = vpop.f32.mrb[0].mxu0
  %v1593 = vadd.f32 0.0, %v1592
  %v1594 = vpop.f32.mrb[0].mxu0
  %v1595 = vadd.f32 0.0, %v1594
  %v1596 = vpop.f32.mrb[0].mxu0
  %v1597 = vadd.f32 0.0, %v1596
  %v1598 = vpop.f32.mrb[0].mxu0
  %v1599 = vadd.f32 0.0, %v1598
  %1600 = vmatprep.mubr.bf16.mxu0 %v573
  %1601 = vmatmul.mubr.bf16.gmra.mrb[0].mxu0 %v168
  %v1602 = vpop.f32.mrb[0].mxu0
  %v1603 = vadd.f32 0.0, %v1602
  %v1604 = vpop.f32.mrb[0].mxu0
  %v1605 = vadd.f32 0.0, %v1604
  %v1606 = vpop.f32.mrb[0].mxu0
  %v1607 = vadd.f32 0.0, %v1606
  %v1608 = vpop.f32.mrb[0].mxu0
  %v1609 = vadd.f32 0.0, %v1608
  %1610 = vmatprep.mubr.bf16.mxu0 %v576
  %1611 = vmatmul.mubr.bf16.gmra.mrb[0].mxu0 %v170
  %v1612 = vpop.f32.mrb[0].mxu0
  %v1613 = vadd.f32 0.0, %v1612
  %v1614 = vpop.f32.mrb[0].mxu0
  %v1615 = vadd.f32 0.0, %v1614
  %v1616 = vpop.f32.mrb[0].mxu0
  %v1617 = vadd.f32 0.0, %v1616
  %v1618 = vpop.f32.mrb[0].mxu0
  %v1619 = vadd.f32 0.0, %v1618
  %1620 = vmatprep.mubr.bf16.mxu0 %v579
  %1621 = vmatmul.mubr.bf16.gmra.mrb[0].mxu0 %v172
  %v1622 = vpop.f32.mrb[0].mxu0
  %v1623 = vadd.f32 0.0, %v1622
  %v1624 = vpop.f32.mrb[0].mxu0
  %v1625 = vadd.f32 0.0, %v1624
  %v1626 = vpop.f32.mrb[0].mxu0
  %v1627 = vadd.f32 0.0, %v1626
  %v1628 = vpop.f32.mrb[0].mxu0
  %v1629 = vadd.f32 0.0, %v1628
  %1630 = vmatprep.mubr.bf16.mxu0 %v582
  %1631 = vmatmul.mubr.bf16.gmra.mrb[0].mxu0 %v174
  %v1632 = vpop.f32.mrb[0].mxu0
  %v1633 = vadd.f32 0.0, %v1632
  %v1634 = vpop.f32.mrb[0].mxu0
  %v1635 = vadd.f32 0.0, %v1634
  %v1636 = vpop.f32.mrb[0].mxu0
  %v1637 = vadd.f32 0.0, %v1636
  %v1638 = vpop.f32.mrb[0].mxu0
  %v1639 = vadd.f32 0.0, %v1638
  %1640 = vmatprep.mubr.bf16.mxu0 %v585
  %1641 = vmatmul.mubr.bf16.gmra.mrb[0].mxu0 %v176
  %v1642 = vpop.f32.mrb[0].mxu0
  %v1643 = vadd.f32 0.0, %v1642
  %v1644 = vpop.f32.mrb[0].mxu0
  %v1645 = vadd.f32 0.0, %v1644
  %v1646 = vpop.f32.mrb[0].mxu0
  %v1647 = vpop.f32.mrb[0].mxu0
  %1648 = vdwg.mxu0
  %1649 = vmatprep.subr.bf16.mxu0 %v1375
  %1650 = vmatpush1.bf16.msra.mxu0 %v1374
  %1651 = vmatprep.subr.bf16.mxu0 %v1383
  %1652 = vmatpush1.bf16.msra.mxu0 %v1382
  %1653 = vmatprep.subr.bf16.mxu0 %v1391
  %1654 = vmatpush1.bf16.msra.mxu0 %v1390
  %1655 = vmatprep.subr.bf16.mxu0 %v1399
  %1656 = vmatpush1.bf16.msra.mxu0 %v1398
  %1657 = vmatprep.subr.bf16.mxu0 %v1407
  %1658 = vmatpush1.bf16.msra.mxu0 %v1406
  %1659 = vmatprep.subr.bf16.mxu0 %v1415
  %1660 = vmatpush1.bf16.msra.mxu0 %v1414
  %1661 = vmatprep.subr.bf16.mxu0 %v1423
  %1662 = vmatpush1.bf16.msra.mxu0 %v1422
  %1663 = vmatprep.subr.bf16.mxu0 %v1431
  %1664 = vmatpush1.bf16.msra.mxu0 %v1430
  %1665 = vmatprep.subr.bf16.mxu0 %v1439
  %1666 = vmatpush1.bf16.msra.mxu0 %v1438
  %1667 = vmatprep.subr.bf16.mxu0 %v1534
  %1668 = vmatpush1.bf16.msra.mxu0 %v1531
  %1669 = vmatprep.subr.bf16.mxu0 0
  %1670 = vmatpush1.bf16.msra.mxu0 0
  %1671 = vmatprep.subr.bf16.mxu0 0
  %1672 = vmatpush1.bf16.msra.mxu0 0
  %1673 = vmatprep.subr.bf16.mxu0 0
  %1674 = vmatpush1.bf16.msra.mxu0 0
  %1675 = vmatprep.subr.bf16.mxu0 0
  %1676 = vmatpush1.bf16.msra.mxu0 0
  %1677 = vmatprep.subr.bf16.mxu0 0
  %1678 = vmatpush1.bf16.msra.mxu0 0
  %1679 = vmatprep.subr.bf16.mxu0 0
  %1680 = vmatpush1.bf16.msra.mxu0 0
  %1681 = vmatprep.mubr.bf16.mxu0 %v567
  %1682 = vmatmul.mubr.bf16.gmra.mrb[0].mxu0 %v164
  %v1683 = vpop.f32.mrb[0].mxu0
  %v1684 = vadd.f32 0.0, %v1683
  %v1685 = vpop.f32.mrb[0].mxu0
  %v1686 = vadd.f32 0.0, %v1685
  %v1687 = vpop.f32.mrb[0].mxu0
  %v1688 = vadd.f32 0.0, %v1687
  %v1689 = vpop.f32.mrb[0].mxu0
  %v1690 = vadd.f32 0.0, %v1689
  %1691 = vmatprep.mubr.bf16.mxu0 %v570
  %1692 = vmatmul.mubr.bf16.gmra.mrb[0].mxu0 %v166
  %v1693 = vpop.f32.mrb[0].mxu0
  %v1694 = vadd.f32 0.0, %v1693
  %v1695 = vpop.f32.mrb[0].mxu0
  %v1696 = vadd.f32 0.0, %v1695
  %v1697 = vpop.f32.mrb[0].mxu0
  %v1698 = vadd.f32 0.0, %v1697
  %v1699 = vpop.f32.mrb[0].mxu0
  %v1700 = vadd.f32 0.0, %v1699
  %1701 = vmatprep.mubr.bf16.mxu0 %v573
  %1702 = vmatmul.mubr.bf16.gmra.mrb[0].mxu0 %v168
  %v1703 = vpop.f32.mrb[0].mxu0
  %v1704 = vadd.f32 0.0, %v1703
  %v1705 = vpop.f32.mrb[0].mxu0
  %v1706 = vadd.f32 0.0, %v1705
  %v1707 = vpop.f32.mrb[0].mxu0
  %v1708 = vadd.f32 0.0, %v1707
  %v1709 = vpop.f32.mrb[0].mxu0
  %v1710 = vadd.f32 0.0, %v1709
  %1711 = vmatprep.mubr.bf16.mxu0 %v576
  %1712 = vmatmul.mubr.bf16.gmra.mrb[0].mxu0 %v170
  %v1713 = vpop.f32.mrb[0].mxu0
  %v1714 = vadd.f32 0.0, %v1713
  %v1715 = vpop.f32.mrb[0].mxu0
  %v1716 = vadd.f32 0.0, %v1715
  %v1717 = vpop.f32.mrb[0].mxu0
  %v1718 = vadd.f32 0.0, %v1717
  %v1719 = vpop.f32.mrb[0].mxu0
  %v1720 = vadd.f32 0.0, %v1719
  %1721 = vmatprep.mubr.bf16.mxu0 %v579
  %1722 = vmatmul.mubr.bf16.gmra.mrb[0].mxu0 %v172
  %v1723 = vpop.f32.mrb[0].mxu0
  %v1724 = vadd.f32 0.0, %v1723
  %v1725 = vpop.f32.mrb[0].mxu0
  %v1726 = vadd.f32 0.0, %v1725
  %v1727 = vpop.f32.mrb[0].mxu0
  %v1728 = vadd.f32 0.0, %v1727
  %v1729 = vpop.f32.mrb[0].mxu0
  %v1730 = vadd.f32 0.0, %v1729
  %1731 = vmatprep.mubr.bf16.mxu0 %v582
  %1732 = vmatmul.mubr.bf16.gmra.mrb[0].mxu0 %v174
  %v1733 = vpop.f32.mrb[0].mxu0
  %v1734 = vadd.f32 0.0, %v1733
  %v1735 = vpop.f32.mrb[0].mxu0
  %v1736 = vadd.f32 0.0, %v1735
  %v1737 = vpop.f32.mrb[0].mxu0
  %v1738 = vadd.f32 0.0, %v1737
  %v1739 = vpop.f32.mrb[0].mxu0
  %v1740 = vadd.f32 0.0, %v1739
  %1741 = vmatprep.mubr.bf16.mxu0 %v585
  %1742 = vmatmul.mubr.bf16.gmra.mrb[0].mxu0 %v176
  %v1743 = vpop.f32.mrb[0].mxu0
  %v1744 = vadd.f32 0.0, %v1743
  %v1745 = vpop.f32.mrb[0].mxu0
  %v1746 = vadd.f32 0.0, %v1745
  %v1747 = vpop.f32.mrb[0].mxu0
  %v1748 = vpop.f32.mrb[0].mxu0
  %1749 = vdwg.mxu0
  %1750 = vmatprep.subr.bf16.mxu0 %v1377
  %1751 = vmatpush1.bf16.msra.mxu0 %v1376
  %1752 = vmatprep.subr.bf16.mxu0 %v1385
  %1753 = vmatpush1.bf16.msra.mxu0 %v1384
  %1754 = vmatprep.subr.bf16.mxu0 %v1393
  %1755 = vmatpush1.bf16.msra.mxu0 %v1392
  %1756 = vmatprep.subr.bf16.mxu0 %v1401
  %1757 = vmatpush1.bf16.msra.mxu0 %v1400
  %1758 = vmatprep.subr.bf16.mxu0 %v1409
  %1759 = vmatpush1.bf16.msra.mxu0 %v1408
  %1760 = vmatprep.subr.bf16.mxu0 %v1417
  %1761 = vmatpush1.bf16.msra.mxu0 %v1416
  %1762 = vmatprep.subr.bf16.mxu0 %v1425
  %1763 = vmatpush1.bf16.msra.mxu0 %v1424
  %1764 = vmatprep.subr.bf16.mxu0 %v1433
  %1765 = vmatpush1.bf16.msra.mxu0 %v1432
  %1766 = vmatprep.subr.bf16.mxu0 %v1441
  %1767 = vmatpush1.bf16.msra.mxu0 %v1440
  %1768 = vmatprep.subr.bf16.mxu0 %v1540
  %1769 = vmatpush1.bf16.msra.mxu0 %v1537
  %1770 = vmatprep.subr.bf16.mxu0 0
  %1771 = vmatpush1.bf16.msra.mxu0 0
  %1772 = vmatprep.subr.bf16.mxu0 0
  %1773 = vmatpush1.bf16.msra.mxu0 0
  %1774 = vmatprep.subr.bf16.mxu0 0
  %1775 = vmatpush1.bf16.msra.mxu0 0
  %1776 = vmatprep.subr.bf16.mxu0 0
  %1777 = vmatpush1.bf16.msra.mxu0 0
  %1778 = vmatprep.subr.bf16.mxu0 0
  %1779 = vmatpush1.bf16.msra.mxu0 0
  %1780 = vmatprep.subr.bf16.mxu0 0
  %1781 = vmatpush1.bf16.msra.mxu0 0
  %1782 = vmatprep.mubr.bf16.mxu0 %v567
  %1783 = vmatmul.mubr.bf16.gmra.mrb[0].mxu0 %v164
  %v1784 = vpop.f32.mrb[0].mxu0
  %v1785 = vadd.f32 0.0, %v1784
  %v1786 = vpop.f32.mrb[0].mxu0
  %v1787 = vadd.f32 0.0, %v1786
  %v1788 = vpop.f32.mrb[0].mxu0
  %v1789 = vadd.f32 0.0, %v1788
  %v1790 = vpop.f32.mrb[0].mxu0
  %v1791 = vadd.f32 0.0, %v1790
  %1792 = vmatprep.mubr.bf16.mxu0 %v570
  %1793 = vmatmul.mubr.bf16.gmra.mrb[0].mxu0 %v166
  %v1794 = vpop.f32.mrb[0].mxu0
  %v1795 = vadd.f32 0.0, %v1794
  %v1796 = vpop.f32.mrb[0].mxu0
  %v1797 = vadd.f32 0.0, %v1796
  %v1798 = vpop.f32.mrb[0].mxu0
  %v1799 = vadd.f32 0.0, %v1798
  %v1800 = vpop.f32.mrb[0].mxu0
  %v1801 = vadd.f32 0.0, %v1800
  %1802 = vmatprep.mubr.bf16.mxu0 %v573
  %1803 = vmatmul.mubr.bf16.gmra.mrb[0].mxu0 %v168
  %v1804 = vpop.f32.mrb[0].mxu0
  %v1805 = vadd.f32 0.0, %v1804
  %v1806 = vpop.f32.mrb[0].mxu0
  %v1807 = vadd.f32 0.0, %v1806
  %v1808 = vpop.f32.mrb[0].mxu0
  %v1809 = vadd.f32 0.0, %v1808
  %v1810 = vpop.f32.mrb[0].mxu0
  %v1811 = vadd.f32 0.0, %v1810
  %1812 = vmatprep.mubr.bf16.mxu0 %v576
  %1813 = vmatmul.mubr.bf16.gmra.mrb[0].mxu0 %v170
  %v1814 = vpop.f32.mrb[0].mxu0
  %v1815 = vadd.f32 0.0, %v1814
  %v1816 = vpop.f32.mrb[0].mxu0
  %v1817 = vadd.f32 0.0, %v1816
  %v1818 = vpop.f32.mrb[0].mxu0
  %v1819 = vadd.f32 0.0, %v1818
  %v1820 = vpop.f32.mrb[0].mxu0
  %v1821 = vadd.f32 0.0, %v1820
  %1822 = vmatprep.mubr.bf16.mxu0 %v579
  %1823 = vmatmul.mubr.bf16.gmra.mrb[0].mxu0 %v172
  %v1824 = vpop.f32.mrb[0].mxu0
  %v1825 = vadd.f32 0.0, %v1824
  %v1826 = vpop.f32.mrb[0].mxu0
  %v1827 = vadd.f32 0.0, %v1826
  %v1828 = vpop.f32.mrb[0].mxu0
  %v1829 = vadd.f32 0.0, %v1828
  %v1830 = vpop.f32.mrb[0].mxu0
  %v1831 = vadd.f32 0.0, %v1830
  %1832 = vmatprep.mubr.bf16.mxu0 %v582
  %1833 = vmatmul.mubr.bf16.gmra.mrb[0].mxu0 %v174
  %v1834 = vpop.f32.mrb[0].mxu0
  %v1835 = vadd.f32 0.0, %v1834
  %v1836 = vpop.f32.mrb[0].mxu0
  %v1837 = vadd.f32 0.0, %v1836
  %v1838 = vpop.f32.mrb[0].mxu0
  %v1839 = vadd.f32 0.0, %v1838
  %v1840 = vpop.f32.mrb[0].mxu0
  %v1841 = vadd.f32 0.0, %v1840
  %1842 = vmatprep.mubr.bf16.mxu0 %v585
  %1843 = vmatmul.mubr.bf16.gmra.mrb[0].mxu0 %v176
  %v1844 = vpop.f32.mrb[0].mxu0
  %v1845 = vadd.f32 0.0, %v1844
  %v1846 = vpop.f32.mrb[0].mxu0
  %v1847 = vadd.f32 0.0, %v1846
  %v1848 = vpop.f32.mrb[0].mxu0
  %v1849 = vpop.f32.mrb[0].mxu0
  %1850 = vdwg.mxu0
  %1851 = vmatprep.subr.bf16.mxu0 %v1379
  %1852 = vmatpush1.bf16.msra.mxu0 %v1378
  %1853 = vmatprep.subr.bf16.mxu0 %v1387
  %1854 = vmatpush1.bf16.msra.mxu0 %v1386
  %1855 = vmatprep.subr.bf16.mxu0 %v1395
  %1856 = vmatpush1.bf16.msra.mxu0 %v1394
  %1857 = vmatprep.subr.bf16.mxu0 %v1403
  %1858 = vmatpush1.bf16.msra.mxu0 %v1402
  %1859 = vmatprep.subr.bf16.mxu0 %v1411
  %1860 = vmatpush1.bf16.msra.mxu0 %v1410
  %1861 = vmatprep.subr.bf16.mxu0 %v1419
  %1862 = vmatpush1.bf16.msra.mxu0 %v1418
  %1863 = vmatprep.subr.bf16.mxu0 %v1427
  %1864 = vmatpush1.bf16.msra.mxu0 %v1426
  %1865 = vmatprep.subr.bf16.mxu0 %v1435
  %1866 = vmatpush1.bf16.msra.mxu0 %v1434
  %1867 = vmatprep.subr.bf16.mxu0 %v1443
  %1868 = vmatpush1.bf16.msra.mxu0 %v1442
  %1869 = vmatprep.subr.bf16.mxu0 %v1546
  %1870 = vmatpush1.bf16.msra.mxu0 %v1543
  %1871 = vmatprep.subr.bf16.mxu0 0
  %1872 = vmatpush1.bf16.msra.mxu0 0
  %1873 = vmatprep.subr.bf16.mxu0 0
  %1874 = vmatpush1.bf16.msra.mxu0 0
  %1875 = vmatprep.subr.bf16.mxu0 0
  %1876 = vmatpush1.bf16.msra.mxu0 0
  %1877 = vmatprep.subr.bf16.mxu0 0
  %1878 = vmatpush1.bf16.msra.mxu0 0
  %1879 = vmatprep.subr.bf16.mxu0 0
  %1880 = vmatpush1.bf16.msra.mxu0 0
  %1881 = vmatprep.subr.bf16.mxu0 0
  %1882 = vmatpush1.bf16.msra.mxu0 0
  %1883 = vmatprep.mubr.bf16.mxu0 %v567
  %1884 = vmatmul.mubr.bf16.gmra.mrb[0].mxu0 %v164
  %v1885 = vpop.f32.mrb[0].mxu0
  %v1886 = vadd.f32 0.0, %v1885
  %v1887 = vpop.f32.mrb[0].mxu0
  %v1888 = vadd.f32 0.0, %v1887
  %v1889 = vpop.f32.mrb[0].mxu0
  %v1890 = vadd.f32 0.0, %v1889
  %v1891 = vpop.f32.mrb[0].mxu0
  %v1892 = vadd.f32 0.0, %v1891
  %1893 = vmatprep.mubr.bf16.mxu0 %v570
  %1894 = vmatmul.mubr.bf16.gmra.mrb[0].mxu0 %v166
  %v1895 = vpop.f32.mrb[0].mxu0
  %v1896 = vadd.f32 0.0, %v1895
  %v1897 = vpop.f32.mrb[0].mxu0
  %v1898 = vadd.f32 0.0, %v1897
  %v1899 = vpop.f32.mrb[0].mxu0
  %v1900 = vadd.f32 0.0, %v1899
  %v1901 = vpop.f32.mrb[0].mxu0
  %v1902 = vadd.f32 0.0, %v1901
  %1903 = vmatprep.mubr.bf16.mxu0 %v573
  %1904 = vmatmul.mubr.bf16.gmra.mrb[0].mxu0 %v168
  %v1905 = vpop.f32.mrb[0].mxu0
  %v1906 = vadd.f32 0.0, %v1905
  %v1907 = vpop.f32.mrb[0].mxu0
  %v1908 = vadd.f32 0.0, %v1907
  %v1909 = vpop.f32.mrb[0].mxu0
  %v1910 = vadd.f32 0.0, %v1909
  %v1911 = vpop.f32.mrb[0].mxu0
  %v1912 = vadd.f32 0.0, %v1911
  %1913 = vmatprep.mubr.bf16.mxu0 %v576
  %1914 = vmatmul.mubr.bf16.gmra.mrb[0].mxu0 %v170
  %v1915 = vpop.f32.mrb[0].mxu0
  %v1916 = vadd.f32 0.0, %v1915
  %v1917 = vpop.f32.mrb[0].mxu0
  %v1918 = vadd.f32 0.0, %v1917
  %v1919 = vpop.f32.mrb[0].mxu0
  %v1920 = vadd.f32 0.0, %v1919
  %v1921 = vpop.f32.mrb[0].mxu0
  %v1922 = vadd.f32 0.0, %v1921
  %1923 = vmatprep.mubr.bf16.mxu0 %v579
  %1924 = vmatmul.mubr.bf16.gmra.mrb[0].mxu0 %v172
  %v1925 = vpop.f32.mrb[0].mxu0
  %v1926 = vadd.f32 0.0, %v1925
  %v1927 = vpop.f32.mrb[0].mxu0
  %v1928 = vadd.f32 0.0, %v1927
  %v1929 = vpop.f32.mrb[0].mxu0
  %v1930 = vadd.f32 0.0, %v1929
  %v1931 = vpop.f32.mrb[0].mxu0
  %v1932 = vadd.f32 0.0, %v1931
  %1933 = vmatprep.mubr.bf16.mxu0 %v582
  %1934 = vmatmul.mubr.bf16.gmra.mrb[0].mxu0 %v174
  %v1935 = vpop.f32.mrb[0].mxu0
  %v1936 = vadd.f32 0.0, %v1935
  %v1937 = vpop.f32.mrb[0].mxu0
  %v1938 = vadd.f32 0.0, %v1937
  %v1939 = vpop.f32.mrb[0].mxu0
  %v1940 = vadd.f32 0.0, %v1939
  %v1941 = vpop.f32.mrb[0].mxu0
  %v1942 = vadd.f32 0.0, %v1941
  %1943 = vmatprep.mubr.bf16.mxu0 %v585
  %1944 = vmatmul.mubr.bf16.gmra.mrb[0].mxu0 %v176
  %v1945 = vpop.f32.mrb[0].mxu0
  %v1946 = vadd.f32 0.0, %v1945
  %v1947 = vpop.f32.mrb[0].mxu0
  %v1948 = vadd.f32 0.0, %v1947
  %v1949 = vpop.f32.mrb[0].mxu0
  %v1950 = vpop.f32.mrb[0].mxu0
  %1951 = vdwg.mxu0
  %v1952 = vmax.f32 %v1583, %v1785
  %v1953 = vmax.f32 %v1585, %v1787
  %v1954 = vmax.f32 %v1684, %v1886
  %v1955 = vmax.f32 %v1686, %v1888
  %v1956 = vmax.f32 %v1587, %v1789
  %v1957 = vmax.f32 %v1589, %v1791
  %v1958 = vmax.f32 %v1688, %v1890
  %v1959 = vmax.f32 %v1690, %v1892
  %v1960 = vmax.f32 %v1593, %v1795
  %v1961 = vmax.f32 %v1595, %v1797
  %v1962 = vmax.f32 %v1694, %v1896
  %v1963 = vmax.f32 %v1696, %v1898
  %v1964 = vmax.f32 %v1597, %v1799
  %v1965 = vmax.f32 %v1599, %v1801
  %v1966 = vmax.f32 %v1698, %v1900
  %v1967 = vmax.f32 %v1700, %v1902
  %v1968 = vmax.f32 %v1603, %v1805
  %v1969 = vmax.f32 %v1605, %v1807
  %v1970 = vmax.f32 %v1704, %v1906
  %v1971 = vmax.f32 %v1706, %v1908
  %v1972 = vmax.f32 %v1607, %v1809
  %v1973 = vmax.f32 %v1609, %v1811
  %v1974 = vmax.f32 %v1708, %v1910
  %v1975 = vmax.f32 %v1710, %v1912
  %v1976 = vmax.f32 %v1613, %v1815
  %v1977 = vmax.f32 %v1615, %v1817
  %v1978 = vmax.f32 %v1714, %v1916
  %v1979 = vmax.f32 %v1716, %v1918
  %v1980 = vmax.f32 %v1617, %v1819
  %v1981 = vmax.f32 %v1619, %v1821
  %v1982 = vmax.f32 %v1718, %v1920
  %v1983 = vmax.f32 %v1720, %v1922
  %v1984 = vmax.f32 %v1623, %v1825
  %v1985 = vmax.f32 %v1625, %v1827
  %v1986 = vmax.f32 %v1724, %v1926
  %v1987 = vmax.f32 %v1726, %v1928
  %v1988 = vmax.f32 %v1627, %v1829
  %v1989 = vmax.f32 %v1629, %v1831
  %v1990 = vmax.f32 %v1728, %v1930
  %v1991 = vmax.f32 %v1730, %v1932
  %v1992 = vmax.f32 %v1633, %v1835
  %v1993 = vmax.f32 %v1635, %v1837
  %v1994 = vmax.f32 %v1734, %v1936
  %v1995 = vmax.f32 %v1736, %v1938
  %v1996 = vmax.f32 %v1637, %v1839
  %v1997 = vmax.f32 %v1639, %v1841
  %v1998 = vmax.f32 %v1738, %v1940
  %v1999 = vmax.f32 %v1740, %v1942
  %v2000 = vmax.f32 %v1643, %v1845
  %v2001 = vmax.f32 %v1645, %v1847
  %v2002 = vmax.f32 %v1744, %v1946
  %v2003 = vmax.f32 %v1746, %v1948
  %v2004 = vmax.f32 %v1016, %v1952
  %v2005 = vmax.f32 %v1017, %v1953
  %v2006 = vmax.f32 %v1018, %v1954
  %v2007 = vmax.f32 %v1019, %v1955
  %v2008 = vmax.f32 %v1020, %v1956
  %v2009 = vmax.f32 %v1021, %v1957
  %v2010 = vmax.f32 %v1022, %v1958
  %v2011 = vmax.f32 %v1023, %v1959
  %v2012 = vmax.f32 %v1024, %v1960
  %v2013 = vmax.f32 %v1025, %v1961
  %v2014 = vmax.f32 %v1026, %v1962
  %v2015 = vmax.f32 %v1027, %v1963
  %v2016 = vmax.f32 %v1028, %v1964
  %v2017 = vmax.f32 %v1029, %v1965
  %v2018 = vmax.f32 %v1030, %v1966
  %v2019 = vmax.f32 %v1031, %v1967
  %v2020 = vmax.f32 %v1032, %v1968
  %v2021 = vmax.f32 %v1033, %v1969
  %v2022 = vmax.f32 %v1034, %v1970
  %v2023 = vmax.f32 %v1035, %v1971
  %v2024 = vmax.f32 %v1036, %v1972
  %v2025 = vmax.f32 %v1037, %v1973
  %v2026 = vmax.f32 %v1038, %v1974
  %v2027 = vmax.f32 %v1039, %v1975
  %v2028 = vmax.f32 %v1040, %v1976
  %v2029 = vmax.f32 %v1041, %v1977
  %v2030 = vmax.f32 %v1042, %v1978
  %v2031 = vmax.f32 %v1043, %v1979
  %v2032 = vmax.f32 %v1044, %v1980
  %v2033 = vmax.f32 %v1045, %v1981
  %v2034 = vmax.f32 %v1046, %v1982
  %v2035 = vmax.f32 %v1047, %v1983
  %v2036 = vmax.f32 %v1048, %v1984
  %v2037 = vmax.f32 %v1049, %v1985
  %v2038 = vmax.f32 %v1050, %v1986
  %v2039 = vmax.f32 %v1051, %v1987
  %v2040 = vmax.f32 %v1052, %v1988
  %v2041 = vmax.f32 %v1053, %v1989
  %v2042 = vmax.f32 %v1054, %v1990
  %v2043 = vmax.f32 %v1055, %v1991
  %v2044 = vmax.f32 %v1056, %v1992
  %v2045 = vmax.f32 %v1057, %v1993
  %v2046 = vmax.f32 %v1058, %v1994
  %v2047 = vmax.f32 %v1059, %v1995
  %v2048 = vmax.f32 %v1060, %v1996
  %v2049 = vmax.f32 %v1061, %v1997
  %v2050 = vmax.f32 %v1062, %v1998
  %v2051 = vmax.f32 %v1063, %v1999
  %v2052 = vmax.f32 %v1064, %v2000
  %v2053 = vmax.f32 %v1065, %v2001
  %v2054 = vmax.f32 %v1066, %v2002
  %v2055 = vmax.f32 %v1067, %v2003
  %v2056 = vld [vmem:[%s6] sm:$0xf]
  %v2058 = vlaneseq
  %v2059 = vshrl.u32 %v2058, 7
  %v2060 = vsub.s32 0, %v2059
  %v2061 = vrot.slane %v2056, %v2060
  %v2062 = vlaneseq
  %v2063 = vshrl.u32 %v2062, 7
  %v2064 = vsub.s32 1, %v2063
  %v2065 = vrot.slane %v2056, %v2064
  %v2066 = vlaneseq
  %v2067 = vshrl.u32 %v2066, 7
  %v2068 = vsub.s32 2, %v2067
  %v2069 = vrot.slane %v2056, %v2068
  %v2070 = vlaneseq
  %v2071 = vshrl.u32 %v2070, 7
  %v2072 = vsub.s32 3, %v2071
  %v2073 = vrot.slane %v2056, %v2072
  %v2078 = vadd.f32 %v2004, %v2061
  %v2079 = vadd.f32 %v2005, %v2065
  %v2080 = vadd.f32 %v2006, %v2069
  %v2081 = vadd.f32 %v2007, %v2073
  %v2082 = vadd.f32 %v2008, %v2061
  %v2083 = vadd.f32 %v2009, %v2065
  %v2084 = vadd.f32 %v2010, %v2069
  %v2085 = vadd.f32 %v2011, %v2073
  %v2086 = vadd.f32 %v2012, %v2061
  %v2087 = vadd.f32 %v2013, %v2065
  %v2088 = vadd.f32 %v2014, %v2069
  %v2089 = vadd.f32 %v2015, %v2073
  %v2090 = vadd.f32 %v2016, %v2061
  %v2091 = vadd.f32 %v2017, %v2065
  %v2092 = vadd.f32 %v2018, %v2069
  %v2093 = vadd.f32 %v2019, %v2073
  %v2094 = vadd.f32 %v2020, %v2061
  %v2095 = vadd.f32 %v2021, %v2065
  %v2096 = vadd.f32 %v2022, %v2069
  %v2097 = vadd.f32 %v2023, %v2073
  %v2098 = vadd.f32 %v2024, %v2061
  %v2099 = vadd.f32 %v2025, %v2065
  %v2100 = vadd.f32 %v2026, %v2069
  %v2101 = vadd.f32 %v2027, %v2073
  %v2102 = vadd.f32 %v2028, %v2061
  %v2103 = vadd.f32 %v2029, %v2065
  %v2104 = vadd.f32 %v2030, %v2069
  %v2105 = vadd.f32 %v2031, %v2073
  %v2106 = vadd.f32 %v2032, %v2061
  %v2107 = vadd.f32 %v2033, %v2065
  %v2108 = vadd.f32 %v2034, %v2069
  %v2109 = vadd.f32 %v2035, %v2073
  %v2110 = vadd.f32 %v2036, %v2061
  %v2111 = vadd.f32 %v2037, %v2065
  %v2112 = vadd.f32 %v2038, %v2069
  %v2113 = vadd.f32 %v2039, %v2073
  %v2114 = vadd.f32 %v2040, %v2061
  %v2115 = vadd.f32 %v2041, %v2065
  %v2116 = vadd.f32 %v2042, %v2069
  %v2117 = vadd.f32 %v2043, %v2073
  %v2118 = vadd.f32 %v2044, %v2061
  %v2119 = vadd.f32 %v2045, %v2065
  %v2120 = vadd.f32 %v2046, %v2069
  %v2121 = vadd.f32 %v2047, %v2073
  %v2122 = vadd.f32 %v2048, %v2061
  %v2123 = vadd.f32 %v2049, %v2065
  %v2124 = vadd.f32 %v2050, %v2069
  %v2125 = vadd.f32 %v2051, %v2073
  %v2126 = vadd.f32 %v2052, %v2061
  %v2127 = vadd.f32 %v2053, %v2065
  %v2128 = vadd.f32 %v2054, %v2069
  %v2129 = vadd.f32 %v2055, %v2073
  %v2130 = vmax.f32 %v2078, 0.0
  %v2131 = vmax.f32 %v2079, 0.0
  %v2132 = vmax.f32 %v2080, 0.0
  %v2133 = vmax.f32 %v2081, 0.0
  %v2134 = vmax.f32 %v2082, 0.0
  %v2135 = vmax.f32 %v2083, 0.0
  %v2136 = vmax.f32 %v2084, 0.0
  %v2137 = vmax.f32 %v2085, 0.0
  %v2138 = vmax.f32 %v2086, 0.0
  %v2139 = vmax.f32 %v2087, 0.0
  %v2140 = vmax.f32 %v2088, 0.0
  %v2141 = vmax.f32 %v2089, 0.0
  %v2142 = vmax.f32 %v2090, 0.0
  %v2143 = vmax.f32 %v2091, 0.0
  %v2144 = vmax.f32 %v2092, 0.0
  %v2145 = vmax.f32 %v2093, 0.0
  %v2146 = vmax.f32 %v2094, 0.0
  %v2147 = vmax.f32 %v2095, 0.0
  %v2148 = vmax.f32 %v2096, 0.0
  %v2149 = vmax.f32 %v2097, 0.0
  %v2150 = vmax.f32 %v2098, 0.0
  %v2151 = vmax.f32 %v2099, 0.0
  %v2152 = vmax.f32 %v2100, 0.0
  %v2153 = vmax.f32 %v2101, 0.0
  %v2154 = vmax.f32 %v2102, 0.0
  %v2155 = vmax.f32 %v2103, 0.0
  %v2156 = vmax.f32 %v2104, 0.0
  %v2157 = vmax.f32 %v2105, 0.0
  %v2158 = vmax.f32 %v2106, 0.0
  %v2159 = vmax.f32 %v2107, 0.0
  %v2160 = vmax.f32 %v2108, 0.0
  %v2161 = vmax.f32 %v2109, 0.0
  %v2162 = vmax.f32 %v2110, 0.0
  %v2163 = vmax.f32 %v2111, 0.0
  %v2164 = vmax.f32 %v2112, 0.0
  %v2165 = vmax.f32 %v2113, 0.0
  %v2166 = vmax.f32 %v2114, 0.0
  %v2167 = vmax.f32 %v2115, 0.0
  %v2168 = vmax.f32 %v2116, 0.0
  %v2169 = vmax.f32 %v2117, 0.0
  %v2170 = vmax.f32 %v2118, 0.0
  %v2171 = vmax.f32 %v2119, 0.0
  %v2172 = vmax.f32 %v2120, 0.0
  %v2173 = vmax.f32 %v2121, 0.0
  %v2174 = vmax.f32 %v2122, 0.0
  %v2175 = vmax.f32 %v2123, 0.0
  %v2176 = vmax.f32 %v2124, 0.0
  %v2177 = vmax.f32 %v2125, 0.0
  %v2178 = vmax.f32 %v2126, 0.0
  %v2179 = vmax.f32 %v2127, 0.0
  %v2180 = vmax.f32 %v2128, 0.0
  %v2181 = vmax.f32 %v2129, 0.0
  %v2182 = vpack.c.bf16 %v2134, %v2130
  %v2183 = vpack.c.bf16 %v2135, %v2131
  %v2184 = vpack.c.bf16 %v2136, %v2132
  %v2185 = vpack.c.bf16 %v2137, %v2133
  %v2186 = vpack.c.bf16 %v2142, %v2138
  %v2187 = vpack.c.bf16 %v2143, %v2139
  %v2188 = vpack.c.bf16 %v2144, %v2140
  %v2189 = vpack.c.bf16 %v2145, %v2141
  %v2190 = vpack.c.bf16 %v2150, %v2146
  %v2191 = vpack.c.bf16 %v2151, %v2147
  %v2192 = vpack.c.bf16 %v2152, %v2148
  %v2193 = vpack.c.bf16 %v2153, %v2149
  %v2194 = vpack.c.bf16 %v2158, %v2154
  %v2195 = vpack.c.bf16 %v2159, %v2155
  %v2196 = vpack.c.bf16 %v2160, %v2156
  %v2197 = vpack.c.bf16 %v2161, %v2157
  %v2198 = vpack.c.bf16 %v2166, %v2162
  %v2199 = vpack.c.bf16 %v2167, %v2163
  %v2200 = vpack.c.bf16 %v2168, %v2164
  %v2201 = vpack.c.bf16 %v2169, %v2165
  %v2202 = vpack.c.bf16 %v2174, %v2170
  %v2203 = vpack.c.bf16 %v2175, %v2171
  %v2204 = vpack.c.bf16 %v2176, %v2172
  %v2205 = vpack.c.bf16 %v2177, %v2173
  %v2206 = vpack.c.bf16 %v2178, %v2178
  %v2207 = vpack.c.bf16 %v2179, %v2179
  %v2208 = vpack.c.bf16 %v2180, %v2180
  %v2209 = vpack.c.bf16 %v2181, %v2181
  %v2238 = vunpack.c.l.b16 %v2182
  %v2239 = vunpack.c.l.b16 %v2183
  %v2240 = vunpack.c.l.b16 %v2184
  %v2241 = vunpack.c.l.b16 %v2185
  %v2242 = vunpack.c.h.b16 %v2182
  %v2243 = vunpack.c.h.b16 %v2183
  %v2244 = vunpack.c.h.b16 %v2184
  %v2245 = vunpack.c.h.b16 %v2185
  %v2246 = vunpack.c.l.b16 %v2186
  %v2247 = vunpack.c.l.b16 %v2187
  %v2248 = vunpack.c.l.b16 %v2188
  %v2249 = vunpack.c.l.b16 %v2189
  %v2250 = vunpack.c.h.b16 %v2186
  %v2251 = vunpack.c.h.b16 %v2187
  %v2252 = vunpack.c.h.b16 %v2188
  %v2253 = vunpack.c.h.b16 %v2189
  %v2254 = vunpack.c.l.b16 %v2190
  %v2255 = vunpack.c.l.b16 %v2191
  %v2256 = vunpack.c.l.b16 %v2192
  %v2257 = vunpack.c.l.b16 %v2193
  %v2258 = vunpack.c.h.b16 %v2190
  %v2259 = vunpack.c.h.b16 %v2191
  %v2260 = vunpack.c.h.b16 %v2192
  %v2261 = vunpack.c.h.b16 %v2193
  %v2262 = vunpack.c.l.b16 %v2194
  %v2263 = vunpack.c.l.b16 %v2195
  %v2264 = vunpack.c.l.b16 %v2196
  %v2265 = vunpack.c.l.b16 %v2197
  %v2266 = vunpack.c.h.b16 %v2194
  %v2267 = vunpack.c.h.b16 %v2195
  %v2268 = vunpack.c.h.b16 %v2196
  %v2269 = vunpack.c.h.b16 %v2197
  %v2270 = vunpack.c.l.b16 %v2198
  %v2271 = vunpack.c.l.b16 %v2199
  %v2272 = vunpack.c.l.b16 %v2200
  %v2273 = vunpack.c.l.b16 %v2201
  %v2274 = vunpack.c.h.b16 %v2198
  %v2275 = vunpack.c.h.b16 %v2199
  %v2276 = vunpack.c.h.b16 %v2200
  %v2277 = vunpack.c.h.b16 %v2201
  %v2278 = vunpack.c.l.b16 %v2202
  %v2279 = vunpack.c.l.b16 %v2203
  %v2280 = vunpack.c.l.b16 %v2204
  %v2281 = vunpack.c.l.b16 %v2205
  %v2282 = vunpack.c.h.b16 %v2202
  %v2283 = vunpack.c.h.b16 %v2203
  %v2284 = vunpack.c.h.b16 %v2204
  %v2285 = vunpack.c.h.b16 %v2205
  %v2286 = vunpack.c.l.b16 %v2206
  %v2287 = vunpack.c.l.b16 %v2207
  %v2288 = vunpack.c.l.b16 %v2208
  %v2289 = vunpack.c.l.b16 %v2209
  %v2290 = vpack.c.b16 %v2239, %v2238
  %v2291 = vpack.c.b16 %v2241, %v2240
  %v2292 = vpack.c.b16 %v2243, %v2242
  %v2293 = vpack.c.b16 %v2245, %v2244
  %v2294 = vpack.c.b16 %v2247, %v2246
  %v2295 = vpack.c.b16 %v2249, %v2248
  %v2296 = vpack.c.b16 %v2251, %v2250
  %v2297 = vpack.c.b16 %v2253, %v2252
  %v2298 = vpack.c.b16 %v2255, %v2254
  %v2299 = vpack.c.b16 %v2257, %v2256
  %v2300 = vpack.c.b16 %v2259, %v2258
  %v2301 = vpack.c.b16 %v2261, %v2260
  %v2302 = vpack.c.b16 %v2263, %v2262
  %v2303 = vpack.c.b16 %v2265, %v2264
  %v2304 = vpack.c.b16 %v2267, %v2266
  %v2305 = vpack.c.b16 %v2269, %v2268
  %v2306 = vpack.c.b16 %v2271, %v2270
  %v2307 = vpack.c.b16 %v2273, %v2272
  %v2308 = vpack.c.b16 %v2275, %v2274
  %v2309 = vpack.c.b16 %v2277, %v2276
  %v2310 = vpack.c.b16 %v2279, %v2278
  %v2311 = vpack.c.b16 %v2281, %v2280
  %v2312 = vpack.c.b16 %v2283, %v2282
  %v2313 = vpack.c.b16 %v2285, %v2284
  %v2314 = vpack.c.b16 %v2287, %v2286
  %v2315 = vpack.c.b16 %v2289, %v2288
  %2342 = vst [vmem:[#allocation2] sm:$0xff] %v2290
  %2343 = vst [vmem:[#allocation2 + $0x8] sm:$0xff] %v2291
  %2344 = vst [vmem:[#allocation2 + $0x10] sm:$0xff] %v2292
  %2345 = vst [vmem:[#allocation2 + $0x18] sm:$0xff] %v2293
  %2346 = vst [vmem:[#allocation2 + $0x20] sm:$0xff] %v2294
  %2347 = vst [vmem:[#allocation2 + $0x28] sm:$0xff] %v2295
  %2348 = vst [vmem:[#allocation2 + $0x30] sm:$0xff] %v2296
  %2349 = vst [vmem:[#allocation2 + $0x38] sm:$0xff] %v2297
  %2350 = vst [vmem:[#allocation2 + $0x40] sm:$0xff] %v2298
  %2351 = vst [vmem:[#allocation2 + $0x48] sm:$0xff] %v2299
  %2352 = vst [vmem:[#allocation2 + $0x50] sm:$0xff] %v2300
  %2353 = vst [vmem:[#allocation2 + $0x58] sm:$0xff] %v2301
  %2354 = vst [vmem:[#allocation2 + $0x60] sm:$0xff] %v2302
  %2355 = vst [vmem:[#allocation2 + $0x68] sm:$0xff] %v2303
  %2356 = vst [vmem:[#allocation2 + $0x70] sm:$0xff] %v2304
  %2357 = vst [vmem:[#allocation2 + $0x78] sm:$0xff] %v2305
  %2358 = vst [vmem:[#allocation2 + $0x80] sm:$0xff] %v2306
  %2359 = vst [vmem:[#allocation2 + $0x88] sm:$0xff] %v2307
  %2360 = vst [vmem:[#allocation2 + $0x90] sm:$0xff] %v2308
  %2361 = vst [vmem:[#allocation2 + $0x98] sm:$0xff] %v2309
  %2362 = vst [vmem:[#allocation2 + $0xa0] sm:$0xff] %v2310
  %2363 = vst [vmem:[#allocation2 + $0xa8] sm:$0xff] %v2311
  %2364 = vst [vmem:[#allocation2 + $0xb0] sm:$0xff] %v2312
  %2365 = vst [vmem:[#allocation2 + $0xb8] sm:$0xff] %v2313
  %2366 = vst [vmem:[#allocation2 + $0xc0] sm:$0xff] %v2314
  %2367 = vst [vmem:[#allocation2 + $0xc8] sm:$0xff] %v2315
  %v2368 = vld [vmem:[#allocation2] sm:$0xff]
  %v2369 = vld [vmem:[#allocation2 + $0x8] sm:$0xff]
  %v2370 = vld [vmem:[#allocation2 + $0x10] sm:$0xff]
  %v2371 = vld [vmem:[#allocation2 + $0x18] sm:$0xff]
  %v2372 = vld [vmem:[#allocation2 + $0x20] sm:$0xff]
  %v2373 = vld [vmem:[#allocation2 + $0x28] sm:$0xff]
  %v2374 = vld [vmem:[#allocation2 + $0x30] sm:$0xff]
  %v2375 = vld [vmem:[#allocation2 + $0x38] sm:$0xff]
  %v2376 = vld [vmem:[#allocation2 + $0x40] sm:$0xff]
  %v2377 = vld [vmem:[#allocation2 + $0x48] sm:$0xff]
  %v2378 = vld [vmem:[#allocation2 + $0x50] sm:$0xff]
  %v2379 = vld [vmem:[#allocation2 + $0x58] sm:$0xff]
  %v2380 = vld [vmem:[#allocation2 + $0x60] sm:$0xff]
  %v2381 = vld [vmem:[#allocation2 + $0x68] sm:$0xff]
  %v2382 = vld [vmem:[#allocation2 + $0x70] sm:$0xff]
  %v2383 = vld [vmem:[#allocation2 + $0x78] sm:$0xff]
  %v2384 = vld [vmem:[#allocation2 + $0x80] sm:$0xff]
  %v2385 = vld [vmem:[#allocation2 + $0x88] sm:$0xff]
  %v2386 = vld [vmem:[%s3] sm:$0xff]
  %v2387 = vld [vmem:[%s3 + $0x8] sm:$0xff]
  %v2388 = vld [vmem:[%s3 + $0x10] sm:$0xff]
  %v2389 = vld [vmem:[%s3 + $0x18] sm:$0xff]
  %v2390 = vld [vmem:[%s3 + $0x20] sm:$0xff]
  %v2391 = vld [vmem:[%s3 + $0x28] sm:$0xff]
  %v2392 = vld [vmem:[%s3 + $0x30] sm:$0xff]
  %v2393 = vld [vmem:[%s3 + $0x38] sm:$0xff]
  %v2394 = vld [vmem:[%s3 + $0x40] sm:$0xff]
  %v2395 = vld [vmem:[%s3 + $0x48] sm:$0xff]
  %v2396 = vld [vmem:[%s3 + $0x50] sm:$0xff]
  %v2397 = vld [vmem:[%s3 + $0x58] sm:$0xff]
  %v2398 = vld [vmem:[%s3 + $0x60] sm:$0xff]
  %v2399 = vld [vmem:[%s3 + $0x68] sm:$0xff]
  %v2400 = vld [vmem:[%s3 + $0x70] sm:$0xff]
  %v2401 = vld [vmem:[%s3 + $0x78] sm:$0xff]
  %v2402 = vld [vmem:[%s3 + $0x80] sm:$0xff]
  %v2403 = vld [vmem:[%s3 + $0x88] sm:$0xff]
  %v2404 = vld [vmem:[%s3 + $0x90] sm:$0xff]
  %v2405 = vld [vmem:[%s3 + $0x98] sm:$0xff]
  %v2406 = vld [vmem:[%s3 + $0xa0] sm:$0xff]
  %v2407 = vld [vmem:[%s3 + $0xa8] sm:$0xff]
  %v2408 = vld [vmem:[%s3 + $0xb0] sm:$0xff]
  %v2409 = vld [vmem:[%s3 + $0xb8] sm:$0xff]
  %v2410 = vld [vmem:[%s3 + $0xc0] sm:$0xff]
  %v2411 = vld [vmem:[%s3 + $0xc8] sm:$0xff]
  %v2412 = vld [vmem:[%s3 + $0xd0] sm:$0xff]
  %v2413 = vld [vmem:[%s3 + $0xd8] sm:$0xff]
  %v2414 = vld [vmem:[%s3 + $0xe0] sm:$0xff]
  %v2415 = vld [vmem:[%s3 + $0xe8] sm:$0xff]
  %v2416 = vld [vmem:[%s3 + $0xf0] sm:$0xff]
  %v2417 = vld [vmem:[%s3 + $0xf8] sm:$0xff]
  %v2418 = vld [vmem:[%s3 + $0x100] sm:$0xff]
  %v2419 = vld [vmem:[%s3 + $0x108] sm:$0xff]
  %v2420 = vld [vmem:[%s3 + $0x110] sm:$0xff]
  %v2421 = vld [vmem:[%s3 + $0x118] sm:$0xff]
  %v2422 = vld [vmem:[%s3 + $0x120] sm:$0xff]
  %v2423 = vld [vmem:[%s3 + $0x128] sm:$0xff]
  %v2424 = vld [vmem:[%s3 + $0x130] sm:$0xff]
  %v2425 = vld [vmem:[%s3 + $0x138] sm:$0xff]
  %v2426 = vld [vmem:[%s3 + $0x140] sm:$0xff]
  %v2427 = vld [vmem:[%s3 + $0x148] sm:$0xff]
  %v2428 = vld [vmem:[%s3 + $0x150] sm:$0xff]
  %v2429 = vld [vmem:[%s3 + $0x158] sm:$0xff]
  %v2430 = vld [vmem:[%s3 + $0x160] sm:$0xff]
  %v2431 = vld [vmem:[%s3 + $0x168] sm:$0xff]
  %v2432 = vld [vmem:[%s3 + $0x170] sm:$0xff]
  %v2433 = vld [vmem:[%s3 + $0x178] sm:$0xff]
  %v2434 = vld [vmem:[%s3 + $0x180] sm:$0xff]
  %v2435 = vld [vmem:[%s3 + $0x188] sm:$0xff]
  %v2436 = vld [vmem:[%s3 + $0x190] sm:$0xff]
  %v2437 = vld [vmem:[%s3 + $0x198] sm:$0xff]
  %v2438 = vld [vmem:[%s3 + $0x1a0] sm:$0xff]
  %v2439 = vld [vmem:[%s3 + $0x1a8] sm:$0xff]
  %v2440 = vld [vmem:[%s3 + $0x1b0] sm:$0xff]
  %v2441 = vld [vmem:[%s3 + $0x1b8] sm:$0xff]
  %v2442 = vld [vmem:[%s3 + $0x1c0] sm:$0xff]
  %v2443 = vld [vmem:[%s3 + $0x1c8] sm:$0xff]
  %v2444 = vld [vmem:[%s3 + $0x1d0] sm:$0xff]
  %v2445 = vld [vmem:[%s3 + $0x1d8] sm:$0xff]
  %v2446 = vld [vmem:[%s3 + $0x1e0] sm:$0xff]
  %v2447 = vld [vmem:[%s3 + $0x1e8] sm:$0xff]
  %v2448 = vld [vmem:[%s3 + $0x1f0] sm:$0xff]
  %v2449 = vld [vmem:[%s3 + $0x1f8] sm:$0xff]
  %v2450 = vld [vmem:[%s3 + $0x200] sm:$0xff]
  %v2451 = vld [vmem:[%s3 + $0x208] sm:$0xff]
  %v2452 = vld [vmem:[%s3 + $0x210] sm:$0xff]
  %v2453 = vld [vmem:[%s3 + $0x218] sm:$0xff]
  %v2454 = vld [vmem:[%s3 + $0x220] sm:$0xff]
  %v2455 = vld [vmem:[%s3 + $0x228] sm:$0xff]
  %v2456 = vld [vmem:[%s3 + $0x230] sm:$0xff]
  %v2457 = vld [vmem:[%s3 + $0x238] sm:$0xff]
  %v2458 = vld [vmem:[%s3 + $0x240] sm:$0xff]
  %v2459 = vld [vmem:[%s3 + $0x248] sm:$0xff]
  %v2460 = vld [vmem:[%s3 + $0x250] sm:$0xff]
  %v2461 = vld [vmem:[%s3 + $0x258] sm:$0xff]
  %v2462 = vld [vmem:[%s3 + $0x260] sm:$0xff]
  %v2463 = vld [vmem:[%s3 + $0x268] sm:$0xff]
  %v2464 = vld [vmem:[%s3 + $0x270] sm:$0xff]
  %v2465 = vld [vmem:[%s3 + $0x278] sm:$0xff]
  %v2466 = vld [vmem:[%s3 + $0x280] sm:$0xff]
  %v2467 = vld [vmem:[%s3 + $0x288] sm:$0xff]
  %v2468 = vld [vmem:[%s3 + $0x290] sm:$0xff]
  %v2469 = vld [vmem:[%s3 + $0x298] sm:$0xff]
  %v2470 = vld [vmem:[%s3 + $0x2a0] sm:$0xff]
  %v2471 = vld [vmem:[%s3 + $0x2a8] sm:$0xff]
  %v2472 = vld [vmem:[%s3 + $0x2b0] sm:$0xff]
  %v2473 = vld [vmem:[%s3 + $0x2b8] sm:$0xff]
  %v2474 = vld [vmem:[%s3 + $0x2c0] sm:$0xff]
  %v2475 = vld [vmem:[%s3 + $0x2c8] sm:$0xff]
  %v2476 = vld [vmem:[%s3 + $0x2d0] sm:$0xff]
  %v2477 = vld [vmem:[%s3 + $0x2d8] sm:$0xff]
  %v2478 = vld [vmem:[%s3 + $0x2e0] sm:$0xff]
  %v2479 = vld [vmem:[%s3 + $0x2e8] sm:$0xff]
  %v2480 = vld [vmem:[%s3 + $0x2f0] sm:$0xff]
  %v2481 = vld [vmem:[%s3 + $0x2f8] sm:$0xff]
  %v2482 = vld [vmem:[%s3 + $0x300] sm:$0xff]
  %v2483 = vld [vmem:[%s3 + $0x308] sm:$0xff]
  %v2484 = vld [vmem:[%s3 + $0x310] sm:$0xff]
  %v2485 = vld [vmem:[%s3 + $0x318] sm:$0xff]
  %v2486 = vld [vmem:[%s3 + $0x320] sm:$0xff]
  %v2487 = vld [vmem:[%s3 + $0x328] sm:$0xff]
  %v2488 = vld [vmem:[%s3 + $0x330] sm:$0xff]
  %v2489 = vld [vmem:[%s3 + $0x338] sm:$0xff]
  %v2490 = vld [vmem:[%s3 + $0x340] sm:$0xff]
  %v2491 = vld [vmem:[%s3 + $0x348] sm:$0xff]
  %v2492 = vld [vmem:[%s3 + $0x350] sm:$0xff]
  %v2493 = vld [vmem:[%s3 + $0x358] sm:$0xff]
  %v2494 = vld [vmem:[%s3 + $0x360] sm:$0xff]
  %v2495 = vld [vmem:[%s3 + $0x368] sm:$0xff]
  %v2496 = vld [vmem:[%s3 + $0x370] sm:$0xff]
  %v2497 = vld [vmem:[%s3 + $0x378] sm:$0xff]
  %v2498 = vld [vmem:[%s3 + $0x380] sm:$0xff]
  %v2499 = vld [vmem:[%s3 + $0x388] sm:$0xff]
  %v2500 = vld [vmem:[%s3 + $0x390] sm:$0xff]
  %v2501 = vld [vmem:[%s3 + $0x398] sm:$0xff]
  %v2502 = vld [vmem:[%s3 + $0x3a0] sm:$0xff]
  %v2503 = vld [vmem:[%s3 + $0x3a8] sm:$0xff]
  %v2504 = vld [vmem:[%s3 + $0x3b0] sm:$0xff]
  %v2505 = vld [vmem:[%s3 + $0x3b8] sm:$0xff]
  %v2506 = vld [vmem:[%s3 + $0x3c0] sm:$0xff]
  %v2507 = vld [vmem:[%s3 + $0x3c8] sm:$0xff]
  %v2508 = vld [vmem:[%s3 + $0x3d0] sm:$0xff]
  %v2509 = vld [vmem:[%s3 + $0x3d8] sm:$0xff]
  %v2510 = vld [vmem:[%s3 + $0x3e0] sm:$0xff]
  %v2511 = vld [vmem:[%s3 + $0x3e8] sm:$0xff]
  %v2512 = vld [vmem:[%s3 + $0x3f0] sm:$0xff]
  %v2513 = vld [vmem:[%s3 + $0x3f8] sm:$0xff]
  %v2514 = vld [vmem:[%s3 + $0x400] sm:$0xff]
  %v2515 = vld [vmem:[%s3 + $0x408] sm:$0xff]
  %v2516 = vld [vmem:[%s3 + $0x410] sm:$0xff]
  %v2517 = vld [vmem:[%s3 + $0x418] sm:$0xff]
  %v2518 = vld [vmem:[%s3 + $0x420] sm:$0xff]
  %v2519 = vld [vmem:[%s3 + $0x428] sm:$0xff]
  %v2520 = vld [vmem:[%s3 + $0x430] sm:$0xff]
  %v2521 = vld [vmem:[%s3 + $0x438] sm:$0xff]
  %v2522 = vld [vmem:[%s3 + $0x440] sm:$0xff]
  %v2523 = vld [vmem:[%s3 + $0x448] sm:$0xff]
  %v2524 = vld [vmem:[%s3 + $0x450] sm:$0xff]
  %v2525 = vld [vmem:[%s3 + $0x458] sm:$0xff]
  %v2526 = vld [vmem:[%s3 + $0x460] sm:$0xff]
  %v2527 = vld [vmem:[%s3 + $0x468] sm:$0xff]
  %v2528 = vld [vmem:[%s3 + $0x470] sm:$0xff]
  %v2529 = vld [vmem:[%s3 + $0x478] sm:$0xff]
  %v2530 = vld [vmem:[%s3 + $0x480] sm:$0xff]
  %v2531 = vld [vmem:[%s3 + $0x488] sm:$0xff]
  %v2532 = vld [vmem:[%s3 + $0x490] sm:$0xff]
  %v2533 = vld [vmem:[%s3 + $0x498] sm:$0xff]
  %v2534 = vld [vmem:[%s3 + $0x4a0] sm:$0xff]
  %v2535 = vld [vmem:[%s3 + $0x4a8] sm:$0xff]
  %v2536 = vld [vmem:[%s3 + $0x4b0] sm:$0xff]
  %v2537 = vld [vmem:[%s3 + $0x4b8] sm:$0xff]
  %v2538 = vld [vmem:[%s3 + $0x4c0] sm:$0xff]
  %v2539 = vld [vmem:[%s3 + $0x4c8] sm:$0xff]
  %v2540 = vld [vmem:[%s3 + $0x4d0] sm:$0xff]
  %v2541 = vld [vmem:[%s3 + $0x4d8] sm:$0xff]
  %v2542 = vld [vmem:[%s3 + $0x4e0] sm:$0xff]
  %v2543 = vld [vmem:[%s3 + $0x4e8] sm:$0xff]
  %v2544 = vld [vmem:[%s3 + $0x4f0] sm:$0xff]
  %v2545 = vld [vmem:[%s3 + $0x4f8] sm:$0xff]
  %v2546 = vld [vmem:[%s3 + $0x500] sm:$0xff]
  %v2547 = vld [vmem:[%s3 + $0x508] sm:$0xff]
  %v2548 = vld [vmem:[%s3 + $0x510] sm:$0xff]
  %v2549 = vld [vmem:[%s3 + $0x518] sm:$0xff]
  %v2550 = vld [vmem:[%s3 + $0x520] sm:$0xff]
  %v2551 = vld [vmem:[%s3 + $0x528] sm:$0xff]
  %v2552 = vld [vmem:[%s3 + $0x530] sm:$0xff]
  %v2553 = vld [vmem:[%s3 + $0x538] sm:$0xff]
  %v2554 = vld [vmem:[%s3 + $0x540] sm:$0xff]
  %v2555 = vld [vmem:[%s3 + $0x548] sm:$0xff]
  %v2556 = vld [vmem:[%s3 + $0x550] sm:$0xff]
  %v2557 = vld [vmem:[%s3 + $0x558] sm:$0xff]
  %v2558 = vld [vmem:[%s3 + $0x560] sm:$0xff]
  %v2559 = vld [vmem:[%s3 + $0x568] sm:$0xff]
  %v2560 = vld [vmem:[%s3 + $0x570] sm:$0xff]
  %v2561 = vld [vmem:[%s3 + $0x578] sm:$0xff]
  %v2562 = vld [vmem:[%s3 + $0x580] sm:$0xff]
  %v2563 = vld [vmem:[%s3 + $0x588] sm:$0xff]
  %v2564 = vld [vmem:[%s3 + $0x590] sm:$0xff]
  %v2565 = vld [vmem:[%s3 + $0x598] sm:$0xff]
  %v2566 = vld [vmem:[%s3 + $0x5a0] sm:$0xff]
  %v2567 = vld [vmem:[%s3 + $0x5a8] sm:$0xff]
  %v2568 = vld [vmem:[%s3 + $0x5b0] sm:$0xff]
  %v2569 = vld [vmem:[%s3 + $0x5b8] sm:$0xff]
  %v2570 = vld [vmem:[%s3 + $0x5c0] sm:$0xff]
  %v2571 = vld [vmem:[%s3 + $0x5c8] sm:$0xff]
  %v2572 = vld [vmem:[%s3 + $0x5d0] sm:$0xff]
  %v2573 = vld [vmem:[%s3 + $0x5d8] sm:$0xff]
  %v2574 = vld [vmem:[%s3 + $0x5e0] sm:$0xff]
  %v2575 = vld [vmem:[%s3 + $0x5e8] sm:$0xff]
  %v2576 = vld [vmem:[%s3 + $0x5f0] sm:$0xff]
  %v2577 = vld [vmem:[%s3 + $0x5f8] sm:$0xff]
  %v2578 = vld [vmem:[#allocation2 + $0x90] sm:$0xff]
  %v2579 = vld [vmem:[#allocation2 + $0x98] sm:$0xff]
  %s2580 = scalar_lea.vmem %s3, 1536
  %v2581 = vld [vmem:[%s2580] sm:$0xff]
  %v2582 = vld [vmem:[%s2580 + $0x8] sm:$0xff]
  %v2583 = vld [vmem:[%s2580 + $0x10] sm:$0xff]
  %v2584 = vld [vmem:[%s2580 + $0x18] sm:$0xff]
  %v2585 = vld [vmem:[%s2580 + $0x20] sm:$0xff]
  %v2586 = vld [vmem:[%s2580 + $0x28] sm:$0xff]
  %v2587 = vld [vmem:[%s2580 + $0x30] sm:$0xff]
  %v2588 = vld [vmem:[%s2580 + $0x38] sm:$0xff]
  %v2589 = vld [vmem:[%s2580 + $0x40] sm:$0xff]
  %v2590 = vld [vmem:[%s2580 + $0x48] sm:$0xff]
  %v2591 = vld [vmem:[%s2580 + $0x50] sm:$0xff]
  %v2592 = vld [vmem:[%s2580 + $0x58] sm:$0xff]
  %v2593 = vld [vmem:[%s2580 + $0x60] sm:$0xff]
  %v2594 = vld [vmem:[%s2580 + $0x68] sm:$0xff]
  %v2595 = vld [vmem:[%s2580 + $0x70] sm:$0xff]
  %v2596 = vld [vmem:[%s2580 + $0x78] sm:$0xff]
  %v2597 = vld [vmem:[%s2580 + $0x80] sm:$0xff]
  %v2598 = vld [vmem:[%s2580 + $0x88] sm:$0xff]
  %v2599 = vld [vmem:[%s2580 + $0x90] sm:$0xff]
  %v2600 = vld [vmem:[%s2580 + $0x98] sm:$0xff]
  %v2601 = vld [vmem:[%s2580 + $0xa0] sm:$0xff]
  %v2602 = vld [vmem:[%s2580 + $0xa8] sm:$0xff]
  %v2603 = vld [vmem:[%s2580 + $0xb0] sm:$0xff]
  %v2604 = vld [vmem:[%s2580 + $0xb8] sm:$0xff]
  %v2605 = vld [vmem:[%s2580 + $0xc0] sm:$0xff]
  %v2606 = vld [vmem:[%s2580 + $0xc8] sm:$0xff]
  %v2607 = vld [vmem:[%s2580 + $0xd0] sm:$0xff]
  %v2608 = vld [vmem:[%s2580 + $0xd8] sm:$0xff]
  %v2609 = vld [vmem:[%s2580 + $0xe0] sm:$0xff]
  %v2610 = vld [vmem:[%s2580 + $0xe8] sm:$0xff]
  %v2611 = vld [vmem:[%s2580 + $0xf0] sm:$0xff]
  %v2612 = vld [vmem:[%s2580 + $0xf8] sm:$0xff]
  %v2613 = vld [vmem:[%s2580 + $0x100] sm:$0xff]
  %v2614 = vld [vmem:[%s2580 + $0x108] sm:$0xff]
  %v2615 = vld [vmem:[%s2580 + $0x110] sm:$0xff]
  %v2616 = vld [vmem:[%s2580 + $0x118] sm:$0xff]
  %v2617 = vld [vmem:[%s2580 + $0x120] sm:$0xff]
  %v2618 = vld [vmem:[%s2580 + $0x128] sm:$0xff]
  %v2619 = vld [vmem:[%s2580 + $0x130] sm:$0xff]
  %v2620 = vld [vmem:[%s2580 + $0x138] sm:$0xff]
  %v2621 = vld [vmem:[%s2580 + $0x140] sm:$0xff]
  %v2622 = vld [vmem:[%s2580 + $0x148] sm:$0xff]
  %v2623 = vld [vmem:[%s2580 + $0x150] sm:$0xff]
  %v2624 = vld [vmem:[%s2580 + $0x158] sm:$0xff]
  %v2625 = vld [vmem:[%s2580 + $0x160] sm:$0xff]
  %v2626 = vld [vmem:[%s2580 + $0x168] sm:$0xff]
  %v2627 = vld [vmem:[%s2580 + $0x170] sm:$0xff]
  %v2628 = vld [vmem:[%s2580 + $0x178] sm:$0xff]
  %v2629 = vld [vmem:[%s2580 + $0x180] sm:$0xff]
  %v2630 = vld [vmem:[%s2580 + $0x188] sm:$0xff]
  %v2631 = vld [vmem:[%s2580 + $0x190] sm:$0xff]
  %v2632 = vld [vmem:[%s2580 + $0x198] sm:$0xff]
  %v2633 = vld [vmem:[%s2580 + $0x1a0] sm:$0xff]
  %v2634 = vld [vmem:[%s2580 + $0x1a8] sm:$0xff]
  %v2635 = vld [vmem:[%s2580 + $0x1b0] sm:$0xff]
  %v2636 = vld [vmem:[%s2580 + $0x1b8] sm:$0xff]
  %v2637 = vld [vmem:[%s2580 + $0x1c0] sm:$0xff]
  %v2638 = vld [vmem:[%s2580 + $0x1c8] sm:$0xff]
  %v2639 = vld [vmem:[%s2580 + $0x1d0] sm:$0xff]
  %v2640 = vld [vmem:[%s2580 + $0x1d8] sm:$0xff]
  %v2641 = vld [vmem:[%s2580 + $0x1e0] sm:$0xff]
  %v2642 = vld [vmem:[%s2580 + $0x1e8] sm:$0xff]
  %v2643 = vld [vmem:[%s2580 + $0x1f0] sm:$0xff]
  %v2644 = vld [vmem:[%s2580 + $0x1f8] sm:$0xff]
  %v2645 = vld [vmem:[%s2580 + $0x200] sm:$0xff]
  %v2646 = vld [vmem:[%s2580 + $0x208] sm:$0xff]
  %v2647 = vld [vmem:[%s2580 + $0x210] sm:$0xff]
  %v2648 = vld [vmem:[%s2580 + $0x218] sm:$0xff]
  %v2649 = vld [vmem:[%s2580 + $0x220] sm:$0xff]
  %v2650 = vld [vmem:[%s2580 + $0x228] sm:$0xff]
  %v2651 = vld [vmem:[%s2580 + $0x230] sm:$0xff]
  %v2652 = vld [vmem:[%s2580 + $0x238] sm:$0xff]
  %v2653 = vld [vmem:[%s2580 + $0x240] sm:$0xff]
  %v2654 = vld [vmem:[%s2580 + $0x248] sm:$0xff]
  %v2655 = vld [vmem:[%s2580 + $0x250] sm:$0xff]
  %v2656 = vld [vmem:[%s2580 + $0x258] sm:$0xff]
  %v2657 = vld [vmem:[%s2580 + $0x260] sm:$0xff]
  %v2658 = vld [vmem:[%s2580 + $0x268] sm:$0xff]
  %v2659 = vld [vmem:[%s2580 + $0x270] sm:$0xff]
  %v2660 = vld [vmem:[%s2580 + $0x278] sm:$0xff]
  %v2661 = vld [vmem:[%s2580 + $0x280] sm:$0xff]
  %v2662 = vld [vmem:[%s2580 + $0x288] sm:$0xff]
  %v2663 = vld [vmem:[%s2580 + $0x290] sm:$0xff]
  %v2664 = vld [vmem:[%s2580 + $0x298] sm:$0xff]
  %v2665 = vld [vmem:[%s2580 + $0x2a0] sm:$0xff]
  %v2666 = vld [vmem:[%s2580 + $0x2a8] sm:$0xff]
  %v2667 = vld [vmem:[%s2580 + $0x2b0] sm:$0xff]
  %v2668 = vld [vmem:[%s2580 + $0x2b8] sm:$0xff]
  %v2669 = vld [vmem:[%s2580 + $0x2c0] sm:$0xff]
  %v2670 = vld [vmem:[%s2580 + $0x2c8] sm:$0xff]
  %v2671 = vld [vmem:[%s2580 + $0x2d0] sm:$0xff]
  %v2672 = vld [vmem:[%s2580 + $0x2d8] sm:$0xff]
  %v2673 = vld [vmem:[%s2580 + $0x2e0] sm:$0xff]
  %v2674 = vld [vmem:[%s2580 + $0x2e8] sm:$0xff]
  %v2675 = vld [vmem:[%s2580 + $0x2f0] sm:$0xff]
  %v2676 = vld [vmem:[%s2580 + $0x2f8] sm:$0xff]
  %v2677 = vld [vmem:[%s2580 + $0x300] sm:$0xff]
  %v2678 = vld [vmem:[%s2580 + $0x308] sm:$0xff]
  %v2679 = vld [vmem:[%s2580 + $0x310] sm:$0xff]
  %v2680 = vld [vmem:[%s2580 + $0x318] sm:$0xff]
  %v2681 = vld [vmem:[%s2580 + $0x320] sm:$0xff]
  %v2682 = vld [vmem:[%s2580 + $0x328] sm:$0xff]
  %v2683 = vld [vmem:[%s2580 + $0x330] sm:$0xff]
  %v2684 = vld [vmem:[%s2580 + $0x338] sm:$0xff]
  %v2685 = vld [vmem:[%s2580 + $0x340] sm:$0xff]
  %v2686 = vld [vmem:[%s2580 + $0x348] sm:$0xff]
  %v2687 = vld [vmem:[%s2580 + $0x350] sm:$0xff]
  %v2688 = vld [vmem:[%s2580 + $0x358] sm:$0xff]
  %v2689 = vld [vmem:[%s2580 + $0x360] sm:$0xff]
  %v2690 = vld [vmem:[%s2580 + $0x368] sm:$0xff]
  %v2691 = vld [vmem:[%s2580 + $0x370] sm:$0xff]
  %v2692 = vld [vmem:[%s2580 + $0x378] sm:$0xff]
  %v2693 = vld [vmem:[%s2580 + $0x380] sm:$0xff]
  %v2694 = vld [vmem:[%s2580 + $0x388] sm:$0xff]
  %v2695 = vld [vmem:[%s2580 + $0x390] sm:$0xff]
  %v2696 = vld [vmem:[%s2580 + $0x398] sm:$0xff]
  %v2697 = vld [vmem:[%s2580 + $0x3a0] sm:$0xff]
  %v2698 = vld [vmem:[%s2580 + $0x3a8] sm:$0xff]
  %v2699 = vld [vmem:[%s2580 + $0x3b0] sm:$0xff]
  %v2700 = vld [vmem:[%s2580 + $0x3b8] sm:$0xff]
  %v2701 = vld [vmem:[%s2580 + $0x3c0] sm:$0xff]
  %v2702 = vld [vmem:[%s2580 + $0x3c8] sm:$0xff]
  %v2703 = vld [vmem:[%s2580 + $0x3d0] sm:$0xff]
  %v2704 = vld [vmem:[%s2580 + $0x3d8] sm:$0xff]
  %v2705 = vld [vmem:[%s2580 + $0x3e0] sm:$0xff]
  %v2706 = vld [vmem:[%s2580 + $0x3e8] sm:$0xff]
  %v2707 = vld [vmem:[%s2580 + $0x3f0] sm:$0xff]
  %v2708 = vld [vmem:[%s2580 + $0x3f8] sm:$0xff]
  %v2709 = vld [vmem:[%s2580 + $0x400] sm:$0xff]
  %v2710 = vld [vmem:[%s2580 + $0x408] sm:$0xff]
  %v2711 = vld [vmem:[%s2580 + $0x410] sm:$0xff]
  %v2712 = vld [vmem:[%s2580 + $0x418] sm:$0xff]
  %v2713 = vld [vmem:[%s2580 + $0x420] sm:$0xff]
  %v2714 = vld [vmem:[%s2580 + $0x428] sm:$0xff]
  %v2715 = vld [vmem:[%s2580 + $0x430] sm:$0xff]
  %v2716 = vld [vmem:[%s2580 + $0x438] sm:$0xff]
  %v2717 = vld [vmem:[%s2580 + $0x440] sm:$0xff]
  %v2718 = vld [vmem:[%s2580 + $0x448] sm:$0xff]
  %v2719 = vld [vmem:[%s2580 + $0x450] sm:$0xff]
  %v2720 = vld [vmem:[%s2580 + $0x458] sm:$0xff]
  %v2721 = vld [vmem:[%s2580 + $0x460] sm:$0xff]
  %v2722 = vld [vmem:[%s2580 + $0x468] sm:$0xff]
  %v2723 = vld [vmem:[%s2580 + $0x470] sm:$0xff]
  %v2724 = vld [vmem:[%s2580 + $0x478] sm:$0xff]
  %v2725 = vld [vmem:[%s2580 + $0x480] sm:$0xff]
  %v2726 = vld [vmem:[%s2580 + $0x488] sm:$0xff]
  %v2727 = vld [vmem:[%s2580 + $0x490] sm:$0xff]
  %v2728 = vld [vmem:[%s2580 + $0x498] sm:$0xff]
  %v2729 = vld [vmem:[%s2580 + $0x4a0] sm:$0xff]
  %v2730 = vld [vmem:[%s2580 + $0x4a8] sm:$0xff]
  %v2731 = vld [vmem:[%s2580 + $0x4b0] sm:$0xff]
  %v2732 = vld [vmem:[%s2580 + $0x4b8] sm:$0xff]
  %v2733 = vld [vmem:[%s2580 + $0x4c0] sm:$0xff]
  %v2734 = vld [vmem:[%s2580 + $0x4c8] sm:$0xff]
  %v2735 = vld [vmem:[%s2580 + $0x4d0] sm:$0xff]
  %v2736 = vld [vmem:[%s2580 + $0x4d8] sm:$0xff]
  %v2737 = vld [vmem:[%s2580 + $0x4e0] sm:$0xff]
  %v2738 = vld [vmem:[%s2580 + $0x4e8] sm:$0xff]
  %v2739 = vld [vmem:[%s2580 + $0x4f0] sm:$0xff]
  %v2740 = vld [vmem:[%s2580 + $0x4f8] sm:$0xff]
  %v2741 = vld [vmem:[%s2580 + $0x500] sm:$0xff]
  %v2742 = vld [vmem:[%s2580 + $0x508] sm:$0xff]
  %v2743 = vld [vmem:[%s2580 + $0x510] sm:$0xff]
  %v2744 = vld [vmem:[%s2580 + $0x518] sm:$0xff]
  %v2745 = vld [vmem:[%s2580 + $0x520] sm:$0xff]
  %v2746 = vld [vmem:[%s2580 + $0x528] sm:$0xff]
  %v2747 = vld [vmem:[%s2580 + $0x530] sm:$0xff]
  %v2748 = vld [vmem:[%s2580 + $0x538] sm:$0xff]
  %v2749 = vld [vmem:[%s2580 + $0x540] sm:$0xff]
  %v2750 = vld [vmem:[%s2580 + $0x548] sm:$0xff]
  %v2751 = vld [vmem:[%s2580 + $0x550] sm:$0xff]
  %v2752 = vld [vmem:[%s2580 + $0x558] sm:$0xff]
  %v2753 = vld [vmem:[%s2580 + $0x560] sm:$0xff]
  %v2754 = vld [vmem:[%s2580 + $0x568] sm:$0xff]
  %v2755 = vld [vmem:[%s2580 + $0x570] sm:$0xff]
  %v2756 = vld [vmem:[%s2580 + $0x578] sm:$0xff]
  %v2757 = vld [vmem:[%s2580 + $0x580] sm:$0xff]
  %v2758 = vld [vmem:[%s2580 + $0x588] sm:$0xff]
  %v2759 = vld [vmem:[%s2580 + $0x590] sm:$0xff]
  %v2760 = vld [vmem:[%s2580 + $0x598] sm:$0xff]
  %v2761 = vld [vmem:[%s2580 + $0x5a0] sm:$0xff]
  %v2762 = vld [vmem:[%s2580 + $0x5a8] sm:$0xff]
  %v2763 = vld [vmem:[%s2580 + $0x5b0] sm:$0xff]
  %v2764 = vld [vmem:[%s2580 + $0x5b8] sm:$0xff]
  %v2765 = vld [vmem:[%s2580 + $0x5c0] sm:$0xff]
  %v2766 = vld [vmem:[%s2580 + $0x5c8] sm:$0xff]
  %v2767 = vld [vmem:[%s2580 + $0x5d0] sm:$0xff]
  %v2768 = vld [vmem:[%s2580 + $0x5d8] sm:$0xff]
  %v2769 = vld [vmem:[%s2580 + $0x5e0] sm:$0xff]
  %v2770 = vld [vmem:[%s2580 + $0x5e8] sm:$0xff]
  %v2771 = vld [vmem:[%s2580 + $0x5f0] sm:$0xff]
  %v2772 = vld [vmem:[%s2580 + $0x5f8] sm:$0xff]
  %v2791 = vunpack.c.l.b16 %v2370
  %v2792 = vunpack.c.h.b16 %v2370
  %v2793 = vunpack.c.l.b16 %v2371
  %v2794 = vunpack.c.h.b16 %v2371
  %v2795 = vunpack.c.l.b16 %v2372
  %v2796 = vunpack.c.h.b16 %v2372
  %v2797 = vunpack.c.l.b16 %v2373
  %v2798 = vunpack.c.h.b16 %v2373
  %v2799 = vunpack.c.l.b16 %v2374
  %v2800 = vunpack.c.h.b16 %v2374
  %v2801 = vunpack.c.l.b16 %v2375
  %v2802 = vunpack.c.h.b16 %v2375
  %v2803 = vunpack.c.l.b16 %v2376
  %v2804 = vunpack.c.h.b16 %v2376
  %v2805 = vunpack.c.l.b16 %v2377
  %v2806 = vunpack.c.h.b16 %v2377
  %v2807 = vunpack.c.l.b16 %v2378
  %v2808 = vunpack.c.h.b16 %v2378
  %v2809 = vunpack.c.l.b16 %v2379
  %v2810 = vunpack.c.h.b16 %v2379
  %v2811 = vunpack.c.l.b16 %v2380
  %v2812 = vunpack.c.h.b16 %v2380
  %v2813 = vunpack.c.l.b16 %v2381
  %v2814 = vunpack.c.h.b16 %v2381
  %v2815 = vunpack.c.l.b16 %v2382
  %v2816 = vunpack.c.h.b16 %v2382
  %v2817 = vunpack.c.l.b16 %v2383
  %v2818 = vunpack.c.h.b16 %v2383
  %v2819 = vunpack.c.l.b16 %v2384
  %v2820 = vunpack.c.h.b16 %v2384
  %v2821 = vunpack.c.l.b16 %v2385
  %v2822 = vunpack.c.h.b16 %v2385
  %v2823 = vunpack.c.l.b16 %v2578
  %v2824 = vunpack.c.h.b16 %v2578
  %v2825 = vunpack.c.l.b16 %v2579
  %v2826 = vunpack.c.h.b16 %v2579
  %v2827 = vpack.c.b16 %v2795, %v2791
  %v2828 = vpack.c.b16 %v2796, %v2792
  %v2829 = vpack.c.b16 %v2797, %v2793
  %v2830 = vpack.c.b16 %v2798, %v2794
  %v2831 = vpack.c.b16 %v2803, %v2799
  %v2832 = vpack.c.b16 %v2804, %v2800
  %v2833 = vpack.c.b16 %v2805, %v2801
  %v2834 = vpack.c.b16 %v2806, %v2802
  %v2835 = vpack.c.b16 %v2811, %v2807
  %v2836 = vpack.c.b16 %v2812, %v2808
  %v2837 = vpack.c.b16 %v2813, %v2809
  %v2838 = vpack.c.b16 %v2814, %v2810
  %v2839 = vpack.c.b16 %v2819, %v2815
  %v2840 = vpack.c.b16 %v2820, %v2816
  %v2841 = vpack.c.b16 %v2821, %v2817
  %v2842 = vpack.c.b16 %v2822, %v2818
  %v2843 = vpack.c.b16 %v2823, %v2823
  %v2844 = vpack.c.b16 %v2824, %v2824
  %v2845 = vpack.c.b16 %v2825, %v2825
  %v2846 = vpack.c.b16 %v2826, %v2826
  %v3059 = vunpack.c.l.b16 %v2581
  %v3060 = vunpack.c.h.b16 %v2581
  %v3061 = vunpack.c.l.b16 %v2582
  %v3062 = vunpack.c.h.b16 %v2582
  %v3063 = vunpack.c.l.b16 %v2583
  %v3064 = vunpack.c.h.b16 %v2583
  %v3065 = vunpack.c.l.b16 %v2584
  %v3066 = vunpack.c.h.b16 %v2584
  %v3067 = vunpack.c.l.b16 %v2585
  %v3068 = vunpack.c.h.b16 %v2585
  %v3069 = vunpack.c.l.b16 %v2586
  %v3070 = vunpack.c.h.b16 %v2586
  %v3071 = vunpack.c.l.b16 %v2587
  %v3072 = vunpack.c.h.b16 %v2587
  %v3073 = vunpack.c.l.b16 %v2588
  %v3074 = vunpack.c.h.b16 %v2588
  %v3075 = vunpack.c.l.b16 %v2589
  %v3076 = vunpack.c.h.b16 %v2589
  %v3077 = vunpack.c.l.b16 %v2590
  %v3078 = vunpack.c.h.b16 %v2590
  %v3079 = vunpack.c.l.b16 %v2591
  %v3080 = vunpack.c.h.b16 %v2591
  %v3081 = vunpack.c.l.b16 %v2592
  %v3082 = vunpack.c.h.b16 %v2592
  %v3083 = vunpack.c.l.b16 %v2593
  %v3084 = vunpack.c.h.b16 %v2593
  %v3085 = vunpack.c.l.b16 %v2594
  %v3086 = vunpack.c.h.b16 %v2594
  %v3087 = vunpack.c.l.b16 %v2595
  %v3088 = vunpack.c.h.b16 %v2595
  %v3089 = vunpack.c.l.b16 %v2596
  %v3090 = vunpack.c.h.b16 %v2596
  %v3091 = vunpack.c.l.b16 %v2597
  %v3092 = vunpack.c.h.b16 %v2597
  %v3093 = vunpack.c.l.b16 %v2598
  %v3094 = vunpack.c.h.b16 %v2598
  %v3095 = vunpack.c.l.b16 %v2599
  %v3096 = vunpack.c.h.b16 %v2599
  %v3097 = vunpack.c.l.b16 %v2600
  %v3098 = vunpack.c.h.b16 %v2600
  %v3099 = vunpack.c.l.b16 %v2601
  %v3100 = vunpack.c.h.b16 %v2601
  %v3101 = vunpack.c.l.b16 %v2602
  %v3102 = vunpack.c.h.b16 %v2602
  %v3103 = vunpack.c.l.b16 %v2603
  %v3104 = vunpack.c.h.b16 %v2603
  %v3105 = vunpack.c.l.b16 %v2604
  %v3106 = vunpack.c.h.b16 %v2604
  %v3107 = vunpack.c.l.b16 %v2605
  %v3108 = vunpack.c.h.b16 %v2605
  %v3109 = vunpack.c.l.b16 %v2606
  %v3110 = vunpack.c.h.b16 %v2606
  %v3111 = vunpack.c.l.b16 %v2607
  %v3112 = vunpack.c.h.b16 %v2607
  %v3113 = vunpack.c.l.b16 %v2608
  %v3114 = vunpack.c.h.b16 %v2608
  %v3115 = vunpack.c.l.b16 %v2609
  %v3116 = vunpack.c.h.b16 %v2609
  %v3117 = vunpack.c.l.b16 %v2610
  %v3118 = vunpack.c.h.b16 %v2610
  %v3119 = vunpack.c.l.b16 %v2611
  %v3120 = vunpack.c.h.b16 %v2611
  %v3121 = vunpack.c.l.b16 %v2612
  %v3122 = vunpack.c.h.b16 %v2612
  %v3123 = vunpack.c.l.b16 %v2613
  %v3124 = vunpack.c.h.b16 %v2613
  %v3125 = vunpack.c.l.b16 %v2614
  %v3126 = vunpack.c.h.b16 %v2614
  %v3127 = vunpack.c.l.b16 %v2615
  %v3128 = vunpack.c.h.b16 %v2615
  %v3129 = vunpack.c.l.b16 %v2616
  %v3130 = vunpack.c.h.b16 %v2616
  %v3131 = vunpack.c.l.b16 %v2617
  %v3132 = vunpack.c.h.b16 %v2617
  %v3133 = vunpack.c.l.b16 %v2618
  %v3134 = vunpack.c.h.b16 %v2618
  %v3135 = vunpack.c.l.b16 %v2619
  %v3136 = vunpack.c.h.b16 %v2619
  %v3137 = vunpack.c.l.b16 %v2620
  %v3138 = vunpack.c.h.b16 %v2620
  %v3139 = vunpack.c.l.b16 %v2621
  %v3140 = vunpack.c.h.b16 %v2621
  %v3141 = vunpack.c.l.b16 %v2622
  %v3142 = vunpack.c.h.b16 %v2622
  %v3143 = vunpack.c.l.b16 %v2623
  %v3144 = vunpack.c.h.b16 %v2623
  %v3145 = vunpack.c.l.b16 %v2624
  %v3146 = vunpack.c.h.b16 %v2624
  %v3147 = vunpack.c.l.b16 %v2625
  %v3148 = vunpack.c.h.b16 %v2625
  %v3149 = vunpack.c.l.b16 %v2626
  %v3150 = vunpack.c.h.b16 %v2626
  %v3151 = vunpack.c.l.b16 %v2627
  %v3152 = vunpack.c.h.b16 %v2627
  %v3153 = vunpack.c.l.b16 %v2628
  %v3154 = vunpack.c.h.b16 %v2628
  %v3155 = vunpack.c.l.b16 %v2629
  %v3156 = vunpack.c.h.b16 %v2629
  %v3157 = vunpack.c.l.b16 %v2630
  %v3158 = vunpack.c.h.b16 %v2630
  %v3159 = vunpack.c.l.b16 %v2631
  %v3160 = vunpack.c.h.b16 %v2631
  %v3161 = vunpack.c.l.b16 %v2632
  %v3162 = vunpack.c.h.b16 %v2632
  %v3163 = vunpack.c.l.b16 %v2633
  %v3164 = vunpack.c.h.b16 %v2633
  %v3165 = vunpack.c.l.b16 %v2634
  %v3166 = vunpack.c.h.b16 %v2634
  %v3167 = vunpack.c.l.b16 %v2635
  %v3168 = vunpack.c.h.b16 %v2635
  %v3169 = vunpack.c.l.b16 %v2636
  %v3170 = vunpack.c.h.b16 %v2636
  %v3171 = vunpack.c.l.b16 %v2637
  %v3172 = vunpack.c.h.b16 %v2637
  %v3173 = vunpack.c.l.b16 %v2638
  %v3174 = vunpack.c.h.b16 %v2638
  %v3175 = vunpack.c.l.b16 %v2639
  %v3176 = vunpack.c.h.b16 %v2639
  %v3177 = vunpack.c.l.b16 %v2640
  %v3178 = vunpack.c.h.b16 %v2640
  %v3179 = vunpack.c.l.b16 %v2641
  %v3180 = vunpack.c.h.b16 %v2641
  %v3181 = vunpack.c.l.b16 %v2642
  %v3182 = vunpack.c.h.b16 %v2642
  %v3183 = vunpack.c.l.b16 %v2643
  %v3184 = vunpack.c.h.b16 %v2643
  %v3185 = vunpack.c.l.b16 %v2644
  %v3186 = vunpack.c.h.b16 %v2644
  %v3187 = vunpack.c.l.b16 %v2645
  %v3188 = vunpack.c.h.b16 %v2645
  %v3189 = vunpack.c.l.b16 %v2646
  %v3190 = vunpack.c.h.b16 %v2646
  %v3191 = vunpack.c.l.b16 %v2647
  %v3192 = vunpack.c.h.b16 %v2647
  %v3193 = vunpack.c.l.b16 %v2648
  %v3194 = vunpack.c.h.b16 %v2648
  %v3195 = vunpack.c.l.b16 %v2649
  %v3196 = vunpack.c.h.b16 %v2649
  %v3197 = vunpack.c.l.b16 %v2650
  %v3198 = vunpack.c.h.b16 %v2650
  %v3199 = vunpack.c.l.b16 %v2651
  %v3200 = vunpack.c.h.b16 %v2651
  %v3201 = vunpack.c.l.b16 %v2652
  %v3202 = vunpack.c.h.b16 %v2652
  %v3203 = vunpack.c.l.b16 %v2653
  %v3204 = vunpack.c.h.b16 %v2653
  %v3205 = vunpack.c.l.b16 %v2654
  %v3206 = vunpack.c.h.b16 %v2654
  %v3207 = vunpack.c.l.b16 %v2655
  %v3208 = vunpack.c.h.b16 %v2655
  %v3209 = vunpack.c.l.b16 %v2656
  %v3210 = vunpack.c.h.b16 %v2656
  %v3211 = vunpack.c.l.b16 %v2657
  %v3212 = vunpack.c.h.b16 %v2657
  %v3213 = vunpack.c.l.b16 %v2658
  %v3214 = vunpack.c.h.b16 %v2658
  %v3215 = vunpack.c.l.b16 %v2659
  %v3216 = vunpack.c.h.b16 %v2659
  %v3217 = vunpack.c.l.b16 %v2660
  %v3218 = vunpack.c.h.b16 %v2660
  %v3219 = vunpack.c.l.b16 %v2661
  %v3220 = vunpack.c.h.b16 %v2661
  %v3221 = vunpack.c.l.b16 %v2662
  %v3222 = vunpack.c.h.b16 %v2662
  %v3223 = vunpack.c.l.b16 %v2663
  %v3224 = vunpack.c.h.b16 %v2663
  %v3225 = vunpack.c.l.b16 %v2664
  %v3226 = vunpack.c.h.b16 %v2664
  %v3227 = vunpack.c.l.b16 %v2665
  %v3228 = vunpack.c.h.b16 %v2665
  %v3229 = vunpack.c.l.b16 %v2666
  %v3230 = vunpack.c.h.b16 %v2666
  %v3231 = vunpack.c.l.b16 %v2667
  %v3232 = vunpack.c.h.b16 %v2667
  %v3233 = vunpack.c.l.b16 %v2668
  %v3234 = vunpack.c.h.b16 %v2668
  %v3235 = vunpack.c.l.b16 %v2669
  %v3236 = vunpack.c.h.b16 %v2669
  %v3237 = vunpack.c.l.b16 %v2670
  %v3238 = vunpack.c.h.b16 %v2670
  %v3239 = vunpack.c.l.b16 %v2671
  %v3240 = vunpack.c.h.b16 %v2671
  %v3241 = vunpack.c.l.b16 %v2672
  %v3242 = vunpack.c.h.b16 %v2672
  %v3243 = vunpack.c.l.b16 %v2673
  %v3244 = vunpack.c.h.b16 %v2673
  %v3245 = vunpack.c.l.b16 %v2674
  %v3246 = vunpack.c.h.b16 %v2674
  %v3247 = vunpack.c.l.b16 %v2675
  %v3248 = vunpack.c.h.b16 %v2675
  %v3249 = vunpack.c.l.b16 %v2676
  %v3250 = vunpack.c.h.b16 %v2676
  %v3251 = vunpack.c.l.b16 %v2677
  %v3252 = vunpack.c.h.b16 %v2677
  %v3253 = vunpack.c.l.b16 %v2678
  %v3254 = vunpack.c.h.b16 %v2678
  %v3255 = vunpack.c.l.b16 %v2679
  %v3256 = vunpack.c.h.b16 %v2679
  %v3257 = vunpack.c.l.b16 %v2680
  %v3258 = vunpack.c.h.b16 %v2680
  %v3259 = vunpack.c.l.b16 %v2681
  %v3260 = vunpack.c.h.b16 %v2681
  %v3261 = vunpack.c.l.b16 %v2682
  %v3262 = vunpack.c.h.b16 %v2682
  %v3263 = vunpack.c.l.b16 %v2683
  %v3264 = vunpack.c.h.b16 %v2683
  %v3265 = vunpack.c.l.b16 %v2684
  %v3266 = vunpack.c.h.b16 %v2684
  %v3267 = vunpack.c.l.b16 %v2685
  %v3268 = vunpack.c.h.b16 %v2685
  %v3269 = vunpack.c.l.b16 %v2686
  %v3270 = vunpack.c.h.b16 %v2686
  %v3271 = vunpack.c.l.b16 %v2687
  %v3272 = vunpack.c.h.b16 %v2687
  %v3273 = vunpack.c.l.b16 %v2688
  %v3274 = vunpack.c.h.b16 %v2688
  %v3275 = vunpack.c.l.b16 %v2689
  %v3276 = vunpack.c.h.b16 %v2689
  %v3277 = vunpack.c.l.b16 %v2690
  %v3278 = vunpack.c.h.b16 %v2690
  %v3279 = vunpack.c.l.b16 %v2691
  %v3280 = vunpack.c.h.b16 %v2691
  %v3281 = vunpack.c.l.b16 %v2692
  %v3282 = vunpack.c.h.b16 %v2692
  %v3283 = vunpack.c.l.b16 %v2693
  %v3284 = vunpack.c.h.b16 %v2693
  %v3285 = vunpack.c.l.b16 %v2694
  %v3286 = vunpack.c.h.b16 %v2694
  %v3287 = vunpack.c.l.b16 %v2695
  %v3288 = vunpack.c.h.b16 %v2695
  %v3289 = vunpack.c.l.b16 %v2696
  %v3290 = vunpack.c.h.b16 %v2696
  %v3291 = vunpack.c.l.b16 %v2697
  %v3292 = vunpack.c.h.b16 %v2697
  %v3293 = vunpack.c.l.b16 %v2698
  %v3294 = vunpack.c.h.b16 %v2698
  %v3295 = vunpack.c.l.b16 %v2699
  %v3296 = vunpack.c.h.b16 %v2699
  %v3297 = vunpack.c.l.b16 %v2700
  %v3298 = vunpack.c.h.b16 %v2700
  %v3299 = vunpack.c.l.b16 %v2701
  %v3300 = vunpack.c.h.b16 %v2701
  %v3301 = vunpack.c.l.b16 %v2702
  %v3302 = vunpack.c.h.b16 %v2702
  %v3303 = vunpack.c.l.b16 %v2703
  %v3304 = vunpack.c.h.b16 %v2703
  %v3305 = vunpack.c.l.b16 %v2704
  %v3306 = vunpack.c.h.b16 %v2704
  %v3307 = vunpack.c.l.b16 %v2705
  %v3308 = vunpack.c.h.b16 %v2705
  %v3309 = vunpack.c.l.b16 %v2706
  %v3310 = vunpack.c.h.b16 %v2706
  %v3311 = vunpack.c.l.b16 %v2707
  %v3312 = vunpack.c.h.b16 %v2707
  %v3313 = vunpack.c.l.b16 %v2708
  %v3314 = vunpack.c.h.b16 %v2708
  %v3315 = vunpack.c.l.b16 %v2709
  %v3316 = vunpack.c.h.b16 %v2709
  %v3317 = vunpack.c.l.b16 %v2710
  %v3318 = vunpack.c.h.b16 %v2710
  %v3319 = vunpack.c.l.b16 %v2711
  %v3320 = vunpack.c.h.b16 %v2711
  %v3321 = vunpack.c.l.b16 %v2712
  %v3322 = vunpack.c.h.b16 %v2712
  %v3323 = vunpack.c.l.b16 %v2713
  %v3324 = vunpack.c.h.b16 %v2713
  %v3325 = vunpack.c.l.b16 %v2714
  %v3326 = vunpack.c.h.b16 %v2714
  %v3327 = vunpack.c.l.b16 %v2715
  %v3328 = vunpack.c.h.b16 %v2715
  %v3329 = vunpack.c.l.b16 %v2716
  %v3330 = vunpack.c.h.b16 %v2716
  %v3331 = vunpack.c.l.b16 %v2717
  %v3332 = vunpack.c.h.b16 %v2717
  %v3333 = vunpack.c.l.b16 %v2718
  %v3334 = vunpack.c.h.b16 %v2718
  %v3335 = vunpack.c.l.b16 %v2719
  %v3336 = vunpack.c.h.b16 %v2719
  %v3337 = vunpack.c.l.b16 %v2720
  %v3338 = vunpack.c.h.b16 %v2720
  %v3339 = vunpack.c.l.b16 %v2721
  %v3340 = vunpack.c.h.b16 %v2721
  %v3341 = vunpack.c.l.b16 %v2722
  %v3342 = vunpack.c.h.b16 %v2722
  %v3343 = vunpack.c.l.b16 %v2723
  %v3344 = vunpack.c.h.b16 %v2723
  %v3345 = vunpack.c.l.b16 %v2724
  %v3346 = vunpack.c.h.b16 %v2724
  %v3347 = vunpack.c.l.b16 %v2725
  %v3348 = vunpack.c.h.b16 %v2725
  %v3349 = vunpack.c.l.b16 %v2726
  %v3350 = vunpack.c.h.b16 %v2726
  %v3351 = vunpack.c.l.b16 %v2727
  %v3352 = vunpack.c.h.b16 %v2727
  %v3353 = vunpack.c.l.b16 %v2728
  %v3354 = vunpack.c.h.b16 %v2728
  %v3355 = vunpack.c.l.b16 %v2729
  %v3356 = vunpack.c.h.b16 %v2729
  %v3357 = vunpack.c.l.b16 %v2730
  %v3358 = vunpack.c.h.b16 %v2730
  %v3359 = vunpack.c.l.b16 %v2731
  %v3360 = vunpack.c.h.b16 %v2731
  %v3361 = vunpack.c.l.b16 %v2732
  %v3362 = vunpack.c.h.b16 %v2732
  %v3363 = vunpack.c.l.b16 %v2733
  %v3364 = vunpack.c.h.b16 %v2733
  %v3365 = vunpack.c.l.b16 %v2734
  %v3366 = vunpack.c.h.b16 %v2734
  %v3367 = vunpack.c.l.b16 %v2735
  %v3368 = vunpack.c.h.b16 %v2735
  %v3369 = vunpack.c.l.b16 %v2736
  %v3370 = vunpack.c.h.b16 %v2736
  %v3371 = vunpack.c.l.b16 %v2737
  %v3372 = vunpack.c.h.b16 %v2737
  %v3373 = vunpack.c.l.b16 %v2738
  %v3374 = vunpack.c.h.b16 %v2738
  %v3375 = vunpack.c.l.b16 %v2739
  %v3376 = vunpack.c.h.b16 %v2739
  %v3377 = vunpack.c.l.b16 %v2740
  %v3378 = vunpack.c.h.b16 %v2740
  %v3379 = vunpack.c.l.b16 %v2741
  %v3380 = vunpack.c.h.b16 %v2741
  %v3381 = vunpack.c.l.b16 %v2742
  %v3382 = vunpack.c.h.b16 %v2742
  %v3383 = vunpack.c.l.b16 %v2743
  %v3384 = vunpack.c.h.b16 %v2743
  %v3385 = vunpack.c.l.b16 %v2744
  %v3386 = vunpack.c.h.b16 %v2744
  %v3387 = vunpack.c.l.b16 %v2745
  %v3388 = vunpack.c.h.b16 %v2745
  %v3389 = vunpack.c.l.b16 %v2746
  %v3390 = vunpack.c.h.b16 %v2746
  %v3391 = vunpack.c.l.b16 %v2747
  %v3392 = vunpack.c.h.b16 %v2747
  %v3393 = vunpack.c.l.b16 %v2748
  %v3394 = vunpack.c.h.b16 %v2748
  %v3395 = vunpack.c.l.b16 %v2749
  %v3396 = vunpack.c.h.b16 %v2749
  %v3397 = vunpack.c.l.b16 %v2750
  %v3398 = vunpack.c.h.b16 %v2750
  %v3399 = vunpack.c.l.b16 %v2751
  %v3400 = vunpack.c.h.b16 %v2751
  %v3401 = vunpack.c.l.b16 %v2752
  %v3402 = vunpack.c.h.b16 %v2752
  %v3403 = vunpack.c.l.b16 %v2753
  %v3404 = vunpack.c.h.b16 %v2753
  %v3405 = vunpack.c.l.b16 %v2754
  %v3406 = vunpack.c.h.b16 %v2754
  %v3407 = vunpack.c.l.b16 %v2755
  %v3408 = vunpack.c.h.b16 %v2755
  %v3409 = vunpack.c.l.b16 %v2756
  %v3410 = vunpack.c.h.b16 %v2756
  %v3411 = vunpack.c.l.b16 %v2757
  %v3412 = vunpack.c.h.b16 %v2757
  %v3413 = vunpack.c.l.b16 %v2758
  %v3414 = vunpack.c.h.b16 %v2758
  %v3415 = vunpack.c.l.b16 %v2759
  %v3416 = vunpack.c.h.b16 %v2759
  %v3417 = vunpack.c.l.b16 %v2760
  %v3418 = vunpack.c.h.b16 %v2760
  %v3419 = vunpack.c.l.b16 %v2761
  %v3420 = vunpack.c.h.b16 %v2761
  %v3421 = vunpack.c.l.b16 %v2762
  %v3422 = vunpack.c.h.b16 %v2762
  %v3423 = vunpack.c.l.b16 %v2763
  %v3424 = vunpack.c.h.b16 %v2763
  %v3425 = vunpack.c.l.b16 %v2764
  %v3426 = vunpack.c.h.b16 %v2764
  %v3427 = vunpack.c.l.b16 %v2765
  %v3428 = vunpack.c.h.b16 %v2765
  %v3429 = vunpack.c.l.b16 %v2766
  %v3430 = vunpack.c.h.b16 %v2766
  %v3431 = vunpack.c.l.b16 %v2767
  %v3432 = vunpack.c.h.b16 %v2767
  %v3433 = vunpack.c.l.b16 %v2768
  %v3434 = vunpack.c.h.b16 %v2768
  %v3435 = vunpack.c.l.b16 %v2769
  %v3436 = vunpack.c.h.b16 %v2769
  %v3437 = vunpack.c.l.b16 %v2770
  %v3438 = vunpack.c.h.b16 %v2770
  %v3439 = vunpack.c.l.b16 %v2771
  %v3440 = vunpack.c.h.b16 %v2771
  %v3441 = vunpack.c.l.b16 %v2772
  %v3442 = vunpack.c.h.b16 %v2772
  %v3443 = vpack.c.b16 %v3065, %v3059
  %v3444 = vpack.c.b16 %v3066, %v3060
  %v3445 = vpack.c.b16 %v3067, %v3061
  %v3446 = vpack.c.b16 %v3068, %v3062
  %v3447 = vpack.c.b16 %v3069, %v3063
  %v3448 = vpack.c.b16 %v3070, %v3064
  %v3449 = vpack.c.b16 %v3077, %v3071
  %v3450 = vpack.c.b16 %v3078, %v3072
  %v3451 = vpack.c.b16 %v3079, %v3073
  %v3452 = vpack.c.b16 %v3080, %v3074
  %v3453 = vpack.c.b16 %v3081, %v3075
  %v3454 = vpack.c.b16 %v3082, %v3076
  %v3455 = vpack.c.b16 %v3089, %v3083
  %v3456 = vpack.c.b16 %v3090, %v3084
  %v3457 = vpack.c.b16 %v3091, %v3085
  %v3458 = vpack.c.b16 %v3092, %v3086
  %v3459 = vpack.c.b16 %v3093, %v3087
  %v3460 = vpack.c.b16 %v3094, %v3088
  %v3461 = vpack.c.b16 %v3101, %v3095
  %v3462 = vpack.c.b16 %v3102, %v3096
  %v3463 = vpack.c.b16 %v3103, %v3097
  %v3464 = vpack.c.b16 %v3104, %v3098
  %v3465 = vpack.c.b16 %v3105, %v3099
  %v3466 = vpack.c.b16 %v3106, %v3100
  %v3467 = vpack.c.b16 %v3113, %v3107
  %v3468 = vpack.c.b16 %v3114, %v3108
  %v3469 = vpack.c.b16 %v3115, %v3109
  %v3470 = vpack.c.b16 %v3116, %v3110
  %v3471 = vpack.c.b16 %v3117, %v3111
  %v3472 = vpack.c.b16 %v3118, %v3112
  %v3473 = vpack.c.b16 %v3125, %v3119
  %v3474 = vpack.c.b16 %v3126, %v3120
  %v3475 = vpack.c.b16 %v3127, %v3121
  %v3476 = vpack.c.b16 %v3128, %v3122
  %v3477 = vpack.c.b16 %v3129, %v3123
  %v3478 = vpack.c.b16 %v3130, %v3124
  %v3479 = vpack.c.b16 %v3137, %v3131
  %v3480 = vpack.c.b16 %v3138, %v3132
  %v3481 = vpack.c.b16 %v3139, %v3133
  %v3482 = vpack.c.b16 %v3140, %v3134
  %v3483 = vpack.c.b16 %v3141, %v3135
  %v3484 = vpack.c.b16 %v3142, %v3136
  %v3485 = vpack.c.b16 %v3149, %v3143
  %v3486 = vpack.c.b16 %v3150, %v3144
  %v3487 = vpack.c.b16 %v3151, %v3145
  %v3488 = vpack.c.b16 %v3152, %v3146
  %v3489 = vpack.c.b16 %v3153, %v3147
  %v3490 = vpack.c.b16 %v3154, %v3148
  %v3491 = vpack.c.b16 %v3161, %v3155
  %v3492 = vpack.c.b16 %v3162, %v3156
  %v3493 = vpack.c.b16 %v3163, %v3157
  %v3494 = vpack.c.b16 %v3164, %v3158
  %v3495 = vpack.c.b16 %v3165, %v3159
  %v3496 = vpack.c.b16 %v3166, %v3160
  %v3497 = vpack.c.b16 %v3173, %v3167
  %v3498 = vpack.c.b16 %v3174, %v3168
  %v3499 = vpack.c.b16 %v3175, %v3169
  %v3500 = vpack.c.b16 %v3176, %v3170
  %v3501 = vpack.c.b16 %v3177, %v3171
  %v3502 = vpack.c.b16 %v3178, %v3172
  %v3503 = vpack.c.b16 %v3185, %v3179
  %v3504 = vpack.c.b16 %v3186, %v3180
  %v3505 = vpack.c.b16 %v3187, %v3181
  %v3506 = vpack.c.b16 %v3188, %v3182
  %v3507 = vpack.c.b16 %v3189, %v3183
  %v3508 = vpack.c.b16 %v3190, %v3184
  %v3509 = vpack.c.b16 %v3197, %v3191
  %v3510 = vpack.c.b16 %v3198, %v3192
  %v3511 = vpack.c.b16 %v3199, %v3193
  %v3512 = vpack.c.b16 %v3200, %v3194
  %v3513 = vpack.c.b16 %v3201, %v3195
  %v3514 = vpack.c.b16 %v3202, %v3196
  %v3515 = vpack.c.b16 %v3209, %v3203
  %v3516 = vpack.c.b16 %v3210, %v3204
  %v3517 = vpack.c.b16 %v3211, %v3205
  %v3518 = vpack.c.b16 %v3212, %v3206
  %v3519 = vpack.c.b16 %v3213, %v3207
  %v3520 = vpack.c.b16 %v3214, %v3208
  %v3521 = vpack.c.b16 %v3221, %v3215
  %v3522 = vpack.c.b16 %v3222, %v3216
  %v3523 = vpack.c.b16 %v3223, %v3217
  %v3524 = vpack.c.b16 %v3224, %v3218
  %v3525 = vpack.c.b16 %v3225, %v3219
  %v3526 = vpack.c.b16 %v3226, %v3220
  %v3527 = vpack.c.b16 %v3233, %v3227
  %v3528 = vpack.c.b16 %v3234, %v3228
  %v3529 = vpack.c.b16 %v3235, %v3229
  %v3530 = vpack.c.b16 %v3236, %v3230
  %v3531 = vpack.c.b16 %v3237, %v3231
  %v3532 = vpack.c.b16 %v3238, %v3232
  %v3533 = vpack.c.b16 %v3245, %v3239
  %v3534 = vpack.c.b16 %v3246, %v3240
  %v3535 = vpack.c.b16 %v3247, %v3241
  %v3536 = vpack.c.b16 %v3248, %v3242
  %v3537 = vpack.c.b16 %v3249, %v3243
  %v3538 = vpack.c.b16 %v3250, %v3244
  %v3539 = vpack.c.b16 %v3257, %v3251
  %v3540 = vpack.c.b16 %v3258, %v3252
  %v3541 = vpack.c.b16 %v3259, %v3253
  %v3542 = vpack.c.b16 %v3260, %v3254
  %v3543 = vpack.c.b16 %v3261, %v3255
  %v3544 = vpack.c.b16 %v3262, %v3256
  %v3545 = vpack.c.b16 %v3269, %v3263
  %v3546 = vpack.c.b16 %v3270, %v3264
  %v3547 = vpack.c.b16 %v3271, %v3265
  %v3548 = vpack.c.b16 %v3272, %v3266
  %v3549 = vpack.c.b16 %v3273, %v3267
  %v3550 = vpack.c.b16 %v3274, %v3268
  %v3551 = vpack.c.b16 %v3281, %v3275
  %v3552 = vpack.c.b16 %v3282, %v3276
  %v3553 = vpack.c.b16 %v3283, %v3277
  %v3554 = vpack.c.b16 %v3284, %v3278
  %v3555 = vpack.c.b16 %v3285, %v3279
  %v3556 = vpack.c.b16 %v3286, %v3280
  %v3557 = vpack.c.b16 %v3293, %v3287
  %v3558 = vpack.c.b16 %v3294, %v3288
  %v3559 = vpack.c.b16 %v3295, %v3289
  %v3560 = vpack.c.b16 %v3296, %v3290
  %v3561 = vpack.c.b16 %v3297, %v3291
  %v3562 = vpack.c.b16 %v3298, %v3292
  %v3563 = vpack.c.b16 %v3305, %v3299
  %v3564 = vpack.c.b16 %v3306, %v3300
  %v3565 = vpack.c.b16 %v3307, %v3301
  %v3566 = vpack.c.b16 %v3308, %v3302
  %v3567 = vpack.c.b16 %v3309, %v3303
  %v3568 = vpack.c.b16 %v3310, %v3304
  %v3569 = vpack.c.b16 %v3317, %v3311
  %v3570 = vpack.c.b16 %v3318, %v3312
  %v3571 = vpack.c.b16 %v3319, %v3313
  %v3572 = vpack.c.b16 %v3320, %v3314
  %v3573 = vpack.c.b16 %v3321, %v3315
  %v3574 = vpack.c.b16 %v3322, %v3316
  %v3575 = vpack.c.b16 %v3329, %v3323
  %v3576 = vpack.c.b16 %v3330, %v3324
  %v3577 = vpack.c.b16 %v3331, %v3325
  %v3578 = vpack.c.b16 %v3332, %v3326
  %v3579 = vpack.c.b16 %v3333, %v3327
  %v3580 = vpack.c.b16 %v3334, %v3328
  %v3581 = vpack.c.b16 %v3341, %v3335
  %v3582 = vpack.c.b16 %v3342, %v3336
  %v3583 = vpack.c.b16 %v3343, %v3337
  %v3584 = vpack.c.b16 %v3344, %v3338
  %v3585 = vpack.c.b16 %v3345, %v3339
  %v3586 = vpack.c.b16 %v3346, %v3340
  %v3587 = vpack.c.b16 %v3353, %v3347
  %v3588 = vpack.c.b16 %v3354, %v3348
  %v3589 = vpack.c.b16 %v3355, %v3349
  %v3590 = vpack.c.b16 %v3356, %v3350
  %v3591 = vpack.c.b16 %v3357, %v3351
  %v3592 = vpack.c.b16 %v3358, %v3352
  %v3593 = vpack.c.b16 %v3365, %v3359
  %v3594 = vpack.c.b16 %v3366, %v3360
  %v3595 = vpack.c.b16 %v3367, %v3361
  %v3596 = vpack.c.b16 %v3368, %v3362
  %v3597 = vpack.c.b16 %v3369, %v3363
  %v3598 = vpack.c.b16 %v3370, %v3364
  %v3599 = vpack.c.b16 %v3377, %v3371
  %v3600 = vpack.c.b16 %v3378, %v3372
  %v3601 = vpack.c.b16 %v3379, %v3373
  %v3602 = vpack.c.b16 %v3380, %v3374
  %v3603 = vpack.c.b16 %v3381, %v3375
  %v3604 = vpack.c.b16 %v3382, %v3376
  %v3605 = vpack.c.b16 %v3389, %v3383
  %v3606 = vpack.c.b16 %v3390, %v3384
  %v3607 = vpack.c.b16 %v3391, %v3385
  %v3608 = vpack.c.b16 %v3392, %v3386
  %v3609 = vpack.c.b16 %v3393, %v3387
  %v3610 = vpack.c.b16 %v3394, %v3388
  %v3611 = vpack.c.b16 %v3401, %v3395
  %v3612 = vpack.c.b16 %v3402, %v3396
  %v3613 = vpack.c.b16 %v3403, %v3397
  %v3614 = vpack.c.b16 %v3404, %v3398
  %v3615 = vpack.c.b16 %v3405, %v3399
  %v3616 = vpack.c.b16 %v3406, %v3400
  %v3617 = vpack.c.b16 %v3413, %v3407
  %v3618 = vpack.c.b16 %v3414, %v3408
  %v3619 = vpack.c.b16 %v3415, %v3409
  %v3620 = vpack.c.b16 %v3416, %v3410
  %v3621 = vpack.c.b16 %v3417, %v3411
  %v3622 = vpack.c.b16 %v3418, %v3412
  %v3623 = vpack.c.b16 %v3425, %v3419
  %v3624 = vpack.c.b16 %v3426, %v3420
  %v3625 = vpack.c.b16 %v3427, %v3421
  %v3626 = vpack.c.b16 %v3428, %v3422
  %v3627 = vpack.c.b16 %v3429, %v3423
  %v3628 = vpack.c.b16 %v3430, %v3424
  %v3629 = vpack.c.b16 %v3437, %v3431
  %v3630 = vpack.c.b16 %v3438, %v3432
  %v3631 = vpack.c.b16 %v3439, %v3433
  %v3632 = vpack.c.b16 %v3440, %v3434
  %v3633 = vpack.c.b16 %v3441, %v3435
  %v3634 = vpack.c.b16 %v3442, %v3436
  %3827 = vmatprep.subr.bf16.mxu0 %v3444
  %3828 = vmatpush1.bf16.msra.mxu0 %v3443
  %3829 = vmatprep.subr.bf16.mxu0 %v3450
  %3830 = vmatpush1.bf16.msra.mxu0 %v3449
  %3831 = vmatprep.subr.bf16.mxu0 %v3456
  %3832 = vmatpush1.bf16.msra.mxu0 %v3455
  %3833 = vmatprep.subr.bf16.mxu0 %v3462
  %3834 = vmatpush1.bf16.msra.mxu0 %v3461
  %3835 = vmatprep.subr.bf16.mxu0 %v3468
  %3836 = vmatpush1.bf16.msra.mxu0 %v3467
  %3837 = vmatprep.subr.bf16.mxu0 %v3474
  %3838 = vmatpush1.bf16.msra.mxu0 %v3473
  %3839 = vmatprep.subr.bf16.mxu0 %v3480
  %3840 = vmatpush1.bf16.msra.mxu0 %v3479
  %3841 = vmatprep.subr.bf16.mxu0 %v3486
  %3842 = vmatpush1.bf16.msra.mxu0 %v3485
  %3843 = vmatprep.subr.bf16.mxu0 %v3492
  %3844 = vmatpush1.bf16.msra.mxu0 %v3491
  %3845 = vmatprep.subr.bf16.mxu0 %v3498
  %3846 = vmatpush1.bf16.msra.mxu0 %v3497
  %3847 = vmatprep.subr.bf16.mxu0 %v3504
  %3848 = vmatpush1.bf16.msra.mxu0 %v3503
  %3849 = vmatprep.subr.bf16.mxu0 %v3510
  %3850 = vmatpush1.bf16.msra.mxu0 %v3509
  %3851 = vmatprep.subr.bf16.mxu0 %v3516
  %3852 = vmatpush1.bf16.msra.mxu0 %v3515
  %3853 = vmatprep.subr.bf16.mxu0 %v3522
  %3854 = vmatpush1.bf16.msra.mxu0 %v3521
  %3855 = vmatprep.subr.bf16.mxu0 %v3528
  %3856 = vmatpush1.bf16.msra.mxu0 %v3527
  %3857 = vmatprep.subr.bf16.mxu0 %v3534
  %3858 = vmatpush1.bf16.msra.mxu0 %v3533
  %3859 = vmatprep.mubr.bf16.mxu0 %v2828
  %3860 = vmatmul.mubr.bf16.gmra.mrb[0].mxu0 %v2827
  %v3861 = vpop.f32.mrb[0].mxu0
  %v3862 = vadd.f32 0.0, %v3861
  %v3863 = vpop.f32.mrb[0].mxu0
  %v3864 = vadd.f32 0.0, %v3863
  %v3865 = vpop.f32.mrb[0].mxu0
  %v3866 = vadd.f32 0.0, %v3865
  %v3867 = vpop.f32.mrb[0].mxu0
  %v3868 = vadd.f32 0.0, %v3867
  %3869 = vmatprep.mubr.bf16.mxu0 %v2832
  %3870 = vmatmul.mubr.bf16.gmra.mrb[0].mxu0 %v2831
  %v3871 = vpop.f32.mrb[0].mxu0
  %v3872 = vadd.f32 0.0, %v3871
  %v3873 = vpop.f32.mrb[0].mxu0
  %v3874 = vadd.f32 0.0, %v3873
  %v3875 = vpop.f32.mrb[0].mxu0
  %v3876 = vadd.f32 0.0, %v3875
  %v3877 = vpop.f32.mrb[0].mxu0
  %v3878 = vadd.f32 0.0, %v3877
  %3879 = vmatprep.mubr.bf16.mxu0 %v2836
  %3880 = vmatmul.mubr.bf16.gmra.mrb[0].mxu0 %v2835
  %v3881 = vpop.f32.mrb[0].mxu0
  %v3882 = vadd.f32 0.0, %v3881
  %v3883 = vpop.f32.mrb[0].mxu0
  %v3884 = vadd.f32 0.0, %v3883
  %v3885 = vpop.f32.mrb[0].mxu0
  %v3886 = vadd.f32 0.0, %v3885
  %v3887 = vpop.f32.mrb[0].mxu0
  %v3888 = vadd.f32 0.0, %v3887
  %3889 = vmatprep.mubr.bf16.mxu0 %v2840
  %3890 = vmatmul.mubr.bf16.gmra.mrb[0].mxu0 %v2839
  %v3891 = vpop.f32.mrb[0].mxu0
  %v3892 = vadd.f32 0.0, %v3891
  %v3893 = vpop.f32.mrb[0].mxu0
  %v3894 = vadd.f32 0.0, %v3893
  %v3895 = vpop.f32.mrb[0].mxu0
  %v3896 = vadd.f32 0.0, %v3895
  %v3897 = vpop.f32.mrb[0].mxu0
  %v3898 = vadd.f32 0.0, %v3897
  %3899 = vmatprep.mubr.bf16.mxu0 %v2844
  %3900 = vmatmul.mubr.bf16.gmra.mrb[0].mxu0 %v2843
  %v3901 = vpop.f32.mrb[0].mxu0
  %v3902 = vadd.f32 0.0, %v3901
  %v3903 = vpop.f32.mrb[0].mxu0
  %v3904 = vadd.f32 0.0, %v3903
  %v3905 = vpop.f32.mrb[0].mxu0
  %v3906 = vpop.f32.mrb[0].mxu0
  %3907 = vdwg.mxu0
  %3908 = vmatprep.subr.bf16.mxu0 %v3540
  %3909 = vmatpush1.bf16.msra.mxu0 %v3539
  %3910 = vmatprep.subr.bf16.mxu0 %v3546
  %3911 = vmatpush1.bf16.msra.mxu0 %v3545
  %3912 = vmatprep.subr.bf16.mxu0 %v3552
  %3913 = vmatpush1.bf16.msra.mxu0 %v3551
  %3914 = vmatprep.subr.bf16.mxu0 %v3558
  %3915 = vmatpush1.bf16.msra.mxu0 %v3557
  %3916 = vmatprep.subr.bf16.mxu0 %v3564
  %3917 = vmatpush1.bf16.msra.mxu0 %v3563
  %3918 = vmatprep.subr.bf16.mxu0 %v3570
  %3919 = vmatpush1.bf16.msra.mxu0 %v3569
  %3920 = vmatprep.subr.bf16.mxu0 %v3576
  %3921 = vmatpush1.bf16.msra.mxu0 %v3575
  %3922 = vmatprep.subr.bf16.mxu0 %v3582
  %3923 = vmatpush1.bf16.msra.mxu0 %v3581
  %3924 = vmatprep.subr.bf16.mxu0 %v3588
  %3925 = vmatpush1.bf16.msra.mxu0 %v3587
  %3926 = vmatprep.subr.bf16.mxu0 %v3594
  %3927 = vmatpush1.bf16.msra.mxu0 %v3593
  %3928 = vmatprep.subr.bf16.mxu0 %v3600
  %3929 = vmatpush1.bf16.msra.mxu0 %v3599
  %3930 = vmatprep.subr.bf16.mxu0 %v3606
  %3931 = vmatpush1.bf16.msra.mxu0 %v3605
  %3932 = vmatprep.subr.bf16.mxu0 %v3612
  %3933 = vmatpush1.bf16.msra.mxu0 %v3611
  %3934 = vmatprep.subr.bf16.mxu0 %v3618
  %3935 = vmatpush1.bf16.msra.mxu0 %v3617
  %3936 = vmatprep.subr.bf16.mxu0 %v3624
  %3937 = vmatpush1.bf16.msra.mxu0 %v3623
  %3938 = vmatprep.subr.bf16.mxu0 %v3630
  %3939 = vmatpush1.bf16.msra.mxu0 %v3629
  %3940 = vmatprep.mubr.bf16.mxu0 %v2830
  %3941 = vmatmul.mubr.bf16.gmra.mrb[0].mxu0 %v2829
  %v3942 = vpop.f32.mrb[0].mxu0
  %v3943 = vadd.f32 %v3862, %v3942
  %v3944 = vpop.f32.mrb[0].mxu0
  %v3945 = vadd.f32 %v3864, %v3944
  %v3946 = vpop.f32.mrb[0].mxu0
  %v3947 = vadd.f32 %v3866, %v3946
  %v3948 = vpop.f32.mrb[0].mxu0
  %v3949 = vadd.f32 %v3868, %v3948
  %3950 = vmatprep.mubr.bf16.mxu0 %v2834
  %3951 = vmatmul.mubr.bf16.gmra.mrb[0].mxu0 %v2833
  %v3952 = vpop.f32.mrb[0].mxu0
  %v3953 = vadd.f32 %v3872, %v3952
  %v3954 = vpop.f32.mrb[0].mxu0
  %v3955 = vadd.f32 %v3874, %v3954
  %v3956 = vpop.f32.mrb[0].mxu0
  %v3957 = vadd.f32 %v3876, %v3956
  %v3958 = vpop.f32.mrb[0].mxu0
  %v3959 = vadd.f32 %v3878, %v3958
  %3960 = vmatprep.mubr.bf16.mxu0 %v2838
  %3961 = vmatmul.mubr.bf16.gmra.mrb[0].mxu0 %v2837
  %v3962 = vpop.f32.mrb[0].mxu0
  %v3963 = vadd.f32 %v3882, %v3962
  %v3964 = vpop.f32.mrb[0].mxu0
  %v3965 = vadd.f32 %v3884, %v3964
  %v3966 = vpop.f32.mrb[0].mxu0
  %v3967 = vadd.f32 %v3886, %v3966
  %v3968 = vpop.f32.mrb[0].mxu0
  %v3969 = vadd.f32 %v3888, %v3968
  %3970 = vmatprep.mubr.bf16.mxu0 %v2842
  %3971 = vmatmul.mubr.bf16.gmra.mrb[0].mxu0 %v2841
  %v3972 = vpop.f32.mrb[0].mxu0
  %v3973 = vadd.f32 %v3892, %v3972
  %v3974 = vpop.f32.mrb[0].mxu0
  %v3975 = vadd.f32 %v3894, %v3974
  %v3976 = vpop.f32.mrb[0].mxu0
  %v3977 = vadd.f32 %v3896, %v3976
  %v3978 = vpop.f32.mrb[0].mxu0
  %v3979 = vadd.f32 %v3898, %v3978
  %3980 = vmatprep.mubr.bf16.mxu0 %v2846
  %3981 = vmatmul.mubr.bf16.gmra.mrb[0].mxu0 %v2845
  %v3982 = vpop.f32.mrb[0].mxu0
  %v3983 = vadd.f32 %v3902, %v3982
  %v3984 = vpop.f32.mrb[0].mxu0
  %v3985 = vadd.f32 %v3904, %v3984
  %v3986 = vpop.f32.mrb[0].mxu0
  %v3987 = vpop.f32.mrb[0].mxu0
  %3988 = vdwg.mxu0
  %3989 = vmatprep.subr.bf16.mxu0 %v3446
  %3990 = vmatpush1.bf16.msra.mxu0 %v3445
  %3991 = vmatprep.subr.bf16.mxu0 %v3452
  %3992 = vmatpush1.bf16.msra.mxu0 %v3451
  %3993 = vmatprep.subr.bf16.mxu0 %v3458
  %3994 = vmatpush1.bf16.msra.mxu0 %v3457
  %3995 = vmatprep.subr.bf16.mxu0 %v3464
  %3996 = vmatpush1.bf16.msra.mxu0 %v3463
  %3997 = vmatprep.subr.bf16.mxu0 %v3470
  %3998 = vmatpush1.bf16.msra.mxu0 %v3469
  %3999 = vmatprep.subr.bf16.mxu0 %v3476
  %4000 = vmatpush1.bf16.msra.mxu0 %v3475
  %4001 = vmatprep.subr.bf16.mxu0 %v3482
  %4002 = vmatpush1.bf16.msra.mxu0 %v3481
  %4003 = vmatprep.subr.bf16.mxu0 %v3488
  %4004 = vmatpush1.bf16.msra.mxu0 %v3487
  %4005 = vmatprep.subr.bf16.mxu0 %v3494
  %4006 = vmatpush1.bf16.msra.mxu0 %v3493
  %4007 = vmatprep.subr.bf16.mxu0 %v3500
  %4008 = vmatpush1.bf16.msra.mxu0 %v3499
  %4009 = vmatprep.subr.bf16.mxu0 %v3506
  %4010 = vmatpush1.bf16.msra.mxu0 %v3505
  %4011 = vmatprep.subr.bf16.mxu0 %v3512
  %4012 = vmatpush1.bf16.msra.mxu0 %v3511
  %4013 = vmatprep.subr.bf16.mxu0 %v3518
  %4014 = vmatpush1.bf16.msra.mxu0 %v3517
  %4015 = vmatprep.subr.bf16.mxu0 %v3524
  %4016 = vmatpush1.bf16.msra.mxu0 %v3523
  %4017 = vmatprep.subr.bf16.mxu0 %v3530
  %4018 = vmatpush1.bf16.msra.mxu0 %v3529
  %4019 = vmatprep.subr.bf16.mxu0 %v3536
  %4020 = vmatpush1.bf16.msra.mxu0 %v3535
  %4021 = vmatprep.mubr.bf16.mxu0 %v2828
  %4022 = vmatmul.mubr.bf16.gmra.mrb[0].mxu0 %v2827
  %v4023 = vpop.f32.mrb[0].mxu0
  %v4024 = vadd.f32 0.0, %v4023
  %v4025 = vpop.f32.mrb[0].mxu0
  %v4026 = vadd.f32 0.0, %v4025
  %v4027 = vpop.f32.mrb[0].mxu0
  %v4028 = vadd.f32 0.0, %v4027
  %v4029 = vpop.f32.mrb[0].mxu0
  %v4030 = vadd.f32 0.0, %v4029
  %4031 = vmatprep.mubr.bf16.mxu0 %v2832
  %4032 = vmatmul.mubr.bf16.gmra.mrb[0].mxu0 %v2831
  %v4033 = vpop.f32.mrb[0].mxu0
  %v4034 = vadd.f32 0.0, %v4033
  %v4035 = vpop.f32.mrb[0].mxu0
  %v4036 = vadd.f32 0.0, %v4035
  %v4037 = vpop.f32.mrb[0].mxu0
  %v4038 = vadd.f32 0.0, %v4037
  %v4039 = vpop.f32.mrb[0].mxu0
  %v4040 = vadd.f32 0.0, %v4039
  %4041 = vmatprep.mubr.bf16.mxu0 %v2836
  %4042 = vmatmul.mubr.bf16.gmra.mrb[0].mxu0 %v2835
  %v4043 = vpop.f32.mrb[0].mxu0
  %v4044 = vadd.f32 0.0, %v4043
  %v4045 = vpop.f32.mrb[0].mxu0
  %v4046 = vadd.f32 0.0, %v4045
  %v4047 = vpop.f32.mrb[0].mxu0
  %v4048 = vadd.f32 0.0, %v4047
  %v4049 = vpop.f32.mrb[0].mxu0
  %v4050 = vadd.f32 0.0, %v4049
  %4051 = vmatprep.mubr.bf16.mxu0 %v2840
  %4052 = vmatmul.mubr.bf16.gmra.mrb[0].mxu0 %v2839
  %v4053 = vpop.f32.mrb[0].mxu0
  %v4054 = vadd.f32 0.0, %v4053
  %v4055 = vpop.f32.mrb[0].mxu0
  %v4056 = vadd.f32 0.0, %v4055
  %v4057 = vpop.f32.mrb[0].mxu0
  %v4058 = vadd.f32 0.0, %v4057
  %v4059 = vpop.f32.mrb[0].mxu0
  %v4060 = vadd.f32 0.0, %v4059
  %4061 = vmatprep.mubr.bf16.mxu0 %v2844
  %4062 = vmatmul.mubr.bf16.gmra.mrb[0].mxu0 %v2843
  %v4063 = vpop.f32.mrb[0].mxu0
  %v4064 = vadd.f32 0.0, %v4063
  %v4065 = vpop.f32.mrb[0].mxu0
  %v4066 = vadd.f32 0.0, %v4065
  %v4067 = vpop.f32.mrb[0].mxu0
  %v4068 = vpop.f32.mrb[0].mxu0
  %4069 = vdwg.mxu0
  %4070 = vmatprep.subr.bf16.mxu0 %v3542
  %4071 = vmatpush1.bf16.msra.mxu0 %v3541
  %4072 = vmatprep.subr.bf16.mxu0 %v3548
  %4073 = vmatpush1.bf16.msra.mxu0 %v3547
  %4074 = vmatprep.subr.bf16.mxu0 %v3554
  %4075 = vmatpush1.bf16.msra.mxu0 %v3553
  %4076 = vmatprep.subr.bf16.mxu0 %v3560
  %4077 = vmatpush1.bf16.msra.mxu0 %v3559
  %4078 = vmatprep.subr.bf16.mxu0 %v3566
  %4079 = vmatpush1.bf16.msra.mxu0 %v3565
  %4080 = vmatprep.subr.bf16.mxu0 %v3572
  %4081 = vmatpush1.bf16.msra.mxu0 %v3571
  %4082 = vmatprep.subr.bf16.mxu0 %v3578
  %4083 = vmatpush1.bf16.msra.mxu0 %v3577
  %4084 = vmatprep.subr.bf16.mxu0 %v3584
  %4085 = vmatpush1.bf16.msra.mxu0 %v3583
  %4086 = vmatprep.subr.bf16.mxu0 %v3590
  %4087 = vmatpush1.bf16.msra.mxu0 %v3589
  %4088 = vmatprep.subr.bf16.mxu0 %v3596
  %4089 = vmatpush1.bf16.msra.mxu0 %v3595
  %4090 = vmatprep.subr.bf16.mxu0 %v3602
  %4091 = vmatpush1.bf16.msra.mxu0 %v3601
  %4092 = vmatprep.subr.bf16.mxu0 %v3608
  %4093 = vmatpush1.bf16.msra.mxu0 %v3607
  %4094 = vmatprep.subr.bf16.mxu0 %v3614
  %4095 = vmatpush1.bf16.msra.mxu0 %v3613
  %4096 = vmatprep.subr.bf16.mxu0 %v3620
  %4097 = vmatpush1.bf16.msra.mxu0 %v3619
  %4098 = vmatprep.subr.bf16.mxu0 %v3626
  %4099 = vmatpush1.bf16.msra.mxu0 %v3625
  %4100 = vmatprep.subr.bf16.mxu0 %v3632
  %4101 = vmatpush1.bf16.msra.mxu0 %v3631
  %4102 = vmatprep.mubr.bf16.mxu0 %v2830
  %4103 = vmatmul.mubr.bf16.gmra.mrb[0].mxu0 %v2829
  %v4104 = vpop.f32.mrb[0].mxu0
  %v4105 = vadd.f32 %v4024, %v4104
  %v4106 = vpop.f32.mrb[0].mxu0
  %v4107 = vadd.f32 %v4026, %v4106
  %v4108 = vpop.f32.mrb[0].mxu0
  %v4109 = vadd.f32 %v4028, %v4108
  %v4110 = vpop.f32.mrb[0].mxu0
  %v4111 = vadd.f32 %v4030, %v4110
  %4112 = vmatprep.mubr.bf16.mxu0 %v2834
  %4113 = vmatmul.mubr.bf16.gmra.mrb[0].mxu0 %v2833
  %v4114 = vpop.f32.mrb[0].mxu0
  %v4115 = vadd.f32 %v4034, %v4114
  %v4116 = vpop.f32.mrb[0].mxu0
  %v4117 = vadd.f32 %v4036, %v4116
  %v4118 = vpop.f32.mrb[0].mxu0
  %v4119 = vadd.f32 %v4038, %v4118
  %v4120 = vpop.f32.mrb[0].mxu0
  %v4121 = vadd.f32 %v4040, %v4120
  %4122 = vmatprep.mubr.bf16.mxu0 %v2838
  %4123 = vmatmul.mubr.bf16.gmra.mrb[0].mxu0 %v2837
  %v4124 = vpop.f32.mrb[0].mxu0
  %v4125 = vadd.f32 %v4044, %v4124
  %v4126 = vpop.f32.mrb[0].mxu0
  %v4127 = vadd.f32 %v4046, %v4126
  %v4128 = vpop.f32.mrb[0].mxu0
  %v4129 = vadd.f32 %v4048, %v4128
  %v4130 = vpop.f32.mrb[0].mxu0
  %v4131 = vadd.f32 %v4050, %v4130
  %4132 = vmatprep.mubr.bf16.mxu0 %v2842
  %4133 = vmatmul.mubr.bf16.gmra.mrb[0].mxu0 %v2841
  %v4134 = vpop.f32.mrb[0].mxu0
  %v4135 = vadd.f32 %v4054, %v4134
  %v4136 = vpop.f32.mrb[0].mxu0
  %v4137 = vadd.f32 %v4056, %v4136
  %v4138 = vpop.f32.mrb[0].mxu0
  %v4139 = vadd.f32 %v4058, %v4138
  %v4140 = vpop.f32.mrb[0].mxu0
  %v4141 = vadd.f32 %v4060, %v4140
  %4142 = vmatprep.mubr.bf16.mxu0 %v2846
  %4143 = vmatmul.mubr.bf16.gmra.mrb[0].mxu0 %v2845
  %v4144 = vpop.f32.mrb[0].mxu0
  %v4145 = vadd.f32 %v4064, %v4144
  %v4146 = vpop.f32.mrb[0].mxu0
  %v4147 = vadd.f32 %v4066, %v4146
  %v4148 = vpop.f32.mrb[0].mxu0
  %v4149 = vpop.f32.mrb[0].mxu0
  %4150 = vdwg.mxu0
  %4151 = vmatprep.subr.bf16.mxu0 %v3448
  %4152 = vmatpush1.bf16.msra.mxu0 %v3447
  %4153 = vmatprep.subr.bf16.mxu0 %v3454
  %4154 = vmatpush1.bf16.msra.mxu0 %v3453
  %4155 = vmatprep.subr.bf16.mxu0 %v3460
  %4156 = vmatpush1.bf16.msra.mxu0 %v3459
  %4157 = vmatprep.subr.bf16.mxu0 %v3466
  %4158 = vmatpush1.bf16.msra.mxu0 %v3465
  %4159 = vmatprep.subr.bf16.mxu0 %v3472
  %4160 = vmatpush1.bf16.msra.mxu0 %v3471
  %4161 = vmatprep.subr.bf16.mxu0 %v3478
  %4162 = vmatpush1.bf16.msra.mxu0 %v3477
  %4163 = vmatprep.subr.bf16.mxu0 %v3484
  %4164 = vmatpush1.bf16.msra.mxu0 %v3483
  %4165 = vmatprep.subr.bf16.mxu0 %v3490
  %4166 = vmatpush1.bf16.msra.mxu0 %v3489
  %4167 = vmatprep.subr.bf16.mxu0 %v3496
  %4168 = vmatpush1.bf16.msra.mxu0 %v3495
  %4169 = vmatprep.subr.bf16.mxu0 %v3502
  %4170 = vmatpush1.bf16.msra.mxu0 %v3501
  %4171 = vmatprep.subr.bf16.mxu0 %v3508
  %4172 = vmatpush1.bf16.msra.mxu0 %v3507
  %4173 = vmatprep.subr.bf16.mxu0 %v3514
  %4174 = vmatpush1.bf16.msra.mxu0 %v3513
  %4175 = vmatprep.subr.bf16.mxu0 %v3520
  %4176 = vmatpush1.bf16.msra.mxu0 %v3519
  %4177 = vmatprep.subr.bf16.mxu0 %v3526
  %4178 = vmatpush1.bf16.msra.mxu0 %v3525
  %4179 = vmatprep.subr.bf16.mxu0 %v3532
  %4180 = vmatpush1.bf16.msra.mxu0 %v3531
  %4181 = vmatprep.subr.bf16.mxu0 %v3538
  %4182 = vmatpush1.bf16.msra.mxu0 %v3537
  %4183 = vmatprep.mubr.bf16.mxu0 %v2828
  %4184 = vmatmul.mubr.bf16.gmra.mrb[0].mxu0 %v2827
  %v4185 = vpop.f32.mrb[0].mxu0
  %v4186 = vadd.f32 0.0, %v4185
  %v4187 = vpop.f32.mrb[0].mxu0
  %v4188 = vadd.f32 0.0, %v4187
  %v4189 = vpop.f32.mrb[0].mxu0
  %v4190 = vadd.f32 0.0, %v4189
  %v4191 = vpop.f32.mrb[0].mxu0
  %v4192 = vadd.f32 0.0, %v4191
  %4193 = vmatprep.mubr.bf16.mxu0 %v2832
  %4194 = vmatmul.mubr.bf16.gmra.mrb[0].mxu0 %v2831
  %v4195 = vpop.f32.mrb[0].mxu0
  %v4196 = vadd.f32 0.0, %v4195
  %v4197 = vpop.f32.mrb[0].mxu0
  %v4198 = vadd.f32 0.0, %v4197
  %v4199 = vpop.f32.mrb[0].mxu0
  %v4200 = vadd.f32 0.0, %v4199
  %v4201 = vpop.f32.mrb[0].mxu0
  %v4202 = vadd.f32 0.0, %v4201
  %4203 = vmatprep.mubr.bf16.mxu0 %v2836
  %4204 = vmatmul.mubr.bf16.gmra.mrb[0].mxu0 %v2835
  %v4205 = vpop.f32.mrb[0].mxu0
  %v4206 = vadd.f32 0.0, %v4205
  %v4207 = vpop.f32.mrb[0].mxu0
  %v4208 = vadd.f32 0.0, %v4207
  %v4209 = vpop.f32.mrb[0].mxu0
  %v4210 = vadd.f32 0.0, %v4209
  %v4211 = vpop.f32.mrb[0].mxu0
  %v4212 = vadd.f32 0.0, %v4211
  %4213 = vmatprep.mubr.bf16.mxu0 %v2840
  %4214 = vmatmul.mubr.bf16.gmra.mrb[0].mxu0 %v2839
  %v4215 = vpop.f32.mrb[0].mxu0
  %v4216 = vadd.f32 0.0, %v4215
  %v4217 = vpop.f32.mrb[0].mxu0
  %v4218 = vadd.f32 0.0, %v4217
  %v4219 = vpop.f32.mrb[0].mxu0
  %v4220 = vadd.f32 0.0, %v4219
  %v4221 = vpop.f32.mrb[0].mxu0
  %v4222 = vadd.f32 0.0, %v4221
  %4223 = vmatprep.mubr.bf16.mxu0 %v2844
  %4224 = vmatmul.mubr.bf16.gmra.mrb[0].mxu0 %v2843
  %v4225 = vpop.f32.mrb[0].mxu0
  %v4226 = vadd.f32 0.0, %v4225
  %v4227 = vpop.f32.mrb[0].mxu0
  %v4228 = vadd.f32 0.0, %v4227
  %v4229 = vpop.f32.mrb[0].mxu0
  %v4230 = vpop.f32.mrb[0].mxu0
  %4231 = vdwg.mxu0
  %4232 = vmatprep.subr.bf16.mxu0 %v3544
  %4233 = vmatpush1.bf16.msra.mxu0 %v3543
  %4234 = vmatprep.subr.bf16.mxu0 %v3550
  %4235 = vmatpush1.bf16.msra.mxu0 %v3549
  %4236 = vmatprep.subr.bf16.mxu0 %v3556
  %4237 = vmatpush1.bf16.msra.mxu0 %v3555
  %4238 = vmatprep.subr.bf16.mxu0 %v3562
  %4239 = vmatpush1.bf16.msra.mxu0 %v3561
  %4240 = vmatprep.subr.bf16.mxu0 %v3568
  %4241 = vmatpush1.bf16.msra.mxu0 %v3567
  %4242 = vmatprep.subr.bf16.mxu0 %v3574
  %4243 = vmatpush1.bf16.msra.mxu0 %v3573
  %4244 = vmatprep.subr.bf16.mxu0 %v3580
  %4245 = vmatpush1.bf16.msra.mxu0 %v3579
  %4246 = vmatprep.subr.bf16.mxu0 %v3586
  %4247 = vmatpush1.bf16.msra.mxu0 %v3585
  %4248 = vmatprep.subr.bf16.mxu0 %v3592
  %4249 = vmatpush1.bf16.msra.mxu0 %v3591
  %4250 = vmatprep.subr.bf16.mxu0 %v3598
  %4251 = vmatpush1.bf16.msra.mxu0 %v3597
  %4252 = vmatprep.subr.bf16.mxu0 %v3604
  %4253 = vmatpush1.bf16.msra.mxu0 %v3603
  %4254 = vmatprep.subr.bf16.mxu0 %v3610
  %4255 = vmatpush1.bf16.msra.mxu0 %v3609
  %4256 = vmatprep.subr.bf16.mxu0 %v3616
  %4257 = vmatpush1.bf16.msra.mxu0 %v3615
  %4258 = vmatprep.subr.bf16.mxu0 %v3622
  %4259 = vmatpush1.bf16.msra.mxu0 %v3621
  %4260 = vmatprep.subr.bf16.mxu0 %v3628
  %4261 = vmatpush1.bf16.msra.mxu0 %v3627
  %4262 = vmatprep.subr.bf16.mxu0 %v3634
  %4263 = vmatpush1.bf16.msra.mxu0 %v3633
  %4264 = vmatprep.mubr.bf16.mxu0 %v2830
  %4265 = vmatmul.mubr.bf16.gmra.mrb[0].mxu0 %v2829
  %v4266 = vpop.f32.mrb[0].mxu0
  %v4267 = vadd.f32 %v4186, %v4266
  %v4268 = vpop.f32.mrb[0].mxu0
  %v4269 = vadd.f32 %v4188, %v4268
  %v4270 = vpop.f32.mrb[0].mxu0
  %v4271 = vadd.f32 %v4190, %v4270
  %v4272 = vpop.f32.mrb[0].mxu0
  %v4273 = vadd.f32 %v4192, %v4272
  %4274 = vmatprep.mubr.bf16.mxu0 %v2834
  %4275 = vmatmul.mubr.bf16.gmra.mrb[0].mxu0 %v2833
  %v4276 = vpop.f32.mrb[0].mxu0
  %v4277 = vadd.f32 %v4196, %v4276
  %v4278 = vpop.f32.mrb[0].mxu0
  %v4279 = vadd.f32 %v4198, %v4278
  %v4280 = vpop.f32.mrb[0].mxu0
  %v4281 = vadd.f32 %v4200, %v4280
  %v4282 = vpop.f32.mrb[0].mxu0
  %v4283 = vadd.f32 %v4202, %v4282
  %4284 = vmatprep.mubr.bf16.mxu0 %v2838
  %4285 = vmatmul.mubr.bf16.gmra.mrb[0].mxu0 %v2837
  %v4286 = vpop.f32.mrb[0].mxu0
  %v4287 = vadd.f32 %v4206, %v4286
  %v4288 = vpop.f32.mrb[0].mxu0
  %v4289 = vadd.f32 %v4208, %v4288
  %v4290 = vpop.f32.mrb[0].mxu0
  %v4291 = vadd.f32 %v4210, %v4290
  %v4292 = vpop.f32.mrb[0].mxu0
  %v4293 = vadd.f32 %v4212, %v4292
  %4294 = vmatprep.mubr.bf16.mxu0 %v2842
  %4295 = vmatmul.mubr.bf16.gmra.mrb[0].mxu0 %v2841
  %v4296 = vpop.f32.mrb[0].mxu0
  %v4297 = vadd.f32 %v4216, %v4296
  %v4298 = vpop.f32.mrb[0].mxu0
  %v4299 = vadd.f32 %v4218, %v4298
  %v4300 = vpop.f32.mrb[0].mxu0
  %v4301 = vadd.f32 %v4220, %v4300
  %v4302 = vpop.f32.mrb[0].mxu0
  %v4303 = vadd.f32 %v4222, %v4302
  %4304 = vmatprep.mubr.bf16.mxu0 %v2846
  %4305 = vmatmul.mubr.bf16.gmra.mrb[0].mxu0 %v2845
  %v4306 = vpop.f32.mrb[0].mxu0
  %v4307 = vadd.f32 %v4226, %v4306
  %v4308 = vpop.f32.mrb[0].mxu0
  %v4309 = vadd.f32 %v4228, %v4308
  %v4310 = vpop.f32.mrb[0].mxu0
  %v4311 = vpop.f32.mrb[0].mxu0
  %4312 = vdwg.mxu0
  %v4315 = vunpack.c.l.b16 %v2368
  %v4316 = vunpack.c.h.b16 %v2368
  %v4317 = vunpack.c.l.b16 %v2369
  %v4318 = vunpack.c.h.b16 %v2369
  %v4319 = vpack.c.b16 %v2791, %v4315
  %v4320 = vpack.c.b16 %v2792, %v4316
  %v4321 = vpack.c.b16 %v2793, %v4317
  %v4322 = vpack.c.b16 %v2794, %v4318
  %v4323 = vpack.c.b16 %v2799, %v2795
  %v4324 = vpack.c.b16 %v2800, %v2796
  %v4325 = vpack.c.b16 %v2801, %v2797
  %v4326 = vpack.c.b16 %v2802, %v2798
  %v4327 = vpack.c.b16 %v2807, %v2803
  %v4328 = vpack.c.b16 %v2808, %v2804
  %v4329 = vpack.c.b16 %v2809, %v2805
  %v4330 = vpack.c.b16 %v2810, %v2806
  %v4331 = vpack.c.b16 %v2815, %v2811
  %v4332 = vpack.c.b16 %v2816, %v2812
  %v4333 = vpack.c.b16 %v2817, %v2813
  %v4334 = vpack.c.b16 %v2818, %v2814
  %v4335 = vpack.c.b16 %v2819, %v2819
  %v4336 = vpack.c.b16 %v2820, %v2820
  %v4337 = vpack.c.b16 %v2821, %v2821
  %v4338 = vpack.c.b16 %v2822, %v2822
  %v4551 = vunpack.c.l.b16 %v2386
  %v4552 = vunpack.c.h.b16 %v2386
  %v4553 = vunpack.c.l.b16 %v2387
  %v4554 = vunpack.c.h.b16 %v2387
  %v4555 = vunpack.c.l.b16 %v2388
  %v4556 = vunpack.c.h.b16 %v2388
  %v4557 = vunpack.c.l.b16 %v2389
  %v4558 = vunpack.c.h.b16 %v2389
  %v4559 = vunpack.c.l.b16 %v2390
  %v4560 = vunpack.c.h.b16 %v2390
  %v4561 = vunpack.c.l.b16 %v2391
  %v4562 = vunpack.c.h.b16 %v2391
  %v4563 = vunpack.c.l.b16 %v2392
  %v4564 = vunpack.c.h.b16 %v2392
  %v4565 = vunpack.c.l.b16 %v2393
  %v4566 = vunpack.c.h.b16 %v2393
  %v4567 = vunpack.c.l.b16 %v2394
  %v4568 = vunpack.c.h.b16 %v2394
  %v4569 = vunpack.c.l.b16 %v2395
  %v4570 = vunpack.c.h.b16 %v2395
  %v4571 = vunpack.c.l.b16 %v2396
  %v4572 = vunpack.c.h.b16 %v2396
  %v4573 = vunpack.c.l.b16 %v2397
  %v4574 = vunpack.c.h.b16 %v2397
  %v4575 = vunpack.c.l.b16 %v2398
  %v4576 = vunpack.c.h.b16 %v2398
  %v4577 = vunpack.c.l.b16 %v2399
  %v4578 = vunpack.c.h.b16 %v2399
  %v4579 = vunpack.c.l.b16 %v2400
  %v4580 = vunpack.c.h.b16 %v2400
  %v4581 = vunpack.c.l.b16 %v2401
  %v4582 = vunpack.c.h.b16 %v2401
  %v4583 = vunpack.c.l.b16 %v2402
  %v4584 = vunpack.c.h.b16 %v2402
  %v4585 = vunpack.c.l.b16 %v2403
  %v4586 = vunpack.c.h.b16 %v2403
  %v4587 = vunpack.c.l.b16 %v2404
  %v4588 = vunpack.c.h.b16 %v2404
  %v4589 = vunpack.c.l.b16 %v2405
  %v4590 = vunpack.c.h.b16 %v2405
  %v4591 = vunpack.c.l.b16 %v2406
  %v4592 = vunpack.c.h.b16 %v2406
  %v4593 = vunpack.c.l.b16 %v2407
  %v4594 = vunpack.c.h.b16 %v2407
  %v4595 = vunpack.c.l.b16 %v2408
  %v4596 = vunpack.c.h.b16 %v2408
  %v4597 = vunpack.c.l.b16 %v2409
  %v4598 = vunpack.c.h.b16 %v2409
  %v4599 = vunpack.c.l.b16 %v2410
  %v4600 = vunpack.c.h.b16 %v2410
  %v4601 = vunpack.c.l.b16 %v2411
  %v4602 = vunpack.c.h.b16 %v2411
  %v4603 = vunpack.c.l.b16 %v2412
  %v4604 = vunpack.c.h.b16 %v2412
  %v4605 = vunpack.c.l.b16 %v2413
  %v4606 = vunpack.c.h.b16 %v2413
  %v4607 = vunpack.c.l.b16 %v2414
  %v4608 = vunpack.c.h.b16 %v2414
  %v4609 = vunpack.c.l.b16 %v2415
  %v4610 = vunpack.c.h.b16 %v2415
  %v4611 = vunpack.c.l.b16 %v2416
  %v4612 = vunpack.c.h.b16 %v2416
  %v4613 = vunpack.c.l.b16 %v2417
  %v4614 = vunpack.c.h.b16 %v2417
  %v4615 = vunpack.c.l.b16 %v2418
  %v4616 = vunpack.c.h.b16 %v2418
  %v4617 = vunpack.c.l.b16 %v2419
  %v4618 = vunpack.c.h.b16 %v2419
  %v4619 = vunpack.c.l.b16 %v2420
  %v4620 = vunpack.c.h.b16 %v2420
  %v4621 = vunpack.c.l.b16 %v2421
  %v4622 = vunpack.c.h.b16 %v2421
  %v4623 = vunpack.c.l.b16 %v2422
  %v4624 = vunpack.c.h.b16 %v2422
  %v4625 = vunpack.c.l.b16 %v2423
  %v4626 = vunpack.c.h.b16 %v2423
  %v4627 = vunpack.c.l.b16 %v2424
  %v4628 = vunpack.c.h.b16 %v2424
  %v4629 = vunpack.c.l.b16 %v2425
  %v4630 = vunpack.c.h.b16 %v2425
  %v4631 = vunpack.c.l.b16 %v2426
  %v4632 = vunpack.c.h.b16 %v2426
  %v4633 = vunpack.c.l.b16 %v2427
  %v4634 = vunpack.c.h.b16 %v2427
  %v4635 = vunpack.c.l.b16 %v2428
  %v4636 = vunpack.c.h.b16 %v2428
  %v4637 = vunpack.c.l.b16 %v2429
  %v4638 = vunpack.c.h.b16 %v2429
  %v4639 = vunpack.c.l.b16 %v2430
  %v4640 = vunpack.c.h.b16 %v2430
  %v4641 = vunpack.c.l.b16 %v2431
  %v4642 = vunpack.c.h.b16 %v2431
  %v4643 = vunpack.c.l.b16 %v2432
  %v4644 = vunpack.c.h.b16 %v2432
  %v4645 = vunpack.c.l.b16 %v2433
  %v4646 = vunpack.c.h.b16 %v2433
  %v4647 = vunpack.c.l.b16 %v2434
  %v4648 = vunpack.c.h.b16 %v2434
  %v4649 = vunpack.c.l.b16 %v2435
  %v4650 = vunpack.c.h.b16 %v2435
  %v4651 = vunpack.c.l.b16 %v2436
  %v4652 = vunpack.c.h.b16 %v2436
  %v4653 = vunpack.c.l.b16 %v2437
  %v4654 = vunpack.c.h.b16 %v2437
  %v4655 = vunpack.c.l.b16 %v2438
  %v4656 = vunpack.c.h.b16 %v2438
  %v4657 = vunpack.c.l.b16 %v2439
  %v4658 = vunpack.c.h.b16 %v2439
  %v4659 = vunpack.c.l.b16 %v2440
  %v4660 = vunpack.c.h.b16 %v2440
  %v4661 = vunpack.c.l.b16 %v2441
  %v4662 = vunpack.c.h.b16 %v2441
  %v4663 = vunpack.c.l.b16 %v2442
  %v4664 = vunpack.c.h.b16 %v2442
  %v4665 = vunpack.c.l.b16 %v2443
  %v4666 = vunpack.c.h.b16 %v2443
  %v4667 = vunpack.c.l.b16 %v2444
  %v4668 = vunpack.c.h.b16 %v2444
  %v4669 = vunpack.c.l.b16 %v2445
  %v4670 = vunpack.c.h.b16 %v2445
  %v4671 = vunpack.c.l.b16 %v2446
  %v4672 = vunpack.c.h.b16 %v2446
  %v4673 = vunpack.c.l.b16 %v2447
  %v4674 = vunpack.c.h.b16 %v2447
  %v4675 = vunpack.c.l.b16 %v2448
  %v4676 = vunpack.c.h.b16 %v2448
  %v4677 = vunpack.c.l.b16 %v2449
  %v4678 = vunpack.c.h.b16 %v2449
  %v4679 = vunpack.c.l.b16 %v2450
  %v4680 = vunpack.c.h.b16 %v2450
  %v4681 = vunpack.c.l.b16 %v2451
  %v4682 = vunpack.c.h.b16 %v2451
  %v4683 = vunpack.c.l.b16 %v2452
  %v4684 = vunpack.c.h.b16 %v2452
  %v4685 = vunpack.c.l.b16 %v2453
  %v4686 = vunpack.c.h.b16 %v2453
  %v4687 = vunpack.c.l.b16 %v2454
  %v4688 = vunpack.c.h.b16 %v2454
  %v4689 = vunpack.c.l.b16 %v2455
  %v4690 = vunpack.c.h.b16 %v2455
  %v4691 = vunpack.c.l.b16 %v2456
  %v4692 = vunpack.c.h.b16 %v2456
  %v4693 = vunpack.c.l.b16 %v2457
  %v4694 = vunpack.c.h.b16 %v2457
  %v4695 = vunpack.c.l.b16 %v2458
  %v4696 = vunpack.c.h.b16 %v2458
  %v4697 = vunpack.c.l.b16 %v2459
  %v4698 = vunpack.c.h.b16 %v2459
  %v4699 = vunpack.c.l.b16 %v2460
  %v4700 = vunpack.c.h.b16 %v2460
  %v4701 = vunpack.c.l.b16 %v2461
  %v4702 = vunpack.c.h.b16 %v2461
  %v4703 = vunpack.c.l.b16 %v2462
  %v4704 = vunpack.c.h.b16 %v2462
  %v4705 = vunpack.c.l.b16 %v2463
  %v4706 = vunpack.c.h.b16 %v2463
  %v4707 = vunpack.c.l.b16 %v2464
  %v4708 = vunpack.c.h.b16 %v2464
  %v4709 = vunpack.c.l.b16 %v2465
  %v4710 = vunpack.c.h.b16 %v2465
  %v4711 = vunpack.c.l.b16 %v2466
  %v4712 = vunpack.c.h.b16 %v2466
  %v4713 = vunpack.c.l.b16 %v2467
  %v4714 = vunpack.c.h.b16 %v2467
  %v4715 = vunpack.c.l.b16 %v2468
  %v4716 = vunpack.c.h.b16 %v2468
  %v4717 = vunpack.c.l.b16 %v2469
  %v4718 = vunpack.c.h.b16 %v2469
  %v4719 = vunpack.c.l.b16 %v2470
  %v4720 = vunpack.c.h.b16 %v2470
  %v4721 = vunpack.c.l.b16 %v2471
  %v4722 = vunpack.c.h.b16 %v2471
  %v4723 = vunpack.c.l.b16 %v2472
  %v4724 = vunpack.c.h.b16 %v2472
  %v4725 = vunpack.c.l.b16 %v2473
  %v4726 = vunpack.c.h.b16 %v2473
  %v4727 = vunpack.c.l.b16 %v2474
  %v4728 = vunpack.c.h.b16 %v2474
  %v4729 = vunpack.c.l.b16 %v2475
  %v4730 = vunpack.c.h.b16 %v2475
  %v4731 = vunpack.c.l.b16 %v2476
  %v4732 = vunpack.c.h.b16 %v2476
  %v4733 = vunpack.c.l.b16 %v2477
  %v4734 = vunpack.c.h.b16 %v2477
  %v4735 = vunpack.c.l.b16 %v2478
  %v4736 = vunpack.c.h.b16 %v2478
  %v4737 = vunpack.c.l.b16 %v2479
  %v4738 = vunpack.c.h.b16 %v2479
  %v4739 = vunpack.c.l.b16 %v2480
  %v4740 = vunpack.c.h.b16 %v2480
  %v4741 = vunpack.c.l.b16 %v2481
  %v4742 = vunpack.c.h.b16 %v2481
  %v4743 = vunpack.c.l.b16 %v2482
  %v4744 = vunpack.c.h.b16 %v2482
  %v4745 = vunpack.c.l.b16 %v2483
  %v4746 = vunpack.c.h.b16 %v2483
  %v4747 = vunpack.c.l.b16 %v2484
  %v4748 = vunpack.c.h.b16 %v2484
  %v4749 = vunpack.c.l.b16 %v2485
  %v4750 = vunpack.c.h.b16 %v2485
  %v4751 = vunpack.c.l.b16 %v2486
  %v4752 = vunpack.c.h.b16 %v2486
  %v4753 = vunpack.c.l.b16 %v2487
  %v4754 = vunpack.c.h.b16 %v2487
  %v4755 = vunpack.c.l.b16 %v2488
  %v4756 = vunpack.c.h.b16 %v2488
  %v4757 = vunpack.c.l.b16 %v2489
  %v4758 = vunpack.c.h.b16 %v2489
  %v4759 = vunpack.c.l.b16 %v2490
  %v4760 = vunpack.c.h.b16 %v2490
  %v4761 = vunpack.c.l.b16 %v2491
  %v4762 = vunpack.c.h.b16 %v2491
  %v4763 = vunpack.c.l.b16 %v2492
  %v4764 = vunpack.c.h.b16 %v2492
  %v4765 = vunpack.c.l.b16 %v2493
  %v4766 = vunpack.c.h.b16 %v2493
  %v4767 = vunpack.c.l.b16 %v2494
  %v4768 = vunpack.c.h.b16 %v2494
  %v4769 = vunpack.c.l.b16 %v2495
  %v4770 = vunpack.c.h.b16 %v2495
  %v4771 = vunpack.c.l.b16 %v2496
  %v4772 = vunpack.c.h.b16 %v2496
  %v4773 = vunpack.c.l.b16 %v2497
  %v4774 = vunpack.c.h.b16 %v2497
  %v4775 = vunpack.c.l.b16 %v2498
  %v4776 = vunpack.c.h.b16 %v2498
  %v4777 = vunpack.c.l.b16 %v2499
  %v4778 = vunpack.c.h.b16 %v2499
  %v4779 = vunpack.c.l.b16 %v2500
  %v4780 = vunpack.c.h.b16 %v2500
  %v4781 = vunpack.c.l.b16 %v2501
  %v4782 = vunpack.c.h.b16 %v2501
  %v4783 = vunpack.c.l.b16 %v2502
  %v4784 = vunpack.c.h.b16 %v2502
  %v4785 = vunpack.c.l.b16 %v2503
  %v4786 = vunpack.c.h.b16 %v2503
  %v4787 = vunpack.c.l.b16 %v2504
  %v4788 = vunpack.c.h.b16 %v2504
  %v4789 = vunpack.c.l.b16 %v2505
  %v4790 = vunpack.c.h.b16 %v2505
  %v4791 = vunpack.c.l.b16 %v2506
  %v4792 = vunpack.c.h.b16 %v2506
  %v4793 = vunpack.c.l.b16 %v2507
  %v4794 = vunpack.c.h.b16 %v2507
  %v4795 = vunpack.c.l.b16 %v2508
  %v4796 = vunpack.c.h.b16 %v2508
  %v4797 = vunpack.c.l.b16 %v2509
  %v4798 = vunpack.c.h.b16 %v2509
  %v4799 = vunpack.c.l.b16 %v2510
  %v4800 = vunpack.c.h.b16 %v2510
  %v4801 = vunpack.c.l.b16 %v2511
  %v4802 = vunpack.c.h.b16 %v2511
  %v4803 = vunpack.c.l.b16 %v2512
  %v4804 = vunpack.c.h.b16 %v2512
  %v4805 = vunpack.c.l.b16 %v2513
  %v4806 = vunpack.c.h.b16 %v2513
  %v4807 = vunpack.c.l.b16 %v2514
  %v4808 = vunpack.c.h.b16 %v2514
  %v4809 = vunpack.c.l.b16 %v2515
  %v4810 = vunpack.c.h.b16 %v2515
  %v4811 = vunpack.c.l.b16 %v2516
  %v4812 = vunpack.c.h.b16 %v2516
  %v4813 = vunpack.c.l.b16 %v2517
  %v4814 = vunpack.c.h.b16 %v2517
  %v4815 = vunpack.c.l.b16 %v2518
  %v4816 = vunpack.c.h.b16 %v2518
  %v4817 = vunpack.c.l.b16 %v2519
  %v4818 = vunpack.c.h.b16 %v2519
  %v4819 = vunpack.c.l.b16 %v2520
  %v4820 = vunpack.c.h.b16 %v2520
  %v4821 = vunpack.c.l.b16 %v2521
  %v4822 = vunpack.c.h.b16 %v2521
  %v4823 = vunpack.c.l.b16 %v2522
  %v4824 = vunpack.c.h.b16 %v2522
  %v4825 = vunpack.c.l.b16 %v2523
  %v4826 = vunpack.c.h.b16 %v2523
  %v4827 = vunpack.c.l.b16 %v2524
  %v4828 = vunpack.c.h.b16 %v2524
  %v4829 = vunpack.c.l.b16 %v2525
  %v4830 = vunpack.c.h.b16 %v2525
  %v4831 = vunpack.c.l.b16 %v2526
  %v4832 = vunpack.c.h.b16 %v2526
  %v4833 = vunpack.c.l.b16 %v2527
  %v4834 = vunpack.c.h.b16 %v2527
  %v4835 = vunpack.c.l.b16 %v2528
  %v4836 = vunpack.c.h.b16 %v2528
  %v4837 = vunpack.c.l.b16 %v2529
  %v4838 = vunpack.c.h.b16 %v2529
  %v4839 = vunpack.c.l.b16 %v2530
  %v4840 = vunpack.c.h.b16 %v2530
  %v4841 = vunpack.c.l.b16 %v2531
  %v4842 = vunpack.c.h.b16 %v2531
  %v4843 = vunpack.c.l.b16 %v2532
  %v4844 = vunpack.c.h.b16 %v2532
  %v4845 = vunpack.c.l.b16 %v2533
  %v4846 = vunpack.c.h.b16 %v2533
  %v4847 = vunpack.c.l.b16 %v2534
  %v4848 = vunpack.c.h.b16 %v2534
  %v4849 = vunpack.c.l.b16 %v2535
  %v4850 = vunpack.c.h.b16 %v2535
  %v4851 = vunpack.c.l.b16 %v2536
  %v4852 = vunpack.c.h.b16 %v2536
  %v4853 = vunpack.c.l.b16 %v2537
  %v4854 = vunpack.c.h.b16 %v2537
  %v4855 = vunpack.c.l.b16 %v2538
  %v4856 = vunpack.c.h.b16 %v2538
  %v4857 = vunpack.c.l.b16 %v2539
  %v4858 = vunpack.c.h.b16 %v2539
  %v4859 = vunpack.c.l.b16 %v2540
  %v4860 = vunpack.c.h.b16 %v2540
  %v4861 = vunpack.c.l.b16 %v2541
  %v4862 = vunpack.c.h.b16 %v2541
  %v4863 = vunpack.c.l.b16 %v2542
  %v4864 = vunpack.c.h.b16 %v2542
  %v4865 = vunpack.c.l.b16 %v2543
  %v4866 = vunpack.c.h.b16 %v2543
  %v4867 = vunpack.c.l.b16 %v2544
  %v4868 = vunpack.c.h.b16 %v2544
  %v4869 = vunpack.c.l.b16 %v2545
  %v4870 = vunpack.c.h.b16 %v2545
  %v4871 = vunpack.c.l.b16 %v2546
  %v4872 = vunpack.c.h.b16 %v2546
  %v4873 = vunpack.c.l.b16 %v2547
  %v4874 = vunpack.c.h.b16 %v2547
  %v4875 = vunpack.c.l.b16 %v2548
  %v4876 = vunpack.c.h.b16 %v2548
  %v4877 = vunpack.c.l.b16 %v2549
  %v4878 = vunpack.c.h.b16 %v2549
  %v4879 = vunpack.c.l.b16 %v2550
  %v4880 = vunpack.c.h.b16 %v2550
  %v4881 = vunpack.c.l.b16 %v2551
  %v4882 = vunpack.c.h.b16 %v2551
  %v4883 = vunpack.c.l.b16 %v2552
  %v4884 = vunpack.c.h.b16 %v2552
  %v4885 = vunpack.c.l.b16 %v2553
  %v4886 = vunpack.c.h.b16 %v2553
  %v4887 = vunpack.c.l.b16 %v2554
  %v4888 = vunpack.c.h.b16 %v2554
  %v4889 = vunpack.c.l.b16 %v2555
  %v4890 = vunpack.c.h.b16 %v2555
  %v4891 = vunpack.c.l.b16 %v2556
  %v4892 = vunpack.c.h.b16 %v2556
  %v4893 = vunpack.c.l.b16 %v2557
  %v4894 = vunpack.c.h.b16 %v2557
  %v4895 = vunpack.c.l.b16 %v2558
  %v4896 = vunpack.c.h.b16 %v2558
  %v4897 = vunpack.c.l.b16 %v2559
  %v4898 = vunpack.c.h.b16 %v2559
  %v4899 = vunpack.c.l.b16 %v2560
  %v4900 = vunpack.c.h.b16 %v2560
  %v4901 = vunpack.c.l.b16 %v2561
  %v4902 = vunpack.c.h.b16 %v2561
  %v4903 = vunpack.c.l.b16 %v2562
  %v4904 = vunpack.c.h.b16 %v2562
  %v4905 = vunpack.c.l.b16 %v2563
  %v4906 = vunpack.c.h.b16 %v2563
  %v4907 = vunpack.c.l.b16 %v2564
  %v4908 = vunpack.c.h.b16 %v2564
  %v4909 = vunpack.c.l.b16 %v2565
  %v4910 = vunpack.c.h.b16 %v2565
  %v4911 = vunpack.c.l.b16 %v2566
  %v4912 = vunpack.c.h.b16 %v2566
  %v4913 = vunpack.c.l.b16 %v2567
  %v4914 = vunpack.c.h.b16 %v2567
  %v4915 = vunpack.c.l.b16 %v2568
  %v4916 = vunpack.c.h.b16 %v2568
  %v4917 = vunpack.c.l.b16 %v2569
  %v4918 = vunpack.c.h.b16 %v2569
  %v4919 = vunpack.c.l.b16 %v2570
  %v4920 = vunpack.c.h.b16 %v2570
  %v4921 = vunpack.c.l.b16 %v2571
  %v4922 = vunpack.c.h.b16 %v2571
  %v4923 = vunpack.c.l.b16 %v2572
  %v4924 = vunpack.c.h.b16 %v2572
  %v4925 = vunpack.c.l.b16 %v2573
  %v4926 = vunpack.c.h.b16 %v2573
  %v4927 = vunpack.c.l.b16 %v2574
  %v4928 = vunpack.c.h.b16 %v2574
  %v4929 = vunpack.c.l.b16 %v2575
  %v4930 = vunpack.c.h.b16 %v2575
  %v4931 = vunpack.c.l.b16 %v2576
  %v4932 = vunpack.c.h.b16 %v2576
  %v4933 = vunpack.c.l.b16 %v2577
  %v4934 = vunpack.c.h.b16 %v2577
  %v4935 = vpack.c.b16 %v4557, %v4551
  %v4936 = vpack.c.b16 %v4558, %v4552
  %v4937 = vpack.c.b16 %v4559, %v4553
  %v4938 = vpack.c.b16 %v4560, %v4554
  %v4939 = vpack.c.b16 %v4561, %v4555
  %v4940 = vpack.c.b16 %v4562, %v4556
  %v4941 = vpack.c.b16 %v4569, %v4563
  %v4942 = vpack.c.b16 %v4570, %v4564
  %v4943 = vpack.c.b16 %v4571, %v4565
  %v4944 = vpack.c.b16 %v4572, %v4566
  %v4945 = vpack.c.b16 %v4573, %v4567
  %v4946 = vpack.c.b16 %v4574, %v4568
  %v4947 = vpack.c.b16 %v4581, %v4575
  %v4948 = vpack.c.b16 %v4582, %v4576
  %v4949 = vpack.c.b16 %v4583, %v4577
  %v4950 = vpack.c.b16 %v4584, %v4578
  %v4951 = vpack.c.b16 %v4585, %v4579
  %v4952 = vpack.c.b16 %v4586, %v4580
  %v4953 = vpack.c.b16 %v4593, %v4587
  %v4954 = vpack.c.b16 %v4594, %v4588
  %v4955 = vpack.c.b16 %v4595, %v4589
  %v4956 = vpack.c.b16 %v4596, %v4590
  %v4957 = vpack.c.b16 %v4597, %v4591
  %v4958 = vpack.c.b16 %v4598, %v4592
  %v4959 = vpack.c.b16 %v4605, %v4599
  %v4960 = vpack.c.b16 %v4606, %v4600
  %v4961 = vpack.c.b16 %v4607, %v4601
  %v4962 = vpack.c.b16 %v4608, %v4602
  %v4963 = vpack.c.b16 %v4609, %v4603
  %v4964 = vpack.c.b16 %v4610, %v4604
  %v4965 = vpack.c.b16 %v4617, %v4611
  %v4966 = vpack.c.b16 %v4618, %v4612
  %v4967 = vpack.c.b16 %v4619, %v4613
  %v4968 = vpack.c.b16 %v4620, %v4614
  %v4969 = vpack.c.b16 %v4621, %v4615
  %v4970 = vpack.c.b16 %v4622, %v4616
  %v4971 = vpack.c.b16 %v4629, %v4623
  %v4972 = vpack.c.b16 %v4630, %v4624
  %v4973 = vpack.c.b16 %v4631, %v4625
  %v4974 = vpack.c.b16 %v4632, %v4626
  %v4975 = vpack.c.b16 %v4633, %v4627
  %v4976 = vpack.c.b16 %v4634, %v4628
  %v4977 = vpack.c.b16 %v4641, %v4635
  %v4978 = vpack.c.b16 %v4642, %v4636
  %v4979 = vpack.c.b16 %v4643, %v4637
  %v4980 = vpack.c.b16 %v4644, %v4638
  %v4981 = vpack.c.b16 %v4645, %v4639
  %v4982 = vpack.c.b16 %v4646, %v4640
  %v4983 = vpack.c.b16 %v4653, %v4647
  %v4984 = vpack.c.b16 %v4654, %v4648
  %v4985 = vpack.c.b16 %v4655, %v4649
  %v4986 = vpack.c.b16 %v4656, %v4650
  %v4987 = vpack.c.b16 %v4657, %v4651
  %v4988 = vpack.c.b16 %v4658, %v4652
  %v4989 = vpack.c.b16 %v4665, %v4659
  %v4990 = vpack.c.b16 %v4666, %v4660
  %v4991 = vpack.c.b16 %v4667, %v4661
  %v4992 = vpack.c.b16 %v4668, %v4662
  %v4993 = vpack.c.b16 %v4669, %v4663
  %v4994 = vpack.c.b16 %v4670, %v4664
  %v4995 = vpack.c.b16 %v4677, %v4671
  %v4996 = vpack.c.b16 %v4678, %v4672
  %v4997 = vpack.c.b16 %v4679, %v4673
  %v4998 = vpack.c.b16 %v4680, %v4674
  %v4999 = vpack.c.b16 %v4681, %v4675
  %v5000 = vpack.c.b16 %v4682, %v4676
  %v5001 = vpack.c.b16 %v4689, %v4683
  %v5002 = vpack.c.b16 %v4690, %v4684
  %v5003 = vpack.c.b16 %v4691, %v4685
  %v5004 = vpack.c.b16 %v4692, %v4686
  %v5005 = vpack.c.b16 %v4693, %v4687
  %v5006 = vpack.c.b16 %v4694, %v4688
  %v5007 = vpack.c.b16 %v4701, %v4695
  %v5008 = vpack.c.b16 %v4702, %v4696
  %v5009 = vpack.c.b16 %v4703, %v4697
  %v5010 = vpack.c.b16 %v4704, %v4698
  %v5011 = vpack.c.b16 %v4705, %v4699
  %v5012 = vpack.c.b16 %v4706, %v4700
  %v5013 = vpack.c.b16 %v4713, %v4707
  %v5014 = vpack.c.b16 %v4714, %v4708
  %v5015 = vpack.c.b16 %v4715, %v4709
  %v5016 = vpack.c.b16 %v4716, %v4710
  %v5017 = vpack.c.b16 %v4717, %v4711
  %v5018 = vpack.c.b16 %v4718, %v4712
  %v5019 = vpack.c.b16 %v4725, %v4719
  %v5020 = vpack.c.b16 %v4726, %v4720
  %v5021 = vpack.c.b16 %v4727, %v4721
  %v5022 = vpack.c.b16 %v4728, %v4722
  %v5023 = vpack.c.b16 %v4729, %v4723
  %v5024 = vpack.c.b16 %v4730, %v4724
  %v5025 = vpack.c.b16 %v4737, %v4731
  %v5026 = vpack.c.b16 %v4738, %v4732
  %v5027 = vpack.c.b16 %v4739, %v4733
  %v5028 = vpack.c.b16 %v4740, %v4734
  %v5029 = vpack.c.b16 %v4741, %v4735
  %v5030 = vpack.c.b16 %v4742, %v4736
  %v5031 = vpack.c.b16 %v4749, %v4743
  %v5032 = vpack.c.b16 %v4750, %v4744
  %v5033 = vpack.c.b16 %v4751, %v4745
  %v5034 = vpack.c.b16 %v4752, %v4746
  %v5035 = vpack.c.b16 %v4753, %v4747
  %v5036 = vpack.c.b16 %v4754, %v4748
  %v5037 = vpack.c.b16 %v4761, %v4755
  %v5038 = vpack.c.b16 %v4762, %v4756
  %v5039 = vpack.c.b16 %v4763, %v4757
  %v5040 = vpack.c.b16 %v4764, %v4758
  %v5041 = vpack.c.b16 %v4765, %v4759
  %v5042 = vpack.c.b16 %v4766, %v4760
  %v5043 = vpack.c.b16 %v4773, %v4767
  %v5044 = vpack.c.b16 %v4774, %v4768
  %v5045 = vpack.c.b16 %v4775, %v4769
  %v5046 = vpack.c.b16 %v4776, %v4770
  %v5047 = vpack.c.b16 %v4777, %v4771
  %v5048 = vpack.c.b16 %v4778, %v4772
  %v5049 = vpack.c.b16 %v4785, %v4779
  %v5050 = vpack.c.b16 %v4786, %v4780
  %v5051 = vpack.c.b16 %v4787, %v4781
  %v5052 = vpack.c.b16 %v4788, %v4782
  %v5053 = vpack.c.b16 %v4789, %v4783
  %v5054 = vpack.c.b16 %v4790, %v4784
  %v5055 = vpack.c.b16 %v4797, %v4791
  %v5056 = vpack.c.b16 %v4798, %v4792
  %v5057 = vpack.c.b16 %v4799, %v4793
  %v5058 = vpack.c.b16 %v4800, %v4794
  %v5059 = vpack.c.b16 %v4801, %v4795
  %v5060 = vpack.c.b16 %v4802, %v4796
  %v5061 = vpack.c.b16 %v4809, %v4803
  %v5062 = vpack.c.b16 %v4810, %v4804
  %v5063 = vpack.c.b16 %v4811, %v4805
  %v5064 = vpack.c.b16 %v4812, %v4806
  %v5065 = vpack.c.b16 %v4813, %v4807
  %v5066 = vpack.c.b16 %v4814, %v4808
  %v5067 = vpack.c.b16 %v4821, %v4815
  %v5068 = vpack.c.b16 %v4822, %v4816
  %v5069 = vpack.c.b16 %v4823, %v4817
  %v5070 = vpack.c.b16 %v4824, %v4818
  %v5071 = vpack.c.b16 %v4825, %v4819
  %v5072 = vpack.c.b16 %v4826, %v4820
  %v5073 = vpack.c.b16 %v4833, %v4827
  %v5074 = vpack.c.b16 %v4834, %v4828
  %v5075 = vpack.c.b16 %v4835, %v4829
  %v5076 = vpack.c.b16 %v4836, %v4830
  %v5077 = vpack.c.b16 %v4837, %v4831
  %v5078 = vpack.c.b16 %v4838, %v4832
  %v5079 = vpack.c.b16 %v4845, %v4839
  %v5080 = vpack.c.b16 %v4846, %v4840
  %v5081 = vpack.c.b16 %v4847, %v4841
  %v5082 = vpack.c.b16 %v4848, %v4842
  %v5083 = vpack.c.b16 %v4849, %v4843
  %v5084 = vpack.c.b16 %v4850, %v4844
  %v5085 = vpack.c.b16 %v4857, %v4851
  %v5086 = vpack.c.b16 %v4858, %v4852
  %v5087 = vpack.c.b16 %v4859, %v4853
  %v5088 = vpack.c.b16 %v4860, %v4854
  %v5089 = vpack.c.b16 %v4861, %v4855
  %v5090 = vpack.c.b16 %v4862, %v4856
  %v5091 = vpack.c.b16 %v4869, %v4863
  %v5092 = vpack.c.b16 %v4870, %v4864
  %v5093 = vpack.c.b16 %v4871, %v4865
  %v5094 = vpack.c.b16 %v4872, %v4866
  %v5095 = vpack.c.b16 %v4873, %v4867
  %v5096 = vpack.c.b16 %v4874, %v4868
  %v5097 = vpack.c.b16 %v4881, %v4875
  %v5098 = vpack.c.b16 %v4882, %v4876
  %v5099 = vpack.c.b16 %v4883, %v4877
  %v5100 = vpack.c.b16 %v4884, %v4878
  %v5101 = vpack.c.b16 %v4885, %v4879
  %v5102 = vpack.c.b16 %v4886, %v4880
  %v5103 = vpack.c.b16 %v4893, %v4887
  %v5104 = vpack.c.b16 %v4894, %v4888
  %v5105 = vpack.c.b16 %v4895, %v4889
  %v5106 = vpack.c.b16 %v4896, %v4890
  %v5107 = vpack.c.b16 %v4897, %v4891
  %v5108 = vpack.c.b16 %v4898, %v4892
  %v5109 = vpack.c.b16 %v4905, %v4899
  %v5110 = vpack.c.b16 %v4906, %v4900
  %v5111 = vpack.c.b16 %v4907, %v4901
  %v5112 = vpack.c.b16 %v4908, %v4902
  %v5113 = vpack.c.b16 %v4909, %v4903
  %v5114 = vpack.c.b16 %v4910, %v4904
  %v5115 = vpack.c.b16 %v4917, %v4911
  %v5116 = vpack.c.b16 %v4918, %v4912
  %v5117 = vpack.c.b16 %v4919, %v4913
  %v5118 = vpack.c.b16 %v4920, %v4914
  %v5119 = vpack.c.b16 %v4921, %v4915
  %v5120 = vpack.c.b16 %v4922, %v4916
  %v5121 = vpack.c.b16 %v4929, %v4923
  %v5122 = vpack.c.b16 %v4930, %v4924
  %v5123 = vpack.c.b16 %v4931, %v4925
  %v5124 = vpack.c.b16 %v4932, %v4926
  %v5125 = vpack.c.b16 %v4933, %v4927
  %v5126 = vpack.c.b16 %v4934, %v4928
  %5319 = vmatprep.subr.bf16.mxu0 %v4936
  %5320 = vmatpush1.bf16.msra.mxu0 %v4935
  %5321 = vmatprep.subr.bf16.mxu0 %v4942
  %5322 = vmatpush1.bf16.msra.mxu0 %v4941
  %5323 = vmatprep.subr.bf16.mxu0 %v4948
  %5324 = vmatpush1.bf16.msra.mxu0 %v4947
  %5325 = vmatprep.subr.bf16.mxu0 %v4954
  %5326 = vmatpush1.bf16.msra.mxu0 %v4953
  %5327 = vmatprep.subr.bf16.mxu0 %v4960
  %5328 = vmatpush1.bf16.msra.mxu0 %v4959
  %5329 = vmatprep.subr.bf16.mxu0 %v4966
  %5330 = vmatpush1.bf16.msra.mxu0 %v4965
  %5331 = vmatprep.subr.bf16.mxu0 %v4972
  %5332 = vmatpush1.bf16.msra.mxu0 %v4971
  %5333 = vmatprep.subr.bf16.mxu0 %v4978
  %5334 = vmatpush1.bf16.msra.mxu0 %v4977
  %5335 = vmatprep.subr.bf16.mxu0 %v4984
  %5336 = vmatpush1.bf16.msra.mxu0 %v4983
  %5337 = vmatprep.subr.bf16.mxu0 %v4990
  %5338 = vmatpush1.bf16.msra.mxu0 %v4989
  %5339 = vmatprep.subr.bf16.mxu0 %v4996
  %5340 = vmatpush1.bf16.msra.mxu0 %v4995
  %5341 = vmatprep.subr.bf16.mxu0 %v5002
  %5342 = vmatpush1.bf16.msra.mxu0 %v5001
  %5343 = vmatprep.subr.bf16.mxu0 %v5008
  %5344 = vmatpush1.bf16.msra.mxu0 %v5007
  %5345 = vmatprep.subr.bf16.mxu0 %v5014
  %5346 = vmatpush1.bf16.msra.mxu0 %v5013
  %5347 = vmatprep.subr.bf16.mxu0 %v5020
  %5348 = vmatpush1.bf16.msra.mxu0 %v5019
  %5349 = vmatprep.subr.bf16.mxu0 %v5026
  %5350 = vmatpush1.bf16.msra.mxu0 %v5025
  %5351 = vmatprep.mubr.bf16.mxu0 %v4320
  %5352 = vmatmul.mubr.bf16.gmra.mrb[0].mxu0 %v4319
  %v5353 = vpop.f32.mrb[0].mxu0
  %v5354 = vadd.f32 %v3943, %v5353
  %v5355 = vpop.f32.mrb[0].mxu0
  %v5356 = vadd.f32 %v3945, %v5355
  %v5357 = vpop.f32.mrb[0].mxu0
  %v5358 = vadd.f32 %v3947, %v5357
  %v5359 = vpop.f32.mrb[0].mxu0
  %v5360 = vadd.f32 %v3949, %v5359
  %5361 = vmatprep.mubr.bf16.mxu0 %v4324
  %5362 = vmatmul.mubr.bf16.gmra.mrb[0].mxu0 %v4323
  %v5363 = vpop.f32.mrb[0].mxu0
  %v5364 = vadd.f32 %v3953, %v5363
  %v5365 = vpop.f32.mrb[0].mxu0
  %v5366 = vadd.f32 %v3955, %v5365
  %v5367 = vpop.f32.mrb[0].mxu0
  %v5368 = vadd.f32 %v3957, %v5367
  %v5369 = vpop.f32.mrb[0].mxu0
  %v5370 = vadd.f32 %v3959, %v5369
  %5371 = vmatprep.mubr.bf16.mxu0 %v4328
  %5372 = vmatmul.mubr.bf16.gmra.mrb[0].mxu0 %v4327
  %v5373 = vpop.f32.mrb[0].mxu0
  %v5374 = vadd.f32 %v3963, %v5373
  %v5375 = vpop.f32.mrb[0].mxu0
  %v5376 = vadd.f32 %v3965, %v5375
  %v5377 = vpop.f32.mrb[0].mxu0
  %v5378 = vadd.f32 %v3967, %v5377
  %v5379 = vpop.f32.mrb[0].mxu0
  %v5380 = vadd.f32 %v3969, %v5379
  %5381 = vmatprep.mubr.bf16.mxu0 %v4332
  %5382 = vmatmul.mubr.bf16.gmra.mrb[0].mxu0 %v4331
  %v5383 = vpop.f32.mrb[0].mxu0
  %v5384 = vadd.f32 %v3973, %v5383
  %v5385 = vpop.f32.mrb[0].mxu0
  %v5386 = vadd.f32 %v3975, %v5385
  %v5387 = vpop.f32.mrb[0].mxu0
  %v5388 = vadd.f32 %v3977, %v5387
  %v5389 = vpop.f32.mrb[0].mxu0
  %v5390 = vadd.f32 %v3979, %v5389
  %5391 = vmatprep.mubr.bf16.mxu0 %v4336
  %5392 = vmatmul.mubr.bf16.gmra.mrb[0].mxu0 %v4335
  %v5393 = vpop.f32.mrb[0].mxu0
  %v5394 = vadd.f32 %v3983, %v5393
  %v5395 = vpop.f32.mrb[0].mxu0
  %v5396 = vadd.f32 %v3985, %v5395
  %v5397 = vpop.f32.mrb[0].mxu0
  %v5398 = vpop.f32.mrb[0].mxu0
  %5399 = vdwg.mxu0
  %5400 = vmatprep.subr.bf16.mxu0 %v5032
  %5401 = vmatpush1.bf16.msra.mxu0 %v5031
  %5402 = vmatprep.subr.bf16.mxu0 %v5038
  %5403 = vmatpush1.bf16.msra.mxu0 %v5037
  %5404 = vmatprep.subr.bf16.mxu0 %v5044
  %5405 = vmatpush1.bf16.msra.mxu0 %v5043
  %5406 = vmatprep.subr.bf16.mxu0 %v5050
  %5407 = vmatpush1.bf16.msra.mxu0 %v5049
  %5408 = vmatprep.subr.bf16.mxu0 %v5056
  %5409 = vmatpush1.bf16.msra.mxu0 %v5055
  %5410 = vmatprep.subr.bf16.mxu0 %v5062
  %5411 = vmatpush1.bf16.msra.mxu0 %v5061
  %5412 = vmatprep.subr.bf16.mxu0 %v5068
  %5413 = vmatpush1.bf16.msra.mxu0 %v5067
  %5414 = vmatprep.subr.bf16.mxu0 %v5074
  %5415 = vmatpush1.bf16.msra.mxu0 %v5073
  %5416 = vmatprep.subr.bf16.mxu0 %v5080
  %5417 = vmatpush1.bf16.msra.mxu0 %v5079
  %5418 = vmatprep.subr.bf16.mxu0 %v5086
  %5419 = vmatpush1.bf16.msra.mxu0 %v5085
  %5420 = vmatprep.subr.bf16.mxu0 %v5092
  %5421 = vmatpush1.bf16.msra.mxu0 %v5091
  %5422 = vmatprep.subr.bf16.mxu0 %v5098
  %5423 = vmatpush1.bf16.msra.mxu0 %v5097
  %5424 = vmatprep.subr.bf16.mxu0 %v5104
  %5425 = vmatpush1.bf16.msra.mxu0 %v5103
  %5426 = vmatprep.subr.bf16.mxu0 %v5110
  %5427 = vmatpush1.bf16.msra.mxu0 %v5109
  %5428 = vmatprep.subr.bf16.mxu0 %v5116
  %5429 = vmatpush1.bf16.msra.mxu0 %v5115
  %5430 = vmatprep.subr.bf16.mxu0 %v5122
  %5431 = vmatpush1.bf16.msra.mxu0 %v5121
  %5432 = vmatprep.mubr.bf16.mxu0 %v4322
  %5433 = vmatmul.mubr.bf16.gmra.mrb[0].mxu0 %v4321
  %v5434 = vpop.f32.mrb[0].mxu0
  %v5435 = vadd.f32 %v5354, %v5434
  %v5436 = vpop.f32.mrb[0].mxu0
  %v5437 = vadd.f32 %v5356, %v5436
  %v5438 = vpop.f32.mrb[0].mxu0
  %v5439 = vadd.f32 %v5358, %v5438
  %v5440 = vpop.f32.mrb[0].mxu0
  %v5441 = vadd.f32 %v5360, %v5440
  %5442 = vmatprep.mubr.bf16.mxu0 %v4326
  %5443 = vmatmul.mubr.bf16.gmra.mrb[0].mxu0 %v4325
  %v5444 = vpop.f32.mrb[0].mxu0
  %v5445 = vadd.f32 %v5364, %v5444
  %v5446 = vpop.f32.mrb[0].mxu0
  %v5447 = vadd.f32 %v5366, %v5446
  %v5448 = vpop.f32.mrb[0].mxu0
  %v5449 = vadd.f32 %v5368, %v5448
  %v5450 = vpop.f32.mrb[0].mxu0
  %v5451 = vadd.f32 %v5370, %v5450
  %5452 = vmatprep.mubr.bf16.mxu0 %v4330
  %5453 = vmatmul.mubr.bf16.gmra.mrb[0].mxu0 %v4329
  %v5454 = vpop.f32.mrb[0].mxu0
  %v5455 = vadd.f32 %v5374, %v5454
  %v5456 = vpop.f32.mrb[0].mxu0
  %v5457 = vadd.f32 %v5376, %v5456
  %v5458 = vpop.f32.mrb[0].mxu0
  %v5459 = vadd.f32 %v5378, %v5458
  %v5460 = vpop.f32.mrb[0].mxu0
  %v5461 = vadd.f32 %v5380, %v5460
  %5462 = vmatprep.mubr.bf16.mxu0 %v4334
  %5463 = vmatmul.mubr.bf16.gmra.mrb[0].mxu0 %v4333
  %v5464 = vpop.f32.mrb[0].mxu0
  %v5465 = vadd.f32 %v5384, %v5464
  %v5466 = vpop.f32.mrb[0].mxu0
  %v5467 = vadd.f32 %v5386, %v5466
  %v5468 = vpop.f32.mrb[0].mxu0
  %v5469 = vadd.f32 %v5388, %v5468
  %v5470 = vpop.f32.mrb[0].mxu0
  %v5471 = vadd.f32 %v5390, %v5470
  %5472 = vmatprep.mubr.bf16.mxu0 %v4338
  %5473 = vmatmul.mubr.bf16.gmra.mrb[0].mxu0 %v4337
  %v5474 = vpop.f32.mrb[0].mxu0
  %v5475 = vadd.f32 %v5394, %v5474
  %v5476 = vpop.f32.mrb[0].mxu0
  %v5477 = vadd.f32 %v5396, %v5476
  %v5478 = vpop.f32.mrb[0].mxu0
  %v5479 = vpop.f32.mrb[0].mxu0
  %5480 = vdwg.mxu0
  %5481 = vmatprep.subr.bf16.mxu0 %v4938
  %5482 = vmatpush1.bf16.msra.mxu0 %v4937
  %5483 = vmatprep.subr.bf16.mxu0 %v4944
  %5484 = vmatpush1.bf16.msra.mxu0 %v4943
  %5485 = vmatprep.subr.bf16.mxu0 %v4950
  %5486 = vmatpush1.bf16.msra.mxu0 %v4949
  %5487 = vmatprep.subr.bf16.mxu0 %v4956
  %5488 = vmatpush1.bf16.msra.mxu0 %v4955
  %5489 = vmatprep.subr.bf16.mxu0 %v4962
  %5490 = vmatpush1.bf16.msra.mxu0 %v4961
  %5491 = vmatprep.subr.bf16.mxu0 %v4968
  %5492 = vmatpush1.bf16.msra.mxu0 %v4967
  %5493 = vmatprep.subr.bf16.mxu0 %v4974
  %5494 = vmatpush1.bf16.msra.mxu0 %v4973
  %5495 = vmatprep.subr.bf16.mxu0 %v4980
  %5496 = vmatpush1.bf16.msra.mxu0 %v4979
  %5497 = vmatprep.subr.bf16.mxu0 %v4986
  %5498 = vmatpush1.bf16.msra.mxu0 %v4985
  %5499 = vmatprep.subr.bf16.mxu0 %v4992
  %5500 = vmatpush1.bf16.msra.mxu0 %v4991
  %5501 = vmatprep.subr.bf16.mxu0 %v4998
  %5502 = vmatpush1.bf16.msra.mxu0 %v4997
  %5503 = vmatprep.subr.bf16.mxu0 %v5004
  %5504 = vmatpush1.bf16.msra.mxu0 %v5003
  %5505 = vmatprep.subr.bf16.mxu0 %v5010
  %5506 = vmatpush1.bf16.msra.mxu0 %v5009
  %5507 = vmatprep.subr.bf16.mxu0 %v5016
  %5508 = vmatpush1.bf16.msra.mxu0 %v5015
  %5509 = vmatprep.subr.bf16.mxu0 %v5022
  %5510 = vmatpush1.bf16.msra.mxu0 %v5021
  %5511 = vmatprep.subr.bf16.mxu0 %v5028
  %5512 = vmatpush1.bf16.msra.mxu0 %v5027
  %5513 = vmatprep.mubr.bf16.mxu0 %v4320
  %5514 = vmatmul.mubr.bf16.gmra.mrb[0].mxu0 %v4319
  %v5515 = vpop.f32.mrb[0].mxu0
  %v5516 = vadd.f32 %v4105, %v5515
  %v5517 = vpop.f32.mrb[0].mxu0
  %v5518 = vadd.f32 %v4107, %v5517
  %v5519 = vpop.f32.mrb[0].mxu0
  %v5520 = vadd.f32 %v4109, %v5519
  %v5521 = vpop.f32.mrb[0].mxu0
  %v5522 = vadd.f32 %v4111, %v5521
  %5523 = vmatprep.mubr.bf16.mxu0 %v4324
  %5524 = vmatmul.mubr.bf16.gmra.mrb[0].mxu0 %v4323
  %v5525 = vpop.f32.mrb[0].mxu0
  %v5526 = vadd.f32 %v4115, %v5525
  %v5527 = vpop.f32.mrb[0].mxu0
  %v5528 = vadd.f32 %v4117, %v5527
  %v5529 = vpop.f32.mrb[0].mxu0
  %v5530 = vadd.f32 %v4119, %v5529
  %v5531 = vpop.f32.mrb[0].mxu0
  %v5532 = vadd.f32 %v4121, %v5531
  %5533 = vmatprep.mubr.bf16.mxu0 %v4328
  %5534 = vmatmul.mubr.bf16.gmra.mrb[0].mxu0 %v4327
  %v5535 = vpop.f32.mrb[0].mxu0
  %v5536 = vadd.f32 %v4125, %v5535
  %v5537 = vpop.f32.mrb[0].mxu0
  %v5538 = vadd.f32 %v4127, %v5537
  %v5539 = vpop.f32.mrb[0].mxu0
  %v5540 = vadd.f32 %v4129, %v5539
  %v5541 = vpop.f32.mrb[0].mxu0
  %v5542 = vadd.f32 %v4131, %v5541
  %5543 = vmatprep.mubr.bf16.mxu0 %v4332
  %5544 = vmatmul.mubr.bf16.gmra.mrb[0].mxu0 %v4331
  %v5545 = vpop.f32.mrb[0].mxu0
  %v5546 = vadd.f32 %v4135, %v5545
  %v5547 = vpop.f32.mrb[0].mxu0
  %v5548 = vadd.f32 %v4137, %v5547
  %v5549 = vpop.f32.mrb[0].mxu0
  %v5550 = vadd.f32 %v4139, %v5549
  %v5551 = vpop.f32.mrb[0].mxu0
  %v5552 = vadd.f32 %v4141, %v5551
  %5553 = vmatprep.mubr.bf16.mxu0 %v4336
  %5554 = vmatmul.mubr.bf16.gmra.mrb[0].mxu0 %v4335
  %v5555 = vpop.f32.mrb[0].mxu0
  %v5556 = vadd.f32 %v4145, %v5555
  %v5557 = vpop.f32.mrb[0].mxu0
  %v5558 = vadd.f32 %v4147, %v5557
  %v5559 = vpop.f32.mrb[0].mxu0
  %v5560 = vpop.f32.mrb[0].mxu0
  %5561 = vdwg.mxu0
  %5562 = vmatprep.subr.bf16.mxu0 %v5034
  %5563 = vmatpush1.bf16.msra.mxu0 %v5033
  %5564 = vmatprep.subr.bf16.mxu0 %v5040
  %5565 = vmatpush1.bf16.msra.mxu0 %v5039
  %5566 = vmatprep.subr.bf16.mxu0 %v5046
  %5567 = vmatpush1.bf16.msra.mxu0 %v5045
  %5568 = vmatprep.subr.bf16.mxu0 %v5052
  %5569 = vmatpush1.bf16.msra.mxu0 %v5051
  %5570 = vmatprep.subr.bf16.mxu0 %v5058
  %5571 = vmatpush1.bf16.msra.mxu0 %v5057
  %5572 = vmatprep.subr.bf16.mxu0 %v5064
  %5573 = vmatpush1.bf16.msra.mxu0 %v5063
  %5574 = vmatprep.subr.bf16.mxu0 %v5070
  %5575 = vmatpush1.bf16.msra.mxu0 %v5069
  %5576 = vmatprep.subr.bf16.mxu0 %v5076
  %5577 = vmatpush1.bf16.msra.mxu0 %v5075
  %5578 = vmatprep.subr.bf16.mxu0 %v5082
  %5579 = vmatpush1.bf16.msra.mxu0 %v5081
  %5580 = vmatprep.subr.bf16.mxu0 %v5088
  %5581 = vmatpush1.bf16.msra.mxu0 %v5087
  %5582 = vmatprep.subr.bf16.mxu0 %v5094
  %5583 = vmatpush1.bf16.msra.mxu0 %v5093
  %5584 = vmatprep.subr.bf16.mxu0 %v5100
  %5585 = vmatpush1.bf16.msra.mxu0 %v5099
  %5586 = vmatprep.subr.bf16.mxu0 %v5106
  %5587 = vmatpush1.bf16.msra.mxu0 %v5105
  %5588 = vmatprep.subr.bf16.mxu0 %v5112
  %5589 = vmatpush1.bf16.msra.mxu0 %v5111
  %5590 = vmatprep.subr.bf16.mxu0 %v5118
  %5591 = vmatpush1.bf16.msra.mxu0 %v5117
  %5592 = vmatprep.subr.bf16.mxu0 %v5124
  %5593 = vmatpush1.bf16.msra.mxu0 %v5123
  %5594 = vmatprep.mubr.bf16.mxu0 %v4322
  %5595 = vmatmul.mubr.bf16.gmra.mrb[0].mxu0 %v4321
  %v5596 = vpop.f32.mrb[0].mxu0
  %v5597 = vadd.f32 %v5516, %v5596
  %v5598 = vpop.f32.mrb[0].mxu0
  %v5599 = vadd.f32 %v5518, %v5598
  %v5600 = vpop.f32.mrb[0].mxu0
  %v5601 = vadd.f32 %v5520, %v5600
  %v5602 = vpop.f32.mrb[0].mxu0
  %v5603 = vadd.f32 %v5522, %v5602
  %5604 = vmatprep.mubr.bf16.mxu0 %v4326
  %5605 = vmatmul.mubr.bf16.gmra.mrb[0].mxu0 %v4325
  %v5606 = vpop.f32.mrb[0].mxu0
  %v5607 = vadd.f32 %v5526, %v5606
  %v5608 = vpop.f32.mrb[0].mxu0
  %v5609 = vadd.f32 %v5528, %v5608
  %v5610 = vpop.f32.mrb[0].mxu0
  %v5611 = vadd.f32 %v5530, %v5610
  %v5612 = vpop.f32.mrb[0].mxu0
  %v5613 = vadd.f32 %v5532, %v5612
  %5614 = vmatprep.mubr.bf16.mxu0 %v4330
  %5615 = vmatmul.mubr.bf16.gmra.mrb[0].mxu0 %v4329
  %v5616 = vpop.f32.mrb[0].mxu0
  %v5617 = vadd.f32 %v5536, %v5616
  %v5618 = vpop.f32.mrb[0].mxu0
  %v5619 = vadd.f32 %v5538, %v5618
  %v5620 = vpop.f32.mrb[0].mxu0
  %v5621 = vadd.f32 %v5540, %v5620
  %v5622 = vpop.f32.mrb[0].mxu0
  %v5623 = vadd.f32 %v5542, %v5622
  %5624 = vmatprep.mubr.bf16.mxu0 %v4334
  %5625 = vmatmul.mubr.bf16.gmra.mrb[0].mxu0 %v4333
  %v5626 = vpop.f32.mrb[0].mxu0
  %v5627 = vadd.f32 %v5546, %v5626
  %v5628 = vpop.f32.mrb[0].mxu0
  %v5629 = vadd.f32 %v5548, %v5628
  %v5630 = vpop.f32.mrb[0].mxu0
  %v5631 = vadd.f32 %v5550, %v5630
  %v5632 = vpop.f32.mrb[0].mxu0
  %v5633 = vadd.f32 %v5552, %v5632
  %5634 = vmatprep.mubr.bf16.mxu0 %v4338
  %5635 = vmatmul.mubr.bf16.gmra.mrb[0].mxu0 %v4337
  %v5636 = vpop.f32.mrb[0].mxu0
  %v5637 = vadd.f32 %v5556, %v5636
  %v5638 = vpop.f32.mrb[0].mxu0
  %v5639 = vadd.f32 %v5558, %v5638
  %v5640 = vpop.f32.mrb[0].mxu0
  %v5641 = vpop.f32.mrb[0].mxu0
  %5642 = vdwg.mxu0
  %5643 = vmatprep.subr.bf16.mxu0 %v4940
  %5644 = vmatpush1.bf16.msra.mxu0 %v4939
  %5645 = vmatprep.subr.bf16.mxu0 %v4946
  %5646 = vmatpush1.bf16.msra.mxu0 %v4945
  %5647 = vmatprep.subr.bf16.mxu0 %v4952
  %5648 = vmatpush1.bf16.msra.mxu0 %v4951
  %5649 = vmatprep.subr.bf16.mxu0 %v4958
  %5650 = vmatpush1.bf16.msra.mxu0 %v4957
  %5651 = vmatprep.subr.bf16.mxu0 %v4964
  %5652 = vmatpush1.bf16.msra.mxu0 %v4963
  %5653 = vmatprep.subr.bf16.mxu0 %v4970
  %5654 = vmatpush1.bf16.msra.mxu0 %v4969
  %5655 = vmatprep.subr.bf16.mxu0 %v4976
  %5656 = vmatpush1.bf16.msra.mxu0 %v4975
  %5657 = vmatprep.subr.bf16.mxu0 %v4982
  %5658 = vmatpush1.bf16.msra.mxu0 %v4981
  %5659 = vmatprep.subr.bf16.mxu0 %v4988
  %5660 = vmatpush1.bf16.msra.mxu0 %v4987
  %5661 = vmatprep.subr.bf16.mxu0 %v4994
  %5662 = vmatpush1.bf16.msra.mxu0 %v4993
  %5663 = vmatprep.subr.bf16.mxu0 %v5000
  %5664 = vmatpush1.bf16.msra.mxu0 %v4999
  %5665 = vmatprep.subr.bf16.mxu0 %v5006
  %5666 = vmatpush1.bf16.msra.mxu0 %v5005
  %5667 = vmatprep.subr.bf16.mxu0 %v5012
  %5668 = vmatpush1.bf16.msra.mxu0 %v5011
  %5669 = vmatprep.subr.bf16.mxu0 %v5018
  %5670 = vmatpush1.bf16.msra.mxu0 %v5017
  %5671 = vmatprep.subr.bf16.mxu0 %v5024
  %5672 = vmatpush1.bf16.msra.mxu0 %v5023
  %5673 = vmatprep.subr.bf16.mxu0 %v5030
  %5674 = vmatpush1.bf16.msra.mxu0 %v5029
  %5675 = vmatprep.mubr.bf16.mxu0 %v4320
  %5676 = vmatmul.mubr.bf16.gmra.mrb[0].mxu0 %v4319
  %v5677 = vpop.f32.mrb[0].mxu0
  %v5678 = vadd.f32 %v4267, %v5677
  %v5679 = vpop.f32.mrb[0].mxu0
  %v5680 = vadd.f32 %v4269, %v5679
  %v5681 = vpop.f32.mrb[0].mxu0
  %v5682 = vadd.f32 %v4271, %v5681
  %v5683 = vpop.f32.mrb[0].mxu0
  %v5684 = vadd.f32 %v4273, %v5683
  %5685 = vmatprep.mubr.bf16.mxu0 %v4324
  %5686 = vmatmul.mubr.bf16.gmra.mrb[0].mxu0 %v4323
  %v5687 = vpop.f32.mrb[0].mxu0
  %v5688 = vadd.f32 %v4277, %v5687
  %v5689 = vpop.f32.mrb[0].mxu0
  %v5690 = vadd.f32 %v4279, %v5689
  %v5691 = vpop.f32.mrb[0].mxu0
  %v5692 = vadd.f32 %v4281, %v5691
  %v5693 = vpop.f32.mrb[0].mxu0
  %v5694 = vadd.f32 %v4283, %v5693
  %5695 = vmatprep.mubr.bf16.mxu0 %v4328
  %5696 = vmatmul.mubr.bf16.gmra.mrb[0].mxu0 %v4327
  %v5697 = vpop.f32.mrb[0].mxu0
  %v5698 = vadd.f32 %v4287, %v5697
  %v5699 = vpop.f32.mrb[0].mxu0
  %v5700 = vadd.f32 %v4289, %v5699
  %v5701 = vpop.f32.mrb[0].mxu0
  %v5702 = vadd.f32 %v4291, %v5701
  %v5703 = vpop.f32.mrb[0].mxu0
  %v5704 = vadd.f32 %v4293, %v5703
  %5705 = vmatprep.mubr.bf16.mxu0 %v4332
  %5706 = vmatmul.mubr.bf16.gmra.mrb[0].mxu0 %v4331
  %v5707 = vpop.f32.mrb[0].mxu0
  %v5708 = vadd.f32 %v4297, %v5707
  %v5709 = vpop.f32.mrb[0].mxu0
  %v5710 = vadd.f32 %v4299, %v5709
  %v5711 = vpop.f32.mrb[0].mxu0
  %v5712 = vadd.f32 %v4301, %v5711
  %v5713 = vpop.f32.mrb[0].mxu0
  %v5714 = vadd.f32 %v4303, %v5713
  %5715 = vmatprep.mubr.bf16.mxu0 %v4336
  %5716 = vmatmul.mubr.bf16.gmra.mrb[0].mxu0 %v4335
  %v5717 = vpop.f32.mrb[0].mxu0
  %v5718 = vadd.f32 %v4307, %v5717
  %v5719 = vpop.f32.mrb[0].mxu0
  %v5720 = vadd.f32 %v4309, %v5719
  %v5721 = vpop.f32.mrb[0].mxu0
  %v5722 = vpop.f32.mrb[0].mxu0
  %5723 = vdwg.mxu0
  %5724 = vmatprep.subr.bf16.mxu0 %v5036
  %5725 = vmatpush1.bf16.msra.mxu0 %v5035
  %5726 = vmatprep.subr.bf16.mxu0 %v5042
  %5727 = vmatpush1.bf16.msra.mxu0 %v5041
  %5728 = vmatprep.subr.bf16.mxu0 %v5048
  %5729 = vmatpush1.bf16.msra.mxu0 %v5047
  %5730 = vmatprep.subr.bf16.mxu0 %v5054
  %5731 = vmatpush1.bf16.msra.mxu0 %v5053
  %5732 = vmatprep.subr.bf16.mxu0 %v5060
  %5733 = vmatpush1.bf16.msra.mxu0 %v5059
  %5734 = vmatprep.subr.bf16.mxu0 %v5066
  %5735 = vmatpush1.bf16.msra.mxu0 %v5065
  %5736 = vmatprep.subr.bf16.mxu0 %v5072
  %5737 = vmatpush1.bf16.msra.mxu0 %v5071
  %5738 = vmatprep.subr.bf16.mxu0 %v5078
  %5739 = vmatpush1.bf16.msra.mxu0 %v5077
  %5740 = vmatprep.subr.bf16.mxu0 %v5084
  %5741 = vmatpush1.bf16.msra.mxu0 %v5083
  %5742 = vmatprep.subr.bf16.mxu0 %v5090
  %5743 = vmatpush1.bf16.msra.mxu0 %v5089
  %5744 = vmatprep.subr.bf16.mxu0 %v5096
  %5745 = vmatpush1.bf16.msra.mxu0 %v5095
  %5746 = vmatprep.subr.bf16.mxu0 %v5102
  %5747 = vmatpush1.bf16.msra.mxu0 %v5101
  %5748 = vmatprep.subr.bf16.mxu0 %v5108
  %5749 = vmatpush1.bf16.msra.mxu0 %v5107
  %5750 = vmatprep.subr.bf16.mxu0 %v5114
  %5751 = vmatpush1.bf16.msra.mxu0 %v5113
  %5752 = vmatprep.subr.bf16.mxu0 %v5120
  %5753 = vmatpush1.bf16.msra.mxu0 %v5119
  %5754 = vmatprep.subr.bf16.mxu0 %v5126
  %5755 = vmatpush1.bf16.msra.mxu0 %v5125
  %5756 = vmatprep.mubr.bf16.mxu0 %v4322
  %5757 = vmatmul.mubr.bf16.gmra.mrb[0].mxu0 %v4321
  %v5758 = vpop.f32.mrb[0].mxu0
  %v5759 = vadd.f32 %v5678, %v5758
  %v5760 = vpop.f32.mrb[0].mxu0
  %v5761 = vadd.f32 %v5680, %v5760
  %v5762 = vpop.f32.mrb[0].mxu0
  %v5763 = vadd.f32 %v5682, %v5762
  %v5764 = vpop.f32.mrb[0].mxu0
  %v5765 = vadd.f32 %v5684, %v5764
  %5766 = vmatprep.mubr.bf16.mxu0 %v4326
  %5767 = vmatmul.mubr.bf16.gmra.mrb[0].mxu0 %v4325
  %v5768 = vpop.f32.mrb[0].mxu0
  %v5769 = vadd.f32 %v5688, %v5768
  %v5770 = vpop.f32.mrb[0].mxu0
  %v5771 = vadd.f32 %v5690, %v5770
  %v5772 = vpop.f32.mrb[0].mxu0
  %v5773 = vadd.f32 %v5692, %v5772
  %v5774 = vpop.f32.mrb[0].mxu0
  %v5775 = vadd.f32 %v5694, %v5774
  %5776 = vmatprep.mubr.bf16.mxu0 %v4330
  %5777 = vmatmul.mubr.bf16.gmra.mrb[0].mxu0 %v4329
  %v5778 = vpop.f32.mrb[0].mxu0
  %v5779 = vadd.f32 %v5698, %v5778
  %v5780 = vpop.f32.mrb[0].mxu0
  %v5781 = vadd.f32 %v5700, %v5780
  %v5782 = vpop.f32.mrb[0].mxu0
  %v5783 = vadd.f32 %v5702, %v5782
  %v5784 = vpop.f32.mrb[0].mxu0
  %v5785 = vadd.f32 %v5704, %v5784
  %5786 = vmatprep.mubr.bf16.mxu0 %v4334
  %5787 = vmatmul.mubr.bf16.gmra.mrb[0].mxu0 %v4333
  %v5788 = vpop.f32.mrb[0].mxu0
  %v5789 = vadd.f32 %v5708, %v5788
  %v5790 = vpop.f32.mrb[0].mxu0
  %v5791 = vadd.f32 %v5710, %v5790
  %v5792 = vpop.f32.mrb[0].mxu0
  %v5793 = vadd.f32 %v5712, %v5792
  %v5794 = vpop.f32.mrb[0].mxu0
  %v5795 = vadd.f32 %v5714, %v5794
  %5796 = vmatprep.mubr.bf16.mxu0 %v4338
  %5797 = vmatmul.mubr.bf16.gmra.mrb[0].mxu0 %v4337
  %v5798 = vpop.f32.mrb[0].mxu0
  %v5799 = vadd.f32 %v5718, %v5798
  %v5800 = vpop.f32.mrb[0].mxu0
  %v5801 = vadd.f32 %v5720, %v5800
  %v5802 = vpop.f32.mrb[0].mxu0
  %v5803 = vpop.f32.mrb[0].mxu0
  %5804 = vdwg.mxu0
  %v5805 = vld [vmem:[#allocation2 + $0x20] sm:$0xff]
  %v5806 = vld [vmem:[#allocation2 + $0x28] sm:$0xff]
  %v5807 = vld [vmem:[#allocation2 + $0x30] sm:$0xff]
  %v5808 = vld [vmem:[#allocation2 + $0x38] sm:$0xff]
  %v5809 = vld [vmem:[#allocation2 + $0x40] sm:$0xff]
  %v5810 = vld [vmem:[#allocation2 + $0x48] sm:$0xff]
  %v5811 = vld [vmem:[#allocation2 + $0x50] sm:$0xff]
  %v5812 = vld [vmem:[#allocation2 + $0x58] sm:$0xff]
  %v5813 = vld [vmem:[#allocation2 + $0x60] sm:$0xff]
  %v5814 = vld [vmem:[#allocation2 + $0x68] sm:$0xff]
  %v5815 = vld [vmem:[#allocation2 + $0x70] sm:$0xff]
  %v5816 = vld [vmem:[#allocation2 + $0x78] sm:$0xff]
  %v5817 = vld [vmem:[#allocation2 + $0x80] sm:$0xff]
  %v5818 = vld [vmem:[#allocation2 + $0x88] sm:$0xff]
  %v5819 = vld [vmem:[#allocation2 + $0x90] sm:$0xff]
  %v5820 = vld [vmem:[#allocation2 + $0x98] sm:$0xff]
  %v5821 = vld [vmem:[#allocation2 + $0xa0] sm:$0xff]
  %v5822 = vld [vmem:[#allocation2 + $0xa8] sm:$0xff]
  %s5823 = scalar_lea.vmem %s3, 3072
  %v5824 = vld [vmem:[%s5823] sm:$0xff]
  %v5825 = vld [vmem:[%s5823 + $0x8] sm:$0xff]
  %v5826 = vld [vmem:[%s5823 + $0x10] sm:$0xff]
  %v5827 = vld [vmem:[%s5823 + $0x18] sm:$0xff]
  %v5828 = vld [vmem:[%s5823 + $0x20] sm:$0xff]
  %v5829 = vld [vmem:[%s5823 + $0x28] sm:$0xff]
  %v5830 = vld [vmem:[%s5823 + $0x30] sm:$0xff]
  %v5831 = vld [vmem:[%s5823 + $0x38] sm:$0xff]
  %v5832 = vld [vmem:[%s5823 + $0x40] sm:$0xff]
  %v5833 = vld [vmem:[%s5823 + $0x48] sm:$0xff]
  %v5834 = vld [vmem:[%s5823 + $0x50] sm:$0xff]
  %v5835 = vld [vmem:[%s5823 + $0x58] sm:$0xff]
  %v5836 = vld [vmem:[%s5823 + $0x60] sm:$0xff]
  %v5837 = vld [vmem:[%s5823 + $0x68] sm:$0xff]
  %v5838 = vld [vmem:[%s5823 + $0x70] sm:$0xff]
  %v5839 = vld [vmem:[%s5823 + $0x78] sm:$0xff]
  %v5840 = vld [vmem:[%s5823 + $0x80] sm:$0xff]
  %v5841 = vld [vmem:[%s5823 + $0x88] sm:$0xff]
  %v5842 = vld [vmem:[%s5823 + $0x90] sm:$0xff]
  %v5843 = vld [vmem:[%s5823 + $0x98] sm:$0xff]
  %v5844 = vld [vmem:[%s5823 + $0xa0] sm:$0xff]
  %v5845 = vld [vmem:[%s5823 + $0xa8] sm:$0xff]
  %v5846 = vld [vmem:[%s5823 + $0xb0] sm:$0xff]
  %v5847 = vld [vmem:[%s5823 + $0xb8] sm:$0xff]
  %v5848 = vld [vmem:[%s5823 + $0xc0] sm:$0xff]
  %v5849 = vld [vmem:[%s5823 + $0xc8] sm:$0xff]
  %v5850 = vld [vmem:[%s5823 + $0xd0] sm:$0xff]
  %v5851 = vld [vmem:[%s5823 + $0xd8] sm:$0xff]
  %v5852 = vld [vmem:[%s5823 + $0xe0] sm:$0xff]
  %v5853 = vld [vmem:[%s5823 + $0xe8] sm:$0xff]
  %v5854 = vld [vmem:[%s5823 + $0xf0] sm:$0xff]
  %v5855 = vld [vmem:[%s5823 + $0xf8] sm:$0xff]
  %v5856 = vld [vmem:[%s5823 + $0x100] sm:$0xff]
  %v5857 = vld [vmem:[%s5823 + $0x108] sm:$0xff]
  %v5858 = vld [vmem:[%s5823 + $0x110] sm:$0xff]
  %v5859 = vld [vmem:[%s5823 + $0x118] sm:$0xff]
  %v5860 = vld [vmem:[%s5823 + $0x120] sm:$0xff]
  %v5861 = vld [vmem:[%s5823 + $0x128] sm:$0xff]
  %v5862 = vld [vmem:[%s5823 + $0x130] sm:$0xff]
  %v5863 = vld [vmem:[%s5823 + $0x138] sm:$0xff]
  %v5864 = vld [vmem:[%s5823 + $0x140] sm:$0xff]
  %v5865 = vld [vmem:[%s5823 + $0x148] sm:$0xff]
  %v5866 = vld [vmem:[%s5823 + $0x150] sm:$0xff]
  %v5867 = vld [vmem:[%s5823 + $0x158] sm:$0xff]
  %v5868 = vld [vmem:[%s5823 + $0x160] sm:$0xff]
  %v5869 = vld [vmem:[%s5823 + $0x168] sm:$0xff]
  %v5870 = vld [vmem:[%s5823 + $0x170] sm:$0xff]
  %v5871 = vld [vmem:[%s5823 + $0x178] sm:$0xff]
  %v5872 = vld [vmem:[%s5823 + $0x180] sm:$0xff]
  %v5873 = vld [vmem:[%s5823 + $0x188] sm:$0xff]
  %v5874 = vld [vmem:[%s5823 + $0x190] sm:$0xff]
  %v5875 = vld [vmem:[%s5823 + $0x198] sm:$0xff]
  %v5876 = vld [vmem:[%s5823 + $0x1a0] sm:$0xff]
  %v5877 = vld [vmem:[%s5823 + $0x1a8] sm:$0xff]
  %v5878 = vld [vmem:[%s5823 + $0x1b0] sm:$0xff]
  %v5879 = vld [vmem:[%s5823 + $0x1b8] sm:$0xff]
  %v5880 = vld [vmem:[%s5823 + $0x1c0] sm:$0xff]
  %v5881 = vld [vmem:[%s5823 + $0x1c8] sm:$0xff]
  %v5882 = vld [vmem:[%s5823 + $0x1d0] sm:$0xff]
  %v5883 = vld [vmem:[%s5823 + $0x1d8] sm:$0xff]
  %v5884 = vld [vmem:[%s5823 + $0x1e0] sm:$0xff]
  %v5885 = vld [vmem:[%s5823 + $0x1e8] sm:$0xff]
  %v5886 = vld [vmem:[%s5823 + $0x1f0] sm:$0xff]
  %v5887 = vld [vmem:[%s5823 + $0x1f8] sm:$0xff]
  %v5888 = vld [vmem:[%s5823 + $0x200] sm:$0xff]
  %v5889 = vld [vmem:[%s5823 + $0x208] sm:$0xff]
  %v5890 = vld [vmem:[%s5823 + $0x210] sm:$0xff]
  %v5891 = vld [vmem:[%s5823 + $0x218] sm:$0xff]
  %v5892 = vld [vmem:[%s5823 + $0x220] sm:$0xff]
  %v5893 = vld [vmem:[%s5823 + $0x228] sm:$0xff]
  %v5894 = vld [vmem:[%s5823 + $0x230] sm:$0xff]
  %v5895 = vld [vmem:[%s5823 + $0x238] sm:$0xff]
  %v5896 = vld [vmem:[%s5823 + $0x240] sm:$0xff]
  %v5897 = vld [vmem:[%s5823 + $0x248] sm:$0xff]
  %v5898 = vld [vmem:[%s5823 + $0x250] sm:$0xff]
  %v5899 = vld [vmem:[%s5823 + $0x258] sm:$0xff]
  %v5900 = vld [vmem:[%s5823 + $0x260] sm:$0xff]
  %v5901 = vld [vmem:[%s5823 + $0x268] sm:$0xff]
  %v5902 = vld [vmem:[%s5823 + $0x270] sm:$0xff]
  %v5903 = vld [vmem:[%s5823 + $0x278] sm:$0xff]
  %v5904 = vld [vmem:[%s5823 + $0x280] sm:$0xff]
  %v5905 = vld [vmem:[%s5823 + $0x288] sm:$0xff]
  %v5906 = vld [vmem:[%s5823 + $0x290] sm:$0xff]
  %v5907 = vld [vmem:[%s5823 + $0x298] sm:$0xff]
  %v5908 = vld [vmem:[%s5823 + $0x2a0] sm:$0xff]
  %v5909 = vld [vmem:[%s5823 + $0x2a8] sm:$0xff]
  %v5910 = vld [vmem:[%s5823 + $0x2b0] sm:$0xff]
  %v5911 = vld [vmem:[%s5823 + $0x2b8] sm:$0xff]
  %v5912 = vld [vmem:[%s5823 + $0x2c0] sm:$0xff]
  %v5913 = vld [vmem:[%s5823 + $0x2c8] sm:$0xff]
  %v5914 = vld [vmem:[%s5823 + $0x2d0] sm:$0xff]
  %v5915 = vld [vmem:[%s5823 + $0x2d8] sm:$0xff]
  %v5916 = vld [vmem:[%s5823 + $0x2e0] sm:$0xff]
  %v5917 = vld [vmem:[%s5823 + $0x2e8] sm:$0xff]
  %v5918 = vld [vmem:[%s5823 + $0x2f0] sm:$0xff]
  %v5919 = vld [vmem:[%s5823 + $0x2f8] sm:$0xff]
  %v5920 = vld [vmem:[%s5823 + $0x300] sm:$0xff]
  %v5921 = vld [vmem:[%s5823 + $0x308] sm:$0xff]
  %v5922 = vld [vmem:[%s5823 + $0x310] sm:$0xff]
  %v5923 = vld [vmem:[%s5823 + $0x318] sm:$0xff]
  %v5924 = vld [vmem:[%s5823 + $0x320] sm:$0xff]
  %v5925 = vld [vmem:[%s5823 + $0x328] sm:$0xff]
  %v5926 = vld [vmem:[%s5823 + $0x330] sm:$0xff]
  %v5927 = vld [vmem:[%s5823 + $0x338] sm:$0xff]
  %v5928 = vld [vmem:[%s5823 + $0x340] sm:$0xff]
  %v5929 = vld [vmem:[%s5823 + $0x348] sm:$0xff]
  %v5930 = vld [vmem:[%s5823 + $0x350] sm:$0xff]
  %v5931 = vld [vmem:[%s5823 + $0x358] sm:$0xff]
  %v5932 = vld [vmem:[%s5823 + $0x360] sm:$0xff]
  %v5933 = vld [vmem:[%s5823 + $0x368] sm:$0xff]
  %v5934 = vld [vmem:[%s5823 + $0x370] sm:$0xff]
  %v5935 = vld [vmem:[%s5823 + $0x378] sm:$0xff]
  %v5936 = vld [vmem:[%s5823 + $0x380] sm:$0xff]
  %v5937 = vld [vmem:[%s5823 + $0x388] sm:$0xff]
  %v5938 = vld [vmem:[%s5823 + $0x390] sm:$0xff]
  %v5939 = vld [vmem:[%s5823 + $0x398] sm:$0xff]
  %v5940 = vld [vmem:[%s5823 + $0x3a0] sm:$0xff]
  %v5941 = vld [vmem:[%s5823 + $0x3a8] sm:$0xff]
  %v5942 = vld [vmem:[%s5823 + $0x3b0] sm:$0xff]
  %v5943 = vld [vmem:[%s5823 + $0x3b8] sm:$0xff]
  %v5944 = vld [vmem:[%s5823 + $0x3c0] sm:$0xff]
  %v5945 = vld [vmem:[%s5823 + $0x3c8] sm:$0xff]
  %v5946 = vld [vmem:[%s5823 + $0x3d0] sm:$0xff]
  %v5947 = vld [vmem:[%s5823 + $0x3d8] sm:$0xff]
  %v5948 = vld [vmem:[%s5823 + $0x3e0] sm:$0xff]
  %v5949 = vld [vmem:[%s5823 + $0x3e8] sm:$0xff]
  %v5950 = vld [vmem:[%s5823 + $0x3f0] sm:$0xff]
  %v5951 = vld [vmem:[%s5823 + $0x3f8] sm:$0xff]
  %v5952 = vld [vmem:[%s5823 + $0x400] sm:$0xff]
  %v5953 = vld [vmem:[%s5823 + $0x408] sm:$0xff]
  %v5954 = vld [vmem:[%s5823 + $0x410] sm:$0xff]
  %v5955 = vld [vmem:[%s5823 + $0x418] sm:$0xff]
  %v5956 = vld [vmem:[%s5823 + $0x420] sm:$0xff]
  %v5957 = vld [vmem:[%s5823 + $0x428] sm:$0xff]
  %v5958 = vld [vmem:[%s5823 + $0x430] sm:$0xff]
  %v5959 = vld [vmem:[%s5823 + $0x438] sm:$0xff]
  %v5960 = vld [vmem:[%s5823 + $0x440] sm:$0xff]
  %v5961 = vld [vmem:[%s5823 + $0x448] sm:$0xff]
  %v5962 = vld [vmem:[%s5823 + $0x450] sm:$0xff]
  %v5963 = vld [vmem:[%s5823 + $0x458] sm:$0xff]
  %v5964 = vld [vmem:[%s5823 + $0x460] sm:$0xff]
  %v5965 = vld [vmem:[%s5823 + $0x468] sm:$0xff]
  %v5966 = vld [vmem:[%s5823 + $0x470] sm:$0xff]
  %v5967 = vld [vmem:[%s5823 + $0x478] sm:$0xff]
  %v5968 = vld [vmem:[%s5823 + $0x480] sm:$0xff]
  %v5969 = vld [vmem:[%s5823 + $0x488] sm:$0xff]
  %v5970 = vld [vmem:[%s5823 + $0x490] sm:$0xff]
  %v5971 = vld [vmem:[%s5823 + $0x498] sm:$0xff]
  %v5972 = vld [vmem:[%s5823 + $0x4a0] sm:$0xff]
  %v5973 = vld [vmem:[%s5823 + $0x4a8] sm:$0xff]
  %v5974 = vld [vmem:[%s5823 + $0x4b0] sm:$0xff]
  %v5975 = vld [vmem:[%s5823 + $0x4b8] sm:$0xff]
  %v5976 = vld [vmem:[%s5823 + $0x4c0] sm:$0xff]
  %v5977 = vld [vmem:[%s5823 + $0x4c8] sm:$0xff]
  %v5978 = vld [vmem:[%s5823 + $0x4d0] sm:$0xff]
  %v5979 = vld [vmem:[%s5823 + $0x4d8] sm:$0xff]
  %v5980 = vld [vmem:[%s5823 + $0x4e0] sm:$0xff]
  %v5981 = vld [vmem:[%s5823 + $0x4e8] sm:$0xff]
  %v5982 = vld [vmem:[%s5823 + $0x4f0] sm:$0xff]
  %v5983 = vld [vmem:[%s5823 + $0x4f8] sm:$0xff]
  %v5984 = vld [vmem:[%s5823 + $0x500] sm:$0xff]
  %v5985 = vld [vmem:[%s5823 + $0x508] sm:$0xff]
  %v5986 = vld [vmem:[%s5823 + $0x510] sm:$0xff]
  %v5987 = vld [vmem:[%s5823 + $0x518] sm:$0xff]
  %v5988 = vld [vmem:[%s5823 + $0x520] sm:$0xff]
  %v5989 = vld [vmem:[%s5823 + $0x528] sm:$0xff]
  %v5990 = vld [vmem:[%s5823 + $0x530] sm:$0xff]
  %v5991 = vld [vmem:[%s5823 + $0x538] sm:$0xff]
  %v5992 = vld [vmem:[%s5823 + $0x540] sm:$0xff]
  %v5993 = vld [vmem:[%s5823 + $0x548] sm:$0xff]
  %v5994 = vld [vmem:[%s5823 + $0x550] sm:$0xff]
  %v5995 = vld [vmem:[%s5823 + $0x558] sm:$0xff]
  %v5996 = vld [vmem:[%s5823 + $0x560] sm:$0xff]
  %v5997 = vld [vmem:[%s5823 + $0x568] sm:$0xff]
  %v5998 = vld [vmem:[%s5823 + $0x570] sm:$0xff]
  %v5999 = vld [vmem:[%s5823 + $0x578] sm:$0xff]
  %v6000 = vld [vmem:[%s5823 + $0x580] sm:$0xff]
  %v6001 = vld [vmem:[%s5823 + $0x588] sm:$0xff]
  %v6002 = vld [vmem:[%s5823 + $0x590] sm:$0xff]
  %v6003 = vld [vmem:[%s5823 + $0x598] sm:$0xff]
  %v6004 = vld [vmem:[%s5823 + $0x5a0] sm:$0xff]
  %v6005 = vld [vmem:[%s5823 + $0x5a8] sm:$0xff]
  %v6006 = vld [vmem:[%s5823 + $0x5b0] sm:$0xff]
  %v6007 = vld [vmem:[%s5823 + $0x5b8] sm:$0xff]
  %v6008 = vld [vmem:[%s5823 + $0x5c0] sm:$0xff]
  %v6009 = vld [vmem:[%s5823 + $0x5c8] sm:$0xff]
  %v6010 = vld [vmem:[%s5823 + $0x5d0] sm:$0xff]
  %v6011 = vld [vmem:[%s5823 + $0x5d8] sm:$0xff]
  %v6012 = vld [vmem:[%s5823 + $0x5e0] sm:$0xff]
  %v6013 = vld [vmem:[%s5823 + $0x5e8] sm:$0xff]
  %v6014 = vld [vmem:[%s5823 + $0x5f0] sm:$0xff]
  %v6015 = vld [vmem:[%s5823 + $0x5f8] sm:$0xff]
  %v6034 = vunpack.c.l.b16 %v5805
  %v6035 = vunpack.c.h.b16 %v5805
  %v6036 = vunpack.c.l.b16 %v5806
  %v6037 = vunpack.c.h.b16 %v5806
  %v6038 = vunpack.c.l.b16 %v5807
  %v6039 = vunpack.c.h.b16 %v5807
  %v6040 = vunpack.c.l.b16 %v5808
  %v6041 = vunpack.c.h.b16 %v5808
  %v6042 = vunpack.c.l.b16 %v5809
  %v6043 = vunpack.c.h.b16 %v5809
  %v6044 = vunpack.c.l.b16 %v5810
  %v6045 = vunpack.c.h.b16 %v5810
  %v6046 = vunpack.c.l.b16 %v5811
  %v6047 = vunpack.c.h.b16 %v5811
  %v6048 = vunpack.c.l.b16 %v5812
  %v6049 = vunpack.c.h.b16 %v5812
  %v6050 = vunpack.c.l.b16 %v5813
  %v6051 = vunpack.c.h.b16 %v5813
  %v6052 = vunpack.c.l.b16 %v5814
  %v6053 = vunpack.c.h.b16 %v5814
  %v6054 = vunpack.c.l.b16 %v5815
  %v6055 = vunpack.c.h.b16 %v5815
  %v6056 = vunpack.c.l.b16 %v5816
  %v6057 = vunpack.c.h.b16 %v5816
  %v6058 = vunpack.c.l.b16 %v5817
  %v6059 = vunpack.c.h.b16 %v5817
  %v6060 = vunpack.c.l.b16 %v5818
  %v6061 = vunpack.c.h.b16 %v5818
  %v6062 = vunpack.c.l.b16 %v5819
  %v6063 = vunpack.c.h.b16 %v5819
  %v6064 = vunpack.c.l.b16 %v5820
  %v6065 = vunpack.c.h.b16 %v5820
  %v6066 = vunpack.c.l.b16 %v5821
  %v6067 = vunpack.c.h.b16 %v5821
  %v6068 = vunpack.c.l.b16 %v5822
  %v6069 = vunpack.c.h.b16 %v5822
  %v6070 = vpack.c.b16 %v6038, %v6034
  %v6071 = vpack.c.b16 %v6039, %v6035
  %v6072 = vpack.c.b16 %v6040, %v6036
  %v6073 = vpack.c.b16 %v6041, %v6037
  %v6074 = vpack.c.b16 %v6046, %v6042
  %v6075 = vpack.c.b16 %v6047, %v6043
  %v6076 = vpack.c.b16 %v6048, %v6044
  %v6077 = vpack.c.b16 %v6049, %v6045
  %v6078 = vpack.c.b16 %v6054, %v6050
  %v6079 = vpack.c.b16 %v6055, %v6051
  %v6080 = vpack.c.b16 %v6056, %v6052
  %v6081 = vpack.c.b16 %v6057, %v6053
  %v6082 = vpack.c.b16 %v6062, %v6058
  %v6083 = vpack.c.b16 %v6063, %v6059
  %v6084 = vpack.c.b16 %v6064, %v6060
  %v6085 = vpack.c.b16 %v6065, %v6061
  %v6086 = vpack.c.b16 %v6066, %v6066
  %v6087 = vpack.c.b16 %v6067, %v6067
  %v6088 = vpack.c.b16 %v6068, %v6068
  %v6089 = vpack.c.b16 %v6069, %v6069
  %v6302 = vunpack.c.l.b16 %v5824
  %v6303 = vunpack.c.h.b16 %v5824
  %v6304 = vunpack.c.l.b16 %v5825
  %v6305 = vunpack.c.h.b16 %v5825
  %v6306 = vunpack.c.l.b16 %v5826
  %v6307 = vunpack.c.h.b16 %v5826
  %v6308 = vunpack.c.l.b16 %v5827
  %v6309 = vunpack.c.h.b16 %v5827
  %v6310 = vunpack.c.l.b16 %v5828
  %v6311 = vunpack.c.h.b16 %v5828
  %v6312 = vunpack.c.l.b16 %v5829
  %v6313 = vunpack.c.h.b16 %v5829
  %v6314 = vunpack.c.l.b16 %v5830
  %v6315 = vunpack.c.h.b16 %v5830
  %v6316 = vunpack.c.l.b16 %v5831
  %v6317 = vunpack.c.h.b16 %v5831
  %v6318 = vunpack.c.l.b16 %v5832
  %v6319 = vunpack.c.h.b16 %v5832
  %v6320 = vunpack.c.l.b16 %v5833
  %v6321 = vunpack.c.h.b16 %v5833
  %v6322 = vunpack.c.l.b16 %v5834
  %v6323 = vunpack.c.h.b16 %v5834
  %v6324 = vunpack.c.l.b16 %v5835
  %v6325 = vunpack.c.h.b16 %v5835
  %v6326 = vunpack.c.l.b16 %v5836
  %v6327 = vunpack.c.h.b16 %v5836
  %v6328 = vunpack.c.l.b16 %v5837
  %v6329 = vunpack.c.h.b16 %v5837
  %v6330 = vunpack.c.l.b16 %v5838
  %v6331 = vunpack.c.h.b16 %v5838
  %v6332 = vunpack.c.l.b16 %v5839
  %v6333 = vunpack.c.h.b16 %v5839
  %v6334 = vunpack.c.l.b16 %v5840
  %v6335 = vunpack.c.h.b16 %v5840
  %v6336 = vunpack.c.l.b16 %v5841
  %v6337 = vunpack.c.h.b16 %v5841
  %v6338 = vunpack.c.l.b16 %v5842
  %v6339 = vunpack.c.h.b16 %v5842
  %v6340 = vunpack.c.l.b16 %v5843
  %v6341 = vunpack.c.h.b16 %v5843
  %v6342 = vunpack.c.l.b16 %v5844
  %v6343 = vunpack.c.h.b16 %v5844
  %v6344 = vunpack.c.l.b16 %v5845
  %v6345 = vunpack.c.h.b16 %v5845
  %v6346 = vunpack.c.l.b16 %v5846
  %v6347 = vunpack.c.h.b16 %v5846
  %v6348 = vunpack.c.l.b16 %v5847
  %v6349 = vunpack.c.h.b16 %v5847
  %v6350 = vunpack.c.l.b16 %v5848
  %v6351 = vunpack.c.h.b16 %v5848
  %v6352 = vunpack.c.l.b16 %v5849
  %v6353 = vunpack.c.h.b16 %v5849
  %v6354 = vunpack.c.l.b16 %v5850
  %v6355 = vunpack.c.h.b16 %v5850
  %v6356 = vunpack.c.l.b16 %v5851
  %v6357 = vunpack.c.h.b16 %v5851
  %v6358 = vunpack.c.l.b16 %v5852
  %v6359 = vunpack.c.h.b16 %v5852
  %v6360 = vunpack.c.l.b16 %v5853
  %v6361 = vunpack.c.h.b16 %v5853
  %v6362 = vunpack.c.l.b16 %v5854
  %v6363 = vunpack.c.h.b16 %v5854
  %v6364 = vunpack.c.l.b16 %v5855
  %v6365 = vunpack.c.h.b16 %v5855
  %v6366 = vunpack.c.l.b16 %v5856
  %v6367 = vunpack.c.h.b16 %v5856
  %v6368 = vunpack.c.l.b16 %v5857
  %v6369 = vunpack.c.h.b16 %v5857
  %v6370 = vunpack.c.l.b16 %v5858
  %v6371 = vunpack.c.h.b16 %v5858
  %v6372 = vunpack.c.l.b16 %v5859
  %v6373 = vunpack.c.h.b16 %v5859
  %v6374 = vunpack.c.l.b16 %v5860
  %v6375 = vunpack.c.h.b16 %v5860
  %v6376 = vunpack.c.l.b16 %v5861
  %v6377 = vunpack.c.h.b16 %v5861
  %v6378 = vunpack.c.l.b16 %v5862
  %v6379 = vunpack.c.h.b16 %v5862
  %v6380 = vunpack.c.l.b16 %v5863
  %v6381 = vunpack.c.h.b16 %v5863
  %v6382 = vunpack.c.l.b16 %v5864
  %v6383 = vunpack.c.h.b16 %v5864
  %v6384 = vunpack.c.l.b16 %v5865
  %v6385 = vunpack.c.h.b16 %v5865
  %v6386 = vunpack.c.l.b16 %v5866
  %v6387 = vunpack.c.h.b16 %v5866
  %v6388 = vunpack.c.l.b16 %v5867
  %v6389 = vunpack.c.h.b16 %v5867
  %v6390 = vunpack.c.l.b16 %v5868
  %v6391 = vunpack.c.h.b16 %v5868
  %v6392 = vunpack.c.l.b16 %v5869
  %v6393 = vunpack.c.h.b16 %v5869
  %v6394 = vunpack.c.l.b16 %v5870
  %v6395 = vunpack.c.h.b16 %v5870
  %v6396 = vunpack.c.l.b16 %v5871
  %v6397 = vunpack.c.h.b16 %v5871
  %v6398 = vunpack.c.l.b16 %v5872
  %v6399 = vunpack.c.h.b16 %v5872
  %v6400 = vunpack.c.l.b16 %v5873
  %v6401 = vunpack.c.h.b16 %v5873
  %v6402 = vunpack.c.l.b16 %v5874
  %v6403 = vunpack.c.h.b16 %v5874
  %v6404 = vunpack.c.l.b16 %v5875
  %v6405 = vunpack.c.h.b16 %v5875
  %v6406 = vunpack.c.l.b16 %v5876
  %v6407 = vunpack.c.h.b16 %v5876
  %v6408 = vunpack.c.l.b16 %v5877
  %v6409 = vunpack.c.h.b16 %v5877
  %v6410 = vunpack.c.l.b16 %v5878
  %v6411 = vunpack.c.h.b16 %v5878
  %v6412 = vunpack.c.l.b16 %v5879
  %v6413 = vunpack.c.h.b16 %v5879
  %v6414 = vunpack.c.l.b16 %v5880
  %v6415 = vunpack.c.h.b16 %v5880
  %v6416 = vunpack.c.l.b16 %v5881
  %v6417 = vunpack.c.h.b16 %v5881
  %v6418 = vunpack.c.l.b16 %v5882
  %v6419 = vunpack.c.h.b16 %v5882
  %v6420 = vunpack.c.l.b16 %v5883
  %v6421 = vunpack.c.h.b16 %v5883
  %v6422 = vunpack.c.l.b16 %v5884
  %v6423 = vunpack.c.h.b16 %v5884
  %v6424 = vunpack.c.l.b16 %v5885
  %v6425 = vunpack.c.h.b16 %v5885
  %v6426 = vunpack.c.l.b16 %v5886
  %v6427 = vunpack.c.h.b16 %v5886
  %v6428 = vunpack.c.l.b16 %v5887
  %v6429 = vunpack.c.h.b16 %v5887
  %v6430 = vunpack.c.l.b16 %v5888
  %v6431 = vunpack.c.h.b16 %v5888
  %v6432 = vunpack.c.l.b16 %v5889
  %v6433 = vunpack.c.h.b16 %v5889
  %v6434 = vunpack.c.l.b16 %v5890
  %v6435 = vunpack.c.h.b16 %v5890
  %v6436 = vunpack.c.l.b16 %v5891
  %v6437 = vunpack.c.h.b16 %v5891
  %v6438 = vunpack.c.l.b16 %v5892
  %v6439 = vunpack.c.h.b16 %v5892
  %v6440 = vunpack.c.l.b16 %v5893
  %v6441 = vunpack.c.h.b16 %v5893
  %v6442 = vunpack.c.l.b16 %v5894
  %v6443 = vunpack.c.h.b16 %v5894
  %v6444 = vunpack.c.l.b16 %v5895
  %v6445 = vunpack.c.h.b16 %v5895
  %v6446 = vunpack.c.l.b16 %v5896
  %v6447 = vunpack.c.h.b16 %v5896
  %v6448 = vunpack.c.l.b16 %v5897
  %v6449 = vunpack.c.h.b16 %v5897
  %v6450 = vunpack.c.l.b16 %v5898
  %v6451 = vunpack.c.h.b16 %v5898
  %v6452 = vunpack.c.l.b16 %v5899
  %v6453 = vunpack.c.h.b16 %v5899
  %v6454 = vunpack.c.l.b16 %v5900
  %v6455 = vunpack.c.h.b16 %v5900
  %v6456 = vunpack.c.l.b16 %v5901
  %v6457 = vunpack.c.h.b16 %v5901
  %v6458 = vunpack.c.l.b16 %v5902
  %v6459 = vunpack.c.h.b16 %v5902
  %v6460 = vunpack.c.l.b16 %v5903
  %v6461 = vunpack.c.h.b16 %v5903
  %v6462 = vunpack.c.l.b16 %v5904
  %v6463 = vunpack.c.h.b16 %v5904
  %v6464 = vunpack.c.l.b16 %v5905
  %v6465 = vunpack.c.h.b16 %v5905
  %v6466 = vunpack.c.l.b16 %v5906
  %v6467 = vunpack.c.h.b16 %v5906
  %v6468 = vunpack.c.l.b16 %v5907
  %v6469 = vunpack.c.h.b16 %v5907
  %v6470 = vunpack.c.l.b16 %v5908
  %v6471 = vunpack.c.h.b16 %v5908
  %v6472 = vunpack.c.l.b16 %v5909
  %v6473 = vunpack.c.h.b16 %v5909
  %v6474 = vunpack.c.l.b16 %v5910
  %v6475 = vunpack.c.h.b16 %v5910
  %v6476 = vunpack.c.l.b16 %v5911
  %v6477 = vunpack.c.h.b16 %v5911
  %v6478 = vunpack.c.l.b16 %v5912
  %v6479 = vunpack.c.h.b16 %v5912
  %v6480 = vunpack.c.l.b16 %v5913
  %v6481 = vunpack.c.h.b16 %v5913
  %v6482 = vunpack.c.l.b16 %v5914
  %v6483 = vunpack.c.h.b16 %v5914
  %v6484 = vunpack.c.l.b16 %v5915
  %v6485 = vunpack.c.h.b16 %v5915
  %v6486 = vunpack.c.l.b16 %v5916
  %v6487 = vunpack.c.h.b16 %v5916
  %v6488 = vunpack.c.l.b16 %v5917
  %v6489 = vunpack.c.h.b16 %v5917
  %v6490 = vunpack.c.l.b16 %v5918
  %v6491 = vunpack.c.h.b16 %v5918
  %v6492 = vunpack.c.l.b16 %v5919
  %v6493 = vunpack.c.h.b16 %v5919
  %v6494 = vunpack.c.l.b16 %v5920
  %v6495 = vunpack.c.h.b16 %v5920
  %v6496 = vunpack.c.l.b16 %v5921
  %v6497 = vunpack.c.h.b16 %v5921
  %v6498 = vunpack.c.l.b16 %v5922
  %v6499 = vunpack.c.h.b16 %v5922
  %v6500 = vunpack.c.l.b16 %v5923
  %v6501 = vunpack.c.h.b16 %v5923
  %v6502 = vunpack.c.l.b16 %v5924
  %v6503 = vunpack.c.h.b16 %v5924
  %v6504 = vunpack.c.l.b16 %v5925
  %v6505 = vunpack.c.h.b16 %v5925
  %v6506 = vunpack.c.l.b16 %v5926
  %v6507 = vunpack.c.h.b16 %v5926
  %v6508 = vunpack.c.l.b16 %v5927
  %v6509 = vunpack.c.h.b16 %v5927
  %v6510 = vunpack.c.l.b16 %v5928
  %v6511 = vunpack.c.h.b16 %v5928
  %v6512 = vunpack.c.l.b16 %v5929
  %v6513 = vunpack.c.h.b16 %v5929
  %v6514 = vunpack.c.l.b16 %v5930
  %v6515 = vunpack.c.h.b16 %v5930
  %v6516 = vunpack.c.l.b16 %v5931
  %v6517 = vunpack.c.h.b16 %v5931
  %v6518 = vunpack.c.l.b16 %v5932
  %v6519 = vunpack.c.h.b16 %v5932
  %v6520 = vunpack.c.l.b16 %v5933
  %v6521 = vunpack.c.h.b16 %v5933
  %v6522 = vunpack.c.l.b16 %v5934
  %v6523 = vunpack.c.h.b16 %v5934
  %v6524 = vunpack.c.l.b16 %v5935
  %v6525 = vunpack.c.h.b16 %v5935
  %v6526 = vunpack.c.l.b16 %v5936
  %v6527 = vunpack.c.h.b16 %v5936
  %v6528 = vunpack.c.l.b16 %v5937
  %v6529 = vunpack.c.h.b16 %v5937
  %v6530 = vunpack.c.l.b16 %v5938
  %v6531 = vunpack.c.h.b16 %v5938
  %v6532 = vunpack.c.l.b16 %v5939
  %v6533 = vunpack.c.h.b16 %v5939
  %v6534 = vunpack.c.l.b16 %v5940
  %v6535 = vunpack.c.h.b16 %v5940
  %v6536 = vunpack.c.l.b16 %v5941
  %v6537 = vunpack.c.h.b16 %v5941
  %v6538 = vunpack.c.l.b16 %v5942
  %v6539 = vunpack.c.h.b16 %v5942
  %v6540 = vunpack.c.l.b16 %v5943
  %v6541 = vunpack.c.h.b16 %v5943
  %v6542 = vunpack.c.l.b16 %v5944
  %v6543 = vunpack.c.h.b16 %v5944
  %v6544 = vunpack.c.l.b16 %v5945
  %v6545 = vunpack.c.h.b16 %v5945
  %v6546 = vunpack.c.l.b16 %v5946
  %v6547 = vunpack.c.h.b16 %v5946
  %v6548 = vunpack.c.l.b16 %v5947
  %v6549 = vunpack.c.h.b16 %v5947
  %v6550 = vunpack.c.l.b16 %v5948
  %v6551 = vunpack.c.h.b16 %v5948
  %v6552 = vunpack.c.l.b16 %v5949
  %v6553 = vunpack.c.h.b16 %v5949
  %v6554 = vunpack.c.l.b16 %v5950
  %v6555 = vunpack.c.h.b16 %v5950
  %v6556 = vunpack.c.l.b16 %v5951
  %v6557 = vunpack.c.h.b16 %v5951
  %v6558 = vunpack.c.l.b16 %v5952
  %v6559 = vunpack.c.h.b16 %v5952
  %v6560 = vunpack.c.l.b16 %v5953
  %v6561 = vunpack.c.h.b16 %v5953
  %v6562 = vunpack.c.l.b16 %v5954
  %v6563 = vunpack.c.h.b16 %v5954
  %v6564 = vunpack.c.l.b16 %v5955
  %v6565 = vunpack.c.h.b16 %v5955
  %v6566 = vunpack.c.l.b16 %v5956
  %v6567 = vunpack.c.h.b16 %v5956
  %v6568 = vunpack.c.l.b16 %v5957
  %v6569 = vunpack.c.h.b16 %v5957
  %v6570 = vunpack.c.l.b16 %v5958
  %v6571 = vunpack.c.h.b16 %v5958
  %v6572 = vunpack.c.l.b16 %v5959
  %v6573 = vunpack.c.h.b16 %v5959
  %v6574 = vunpack.c.l.b16 %v5960
  %v6575 = vunpack.c.h.b16 %v5960
  %v6576 = vunpack.c.l.b16 %v5961
  %v6577 = vunpack.c.h.b16 %v5961
  %v6578 = vunpack.c.l.b16 %v5962
  %v6579 = vunpack.c.h.b16 %v5962
  %v6580 = vunpack.c.l.b16 %v5963
  %v6581 = vunpack.c.h.b16 %v5963
  %v6582 = vunpack.c.l.b16 %v5964
  %v6583 = vunpack.c.h.b16 %v5964
  %v6584 = vunpack.c.l.b16 %v5965
  %v6585 = vunpack.c.h.b16 %v5965
  %v6586 = vunpack.c.l.b16 %v5966
  %v6587 = vunpack.c.h.b16 %v5966
  %v6588 = vunpack.c.l.b16 %v5967
  %v6589 = vunpack.c.h.b16 %v5967
  %v6590 = vunpack.c.l.b16 %v5968
  %v6591 = vunpack.c.h.b16 %v5968
  %v6592 = vunpack.c.l.b16 %v5969
  %v6593 = vunpack.c.h.b16 %v5969
  %v6594 = vunpack.c.l.b16 %v5970
  %v6595 = vunpack.c.h.b16 %v5970
  %v6596 = vunpack.c.l.b16 %v5971
  %v6597 = vunpack.c.h.b16 %v5971
  %v6598 = vunpack.c.l.b16 %v5972
  %v6599 = vunpack.c.h.b16 %v5972
  %v6600 = vunpack.c.l.b16 %v5973
  %v6601 = vunpack.c.h.b16 %v5973
  %v6602 = vunpack.c.l.b16 %v5974
  %v6603 = vunpack.c.h.b16 %v5974
  %v6604 = vunpack.c.l.b16 %v5975
  %v6605 = vunpack.c.h.b16 %v5975
  %v6606 = vunpack.c.l.b16 %v5976
  %v6607 = vunpack.c.h.b16 %v5976
  %v6608 = vunpack.c.l.b16 %v5977
  %v6609 = vunpack.c.h.b16 %v5977
  %v6610 = vunpack.c.l.b16 %v5978
  %v6611 = vunpack.c.h.b16 %v5978
  %v6612 = vunpack.c.l.b16 %v5979
  %v6613 = vunpack.c.h.b16 %v5979
  %v6614 = vunpack.c.l.b16 %v5980
  %v6615 = vunpack.c.h.b16 %v5980
  %v6616 = vunpack.c.l.b16 %v5981
  %v6617 = vunpack.c.h.b16 %v5981
  %v6618 = vunpack.c.l.b16 %v5982
  %v6619 = vunpack.c.h.b16 %v5982
  %v6620 = vunpack.c.l.b16 %v5983
  %v6621 = vunpack.c.h.b16 %v5983
  %v6622 = vunpack.c.l.b16 %v5984
  %v6623 = vunpack.c.h.b16 %v5984
  %v6624 = vunpack.c.l.b16 %v5985
  %v6625 = vunpack.c.h.b16 %v5985
  %v6626 = vunpack.c.l.b16 %v5986
  %v6627 = vunpack.c.h.b16 %v5986
  %v6628 = vunpack.c.l.b16 %v5987
  %v6629 = vunpack.c.h.b16 %v5987
  %v6630 = vunpack.c.l.b16 %v5988
  %v6631 = vunpack.c.h.b16 %v5988
  %v6632 = vunpack.c.l.b16 %v5989
  %v6633 = vunpack.c.h.b16 %v5989
  %v6634 = vunpack.c.l.b16 %v5990
  %v6635 = vunpack.c.h.b16 %v5990
  %v6636 = vunpack.c.l.b16 %v5991
  %v6637 = vunpack.c.h.b16 %v5991
  %v6638 = vunpack.c.l.b16 %v5992
  %v6639 = vunpack.c.h.b16 %v5992
  %v6640 = vunpack.c.l.b16 %v5993
  %v6641 = vunpack.c.h.b16 %v5993
  %v6642 = vunpack.c.l.b16 %v5994
  %v6643 = vunpack.c.h.b16 %v5994
  %v6644 = vunpack.c.l.b16 %v5995
  %v6645 = vunpack.c.h.b16 %v5995
  %v6646 = vunpack.c.l.b16 %v5996
  %v6647 = vunpack.c.h.b16 %v5996
  %v6648 = vunpack.c.l.b16 %v5997
  %v6649 = vunpack.c.h.b16 %v5997
  %v6650 = vunpack.c.l.b16 %v5998
  %v6651 = vunpack.c.h.b16 %v5998
  %v6652 = vunpack.c.l.b16 %v5999
  %v6653 = vunpack.c.h.b16 %v5999
  %v6654 = vunpack.c.l.b16 %v6000
  %v6655 = vunpack.c.h.b16 %v6000
  %v6656 = vunpack.c.l.b16 %v6001
  %v6657 = vunpack.c.h.b16 %v6001
  %v6658 = vunpack.c.l.b16 %v6002
  %v6659 = vunpack.c.h.b16 %v6002
  %v6660 = vunpack.c.l.b16 %v6003
  %v6661 = vunpack.c.h.b16 %v6003
  %v6662 = vunpack.c.l.b16 %v6004
  %v6663 = vunpack.c.h.b16 %v6004
  %v6664 = vunpack.c.l.b16 %v6005
  %v6665 = vunpack.c.h.b16 %v6005
  %v6666 = vunpack.c.l.b16 %v6006
  %v6667 = vunpack.c.h.b16 %v6006
  %v6668 = vunpack.c.l.b16 %v6007
  %v6669 = vunpack.c.h.b16 %v6007
  %v6670 = vunpack.c.l.b16 %v6008
  %v6671 = vunpack.c.h.b16 %v6008
  %v6672 = vunpack.c.l.b16 %v6009
  %v6673 = vunpack.c.h.b16 %v6009
  %v6674 = vunpack.c.l.b16 %v6010
  %v6675 = vunpack.c.h.b16 %v6010
  %v6676 = vunpack.c.l.b16 %v6011
  %v6677 = vunpack.c.h.b16 %v6011
  %v6678 = vunpack.c.l.b16 %v6012
  %v6679 = vunpack.c.h.b16 %v6012
  %v6680 = vunpack.c.l.b16 %v6013
  %v6681 = vunpack.c.h.b16 %v6013
  %v6682 = vunpack.c.l.b16 %v6014
  %v6683 = vunpack.c.h.b16 %v6014
  %v6684 = vunpack.c.l.b16 %v6015
  %v6685 = vunpack.c.h.b16 %v6015
  %v6686 = vpack.c.b16 %v6308, %v6302
  %v6687 = vpack.c.b16 %v6309, %v6303
  %v6688 = vpack.c.b16 %v6310, %v6304
  %v6689 = vpack.c.b16 %v6311, %v6305
  %v6690 = vpack.c.b16 %v6312, %v6306
  %v6691 = vpack.c.b16 %v6313, %v6307
  %v6692 = vpack.c.b16 %v6320, %v6314
  %v6693 = vpack.c.b16 %v6321, %v6315
  %v6694 = vpack.c.b16 %v6322, %v6316
  %v6695 = vpack.c.b16 %v6323, %v6317
  %v6696 = vpack.c.b16 %v6324, %v6318
  %v6697 = vpack.c.b16 %v6325, %v6319
  %v6698 = vpack.c.b16 %v6332, %v6326
  %v6699 = vpack.c.b16 %v6333, %v6327
  %v6700 = vpack.c.b16 %v6334, %v6328
  %v6701 = vpack.c.b16 %v6335, %v6329
  %v6702 = vpack.c.b16 %v6336, %v6330
  %v6703 = vpack.c.b16 %v6337, %v6331
  %v6704 = vpack.c.b16 %v6344, %v6338
  %v6705 = vpack.c.b16 %v6345, %v6339
  %v6706 = vpack.c.b16 %v6346, %v6340
  %v6707 = vpack.c.b16 %v6347, %v6341
  %v6708 = vpack.c.b16 %v6348, %v6342
  %v6709 = vpack.c.b16 %v6349, %v6343
  %v6710 = vpack.c.b16 %v6356, %v6350
  %v6711 = vpack.c.b16 %v6357, %v6351
  %v6712 = vpack.c.b16 %v6358, %v6352
  %v6713 = vpack.c.b16 %v6359, %v6353
  %v6714 = vpack.c.b16 %v6360, %v6354
  %v6715 = vpack.c.b16 %v6361, %v6355
  %v6716 = vpack.c.b16 %v6368, %v6362
  %v6717 = vpack.c.b16 %v6369, %v6363
  %v6718 = vpack.c.b16 %v6370, %v6364
  %v6719 = vpack.c.b16 %v6371, %v6365
  %v6720 = vpack.c.b16 %v6372, %v6366
  %v6721 = vpack.c.b16 %v6373, %v6367
  %v6722 = vpack.c.b16 %v6380, %v6374
  %v6723 = vpack.c.b16 %v6381, %v6375
  %v6724 = vpack.c.b16 %v6382, %v6376
  %v6725 = vpack.c.b16 %v6383, %v6377
  %v6726 = vpack.c.b16 %v6384, %v6378
  %v6727 = vpack.c.b16 %v6385, %v6379
  %v6728 = vpack.c.b16 %v6392, %v6386
  %v6729 = vpack.c.b16 %v6393, %v6387
  %v6730 = vpack.c.b16 %v6394, %v6388
  %v6731 = vpack.c.b16 %v6395, %v6389
  %v6732 = vpack.c.b16 %v6396, %v6390
  %v6733 = vpack.c.b16 %v6397, %v6391
  %v6734 = vpack.c.b16 %v6404, %v6398
  %v6735 = vpack.c.b16 %v6405, %v6399
  %v6736 = vpack.c.b16 %v6406, %v6400
  %v6737 = vpack.c.b16 %v6407, %v6401
  %v6738 = vpack.c.b16 %v6408, %v6402
  %v6739 = vpack.c.b16 %v6409, %v6403
  %v6740 = vpack.c.b16 %v6416, %v6410
  %v6741 = vpack.c.b16 %v6417, %v6411
  %v6742 = vpack.c.b16 %v6418, %v6412
  %v6743 = vpack.c.b16 %v6419, %v6413
  %v6744 = vpack.c.b16 %v6420, %v6414
  %v6745 = vpack.c.b16 %v6421, %v6415
  %v6746 = vpack.c.b16 %v6428, %v6422
  %v6747 = vpack.c.b16 %v6429, %v6423
  %v6748 = vpack.c.b16 %v6430, %v6424
  %v6749 = vpack.c.b16 %v6431, %v6425
  %v6750 = vpack.c.b16 %v6432, %v6426
  %v6751 = vpack.c.b16 %v6433, %v6427
  %v6752 = vpack.c.b16 %v6440, %v6434
  %v6753 = vpack.c.b16 %v6441, %v6435
  %v6754 = vpack.c.b16 %v6442, %v6436
  %v6755 = vpack.c.b16 %v6443, %v6437
  %v6756 = vpack.c.b16 %v6444, %v6438
  %v6757 = vpack.c.b16 %v6445, %v6439
  %v6758 = vpack.c.b16 %v6452, %v6446
  %v6759 = vpack.c.b16 %v6453, %v6447
  %v6760 = vpack.c.b16 %v6454, %v6448
  %v6761 = vpack.c.b16 %v6455, %v6449
  %v6762 = vpack.c.b16 %v6456, %v6450
  %v6763 = vpack.c.b16 %v6457, %v6451
  %v6764 = vpack.c.b16 %v6464, %v6458
  %v6765 = vpack.c.b16 %v6465, %v6459
  %v6766 = vpack.c.b16 %v6466, %v6460
  %v6767 = vpack.c.b16 %v6467, %v6461
  %v6768 = vpack.c.b16 %v6468, %v6462
  %v6769 = vpack.c.b16 %v6469, %v6463
  %v6770 = vpack.c.b16 %v6476, %v6470
  %v6771 = vpack.c.b16 %v6477, %v6471
  %v6772 = vpack.c.b16 %v6478, %v6472
  %v6773 = vpack.c.b16 %v6479, %v6473
  %v6774 = vpack.c.b16 %v6480, %v6474
  %v6775 = vpack.c.b16 %v6481, %v6475
  %v6776 = vpack.c.b16 %v6488, %v6482
  %v6777 = vpack.c.b16 %v6489, %v6483
  %v6778 = vpack.c.b16 %v6490, %v6484
  %v6779 = vpack.c.b16 %v6491, %v6485
  %v6780 = vpack.c.b16 %v6492, %v6486
  %v6781 = vpack.c.b16 %v6493, %v6487
  %v6782 = vpack.c.b16 %v6500, %v6494
  %v6783 = vpack.c.b16 %v6501, %v6495
  %v6784 = vpack.c.b16 %v6502, %v6496
  %v6785 = vpack.c.b16 %v6503, %v6497
  %v6786 = vpack.c.b16 %v6504, %v6498
  %v6787 = vpack.c.b16 %v6505, %v6499
  %v6788 = vpack.c.b16 %v6512, %v6506
  %v6789 = vpack.c.b16 %v6513, %v6507
  %v6790 = vpack.c.b16 %v6514, %v6508
  %v6791 = vpack.c.b16 %v6515, %v6509
  %v6792 = vpack.c.b16 %v6516, %v6510
  %v6793 = vpack.c.b16 %v6517, %v6511
  %v6794 = vpack.c.b16 %v6524, %v6518
  %v6795 = vpack.c.b16 %v6525, %v6519
  %v6796 = vpack.c.b16 %v6526, %v6520
  %v6797 = vpack.c.b16 %v6527, %v6521
  %v6798 = vpack.c.b16 %v6528, %v6522
  %v6799 = vpack.c.b16 %v6529, %v6523
  %v6800 = vpack.c.b16 %v6536, %v6530
  %v6801 = vpack.c.b16 %v6537, %v6531
  %v6802 = vpack.c.b16 %v6538, %v6532
  %v6803 = vpack.c.b16 %v6539, %v6533
  %v6804 = vpack.c.b16 %v6540, %v6534
  %v6805 = vpack.c.b16 %v6541, %v6535
  %v6806 = vpack.c.b16 %v6548, %v6542
  %v6807 = vpack.c.b16 %v6549, %v6543
  %v6808 = vpack.c.b16 %v6550, %v6544
  %v6809 = vpack.c.b16 %v6551, %v6545
  %v6810 = vpack.c.b16 %v6552, %v6546
  %v6811 = vpack.c.b16 %v6553, %v6547
  %v6812 = vpack.c.b16 %v6560, %v6554
  %v6813 = vpack.c.b16 %v6561, %v6555
  %v6814 = vpack.c.b16 %v6562, %v6556
  %v6815 = vpack.c.b16 %v6563, %v6557
  %v6816 = vpack.c.b16 %v6564, %v6558
  %v6817 = vpack.c.b16 %v6565, %v6559
  %v6818 = vpack.c.b16 %v6572, %v6566
  %v6819 = vpack.c.b16 %v6573, %v6567
  %v6820 = vpack.c.b16 %v6574, %v6568
  %v6821 = vpack.c.b16 %v6575, %v6569
  %v6822 = vpack.c.b16 %v6576, %v6570
  %v6823 = vpack.c.b16 %v6577, %v6571
  %v6824 = vpack.c.b16 %v6584, %v6578
  %v6825 = vpack.c.b16 %v6585, %v6579
  %v6826 = vpack.c.b16 %v6586, %v6580
  %v6827 = vpack.c.b16 %v6587, %v6581
  %v6828 = vpack.c.b16 %v6588, %v6582
  %v6829 = vpack.c.b16 %v6589, %v6583
  %v6830 = vpack.c.b16 %v6596, %v6590
  %v6831 = vpack.c.b16 %v6597, %v6591
  %v6832 = vpack.c.b16 %v6598, %v6592
  %v6833 = vpack.c.b16 %v6599, %v6593
  %v6834 = vpack.c.b16 %v6600, %v6594
  %v6835 = vpack.c.b16 %v6601, %v6595
  %v6836 = vpack.c.b16 %v6608, %v6602
  %v6837 = vpack.c.b16 %v6609, %v6603
  %v6838 = vpack.c.b16 %v6610, %v6604
  %v6839 = vpack.c.b16 %v6611, %v6605
  %v6840 = vpack.c.b16 %v6612, %v6606
  %v6841 = vpack.c.b16 %v6613, %v6607
  %v6842 = vpack.c.b16 %v6620, %v6614
  %v6843 = vpack.c.b16 %v6621, %v6615
  %v6844 = vpack.c.b16 %v6622, %v6616
  %v6845 = vpack.c.b16 %v6623, %v6617
  %v6846 = vpack.c.b16 %v6624, %v6618
  %v6847 = vpack.c.b16 %v6625, %v6619
  %v6848 = vpack.c.b16 %v6632, %v6626
  %v6849 = vpack.c.b16 %v6633, %v6627
  %v6850 = vpack.c.b16 %v6634, %v6628
  %v6851 = vpack.c.b16 %v6635, %v6629
  %v6852 = vpack.c.b16 %v6636, %v6630
  %v6853 = vpack.c.b16 %v6637, %v6631
  %v6854 = vpack.c.b16 %v6644, %v6638
  %v6855 = vpack.c.b16 %v6645, %v6639
  %v6856 = vpack.c.b16 %v6646, %v6640
  %v6857 = vpack.c.b16 %v6647, %v6641
  %v6858 = vpack.c.b16 %v6648, %v6642
  %v6859 = vpack.c.b16 %v6649, %v6643
  %v6860 = vpack.c.b16 %v6656, %v6650
  %v6861 = vpack.c.b16 %v6657, %v6651
  %v6862 = vpack.c.b16 %v6658, %v6652
  %v6863 = vpack.c.b16 %v6659, %v6653
  %v6864 = vpack.c.b16 %v6660, %v6654
  %v6865 = vpack.c.b16 %v6661, %v6655
  %v6866 = vpack.c.b16 %v6668, %v6662
  %v6867 = vpack.c.b16 %v6669, %v6663
  %v6868 = vpack.c.b16 %v6670, %v6664
  %v6869 = vpack.c.b16 %v6671, %v6665
  %v6870 = vpack.c.b16 %v6672, %v6666
  %v6871 = vpack.c.b16 %v6673, %v6667
  %v6872 = vpack.c.b16 %v6680, %v6674
  %v6873 = vpack.c.b16 %v6681, %v6675
  %v6874 = vpack.c.b16 %v6682, %v6676
  %v6875 = vpack.c.b16 %v6683, %v6677
  %v6876 = vpack.c.b16 %v6684, %v6678
  %v6877 = vpack.c.b16 %v6685, %v6679
  %7070 = vmatprep.subr.bf16.mxu0 %v6687
  %7071 = vmatpush1.bf16.msra.mxu0 %v6686
  %7072 = vmatprep.subr.bf16.mxu0 %v6693
  %7073 = vmatpush1.bf16.msra.mxu0 %v6692
  %7074 = vmatprep.subr.bf16.mxu0 %v6699
  %7075 = vmatpush1.bf16.msra.mxu0 %v6698
  %7076 = vmatprep.subr.bf16.mxu0 %v6705
  %7077 = vmatpush1.bf16.msra.mxu0 %v6704
  %7078 = vmatprep.subr.bf16.mxu0 %v6711
  %7079 = vmatpush1.bf16.msra.mxu0 %v6710
  %7080 = vmatprep.subr.bf16.mxu0 %v6717
  %7081 = vmatpush1.bf16.msra.mxu0 %v6716
  %7082 = vmatprep.subr.bf16.mxu0 %v6723
  %7083 = vmatpush1.bf16.msra.mxu0 %v6722
  %7084 = vmatprep.subr.bf16.mxu0 %v6729
  %7085 = vmatpush1.bf16.msra.mxu0 %v6728
  %7086 = vmatprep.subr.bf16.mxu0 %v6735
  %7087 = vmatpush1.bf16.msra.mxu0 %v6734
  %7088 = vmatprep.subr.bf16.mxu0 %v6741
  %7089 = vmatpush1.bf16.msra.mxu0 %v6740
  %7090 = vmatprep.subr.bf16.mxu0 %v6747
  %7091 = vmatpush1.bf16.msra.mxu0 %v6746
  %7092 = vmatprep.subr.bf16.mxu0 %v6753
  %7093 = vmatpush1.bf16.msra.mxu0 %v6752
  %7094 = vmatprep.subr.bf16.mxu0 %v6759
  %7095 = vmatpush1.bf16.msra.mxu0 %v6758
  %7096 = vmatprep.subr.bf16.mxu0 %v6765
  %7097 = vmatpush1.bf16.msra.mxu0 %v6764
  %7098 = vmatprep.subr.bf16.mxu0 %v6771
  %7099 = vmatpush1.bf16.msra.mxu0 %v6770
  %7100 = vmatprep.subr.bf16.mxu0 %v6777
  %7101 = vmatpush1.bf16.msra.mxu0 %v6776
  %7102 = vmatprep.mubr.bf16.mxu0 %v6071
  %7103 = vmatmul.mubr.bf16.gmra.mrb[0].mxu0 %v6070
  %v7104 = vpop.f32.mrb[0].mxu0
  %v7105 = vadd.f32 0.0, %v7104
  %v7106 = vpop.f32.mrb[0].mxu0
  %v7107 = vadd.f32 0.0, %v7106
  %v7108 = vpop.f32.mrb[0].mxu0
  %v7109 = vadd.f32 0.0, %v7108
  %v7110 = vpop.f32.mrb[0].mxu0
  %v7111 = vadd.f32 0.0, %v7110
  %7112 = vmatprep.mubr.bf16.mxu0 %v6075
  %7113 = vmatmul.mubr.bf16.gmra.mrb[0].mxu0 %v6074
  %v7114 = vpop.f32.mrb[0].mxu0
  %v7115 = vadd.f32 0.0, %v7114
  %v7116 = vpop.f32.mrb[0].mxu0
  %v7117 = vadd.f32 0.0, %v7116
  %v7118 = vpop.f32.mrb[0].mxu0
  %v7119 = vadd.f32 0.0, %v7118
  %v7120 = vpop.f32.mrb[0].mxu0
  %v7121 = vadd.f32 0.0, %v7120
  %7122 = vmatprep.mubr.bf16.mxu0 %v6079
  %7123 = vmatmul.mubr.bf16.gmra.mrb[0].mxu0 %v6078
  %v7124 = vpop.f32.mrb[0].mxu0
  %v7125 = vadd.f32 0.0, %v7124
  %v7126 = vpop.f32.mrb[0].mxu0
  %v7127 = vadd.f32 0.0, %v7126
  %v7128 = vpop.f32.mrb[0].mxu0
  %v7129 = vadd.f32 0.0, %v7128
  %v7130 = vpop.f32.mrb[0].mxu0
  %v7131 = vadd.f32 0.0, %v7130
  %7132 = vmatprep.mubr.bf16.mxu0 %v6083
  %7133 = vmatmul.mubr.bf16.gmra.mrb[0].mxu0 %v6082
  %v7134 = vpop.f32.mrb[0].mxu0
  %v7135 = vadd.f32 0.0, %v7134
  %v7136 = vpop.f32.mrb[0].mxu0
  %v7137 = vadd.f32 0.0, %v7136
  %v7138 = vpop.f32.mrb[0].mxu0
  %v7139 = vadd.f32 0.0, %v7138
  %v7140 = vpop.f32.mrb[0].mxu0
  %v7141 = vadd.f32 0.0, %v7140
  %7142 = vmatprep.mubr.bf16.mxu0 %v6087
  %7143 = vmatmul.mubr.bf16.gmra.mrb[0].mxu0 %v6086
  %v7144 = vpop.f32.mrb[0].mxu0
  %v7145 = vadd.f32 0.0, %v7144
  %v7146 = vpop.f32.mrb[0].mxu0
  %v7147 = vadd.f32 0.0, %v7146
  %v7148 = vpop.f32.mrb[0].mxu0
  %v7149 = vpop.f32.mrb[0].mxu0
  %7150 = vdwg.mxu0
  %7151 = vmatprep.subr.bf16.mxu0 %v6783
  %7152 = vmatpush1.bf16.msra.mxu0 %v6782
  %7153 = vmatprep.subr.bf16.mxu0 %v6789
  %7154 = vmatpush1.bf16.msra.mxu0 %v6788
  %7155 = vmatprep.subr.bf16.mxu0 %v6795
  %7156 = vmatpush1.bf16.msra.mxu0 %v6794
  %7157 = vmatprep.subr.bf16.mxu0 %v6801
  %7158 = vmatpush1.bf16.msra.mxu0 %v6800
  %7159 = vmatprep.subr.bf16.mxu0 %v6807
  %7160 = vmatpush1.bf16.msra.mxu0 %v6806
  %7161 = vmatprep.subr.bf16.mxu0 %v6813
  %7162 = vmatpush1.bf16.msra.mxu0 %v6812
  %7163 = vmatprep.subr.bf16.mxu0 %v6819
  %7164 = vmatpush1.bf16.msra.mxu0 %v6818
  %7165 = vmatprep.subr.bf16.mxu0 %v6825
  %7166 = vmatpush1.bf16.msra.mxu0 %v6824
  %7167 = vmatprep.subr.bf16.mxu0 %v6831
  %7168 = vmatpush1.bf16.msra.mxu0 %v6830
  %7169 = vmatprep.subr.bf16.mxu0 %v6837
  %7170 = vmatpush1.bf16.msra.mxu0 %v6836
  %7171 = vmatprep.subr.bf16.mxu0 %v6843
  %7172 = vmatpush1.bf16.msra.mxu0 %v6842
  %7173 = vmatprep.subr.bf16.mxu0 %v6849
  %7174 = vmatpush1.bf16.msra.mxu0 %v6848
  %7175 = vmatprep.subr.bf16.mxu0 %v6855
  %7176 = vmatpush1.bf16.msra.mxu0 %v6854
  %7177 = vmatprep.subr.bf16.mxu0 %v6861
  %7178 = vmatpush1.bf16.msra.mxu0 %v6860
  %7179 = vmatprep.subr.bf16.mxu0 %v6867
  %7180 = vmatpush1.bf16.msra.mxu0 %v6866
  %7181 = vmatprep.subr.bf16.mxu0 %v6873
  %7182 = vmatpush1.bf16.msra.mxu0 %v6872
  %7183 = vmatprep.mubr.bf16.mxu0 %v6073
  %7184 = vmatmul.mubr.bf16.gmra.mrb[0].mxu0 %v6072
  %v7185 = vpop.f32.mrb[0].mxu0
  %v7186 = vadd.f32 %v7105, %v7185
  %v7187 = vpop.f32.mrb[0].mxu0
  %v7188 = vadd.f32 %v7107, %v7187
  %v7189 = vpop.f32.mrb[0].mxu0
  %v7190 = vadd.f32 %v7109, %v7189
  %v7191 = vpop.f32.mrb[0].mxu0
  %v7192 = vadd.f32 %v7111, %v7191
  %7193 = vmatprep.mubr.bf16.mxu0 %v6077
  %7194 = vmatmul.mubr.bf16.gmra.mrb[0].mxu0 %v6076
  %v7195 = vpop.f32.mrb[0].mxu0
  %v7196 = vadd.f32 %v7115, %v7195
  %v7197 = vpop.f32.mrb[0].mxu0
  %v7198 = vadd.f32 %v7117, %v7197
  %v7199 = vpop.f32.mrb[0].mxu0
  %v7200 = vadd.f32 %v7119, %v7199
  %v7201 = vpop.f32.mrb[0].mxu0
  %v7202 = vadd.f32 %v7121, %v7201
  %7203 = vmatprep.mubr.bf16.mxu0 %v6081
  %7204 = vmatmul.mubr.bf16.gmra.mrb[0].mxu0 %v6080
  %v7205 = vpop.f32.mrb[0].mxu0
  %v7206 = vadd.f32 %v7125, %v7205
  %v7207 = vpop.f32.mrb[0].mxu0
  %v7208 = vadd.f32 %v7127, %v7207
  %v7209 = vpop.f32.mrb[0].mxu0
  %v7210 = vadd.f32 %v7129, %v7209
  %v7211 = vpop.f32.mrb[0].mxu0
  %v7212 = vadd.f32 %v7131, %v7211
  %7213 = vmatprep.mubr.bf16.mxu0 %v6085
  %7214 = vmatmul.mubr.bf16.gmra.mrb[0].mxu0 %v6084
  %v7215 = vpop.f32.mrb[0].mxu0
  %v7216 = vadd.f32 %v7135, %v7215
  %v7217 = vpop.f32.mrb[0].mxu0
  %v7218 = vadd.f32 %v7137, %v7217
  %v7219 = vpop.f32.mrb[0].mxu0
  %v7220 = vadd.f32 %v7139, %v7219
  %v7221 = vpop.f32.mrb[0].mxu0
  %v7222 = vadd.f32 %v7141, %v7221
  %7223 = vmatprep.mubr.bf16.mxu0 %v6089
  %7224 = vmatmul.mubr.bf16.gmra.mrb[0].mxu0 %v6088
  %v7225 = vpop.f32.mrb[0].mxu0
  %v7226 = vadd.f32 %v7145, %v7225
  %v7227 = vpop.f32.mrb[0].mxu0
  %v7228 = vadd.f32 %v7147, %v7227
  %v7229 = vpop.f32.mrb[0].mxu0
  %v7230 = vpop.f32.mrb[0].mxu0
  %7231 = vdwg.mxu0
  %7232 = vmatprep.subr.bf16.mxu0 %v6689
  %7233 = vmatpush1.bf16.msra.mxu0 %v6688
  %7234 = vmatprep.subr.bf16.mxu0 %v6695
  %7235 = vmatpush1.bf16.msra.mxu0 %v6694
  %7236 = vmatprep.subr.bf16.mxu0 %v6701
  %7237 = vmatpush1.bf16.msra.mxu0 %v6700
  %7238 = vmatprep.subr.bf16.mxu0 %v6707
  %7239 = vmatpush1.bf16.msra.mxu0 %v6706
  %7240 = vmatprep.subr.bf16.mxu0 %v6713
  %7241 = vmatpush1.bf16.msra.mxu0 %v6712
  %7242 = vmatprep.subr.bf16.mxu0 %v6719
  %7243 = vmatpush1.bf16.msra.mxu0 %v6718
  %7244 = vmatprep.subr.bf16.mxu0 %v6725
  %7245 = vmatpush1.bf16.msra.mxu0 %v6724
  %7246 = vmatprep.subr.bf16.mxu0 %v6731
  %7247 = vmatpush1.bf16.msra.mxu0 %v6730
  %7248 = vmatprep.subr.bf16.mxu0 %v6737
  %7249 = vmatpush1.bf16.msra.mxu0 %v6736
  %7250 = vmatprep.subr.bf16.mxu0 %v6743
  %7251 = vmatpush1.bf16.msra.mxu0 %v6742
  %7252 = vmatprep.subr.bf16.mxu0 %v6749
  %7253 = vmatpush1.bf16.msra.mxu0 %v6748
  %7254 = vmatprep.subr.bf16.mxu0 %v6755
  %7255 = vmatpush1.bf16.msra.mxu0 %v6754
  %7256 = vmatprep.subr.bf16.mxu0 %v6761
  %7257 = vmatpush1.bf16.msra.mxu0 %v6760
  %7258 = vmatprep.subr.bf16.mxu0 %v6767
  %7259 = vmatpush1.bf16.msra.mxu0 %v6766
  %7260 = vmatprep.subr.bf16.mxu0 %v6773
  %7261 = vmatpush1.bf16.msra.mxu0 %v6772
  %7262 = vmatprep.subr.bf16.mxu0 %v6779
  %7263 = vmatpush1.bf16.msra.mxu0 %v6778
  %7264 = vmatprep.mubr.bf16.mxu0 %v6071
  %7265 = vmatmul.mubr.bf16.gmra.mrb[0].mxu0 %v6070
  %v7266 = vpop.f32.mrb[0].mxu0
  %v7267 = vadd.f32 0.0, %v7266
  %v7268 = vpop.f32.mrb[0].mxu0
  %v7269 = vadd.f32 0.0, %v7268
  %v7270 = vpop.f32.mrb[0].mxu0
  %v7271 = vadd.f32 0.0, %v7270
  %v7272 = vpop.f32.mrb[0].mxu0
  %v7273 = vadd.f32 0.0, %v7272
  %7274 = vmatprep.mubr.bf16.mxu0 %v6075
  %7275 = vmatmul.mubr.bf16.gmra.mrb[0].mxu0 %v6074
  %v7276 = vpop.f32.mrb[0].mxu0
  %v7277 = vadd.f32 0.0, %v7276
  %v7278 = vpop.f32.mrb[0].mxu0
  %v7279 = vadd.f32 0.0, %v7278
  %v7280 = vpop.f32.mrb[0].mxu0
  %v7281 = vadd.f32 0.0, %v7280
  %v7282 = vpop.f32.mrb[0].mxu0
  %v7283 = vadd.f32 0.0, %v7282
  %7284 = vmatprep.mubr.bf16.mxu0 %v6079
  %7285 = vmatmul.mubr.bf16.gmra.mrb[0].mxu0 %v6078
  %v7286 = vpop.f32.mrb[0].mxu0
  %v7287 = vadd.f32 0.0, %v7286
  %v7288 = vpop.f32.mrb[0].mxu0
  %v7289 = vadd.f32 0.0, %v7288
  %v7290 = vpop.f32.mrb[0].mxu0
  %v7291 = vadd.f32 0.0, %v7290
  %v7292 = vpop.f32.mrb[0].mxu0
  %v7293 = vadd.f32 0.0, %v7292
  %7294 = vmatprep.mubr.bf16.mxu0 %v6083
  %7295 = vmatmul.mubr.bf16.gmra.mrb[0].mxu0 %v6082
  %v7296 = vpop.f32.mrb[0].mxu0
  %v7297 = vadd.f32 0.0, %v7296
  %v7298 = vpop.f32.mrb[0].mxu0
  %v7299 = vadd.f32 0.0, %v7298
  %v7300 = vpop.f32.mrb[0].mxu0
  %v7301 = vadd.f32 0.0, %v7300
  %v7302 = vpop.f32.mrb[0].mxu0
  %v7303 = vadd.f32 0.0, %v7302
  %7304 = vmatprep.mubr.bf16.mxu0 %v6087
  %7305 = vmatmul.mubr.bf16.gmra.mrb[0].mxu0 %v6086
  %v7306 = vpop.f32.mrb[0].mxu0
  %v7307 = vadd.f32 0.0, %v7306
  %v7308 = vpop.f32.mrb[0].mxu0
  %v7309 = vadd.f32 0.0, %v7308
  %v7310 = vpop.f32.mrb[0].mxu0
  %v7311 = vpop.f32.mrb[0].mxu0
  %7312 = vdwg.mxu0
  %7313 = vmatprep.subr.bf16.mxu0 %v6785
  %7314 = vmatpush1.bf16.msra.mxu0 %v6784
  %7315 = vmatprep.subr.bf16.mxu0 %v6791
  %7316 = vmatpush1.bf16.msra.mxu0 %v6790
  %7317 = vmatprep.subr.bf16.mxu0 %v6797
  %7318 = vmatpush1.bf16.msra.mxu0 %v6796
  %7319 = vmatprep.subr.bf16.mxu0 %v6803
  %7320 = vmatpush1.bf16.msra.mxu0 %v6802
  %7321 = vmatprep.subr.bf16.mxu0 %v6809
  %7322 = vmatpush1.bf16.msra.mxu0 %v6808
  %7323 = vmatprep.subr.bf16.mxu0 %v6815
  %7324 = vmatpush1.bf16.msra.mxu0 %v6814
  %7325 = vmatprep.subr.bf16.mxu0 %v6821
  %7326 = vmatpush1.bf16.msra.mxu0 %v6820
  %7327 = vmatprep.subr.bf16.mxu0 %v6827
  %7328 = vmatpush1.bf16.msra.mxu0 %v6826
  %7329 = vmatprep.subr.bf16.mxu0 %v6833
  %7330 = vmatpush1.bf16.msra.mxu0 %v6832
  %7331 = vmatprep.subr.bf16.mxu0 %v6839
  %7332 = vmatpush1.bf16.msra.mxu0 %v6838
  %7333 = vmatprep.subr.bf16.mxu0 %v6845
  %7334 = vmatpush1.bf16.msra.mxu0 %v6844
  %7335 = vmatprep.subr.bf16.mxu0 %v6851
  %7336 = vmatpush1.bf16.msra.mxu0 %v6850
  %7337 = vmatprep.subr.bf16.mxu0 %v6857
  %7338 = vmatpush1.bf16.msra.mxu0 %v6856
  %7339 = vmatprep.subr.bf16.mxu0 %v6863
  %7340 = vmatpush1.bf16.msra.mxu0 %v6862
  %7341 = vmatprep.subr.bf16.mxu0 %v6869
  %7342 = vmatpush1.bf16.msra.mxu0 %v6868
  %7343 = vmatprep.subr.bf16.mxu0 %v6875
  %7344 = vmatpush1.bf16.msra.mxu0 %v6874
  %7345 = vmatprep.mubr.bf16.mxu0 %v6073
  %7346 = vmatmul.mubr.bf16.gmra.mrb[0].mxu0 %v6072
  %v7347 = vpop.f32.mrb[0].mxu0
  %v7348 = vadd.f32 %v7267, %v7347
  %v7349 = vpop.f32.mrb[0].mxu0
  %v7350 = vadd.f32 %v7269, %v7349
  %v7351 = vpop.f32.mrb[0].mxu0
  %v7352 = vadd.f32 %v7271, %v7351
  %v7353 = vpop.f32.mrb[0].mxu0
  %v7354 = vadd.f32 %v7273, %v7353
  %7355 = vmatprep.mubr.bf16.mxu0 %v6077
  %7356 = vmatmul.mubr.bf16.gmra.mrb[0].mxu0 %v6076
  %v7357 = vpop.f32.mrb[0].mxu0
  %v7358 = vadd.f32 %v7277, %v7357
  %v7359 = vpop.f32.mrb[0].mxu0
  %v7360 = vadd.f32 %v7279, %v7359
  %v7361 = vpop.f32.mrb[0].mxu0
  %v7362 = vadd.f32 %v7281, %v7361
  %v7363 = vpop.f32.mrb[0].mxu0
  %v7364 = vadd.f32 %v7283, %v7363
  %7365 = vmatprep.mubr.bf16.mxu0 %v6081
  %7366 = vmatmul.mubr.bf16.gmra.mrb[0].mxu0 %v6080
  %v7367 = vpop.f32.mrb[0].mxu0
  %v7368 = vadd.f32 %v7287, %v7367
  %v7369 = vpop.f32.mrb[0].mxu0
  %v7370 = vadd.f32 %v7289, %v7369
  %v7371 = vpop.f32.mrb[0].mxu0
  %v7372 = vadd.f32 %v7291, %v7371
  %v7373 = vpop.f32.mrb[0].mxu0
  %v7374 = vadd.f32 %v7293, %v7373
  %7375 = vmatprep.mubr.bf16.mxu0 %v6085
  %7376 = vmatmul.mubr.bf16.gmra.mrb[0].mxu0 %v6084
  %v7377 = vpop.f32.mrb[0].mxu0
  %v7378 = vadd.f32 %v7297, %v7377
  %v7379 = vpop.f32.mrb[0].mxu0
  %v7380 = vadd.f32 %v7299, %v7379
  %v7381 = vpop.f32.mrb[0].mxu0
  %v7382 = vadd.f32 %v7301, %v7381
  %v7383 = vpop.f32.mrb[0].mxu0
  %v7384 = vadd.f32 %v7303, %v7383
  %7385 = vmatprep.mubr.bf16.mxu0 %v6089
  %7386 = vmatmul.mubr.bf16.gmra.mrb[0].mxu0 %v6088
  %v7387 = vpop.f32.mrb[0].mxu0
  %v7388 = vadd.f32 %v7307, %v7387
  %v7389 = vpop.f32.mrb[0].mxu0
  %v7390 = vadd.f32 %v7309, %v7389
  %v7391 = vpop.f32.mrb[0].mxu0
  %v7392 = vpop.f32.mrb[0].mxu0
  %7393 = vdwg.mxu0
  %7394 = vmatprep.subr.bf16.mxu0 %v6691
  %7395 = vmatpush1.bf16.msra.mxu0 %v6690
  %7396 = vmatprep.subr.bf16.mxu0 %v6697
  %7397 = vmatpush1.bf16.msra.mxu0 %v6696
  %7398 = vmatprep.subr.bf16.mxu0 %v6703
  %7399 = vmatpush1.bf16.msra.mxu0 %v6702
  %7400 = vmatprep.subr.bf16.mxu0 %v6709
  %7401 = vmatpush1.bf16.msra.mxu0 %v6708
  %7402 = vmatprep.subr.bf16.mxu0 %v6715
  %7403 = vmatpush1.bf16.msra.mxu0 %v6714
  %7404 = vmatprep.subr.bf16.mxu0 %v6721
  %7405 = vmatpush1.bf16.msra.mxu0 %v6720
  %7406 = vmatprep.subr.bf16.mxu0 %v6727
  %7407 = vmatpush1.bf16.msra.mxu0 %v6726
  %7408 = vmatprep.subr.bf16.mxu0 %v6733
  %7409 = vmatpush1.bf16.msra.mxu0 %v6732
  %7410 = vmatprep.subr.bf16.mxu0 %v6739
  %7411 = vmatpush1.bf16.msra.mxu0 %v6738
  %7412 = vmatprep.subr.bf16.mxu0 %v6745
  %7413 = vmatpush1.bf16.msra.mxu0 %v6744
  %7414 = vmatprep.subr.bf16.mxu0 %v6751
  %7415 = vmatpush1.bf16.msra.mxu0 %v6750
  %7416 = vmatprep.subr.bf16.mxu0 %v6757
  %7417 = vmatpush1.bf16.msra.mxu0 %v6756
  %7418 = vmatprep.subr.bf16.mxu0 %v6763
  %7419 = vmatpush1.bf16.msra.mxu0 %v6762
  %7420 = vmatprep.subr.bf16.mxu0 %v6769
  %7421 = vmatpush1.bf16.msra.mxu0 %v6768
  %7422 = vmatprep.subr.bf16.mxu0 %v6775
  %7423 = vmatpush1.bf16.msra.mxu0 %v6774
  %7424 = vmatprep.subr.bf16.mxu0 %v6781
  %7425 = vmatpush1.bf16.msra.mxu0 %v6780
  %7426 = vmatprep.mubr.bf16.mxu0 %v6071
  %7427 = vmatmul.mubr.bf16.gmra.mrb[0].mxu0 %v6070
  %v7428 = vpop.f32.mrb[0].mxu0
  %v7429 = vadd.f32 0.0, %v7428
  %v7430 = vpop.f32.mrb[0].mxu0
  %v7431 = vadd.f32 0.0, %v7430
  %v7432 = vpop.f32.mrb[0].mxu0
  %v7433 = vadd.f32 0.0, %v7432
  %v7434 = vpop.f32.mrb[0].mxu0
  %v7435 = vadd.f32 0.0, %v7434
  %7436 = vmatprep.mubr.bf16.mxu0 %v6075
  %7437 = vmatmul.mubr.bf16.gmra.mrb[0].mxu0 %v6074
  %v7438 = vpop.f32.mrb[0].mxu0
  %v7439 = vadd.f32 0.0, %v7438
  %v7440 = vpop.f32.mrb[0].mxu0
  %v7441 = vadd.f32 0.0, %v7440
  %v7442 = vpop.f32.mrb[0].mxu0
  %v7443 = vadd.f32 0.0, %v7442
  %v7444 = vpop.f32.mrb[0].mxu0
  %v7445 = vadd.f32 0.0, %v7444
  %7446 = vmatprep.mubr.bf16.mxu0 %v6079
  %7447 = vmatmul.mubr.bf16.gmra.mrb[0].mxu0 %v6078
  %v7448 = vpop.f32.mrb[0].mxu0
  %v7449 = vadd.f32 0.0, %v7448
  %v7450 = vpop.f32.mrb[0].mxu0
  %v7451 = vadd.f32 0.0, %v7450
  %v7452 = vpop.f32.mrb[0].mxu0
  %v7453 = vadd.f32 0.0, %v7452
  %v7454 = vpop.f32.mrb[0].mxu0
  %v7455 = vadd.f32 0.0, %v7454
  %7456 = vmatprep.mubr.bf16.mxu0 %v6083
  %7457 = vmatmul.mubr.bf16.gmra.mrb[0].mxu0 %v6082
  %v7458 = vpop.f32.mrb[0].mxu0
  %v7459 = vadd.f32 0.0, %v7458
  %v7460 = vpop.f32.mrb[0].mxu0
  %v7461 = vadd.f32 0.0, %v7460
  %v7462 = vpop.f32.mrb[0].mxu0
  %v7463 = vadd.f32 0.0, %v7462
  %v7464 = vpop.f32.mrb[0].mxu0
  %v7465 = vadd.f32 0.0, %v7464
  %7466 = vmatprep.mubr.bf16.mxu0 %v6087
  %7467 = vmatmul.mubr.bf16.gmra.mrb[0].mxu0 %v6086
  %v7468 = vpop.f32.mrb[0].mxu0
  %v7469 = vadd.f32 0.0, %v7468
  %v7470 = vpop.f32.mrb[0].mxu0
  %v7471 = vadd.f32 0.0, %v7470
  %v7472 = vpop.f32.mrb[0].mxu0
  %v7473 = vpop.f32.mrb[0].mxu0
  %7474 = vdwg.mxu0
  %7475 = vmatprep.subr.bf16.mxu0 %v6787
  %7476 = vmatpush1.bf16.msra.mxu0 %v6786
  %7477 = vmatprep.subr.bf16.mxu0 %v6793
  %7478 = vmatpush1.bf16.msra.mxu0 %v6792
  %7479 = vmatprep.subr.bf16.mxu0 %v6799
  %7480 = vmatpush1.bf16.msra.mxu0 %v6798
  %7481 = vmatprep.subr.bf16.mxu0 %v6805
  %7482 = vmatpush1.bf16.msra.mxu0 %v6804
  %7483 = vmatprep.subr.bf16.mxu0 %v6811
  %7484 = vmatpush1.bf16.msra.mxu0 %v6810
  %7485 = vmatprep.subr.bf16.mxu0 %v6817
  %7486 = vmatpush1.bf16.msra.mxu0 %v6816
  %7487 = vmatprep.subr.bf16.mxu0 %v6823
  %7488 = vmatpush1.bf16.msra.mxu0 %v6822
  %7489 = vmatprep.subr.bf16.mxu0 %v6829
  %7490 = vmatpush1.bf16.msra.mxu0 %v6828
  %7491 = vmatprep.subr.bf16.mxu0 %v6835
  %7492 = vmatpush1.bf16.msra.mxu0 %v6834
  %7493 = vmatprep.subr.bf16.mxu0 %v6841
  %7494 = vmatpush1.bf16.msra.mxu0 %v6840
  %7495 = vmatprep.subr.bf16.mxu0 %v6847
  %7496 = vmatpush1.bf16.msra.mxu0 %v6846
  %7497 = vmatprep.subr.bf16.mxu0 %v6853
  %7498 = vmatpush1.bf16.msra.mxu0 %v6852
  %7499 = vmatprep.subr.bf16.mxu0 %v6859
  %7500 = vmatpush1.bf16.msra.mxu0 %v6858
  %7501 = vmatprep.subr.bf16.mxu0 %v6865
  %7502 = vmatpush1.bf16.msra.mxu0 %v6864
  %7503 = vmatprep.subr.bf16.mxu0 %v6871
  %7504 = vmatpush1.bf16.msra.mxu0 %v6870
  %7505 = vmatprep.subr.bf16.mxu0 %v6877
  %7506 = vmatpush1.bf16.msra.mxu0 %v6876
  %7507 = vmatprep.mubr.bf16.mxu0 %v6073
  %7508 = vmatmul.mubr.bf16.gmra.mrb[0].mxu0 %v6072
  %v7509 = vpop.f32.mrb[0].mxu0
  %v7510 = vadd.f32 %v7429, %v7509
  %v7511 = vpop.f32.mrb[0].mxu0
  %v7512 = vadd.f32 %v7431, %v7511
  %v7513 = vpop.f32.mrb[0].mxu0
  %v7514 = vadd.f32 %v7433, %v7513
  %v7515 = vpop.f32.mrb[0].mxu0
  %v7516 = vadd.f32 %v7435, %v7515
  %7517 = vmatprep.mubr.bf16.mxu0 %v6077
  %7518 = vmatmul.mubr.bf16.gmra.mrb[0].mxu0 %v6076
  %v7519 = vpop.f32.mrb[0].mxu0
  %v7520 = vadd.f32 %v7439, %v7519
  %v7521 = vpop.f32.mrb[0].mxu0
  %v7522 = vadd.f32 %v7441, %v7521
  %v7523 = vpop.f32.mrb[0].mxu0
  %v7524 = vadd.f32 %v7443, %v7523
  %v7525 = vpop.f32.mrb[0].mxu0
  %v7526 = vadd.f32 %v7445, %v7525
  %7527 = vmatprep.mubr.bf16.mxu0 %v6081
  %7528 = vmatmul.mubr.bf16.gmra.mrb[0].mxu0 %v6080
  %v7529 = vpop.f32.mrb[0].mxu0
  %v7530 = vadd.f32 %v7449, %v7529
  %v7531 = vpop.f32.mrb[0].mxu0
  %v7532 = vadd.f32 %v7451, %v7531
  %v7533 = vpop.f32.mrb[0].mxu0
  %v7534 = vadd.f32 %v7453, %v7533
  %v7535 = vpop.f32.mrb[0].mxu0
  %v7536 = vadd.f32 %v7455, %v7535
  %7537 = vmatprep.mubr.bf16.mxu0 %v6085
  %7538 = vmatmul.mubr.bf16.gmra.mrb[0].mxu0 %v6084
  %v7539 = vpop.f32.mrb[0].mxu0
  %v7540 = vadd.f32 %v7459, %v7539
  %v7541 = vpop.f32.mrb[0].mxu0
  %v7542 = vadd.f32 %v7461, %v7541
  %v7543 = vpop.f32.mrb[0].mxu0
  %v7544 = vadd.f32 %v7463, %v7543
  %v7545 = vpop.f32.mrb[0].mxu0
  %v7546 = vadd.f32 %v7465, %v7545
  %7547 = vmatprep.mubr.bf16.mxu0 %v6089
  %7548 = vmatmul.mubr.bf16.gmra.mrb[0].mxu0 %v6088
  %v7549 = vpop.f32.mrb[0].mxu0
  %v7550 = vadd.f32 %v7469, %v7549
  %v7551 = vpop.f32.mrb[0].mxu0
  %v7552 = vadd.f32 %v7471, %v7551
  %v7553 = vpop.f32.mrb[0].mxu0
  %v7554 = vpop.f32.mrb[0].mxu0
  %7555 = vdwg.mxu0
  %v7556 = vadd.f32 %v5435, %v7186
  %v7557 = vadd.f32 %v5437, %v7188
  %v7558 = vadd.f32 %v5597, %v7348
  %v7559 = vadd.f32 %v5599, %v7350
  %v7560 = vadd.f32 %v5759, %v7510
  %v7561 = vadd.f32 %v5761, %v7512
  %v7562 = vadd.f32 %v5439, %v7190
  %v7563 = vadd.f32 %v5441, %v7192
  %v7564 = vadd.f32 %v5601, %v7352
  %v7565 = vadd.f32 %v5603, %v7354
  %v7566 = vadd.f32 %v5763, %v7514
  %v7567 = vadd.f32 %v5765, %v7516
  %v7568 = vadd.f32 %v5445, %v7196
  %v7569 = vadd.f32 %v5447, %v7198
  %v7570 = vadd.f32 %v5607, %v7358
  %v7571 = vadd.f32 %v5609, %v7360
  %v7572 = vadd.f32 %v5769, %v7520
  %v7573 = vadd.f32 %v5771, %v7522
  %v7574 = vadd.f32 %v5449, %v7200
  %v7575 = vadd.f32 %v5451, %v7202
  %v7576 = vadd.f32 %v5611, %v7362
  %v7577 = vadd.f32 %v5613, %v7364
  %v7578 = vadd.f32 %v5773, %v7524
  %v7579 = vadd.f32 %v5775, %v7526
  %v7580 = vadd.f32 %v5455, %v7206
  %v7581 = vadd.f32 %v5457, %v7208
  %v7582 = vadd.f32 %v5617, %v7368
  %v7583 = vadd.f32 %v5619, %v7370
  %v7584 = vadd.f32 %v5779, %v7530
  %v7585 = vadd.f32 %v5781, %v7532
  %v7586 = vadd.f32 %v5459, %v7210
  %v7587 = vadd.f32 %v5461, %v7212
  %v7588 = vadd.f32 %v5621, %v7372
  %v7589 = vadd.f32 %v5623, %v7374
  %v7590 = vadd.f32 %v5783, %v7534
  %v7591 = vadd.f32 %v5785, %v7536
  %v7592 = vadd.f32 %v5465, %v7216
  %v7593 = vadd.f32 %v5467, %v7218
  %v7594 = vadd.f32 %v5627, %v7378
  %v7595 = vadd.f32 %v5629, %v7380
  %v7596 = vadd.f32 %v5789, %v7540
  %v7597 = vadd.f32 %v5791, %v7542
  %v7598 = vadd.f32 %v5469, %v7220
  %v7599 = vadd.f32 %v5471, %v7222
  %v7600 = vadd.f32 %v5631, %v7382
  %v7601 = vadd.f32 %v5633, %v7384
  %v7602 = vadd.f32 %v5793, %v7544
  %v7603 = vadd.f32 %v5795, %v7546
  %v7604 = vadd.f32 %v5475, %v7226
  %v7605 = vadd.f32 %v5477, %v7228
  %v7606 = vadd.f32 %v5637, %v7388
  %v7607 = vadd.f32 %v5639, %v7390
  %v7608 = vadd.f32 %v5799, %v7550
  %v7609 = vadd.f32 %v5801, %v7552
  %v7610 = vld [vmem:[#allocation2 + $0x30] sm:$0xff]
  %v7611 = vld [vmem:[#allocation2 + $0x38] sm:$0xff]
  %v7612 = vld [vmem:[#allocation2 + $0x40] sm:$0xff]
  %v7613 = vld [vmem:[#allocation2 + $0x48] sm:$0xff]
  %v7614 = vld [vmem:[#allocation2 + $0x50] sm:$0xff]
  %v7615 = vld [vmem:[#allocation2 + $0x58] sm:$0xff]
  %v7616 = vld [vmem:[#allocation2 + $0x60] sm:$0xff]
  %v7617 = vld [vmem:[#allocation2 + $0x68] sm:$0xff]
  %v7618 = vld [vmem:[#allocation2 + $0x70] sm:$0xff]
  %v7619 = vld [vmem:[#allocation2 + $0x78] sm:$0xff]
  %v7620 = vld [vmem:[#allocation2 + $0x80] sm:$0xff]
  %v7621 = vld [vmem:[#allocation2 + $0x88] sm:$0xff]
  %v7622 = vld [vmem:[#allocation2 + $0x90] sm:$0xff]
  %v7623 = vld [vmem:[#allocation2 + $0x98] sm:$0xff]
  %v7624 = vld [vmem:[#allocation2 + $0xa0] sm:$0xff]
  %v7625 = vld [vmem:[#allocation2 + $0xa8] sm:$0xff]
  %v7626 = vld [vmem:[#allocation2 + $0xb0] sm:$0xff]
  %v7627 = vld [vmem:[#allocation2 + $0xb8] sm:$0xff]
  %s7628 = scalar_lea.vmem %s3, 4608
  %v7629 = vld [vmem:[%s7628] sm:$0xff]
  %v7630 = vld [vmem:[%s7628 + $0x8] sm:$0xff]
  %v7631 = vld [vmem:[%s7628 + $0x10] sm:$0xff]
  %v7632 = vld [vmem:[%s7628 + $0x18] sm:$0xff]
  %v7633 = vld [vmem:[%s7628 + $0x20] sm:$0xff]
  %v7634 = vld [vmem:[%s7628 + $0x28] sm:$0xff]
  %v7635 = vld [vmem:[%s7628 + $0x30] sm:$0xff]
  %v7636 = vld [vmem:[%s7628 + $0x38] sm:$0xff]
  %v7637 = vld [vmem:[%s7628 + $0x40] sm:$0xff]
  %v7638 = vld [vmem:[%s7628 + $0x48] sm:$0xff]
  %v7639 = vld [vmem:[%s7628 + $0x50] sm:$0xff]
  %v7640 = vld [vmem:[%s7628 + $0x58] sm:$0xff]
  %v7641 = vld [vmem:[%s7628 + $0x60] sm:$0xff]
  %v7642 = vld [vmem:[%s7628 + $0x68] sm:$0xff]
  %v7643 = vld [vmem:[%s7628 + $0x70] sm:$0xff]
  %v7644 = vld [vmem:[%s7628 + $0x78] sm:$0xff]
  %v7645 = vld [vmem:[%s7628 + $0x80] sm:$0xff]
  %v7646 = vld [vmem:[%s7628 + $0x88] sm:$0xff]
  %v7647 = vld [vmem:[%s7628 + $0x90] sm:$0xff]
  %v7648 = vld [vmem:[%s7628 + $0x98] sm:$0xff]
  %v7649 = vld [vmem:[%s7628 + $0xa0] sm:$0xff]
  %v7650 = vld [vmem:[%s7628 + $0xa8] sm:$0xff]
  %v7651 = vld [vmem:[%s7628 + $0xb0] sm:$0xff]
  %v7652 = vld [vmem:[%s7628 + $0xb8] sm:$0xff]
  %v7653 = vld [vmem:[%s7628 + $0xc0] sm:$0xff]
  %v7654 = vld [vmem:[%s7628 + $0xc8] sm:$0xff]
  %v7655 = vld [vmem:[%s7628 + $0xd0] sm:$0xff]
  %v7656 = vld [vmem:[%s7628 + $0xd8] sm:$0xff]
  %v7657 = vld [vmem:[%s7628 + $0xe0] sm:$0xff]
  %v7658 = vld [vmem:[%s7628 + $0xe8] sm:$0xff]
  %v7659 = vld [vmem:[%s7628 + $0xf0] sm:$0xff]
  %v7660 = vld [vmem:[%s7628 + $0xf8] sm:$0xff]
  %v7661 = vld [vmem:[%s7628 + $0x100] sm:$0xff]
  %v7662 = vld [vmem:[%s7628 + $0x108] sm:$0xff]
  %v7663 = vld [vmem:[%s7628 + $0x110] sm:$0xff]
  %v7664 = vld [vmem:[%s7628 + $0x118] sm:$0xff]
  %v7665 = vld [vmem:[%s7628 + $0x120] sm:$0xff]
  %v7666 = vld [vmem:[%s7628 + $0x128] sm:$0xff]
  %v7667 = vld [vmem:[%s7628 + $0x130] sm:$0xff]
  %v7668 = vld [vmem:[%s7628 + $0x138] sm:$0xff]
  %v7669 = vld [vmem:[%s7628 + $0x140] sm:$0xff]
  %v7670 = vld [vmem:[%s7628 + $0x148] sm:$0xff]
  %v7671 = vld [vmem:[%s7628 + $0x150] sm:$0xff]
  %v7672 = vld [vmem:[%s7628 + $0x158] sm:$0xff]
  %v7673 = vld [vmem:[%s7628 + $0x160] sm:$0xff]
  %v7674 = vld [vmem:[%s7628 + $0x168] sm:$0xff]
  %v7675 = vld [vmem:[%s7628 + $0x170] sm:$0xff]
  %v7676 = vld [vmem:[%s7628 + $0x178] sm:$0xff]
  %v7677 = vld [vmem:[%s7628 + $0x180] sm:$0xff]
  %v7678 = vld [vmem:[%s7628 + $0x188] sm:$0xff]
  %v7679 = vld [vmem:[%s7628 + $0x190] sm:$0xff]
  %v7680 = vld [vmem:[%s7628 + $0x198] sm:$0xff]
  %v7681 = vld [vmem:[%s7628 + $0x1a0] sm:$0xff]
  %v7682 = vld [vmem:[%s7628 + $0x1a8] sm:$0xff]
  %v7683 = vld [vmem:[%s7628 + $0x1b0] sm:$0xff]
  %v7684 = vld [vmem:[%s7628 + $0x1b8] sm:$0xff]
  %v7685 = vld [vmem:[%s7628 + $0x1c0] sm:$0xff]
  %v7686 = vld [vmem:[%s7628 + $0x1c8] sm:$0xff]
  %v7687 = vld [vmem:[%s7628 + $0x1d0] sm:$0xff]
  %v7688 = vld [vmem:[%s7628 + $0x1d8] sm:$0xff]
  %v7689 = vld [vmem:[%s7628 + $0x1e0] sm:$0xff]
  %v7690 = vld [vmem:[%s7628 + $0x1e8] sm:$0xff]
  %v7691 = vld [vmem:[%s7628 + $0x1f0] sm:$0xff]
  %v7692 = vld [vmem:[%s7628 + $0x1f8] sm:$0xff]
  %v7693 = vld [vmem:[%s7628 + $0x200] sm:$0xff]
  %v7694 = vld [vmem:[%s7628 + $0x208] sm:$0xff]
  %v7695 = vld [vmem:[%s7628 + $0x210] sm:$0xff]
  %v7696 = vld [vmem:[%s7628 + $0x218] sm:$0xff]
  %v7697 = vld [vmem:[%s7628 + $0x220] sm:$0xff]
  %v7698 = vld [vmem:[%s7628 + $0x228] sm:$0xff]
  %v7699 = vld [vmem:[%s7628 + $0x230] sm:$0xff]
  %v7700 = vld [vmem:[%s7628 + $0x238] sm:$0xff]
  %v7701 = vld [vmem:[%s7628 + $0x240] sm:$0xff]
  %v7702 = vld [vmem:[%s7628 + $0x248] sm:$0xff]
  %v7703 = vld [vmem:[%s7628 + $0x250] sm:$0xff]
  %v7704 = vld [vmem:[%s7628 + $0x258] sm:$0xff]
  %v7705 = vld [vmem:[%s7628 + $0x260] sm:$0xff]
  %v7706 = vld [vmem:[%s7628 + $0x268] sm:$0xff]
  %v7707 = vld [vmem:[%s7628 + $0x270] sm:$0xff]
  %v7708 = vld [vmem:[%s7628 + $0x278] sm:$0xff]
  %v7709 = vld [vmem:[%s7628 + $0x280] sm:$0xff]
  %v7710 = vld [vmem:[%s7628 + $0x288] sm:$0xff]
  %v7711 = vld [vmem:[%s7628 + $0x290] sm:$0xff]
  %v7712 = vld [vmem:[%s7628 + $0x298] sm:$0xff]
  %v7713 = vld [vmem:[%s7628 + $0x2a0] sm:$0xff]
  %v7714 = vld [vmem:[%s7628 + $0x2a8] sm:$0xff]
  %v7715 = vld [vmem:[%s7628 + $0x2b0] sm:$0xff]
  %v7716 = vld [vmem:[%s7628 + $0x2b8] sm:$0xff]
  %v7717 = vld [vmem:[%s7628 + $0x2c0] sm:$0xff]
  %v7718 = vld [vmem:[%s7628 + $0x2c8] sm:$0xff]
  %v7719 = vld [vmem:[%s7628 + $0x2d0] sm:$0xff]
  %v7720 = vld [vmem:[%s7628 + $0x2d8] sm:$0xff]
  %v7721 = vld [vmem:[%s7628 + $0x2e0] sm:$0xff]
  %v7722 = vld [vmem:[%s7628 + $0x2e8] sm:$0xff]
  %v7723 = vld [vmem:[%s7628 + $0x2f0] sm:$0xff]
  %v7724 = vld [vmem:[%s7628 + $0x2f8] sm:$0xff]
  %v7725 = vld [vmem:[%s7628 + $0x300] sm:$0xff]
  %v7726 = vld [vmem:[%s7628 + $0x308] sm:$0xff]
  %v7727 = vld [vmem:[%s7628 + $0x310] sm:$0xff]
  %v7728 = vld [vmem:[%s7628 + $0x318] sm:$0xff]
  %v7729 = vld [vmem:[%s7628 + $0x320] sm:$0xff]
  %v7730 = vld [vmem:[%s7628 + $0x328] sm:$0xff]
  %v7731 = vld [vmem:[%s7628 + $0x330] sm:$0xff]
  %v7732 = vld [vmem:[%s7628 + $0x338] sm:$0xff]
  %v7733 = vld [vmem:[%s7628 + $0x340] sm:$0xff]
  %v7734 = vld [vmem:[%s7628 + $0x348] sm:$0xff]
  %v7735 = vld [vmem:[%s7628 + $0x350] sm:$0xff]
  %v7736 = vld [vmem:[%s7628 + $0x358] sm:$0xff]
  %v7737 = vld [vmem:[%s7628 + $0x360] sm:$0xff]
  %v7738 = vld [vmem:[%s7628 + $0x368] sm:$0xff]
  %v7739 = vld [vmem:[%s7628 + $0x370] sm:$0xff]
  %v7740 = vld [vmem:[%s7628 + $0x378] sm:$0xff]
  %v7741 = vld [vmem:[%s7628 + $0x380] sm:$0xff]
  %v7742 = vld [vmem:[%s7628 + $0x388] sm:$0xff]
  %v7743 = vld [vmem:[%s7628 + $0x390] sm:$0xff]
  %v7744 = vld [vmem:[%s7628 + $0x398] sm:$0xff]
  %v7745 = vld [vmem:[%s7628 + $0x3a0] sm:$0xff]
  %v7746 = vld [vmem:[%s7628 + $0x3a8] sm:$0xff]
  %v7747 = vld [vmem:[%s7628 + $0x3b0] sm:$0xff]
  %v7748 = vld [vmem:[%s7628 + $0x3b8] sm:$0xff]
  %v7749 = vld [vmem:[%s7628 + $0x3c0] sm:$0xff]
  %v7750 = vld [vmem:[%s7628 + $0x3c8] sm:$0xff]
  %v7751 = vld [vmem:[%s7628 + $0x3d0] sm:$0xff]
  %v7752 = vld [vmem:[%s7628 + $0x3d8] sm:$0xff]
  %v7753 = vld [vmem:[%s7628 + $0x3e0] sm:$0xff]
  %v7754 = vld [vmem:[%s7628 + $0x3e8] sm:$0xff]
  %v7755 = vld [vmem:[%s7628 + $0x3f0] sm:$0xff]
  %v7756 = vld [vmem:[%s7628 + $0x3f8] sm:$0xff]
  %v7757 = vld [vmem:[%s7628 + $0x400] sm:$0xff]
  %v7758 = vld [vmem:[%s7628 + $0x408] sm:$0xff]
  %v7759 = vld [vmem:[%s7628 + $0x410] sm:$0xff]
  %v7760 = vld [vmem:[%s7628 + $0x418] sm:$0xff]
  %v7761 = vld [vmem:[%s7628 + $0x420] sm:$0xff]
  %v7762 = vld [vmem:[%s7628 + $0x428] sm:$0xff]
  %v7763 = vld [vmem:[%s7628 + $0x430] sm:$0xff]
  %v7764 = vld [vmem:[%s7628 + $0x438] sm:$0xff]
  %v7765 = vld [vmem:[%s7628 + $0x440] sm:$0xff]
  %v7766 = vld [vmem:[%s7628 + $0x448] sm:$0xff]
  %v7767 = vld [vmem:[%s7628 + $0x450] sm:$0xff]
  %v7768 = vld [vmem:[%s7628 + $0x458] sm:$0xff]
  %v7769 = vld [vmem:[%s7628 + $0x460] sm:$0xff]
  %v7770 = vld [vmem:[%s7628 + $0x468] sm:$0xff]
  %v7771 = vld [vmem:[%s7628 + $0x470] sm:$0xff]
  %v7772 = vld [vmem:[%s7628 + $0x478] sm:$0xff]
  %v7773 = vld [vmem:[%s7628 + $0x480] sm:$0xff]
  %v7774 = vld [vmem:[%s7628 + $0x488] sm:$0xff]
  %v7775 = vld [vmem:[%s7628 + $0x490] sm:$0xff]
  %v7776 = vld [vmem:[%s7628 + $0x498] sm:$0xff]
  %v7777 = vld [vmem:[%s7628 + $0x4a0] sm:$0xff]
  %v7778 = vld [vmem:[%s7628 + $0x4a8] sm:$0xff]
  %v7779 = vld [vmem:[%s7628 + $0x4b0] sm:$0xff]
  %v7780 = vld [vmem:[%s7628 + $0x4b8] sm:$0xff]
  %v7781 = vld [vmem:[%s7628 + $0x4c0] sm:$0xff]
  %v7782 = vld [vmem:[%s7628 + $0x4c8] sm:$0xff]
  %v7783 = vld [vmem:[%s7628 + $0x4d0] sm:$0xff]
  %v7784 = vld [vmem:[%s7628 + $0x4d8] sm:$0xff]
  %v7785 = vld [vmem:[%s7628 + $0x4e0] sm:$0xff]
  %v7786 = vld [vmem:[%s7628 + $0x4e8] sm:$0xff]
  %v7787 = vld [vmem:[%s7628 + $0x4f0] sm:$0xff]
  %v7788 = vld [vmem:[%s7628 + $0x4f8] sm:$0xff]
  %v7789 = vld [vmem:[%s7628 + $0x500] sm:$0xff]
  %v7790 = vld [vmem:[%s7628 + $0x508] sm:$0xff]
  %v7791 = vld [vmem:[%s7628 + $0x510] sm:$0xff]
  %v7792 = vld [vmem:[%s7628 + $0x518] sm:$0xff]
  %v7793 = vld [vmem:[%s7628 + $0x520] sm:$0xff]
  %v7794 = vld [vmem:[%s7628 + $0x528] sm:$0xff]
  %v7795 = vld [vmem:[%s7628 + $0x530] sm:$0xff]
  %v7796 = vld [vmem:[%s7628 + $0x538] sm:$0xff]
  %v7797 = vld [vmem:[%s7628 + $0x540] sm:$0xff]
  %v7798 = vld [vmem:[%s7628 + $0x548] sm:$0xff]
  %v7799 = vld [vmem:[%s7628 + $0x550] sm:$0xff]
  %v7800 = vld [vmem:[%s7628 + $0x558] sm:$0xff]
  %v7801 = vld [vmem:[%s7628 + $0x560] sm:$0xff]
  %v7802 = vld [vmem:[%s7628 + $0x568] sm:$0xff]
  %v7803 = vld [vmem:[%s7628 + $0x570] sm:$0xff]
  %v7804 = vld [vmem:[%s7628 + $0x578] sm:$0xff]
  %v7805 = vld [vmem:[%s7628 + $0x580] sm:$0xff]
  %v7806 = vld [vmem:[%s7628 + $0x588] sm:$0xff]
  %v7807 = vld [vmem:[%s7628 + $0x590] sm:$0xff]
  %v7808 = vld [vmem:[%s7628 + $0x598] sm:$0xff]
  %v7809 = vld [vmem:[%s7628 + $0x5a0] sm:$0xff]
  %v7810 = vld [vmem:[%s7628 + $0x5a8] sm:$0xff]
  %v7811 = vld [vmem:[%s7628 + $0x5b0] sm:$0xff]
  %v7812 = vld [vmem:[%s7628 + $0x5b8] sm:$0xff]
  %v7813 = vld [vmem:[%s7628 + $0x5c0] sm:$0xff]
  %v7814 = vld [vmem:[%s7628 + $0x5c8] sm:$0xff]
  %v7815 = vld [vmem:[%s7628 + $0x5d0] sm:$0xff]
  %v7816 = vld [vmem:[%s7628 + $0x5d8] sm:$0xff]
  %v7817 = vld [vmem:[%s7628 + $0x5e0] sm:$0xff]
  %v7818 = vld [vmem:[%s7628 + $0x5e8] sm:$0xff]
  %v7819 = vld [vmem:[%s7628 + $0x5f0] sm:$0xff]
  %v7820 = vld [vmem:[%s7628 + $0x5f8] sm:$0xff]
  %v7839 = vunpack.c.l.b16 %v7610
  %v7840 = vunpack.c.h.b16 %v7610
  %v7841 = vunpack.c.l.b16 %v7611
  %v7842 = vunpack.c.h.b16 %v7611
  %v7843 = vunpack.c.l.b16 %v7612
  %v7844 = vunpack.c.h.b16 %v7612
  %v7845 = vunpack.c.l.b16 %v7613
  %v7846 = vunpack.c.h.b16 %v7613
  %v7847 = vunpack.c.l.b16 %v7614
  %v7848 = vunpack.c.h.b16 %v7614
  %v7849 = vunpack.c.l.b16 %v7615
  %v7850 = vunpack.c.h.b16 %v7615
  %v7851 = vunpack.c.l.b16 %v7616
  %v7852 = vunpack.c.h.b16 %v7616
  %v7853 = vunpack.c.l.b16 %v7617
  %v7854 = vunpack.c.h.b16 %v7617
  %v7855 = vunpack.c.l.b16 %v7618
  %v7856 = vunpack.c.h.b16 %v7618
  %v7857 = vunpack.c.l.b16 %v7619
  %v7858 = vunpack.c.h.b16 %v7619
  %v7859 = vunpack.c.l.b16 %v7620
  %v7860 = vunpack.c.h.b16 %v7620
  %v7861 = vunpack.c.l.b16 %v7621
  %v7862 = vunpack.c.h.b16 %v7621
  %v7863 = vunpack.c.l.b16 %v7622
  %v7864 = vunpack.c.h.b16 %v7622
  %v7865 = vunpack.c.l.b16 %v7623
  %v7866 = vunpack.c.h.b16 %v7623
  %v7867 = vunpack.c.l.b16 %v7624
  %v7868 = vunpack.c.h.b16 %v7624
  %v7869 = vunpack.c.l.b16 %v7625
  %v7870 = vunpack.c.h.b16 %v7625
  %v7871 = vunpack.c.l.b16 %v7626
  %v7872 = vunpack.c.h.b16 %v7626
  %v7873 = vunpack.c.l.b16 %v7627
  %v7874 = vunpack.c.h.b16 %v7627
  %v7875 = vpack.c.b16 %v7843, %v7839
  %v7876 = vpack.c.b16 %v7844, %v7840
  %v7877 = vpack.c.b16 %v7845, %v7841
  %v7878 = vpack.c.b16 %v7846, %v7842
  %v7879 = vpack.c.b16 %v7851, %v7847
  %v7880 = vpack.c.b16 %v7852, %v7848
  %v7881 = vpack.c.b16 %v7853, %v7849
  %v7882 = vpack.c.b16 %v7854, %v7850
  %v7883 = vpack.c.b16 %v7859, %v7855
  %v7884 = vpack.c.b16 %v7860, %v7856
  %v7885 = vpack.c.b16 %v7861, %v7857
  %v7886 = vpack.c.b16 %v7862, %v7858
  %v7887 = vpack.c.b16 %v7867, %v7863
  %v7888 = vpack.c.b16 %v7868, %v7864
  %v7889 = vpack.c.b16 %v7869, %v7865
  %v7890 = vpack.c.b16 %v7870, %v7866
  %v7891 = vpack.c.b16 %v7871, %v7871
  %v7892 = vpack.c.b16 %v7872, %v7872
  %v7893 = vpack.c.b16 %v7873, %v7873
  %v7894 = vpack.c.b16 %v7874, %v7874
  %v8107 = vunpack.c.l.b16 %v7629
  %v8108 = vunpack.c.h.b16 %v7629
  %v8109 = vunpack.c.l.b16 %v7630
  %v8110 = vunpack.c.h.b16 %v7630
  %v8111 = vunpack.c.l.b16 %v7631
  %v8112 = vunpack.c.h.b16 %v7631
  %v8113 = vunpack.c.l.b16 %v7632
  %v8114 = vunpack.c.h.b16 %v7632
  %v8115 = vunpack.c.l.b16 %v7633
  %v8116 = vunpack.c.h.b16 %v7633
  %v8117 = vunpack.c.l.b16 %v7634
  %v8118 = vunpack.c.h.b16 %v7634
  %v8119 = vunpack.c.l.b16 %v7635
  %v8120 = vunpack.c.h.b16 %v7635
  %v8121 = vunpack.c.l.b16 %v7636
  %v8122 = vunpack.c.h.b16 %v7636
  %v8123 = vunpack.c.l.b16 %v7637
  %v8124 = vunpack.c.h.b16 %v7637
  %v8125 = vunpack.c.l.b16 %v7638
  %v8126 = vunpack.c.h.b16 %v7638
  %v8127 = vunpack.c.l.b16 %v7639
  %v8128 = vunpack.c.h.b16 %v7639
  %v8129 = vunpack.c.l.b16 %v7640
  %v8130 = vunpack.c.h.b16 %v7640
  %v8131 = vunpack.c.l.b16 %v7641
  %v8132 = vunpack.c.h.b16 %v7641
  %v8133 = vunpack.c.l.b16 %v7642
  %v8134 = vunpack.c.h.b16 %v7642
  %v8135 = vunpack.c.l.b16 %v7643
  %v8136 = vunpack.c.h.b16 %v7643
  %v8137 = vunpack.c.l.b16 %v7644
  %v8138 = vunpack.c.h.b16 %v7644
  %v8139 = vunpack.c.l.b16 %v7645
  %v8140 = vunpack.c.h.b16 %v7645
  %v8141 = vunpack.c.l.b16 %v7646
  %v8142 = vunpack.c.h.b16 %v7646
  %v8143 = vunpack.c.l.b16 %v7647
  %v8144 = vunpack.c.h.b16 %v7647
  %v8145 = vunpack.c.l.b16 %v7648
  %v8146 = vunpack.c.h.b16 %v7648
  %v8147 = vunpack.c.l.b16 %v7649
  %v8148 = vunpack.c.h.b16 %v7649
  %v8149 = vunpack.c.l.b16 %v7650
  %v8150 = vunpack.c.h.b16 %v7650
  %v8151 = vunpack.c.l.b16 %v7651
  %v8152 = vunpack.c.h.b16 %v7651
  %v8153 = vunpack.c.l.b16 %v7652
  %v8154 = vunpack.c.h.b16 %v7652
  %v8155 = vunpack.c.l.b16 %v7653
  %v8156 = vunpack.c.h.b16 %v7653
  %v8157 = vunpack.c.l.b16 %v7654
  %v8158 = vunpack.c.h.b16 %v7654
  %v8159 = vunpack.c.l.b16 %v7655
  %v8160 = vunpack.c.h.b16 %v7655
  %v8161 = vunpack.c.l.b16 %v7656
  %v8162 = vunpack.c.h.b16 %v7656
  %v8163 = vunpack.c.l.b16 %v7657
  %v8164 = vunpack.c.h.b16 %v7657
  %v8165 = vunpack.c.l.b16 %v7658
  %v8166 = vunpack.c.h.b16 %v7658
  %v8167 = vunpack.c.l.b16 %v7659
  %v8168 = vunpack.c.h.b16 %v7659
  %v8169 = vunpack.c.l.b16 %v7660
  %v8170 = vunpack.c.h.b16 %v7660
  %v8171 = vunpack.c.l.b16 %v7661
  %v8172 = vunpack.c.h.b16 %v7661
  %v8173 = vunpack.c.l.b16 %v7662
  %v8174 = vunpack.c.h.b16 %v7662
  %v8175 = vunpack.c.l.b16 %v7663
  %v8176 = vunpack.c.h.b16 %v7663
  %v8177 = vunpack.c.l.b16 %v7664
  %v8178 = vunpack.c.h.b16 %v7664
  %v8179 = vunpack.c.l.b16 %v7665
  %v8180 = vunpack.c.h.b16 %v7665
  %v8181 = vunpack.c.l.b16 %v7666
  %v8182 = vunpack.c.h.b16 %v7666
  %v8183 = vunpack.c.l.b16 %v7667
  %v8184 = vunpack.c.h.b16 %v7667
  %v8185 = vunpack.c.l.b16 %v7668
  %v8186 = vunpack.c.h.b16 %v7668
  %v8187 = vunpack.c.l.b16 %v7669
  %v8188 = vunpack.c.h.b16 %v7669
  %v8189 = vunpack.c.l.b16 %v7670
  %v8190 = vunpack.c.h.b16 %v7670
  %v8191 = vunpack.c.l.b16 %v7671
  %v8192 = vunpack.c.h.b16 %v7671
  %v8193 = vunpack.c.l.b16 %v7672
  %v8194 = vunpack.c.h.b16 %v7672
  %v8195 = vunpack.c.l.b16 %v7673
  %v8196 = vunpack.c.h.b16 %v7673
  %v8197 = vunpack.c.l.b16 %v7674
  %v8198 = vunpack.c.h.b16 %v7674
  %v8199 = vunpack.c.l.b16 %v7675
  %v8200 = vunpack.c.h.b16 %v7675
  %v8201 = vunpack.c.l.b16 %v7676
  %v8202 = vunpack.c.h.b16 %v7676
  %v8203 = vunpack.c.l.b16 %v7677
  %v8204 = vunpack.c.h.b16 %v7677
  %v8205 = vunpack.c.l.b16 %v7678
  %v8206 = vunpack.c.h.b16 %v7678
  %v8207 = vunpack.c.l.b16 %v7679
  %v8208 = vunpack.c.h.b16 %v7679
  %v8209 = vunpack.c.l.b16 %v7680
  %v8210 = vunpack.c.h.b16 %v7680
  %v8211 = vunpack.c.l.b16 %v7681
  %v8212 = vunpack.c.h.b16 %v7681
  %v8213 = vunpack.c.l.b16 %v7682
  %v8214 = vunpack.c.h.b16 %v7682
  %v8215 = vunpack.c.l.b16 %v7683
  %v8216 = vunpack.c.h.b16 %v7683
  %v8217 = vunpack.c.l.b16 %v7684
  %v8218 = vunpack.c.h.b16 %v7684
  %v8219 = vunpack.c.l.b16 %v7685
  %v8220 = vunpack.c.h.b16 %v7685
  %v8221 = vunpack.c.l.b16 %v7686
  %v8222 = vunpack.c.h.b16 %v7686
  %v8223 = vunpack.c.l.b16 %v7687
  %v8224 = vunpack.c.h.b16 %v7687
  %v8225 = vunpack.c.l.b16 %v7688
  %v8226 = vunpack.c.h.b16 %v7688
  %v8227 = vunpack.c.l.b16 %v7689
  %v8228 = vunpack.c.h.b16 %v7689
  %v8229 = vunpack.c.l.b16 %v7690
  %v8230 = vunpack.c.h.b16 %v7690
  %v8231 = vunpack.c.l.b16 %v7691
  %v8232 = vunpack.c.h.b16 %v7691
  %v8233 = vunpack.c.l.b16 %v7692
  %v8234 = vunpack.c.h.b16 %v7692
  %v8235 = vunpack.c.l.b16 %v7693
  %v8236 = vunpack.c.h.b16 %v7693
  %v8237 = vunpack.c.l.b16 %v7694
  %v8238 = vunpack.c.h.b16 %v7694
  %v8239 = vunpack.c.l.b16 %v7695
  %v8240 = vunpack.c.h.b16 %v7695
  %v8241 = vunpack.c.l.b16 %v7696
  %v8242 = vunpack.c.h.b16 %v7696
  %v8243 = vunpack.c.l.b16 %v7697
  %v8244 = vunpack.c.h.b16 %v7697
  %v8245 = vunpack.c.l.b16 %v7698
  %v8246 = vunpack.c.h.b16 %v7698
  %v8247 = vunpack.c.l.b16 %v7699
  %v8248 = vunpack.c.h.b16 %v7699
  %v8249 = vunpack.c.l.b16 %v7700
  %v8250 = vunpack.c.h.b16 %v7700
  %v8251 = vunpack.c.l.b16 %v7701
  %v8252 = vunpack.c.h.b16 %v7701
  %v8253 = vunpack.c.l.b16 %v7702
  %v8254 = vunpack.c.h.b16 %v7702
  %v8255 = vunpack.c.l.b16 %v7703
  %v8256 = vunpack.c.h.b16 %v7703
  %v8257 = vunpack.c.l.b16 %v7704
  %v8258 = vunpack.c.h.b16 %v7704
  %v8259 = vunpack.c.l.b16 %v7705
  %v8260 = vunpack.c.h.b16 %v7705
  %v8261 = vunpack.c.l.b16 %v7706
  %v8262 = vunpack.c.h.b16 %v7706
  %v8263 = vunpack.c.l.b16 %v7707
  %v8264 = vunpack.c.h.b16 %v7707
  %v8265 = vunpack.c.l.b16 %v7708
  %v8266 = vunpack.c.h.b16 %v7708
  %v8267 = vunpack.c.l.b16 %v7709
  %v8268 = vunpack.c.h.b16 %v7709
  %v8269 = vunpack.c.l.b16 %v7710
  %v8270 = vunpack.c.h.b16 %v7710
  %v8271 = vunpack.c.l.b16 %v7711
  %v8272 = vunpack.c.h.b16 %v7711
  %v8273 = vunpack.c.l.b16 %v7712
  %v8274 = vunpack.c.h.b16 %v7712
  %v8275 = vunpack.c.l.b16 %v7713
  %v8276 = vunpack.c.h.b16 %v7713
  %v8277 = vunpack.c.l.b16 %v7714
  %v8278 = vunpack.c.h.b16 %v7714
  %v8279 = vunpack.c.l.b16 %v7715
  %v8280 = vunpack.c.h.b16 %v7715
  %v8281 = vunpack.c.l.b16 %v7716
  %v8282 = vunpack.c.h.b16 %v7716
  %v8283 = vunpack.c.l.b16 %v7717
  %v8284 = vunpack.c.h.b16 %v7717
  %v8285 = vunpack.c.l.b16 %v7718
  %v8286 = vunpack.c.h.b16 %v7718
  %v8287 = vunpack.c.l.b16 %v7719
  %v8288 = vunpack.c.h.b16 %v7719
  %v8289 = vunpack.c.l.b16 %v7720
  %v8290 = vunpack.c.h.b16 %v7720
  %v8291 = vunpack.c.l.b16 %v7721
  %v8292 = vunpack.c.h.b16 %v7721
  %v8293 = vunpack.c.l.b16 %v7722
  %v8294 = vunpack.c.h.b16 %v7722
  %v8295 = vunpack.c.l.b16 %v7723
  %v8296 = vunpack.c.h.b16 %v7723
  %v8297 = vunpack.c.l.b16 %v7724
  %v8298 = vunpack.c.h.b16 %v7724
  %v8299 = vunpack.c.l.b16 %v7725
  %v8300 = vunpack.c.h.b16 %v7725
  %v8301 = vunpack.c.l.b16 %v7726
  %v8302 = vunpack.c.h.b16 %v7726
  %v8303 = vunpack.c.l.b16 %v7727
  %v8304 = vunpack.c.h.b16 %v7727
  %v8305 = vunpack.c.l.b16 %v7728
  %v8306 = vunpack.c.h.b16 %v7728
  %v8307 = vunpack.c.l.b16 %v7729
  %v8308 = vunpack.c.h.b16 %v7729
  %v8309 = vunpack.c.l.b16 %v7730
  %v8310 = vunpack.c.h.b16 %v7730
  %v8311 = vunpack.c.l.b16 %v7731
  %v8312 = vunpack.c.h.b16 %v7731
  %v8313 = vunpack.c.l.b16 %v7732
  %v8314 = vunpack.c.h.b16 %v7732
  %v8315 = vunpack.c.l.b16 %v7733
  %v8316 = vunpack.c.h.b16 %v7733
  %v8317 = vunpack.c.l.b16 %v7734
  %v8318 = vunpack.c.h.b16 %v7734
  %v8319 = vunpack.c.l.b16 %v7735
  %v8320 = vunpack.c.h.b16 %v7735
  %v8321 = vunpack.c.l.b16 %v7736
  %v8322 = vunpack.c.h.b16 %v7736
  %v8323 = vunpack.c.l.b16 %v7737
  %v8324 = vunpack.c.h.b16 %v7737
  %v8325 = vunpack.c.l.b16 %v7738
  %v8326 = vunpack.c.h.b16 %v7738
  %v8327 = vunpack.c.l.b16 %v7739
  %v8328 = vunpack.c.h.b16 %v7739
  %v8329 = vunpack.c.l.b16 %v7740
  %v8330 = vunpack.c.h.b16 %v7740
  %v8331 = vunpack.c.l.b16 %v7741
  %v8332 = vunpack.c.h.b16 %v7741
  %v8333 = vunpack.c.l.b16 %v7742
  %v8334 = vunpack.c.h.b16 %v7742
  %v8335 = vunpack.c.l.b16 %v7743
  %v8336 = vunpack.c.h.b16 %v7743
  %v8337 = vunpack.c.l.b16 %v7744
  %v8338 = vunpack.c.h.b16 %v7744
  %v8339 = vunpack.c.l.b16 %v7745
  %v8340 = vunpack.c.h.b16 %v7745
  %v8341 = vunpack.c.l.b16 %v7746
  %v8342 = vunpack.c.h.b16 %v7746
  %v8343 = vunpack.c.l.b16 %v7747
  %v8344 = vunpack.c.h.b16 %v7747
  %v8345 = vunpack.c.l.b16 %v7748
  %v8346 = vunpack.c.h.b16 %v7748
  %v8347 = vunpack.c.l.b16 %v7749
  %v8348 = vunpack.c.h.b16 %v7749
  %v8349 = vunpack.c.l.b16 %v7750
  %v8350 = vunpack.c.h.b16 %v7750
  %v8351 = vunpack.c.l.b16 %v7751
  %v8352 = vunpack.c.h.b16 %v7751
  %v8353 = vunpack.c.l.b16 %v7752
  %v8354 = vunpack.c.h.b16 %v7752
  %v8355 = vunpack.c.l.b16 %v7753
  %v8356 = vunpack.c.h.b16 %v7753
  %v8357 = vunpack.c.l.b16 %v7754
  %v8358 = vunpack.c.h.b16 %v7754
  %v8359 = vunpack.c.l.b16 %v7755
  %v8360 = vunpack.c.h.b16 %v7755
  %v8361 = vunpack.c.l.b16 %v7756
  %v8362 = vunpack.c.h.b16 %v7756
  %v8363 = vunpack.c.l.b16 %v7757
  %v8364 = vunpack.c.h.b16 %v7757
  %v8365 = vunpack.c.l.b16 %v7758
  %v8366 = vunpack.c.h.b16 %v7758
  %v8367 = vunpack.c.l.b16 %v7759
  %v8368 = vunpack.c.h.b16 %v7759
  %v8369 = vunpack.c.l.b16 %v7760
  %v8370 = vunpack.c.h.b16 %v7760
  %v8371 = vunpack.c.l.b16 %v7761
  %v8372 = vunpack.c.h.b16 %v7761
  %v8373 = vunpack.c.l.b16 %v7762
  %v8374 = vunpack.c.h.b16 %v7762
  %v8375 = vunpack.c.l.b16 %v7763
  %v8376 = vunpack.c.h.b16 %v7763
  %v8377 = vunpack.c.l.b16 %v7764
  %v8378 = vunpack.c.h.b16 %v7764
  %v8379 = vunpack.c.l.b16 %v7765
  %v8380 = vunpack.c.h.b16 %v7765
  %v8381 = vunpack.c.l.b16 %v7766
  %v8382 = vunpack.c.h.b16 %v7766
  %v8383 = vunpack.c.l.b16 %v7767
  %v8384 = vunpack.c.h.b16 %v7767
  %v8385 = vunpack.c.l.b16 %v7768
  %v8386 = vunpack.c.h.b16 %v7768
  %v8387 = vunpack.c.l.b16 %v7769
  %v8388 = vunpack.c.h.b16 %v7769
  %v8389 = vunpack.c.l.b16 %v7770
  %v8390 = vunpack.c.h.b16 %v7770
  %v8391 = vunpack.c.l.b16 %v7771
  %v8392 = vunpack.c.h.b16 %v7771
  %v8393 = vunpack.c.l.b16 %v7772
  %v8394 = vunpack.c.h.b16 %v7772
  %v8395 = vunpack.c.l.b16 %v7773
  %v8396 = vunpack.c.h.b16 %v7773
  %v8397 = vunpack.c.l.b16 %v7774
  %v8398 = vunpack.c.h.b16 %v7774
  %v8399 = vunpack.c.l.b16 %v7775
  %v8400 = vunpack.c.h.b16 %v7775
  %v8401 = vunpack.c.l.b16 %v7776
  %v8402 = vunpack.c.h.b16 %v7776
  %v8403 = vunpack.c.l.b16 %v7777
  %v8404 = vunpack.c.h.b16 %v7777
  %v8405 = vunpack.c.l.b16 %v7778
  %v8406 = vunpack.c.h.b16 %v7778
  %v8407 = vunpack.c.l.b16 %v7779
  %v8408 = vunpack.c.h.b16 %v7779
  %v8409 = vunpack.c.l.b16 %v7780
  %v8410 = vunpack.c.h.b16 %v7780
  %v8411 = vunpack.c.l.b16 %v7781
  %v8412 = vunpack.c.h.b16 %v7781
  %v8413 = vunpack.c.l.b16 %v7782
  %v8414 = vunpack.c.h.b16 %v7782
  %v8415 = vunpack.c.l.b16 %v7783
  %v8416 = vunpack.c.h.b16 %v7783
  %v8417 = vunpack.c.l.b16 %v7784
  %v8418 = vunpack.c.h.b16 %v7784
  %v8419 = vunpack.c.l.b16 %v7785
  %v8420 = vunpack.c.h.b16 %v7785
  %v8421 = vunpack.c.l.b16 %v7786
  %v8422 = vunpack.c.h.b16 %v7786
  %v8423 = vunpack.c.l.b16 %v7787
  %v8424 = vunpack.c.h.b16 %v7787
  %v8425 = vunpack.c.l.b16 %v7788
  %v8426 = vunpack.c.h.b16 %v7788
  %v8427 = vunpack.c.l.b16 %v7789
  %v8428 = vunpack.c.h.b16 %v7789
  %v8429 = vunpack.c.l.b16 %v7790
  %v8430 = vunpack.c.h.b16 %v7790
  %v8431 = vunpack.c.l.b16 %v7791
  %v8432 = vunpack.c.h.b16 %v7791
  %v8433 = vunpack.c.l.b16 %v7792
  %v8434 = vunpack.c.h.b16 %v7792
  %v8435 = vunpack.c.l.b16 %v7793
  %v8436 = vunpack.c.h.b16 %v7793
  %v8437 = vunpack.c.l.b16 %v7794
  %v8438 = vunpack.c.h.b16 %v7794
  %v8439 = vunpack.c.l.b16 %v7795
  %v8440 = vunpack.c.h.b16 %v7795
  %v8441 = vunpack.c.l.b16 %v7796
  %v8442 = vunpack.c.h.b16 %v7796
  %v8443 = vunpack.c.l.b16 %v7797
  %v8444 = vunpack.c.h.b16 %v7797
  %v8445 = vunpack.c.l.b16 %v7798
  %v8446 = vunpack.c.h.b16 %v7798
  %v8447 = vunpack.c.l.b16 %v7799
  %v8448 = vunpack.c.h.b16 %v7799
  %v8449 = vunpack.c.l.b16 %v7800
  %v8450 = vunpack.c.h.b16 %v7800
  %v8451 = vunpack.c.l.b16 %v7801
  %v8452 = vunpack.c.h.b16 %v7801
  %v8453 = vunpack.c.l.b16 %v7802
  %v8454 = vunpack.c.h.b16 %v7802
  %v8455 = vunpack.c.l.b16 %v7803
  %v8456 = vunpack.c.h.b16 %v7803
  %v8457 = vunpack.c.l.b16 %v7804
  %v8458 = vunpack.c.h.b16 %v7804
  %v8459 = vunpack.c.l.b16 %v7805
  %v8460 = vunpack.c.h.b16 %v7805
  %v8461 = vunpack.c.l.b16 %v7806
  %v8462 = vunpack.c.h.b16 %v7806
  %v8463 = vunpack.c.l.b16 %v7807
  %v8464 = vunpack.c.h.b16 %v7807
  %v8465 = vunpack.c.l.b16 %v7808
  %v8466 = vunpack.c.h.b16 %v7808
  %v8467 = vunpack.c.l.b16 %v7809
  %v8468 = vunpack.c.h.b16 %v7809
  %v8469 = vunpack.c.l.b16 %v7810
  %v8470 = vunpack.c.h.b16 %v7810
  %v8471 = vunpack.c.l.b16 %v7811
  %v8472 = vunpack.c.h.b16 %v7811
  %v8473 = vunpack.c.l.b16 %v7812
  %v8474 = vunpack.c.h.b16 %v7812
  %v8475 = vunpack.c.l.b16 %v7813
  %v8476 = vunpack.c.h.b16 %v7813
  %v8477 = vunpack.c.l.b16 %v7814
  %v8478 = vunpack.c.h.b16 %v7814
  %v8479 = vunpack.c.l.b16 %v7815
  %v8480 = vunpack.c.h.b16 %v7815
  %v8481 = vunpack.c.l.b16 %v7816
  %v8482 = vunpack.c.h.b16 %v7816
  %v8483 = vunpack.c.l.b16 %v7817
  %v8484 = vunpack.c.h.b16 %v7817
  %v8485 = vunpack.c.l.b16 %v7818
  %v8486 = vunpack.c.h.b16 %v7818
  %v8487 = vunpack.c.l.b16 %v7819
  %v8488 = vunpack.c.h.b16 %v7819
  %v8489 = vunpack.c.l.b16 %v7820
  %v8490 = vunpack.c.h.b16 %v7820
  %v8491 = vpack.c.b16 %v8113, %v8107
  %v8492 = vpack.c.b16 %v8114, %v8108
  %v8493 = vpack.c.b16 %v8115, %v8109
  %v8494 = vpack.c.b16 %v8116, %v8110
  %v8495 = vpack.c.b16 %v8117, %v8111
  %v8496 = vpack.c.b16 %v8118, %v8112
  %v8497 = vpack.c.b16 %v8125, %v8119
  %v8498 = vpack.c.b16 %v8126, %v8120
  %v8499 = vpack.c.b16 %v8127, %v8121
  %v8500 = vpack.c.b16 %v8128, %v8122
  %v8501 = vpack.c.b16 %v8129, %v8123
  %v8502 = vpack.c.b16 %v8130, %v8124
  %v8503 = vpack.c.b16 %v8137, %v8131
  %v8504 = vpack.c.b16 %v8138, %v8132
  %v8505 = vpack.c.b16 %v8139, %v8133
  %v8506 = vpack.c.b16 %v8140, %v8134
  %v8507 = vpack.c.b16 %v8141, %v8135
  %v8508 = vpack.c.b16 %v8142, %v8136
  %v8509 = vpack.c.b16 %v8149, %v8143
  %v8510 = vpack.c.b16 %v8150, %v8144
  %v8511 = vpack.c.b16 %v8151, %v8145
  %v8512 = vpack.c.b16 %v8152, %v8146
  %v8513 = vpack.c.b16 %v8153, %v8147
  %v8514 = vpack.c.b16 %v8154, %v8148
  %v8515 = vpack.c.b16 %v8161, %v8155
  %v8516 = vpack.c.b16 %v8162, %v8156
  %v8517 = vpack.c.b16 %v8163, %v8157
  %v8518 = vpack.c.b16 %v8164, %v8158
  %v8519 = vpack.c.b16 %v8165, %v8159
  %v8520 = vpack.c.b16 %v8166, %v8160
  %v8521 = vpack.c.b16 %v8173, %v8167
  %v8522 = vpack.c.b16 %v8174, %v8168
  %v8523 = vpack.c.b16 %v8175, %v8169
  %v8524 = vpack.c.b16 %v8176, %v8170
  %v8525 = vpack.c.b16 %v8177, %v8171
  %v8526 = vpack.c.b16 %v8178, %v8172
  %v8527 = vpack.c.b16 %v8185, %v8179
  %v8528 = vpack.c.b16 %v8186, %v8180
  %v8529 = vpack.c.b16 %v8187, %v8181
  %v8530 = vpack.c.b16 %v8188, %v8182
  %v8531 = vpack.c.b16 %v8189, %v8183
  %v8532 = vpack.c.b16 %v8190, %v8184
  %v8533 = vpack.c.b16 %v8197, %v8191
  %v8534 = vpack.c.b16 %v8198, %v8192
  %v8535 = vpack.c.b16 %v8199, %v8193
  %v8536 = vpack.c.b16 %v8200, %v8194
  %v8537 = vpack.c.b16 %v8201, %v8195
  %v8538 = vpack.c.b16 %v8202, %v8196
  %v8539 = vpack.c.b16 %v8209, %v8203
  %v8540 = vpack.c.b16 %v8210, %v8204
  %v8541 = vpack.c.b16 %v8211, %v8205
  %v8542 = vpack.c.b16 %v8212, %v8206
  %v8543 = vpack.c.b16 %v8213, %v8207
  %v8544 = vpack.c.b16 %v8214, %v8208
  %v8545 = vpack.c.b16 %v8221, %v8215
  %v8546 = vpack.c.b16 %v8222, %v8216
  %v8547 = vpack.c.b16 %v8223, %v8217
  %v8548 = vpack.c.b16 %v8224, %v8218
  %v8549 = vpack.c.b16 %v8225, %v8219
  %v8550 = vpack.c.b16 %v8226, %v8220
  %v8551 = vpack.c.b16 %v8233, %v8227
  %v8552 = vpack.c.b16 %v8234, %v8228
  %v8553 = vpack.c.b16 %v8235, %v8229
  %v8554 = vpack.c.b16 %v8236, %v8230
  %v8555 = vpack.c.b16 %v8237, %v8231
  %v8556 = vpack.c.b16 %v8238, %v8232
  %v8557 = vpack.c.b16 %v8245, %v8239
  %v8558 = vpack.c.b16 %v8246, %v8240
  %v8559 = vpack.c.b16 %v8247, %v8241
  %v8560 = vpack.c.b16 %v8248, %v8242
  %v8561 = vpack.c.b16 %v8249, %v8243
  %v8562 = vpack.c.b16 %v8250, %v8244
  %v8563 = vpack.c.b16 %v8257, %v8251
  %v8564 = vpack.c.b16 %v8258, %v8252
  %v8565 = vpack.c.b16 %v8259, %v8253
  %v8566 = vpack.c.b16 %v8260, %v8254
  %v8567 = vpack.c.b16 %v8261, %v8255
  %v8568 = vpack.c.b16 %v8262, %v8256
  %v8569 = vpack.c.b16 %v8269, %v8263
  %v8570 = vpack.c.b16 %v8270, %v8264
  %v8571 = vpack.c.b16 %v8271, %v8265
  %v8572 = vpack.c.b16 %v8272, %v8266
  %v8573 = vpack.c.b16 %v8273, %v8267
  %v8574 = vpack.c.b16 %v8274, %v8268
  %v8575 = vpack.c.b16 %v8281, %v8275
  %v8576 = vpack.c.b16 %v8282, %v8276
  %v8577 = vpack.c.b16 %v8283, %v8277
  %v8578 = vpack.c.b16 %v8284, %v8278
  %v8579 = vpack.c.b16 %v8285, %v8279
  %v8580 = vpack.c.b16 %v8286, %v8280
  %v8581 = vpack.c.b16 %v8293, %v8287
  %v8582 = vpack.c.b16 %v8294, %v8288
  %v8583 = vpack.c.b16 %v8295, %v8289
  %v8584 = vpack.c.b16 %v8296, %v8290
  %v8585 = vpack.c.b16 %v8297, %v8291
  %v8586 = vpack.c.b16 %v8298, %v8292
  %v8587 = vpack.c.b16 %v8305, %v8299
  %v8588 = vpack.c.b16 %v8306, %v8300
  %v8589 = vpack.c.b16 %v8307, %v8301
  %v8590 = vpack.c.b16 %v8308, %v8302
  %v8591 = vpack.c.b16 %v8309, %v8303
  %v8592 = vpack.c.b16 %v8310, %v8304
  %v8593 = vpack.c.b16 %v8317, %v8311
  %v8594 = vpack.c.b16 %v8318, %v8312
  %v8595 = vpack.c.b16 %v8319, %v8313
  %v8596 = vpack.c.b16 %v8320, %v8314
  %v8597 = vpack.c.b16 %v8321, %v8315
  %v8598 = vpack.c.b16 %v8322, %v8316
  %v8599 = vpack.c.b16 %v8329, %v8323
  %v8600 = vpack.c.b16 %v8330, %v8324
  %v8601 = vpack.c.b16 %v8331, %v8325
  %v8602 = vpack.c.b16 %v8332, %v8326
  %v8603 = vpack.c.b16 %v8333, %v8327
  %v8604 = vpack.c.b16 %v8334, %v8328
  %v8605 = vpack.c.b16 %v8341, %v8335
  %v8606 = vpack.c.b16 %v8342, %v8336
  %v8607 = vpack.c.b16 %v8343, %v8337
  %v8608 = vpack.c.b16 %v8344, %v8338
  %v8609 = vpack.c.b16 %v8345, %v8339
  %v8610 = vpack.c.b16 %v8346, %v8340
  %v8611 = vpack.c.b16 %v8353, %v8347
  %v8612 = vpack.c.b16 %v8354, %v8348
  %v8613 = vpack.c.b16 %v8355, %v8349
  %v8614 = vpack.c.b16 %v8356, %v8350
  %v8615 = vpack.c.b16 %v8357, %v8351
  %v8616 = vpack.c.b16 %v8358, %v8352
  %v8617 = vpack.c.b16 %v8365, %v8359
  %v8618 = vpack.c.b16 %v8366, %v8360
  %v8619 = vpack.c.b16 %v8367, %v8361
  %v8620 = vpack.c.b16 %v8368, %v8362
  %v8621 = vpack.c.b16 %v8369, %v8363
  %v8622 = vpack.c.b16 %v8370, %v8364
  %v8623 = vpack.c.b16 %v8377, %v8371
  %v8624 = vpack.c.b16 %v8378, %v8372
  %v8625 = vpack.c.b16 %v8379, %v8373
  %v8626 = vpack.c.b16 %v8380, %v8374
  %v8627 = vpack.c.b16 %v8381, %v8375
  %v8628 = vpack.c.b16 %v8382, %v8376
  %v8629 = vpack.c.b16 %v8389, %v8383
  %v8630 = vpack.c.b16 %v8390, %v8384
  %v8631 = vpack.c.b16 %v8391, %v8385
  %v8632 = vpack.c.b16 %v8392, %v8386
  %v8633 = vpack.c.b16 %v8393, %v8387
  %v8634 = vpack.c.b16 %v8394, %v8388
  %v8635 = vpack.c.b16 %v8401, %v8395
  %v8636 = vpack.c.b16 %v8402, %v8396
  %v8637 = vpack.c.b16 %v8403, %v8397
  %v8638 = vpack.c.b16 %v8404, %v8398
  %v8639 = vpack.c.b16 %v8405, %v8399
  %v8640 = vpack.c.b16 %v8406, %v8400
  %v8641 = vpack.c.b16 %v8413, %v8407
  %v8642 = vpack.c.b16 %v8414, %v8408
  %v8643 = vpack.c.b16 %v8415, %v8409
  %v8644 = vpack.c.b16 %v8416, %v8410
  %v8645 = vpack.c.b16 %v8417, %v8411
  %v8646 = vpack.c.b16 %v8418, %v8412
  %v8647 = vpack.c.b16 %v8425, %v8419
  %v8648 = vpack.c.b16 %v8426, %v8420
  %v8649 = vpack.c.b16 %v8427, %v8421
  %v8650 = vpack.c.b16 %v8428, %v8422
  %v8651 = vpack.c.b16 %v8429, %v8423
  %v8652 = vpack.c.b16 %v8430, %v8424
  %v8653 = vpack.c.b16 %v8437, %v8431
  %v8654 = vpack.c.b16 %v8438, %v8432
  %v8655 = vpack.c.b16 %v8439, %v8433
  %v8656 = vpack.c.b16 %v8440, %v8434
  %v8657 = vpack.c.b16 %v8441, %v8435
  %v8658 = vpack.c.b16 %v8442, %v8436
  %v8659 = vpack.c.b16 %v8449, %v8443
  %v8660 = vpack.c.b16 %v8450, %v8444
  %v8661 = vpack.c.b16 %v8451, %v8445
  %v8662 = vpack.c.b16 %v8452, %v8446
  %v8663 = vpack.c.b16 %v8453, %v8447
  %v8664 = vpack.c.b16 %v8454, %v8448
  %v8665 = vpack.c.b16 %v8461, %v8455
  %v8666 = vpack.c.b16 %v8462, %v8456
  %v8667 = vpack.c.b16 %v8463, %v8457
  %v8668 = vpack.c.b16 %v8464, %v8458
  %v8669 = vpack.c.b16 %v8465, %v8459
  %v8670 = vpack.c.b16 %v8466, %v8460
  %v8671 = vpack.c.b16 %v8473, %v8467
  %v8672 = vpack.c.b16 %v8474, %v8468
  %v8673 = vpack.c.b16 %v8475, %v8469
  %v8674 = vpack.c.b16 %v8476, %v8470
  %v8675 = vpack.c.b16 %v8477, %v8471
  %v8676 = vpack.c.b16 %v8478, %v8472
  %v8677 = vpack.c.b16 %v8485, %v8479
  %v8678 = vpack.c.b16 %v8486, %v8480
  %v8679 = vpack.c.b16 %v8487, %v8481
  %v8680 = vpack.c.b16 %v8488, %v8482
  %v8681 = vpack.c.b16 %v8489, %v8483
  %v8682 = vpack.c.b16 %v8490, %v8484
  %8875 = vmatprep.subr.bf16.mxu0 %v8492
  %8876 = vmatpush1.bf16.msra.mxu0 %v8491
  %8877 = vmatprep.subr.bf16.mxu0 %v8498
  %8878 = vmatpush1.bf16.msra.mxu0 %v8497
  %8879 = vmatprep.subr.bf16.mxu0 %v8504
  %8880 = vmatpush1.bf16.msra.mxu0 %v8503
  %8881 = vmatprep.subr.bf16.mxu0 %v8510
  %8882 = vmatpush1.bf16.msra.mxu0 %v8509
  %8883 = vmatprep.subr.bf16.mxu0 %v8516
  %8884 = vmatpush1.bf16.msra.mxu0 %v8515
  %8885 = vmatprep.subr.bf16.mxu0 %v8522
  %8886 = vmatpush1.bf16.msra.mxu0 %v8521
  %8887 = vmatprep.subr.bf16.mxu0 %v8528
  %8888 = vmatpush1.bf16.msra.mxu0 %v8527
  %8889 = vmatprep.subr.bf16.mxu0 %v8534
  %8890 = vmatpush1.bf16.msra.mxu0 %v8533
  %8891 = vmatprep.subr.bf16.mxu0 %v8540
  %8892 = vmatpush1.bf16.msra.mxu0 %v8539
  %8893 = vmatprep.subr.bf16.mxu0 %v8546
  %8894 = vmatpush1.bf16.msra.mxu0 %v8545
  %8895 = vmatprep.subr.bf16.mxu0 %v8552
  %8896 = vmatpush1.bf16.msra.mxu0 %v8551
  %8897 = vmatprep.subr.bf16.mxu0 %v8558
  %8898 = vmatpush1.bf16.msra.mxu0 %v8557
  %8899 = vmatprep.subr.bf16.mxu0 %v8564
  %8900 = vmatpush1.bf16.msra.mxu0 %v8563
  %8901 = vmatprep.subr.bf16.mxu0 %v8570
  %8902 = vmatpush1.bf16.msra.mxu0 %v8569
  %8903 = vmatprep.subr.bf16.mxu0 %v8576
  %8904 = vmatpush1.bf16.msra.mxu0 %v8575
  %8905 = vmatprep.subr.bf16.mxu0 %v8582
  %8906 = vmatpush1.bf16.msra.mxu0 %v8581
  %8907 = vmatprep.mubr.bf16.mxu0 %v7876
  %8908 = vmatmul.mubr.bf16.gmra.mrb[0].mxu0 %v7875
  %v8909 = vpop.f32.mrb[0].mxu0
  %v8910 = vadd.f32 0.0, %v8909
  %v8911 = vpop.f32.mrb[0].mxu0
  %v8912 = vadd.f32 0.0, %v8911
  %v8913 = vpop.f32.mrb[0].mxu0
  %v8914 = vadd.f32 0.0, %v8913
  %v8915 = vpop.f32.mrb[0].mxu0
  %v8916 = vadd.f32 0.0, %v8915
  %8917 = vmatprep.mubr.bf16.mxu0 %v7880
  %8918 = vmatmul.mubr.bf16.gmra.mrb[0].mxu0 %v7879
  %v8919 = vpop.f32.mrb[0].mxu0
  %v8920 = vadd.f32 0.0, %v8919
  %v8921 = vpop.f32.mrb[0].mxu0
  %v8922 = vadd.f32 0.0, %v8921
  %v8923 = vpop.f32.mrb[0].mxu0
  %v8924 = vadd.f32 0.0, %v8923
  %v8925 = vpop.f32.mrb[0].mxu0
  %v8926 = vadd.f32 0.0, %v8925
  %8927 = vmatprep.mubr.bf16.mxu0 %v7884
  %8928 = vmatmul.mubr.bf16.gmra.mrb[0].mxu0 %v7883
  %v8929 = vpop.f32.mrb[0].mxu0
  %v8930 = vadd.f32 0.0, %v8929
  %v8931 = vpop.f32.mrb[0].mxu0
  %v8932 = vadd.f32 0.0, %v8931
  %v8933 = vpop.f32.mrb[0].mxu0
  %v8934 = vadd.f32 0.0, %v8933
  %v8935 = vpop.f32.mrb[0].mxu0
  %v8936 = vadd.f32 0.0, %v8935
  %8937 = vmatprep.mubr.bf16.mxu0 %v7888
  %8938 = vmatmul.mubr.bf16.gmra.mrb[0].mxu0 %v7887
  %v8939 = vpop.f32.mrb[0].mxu0
  %v8940 = vadd.f32 0.0, %v8939
  %v8941 = vpop.f32.mrb[0].mxu0
  %v8942 = vadd.f32 0.0, %v8941
  %v8943 = vpop.f32.mrb[0].mxu0
  %v8944 = vadd.f32 0.0, %v8943
  %v8945 = vpop.f32.mrb[0].mxu0
  %v8946 = vadd.f32 0.0, %v8945
  %8947 = vmatprep.mubr.bf16.mxu0 %v7892
  %8948 = vmatmul.mubr.bf16.gmra.mrb[0].mxu0 %v7891
  %v8949 = vpop.f32.mrb[0].mxu0
  %v8950 = vadd.f32 0.0, %v8949
  %v8951 = vpop.f32.mrb[0].mxu0
  %v8952 = vadd.f32 0.0, %v8951
  %v8953 = vpop.f32.mrb[0].mxu0
  %v8954 = vpop.f32.mrb[0].mxu0
  %8955 = vdwg.mxu0
  %8956 = vmatprep.subr.bf16.mxu0 %v8588
  %8957 = vmatpush1.bf16.msra.mxu0 %v8587
  %8958 = vmatprep.subr.bf16.mxu0 %v8594
  %8959 = vmatpush1.bf16.msra.mxu0 %v8593
  %8960 = vmatprep.subr.bf16.mxu0 %v8600
  %8961 = vmatpush1.bf16.msra.mxu0 %v8599
  %8962 = vmatprep.subr.bf16.mxu0 %v8606
  %8963 = vmatpush1.bf16.msra.mxu0 %v8605
  %8964 = vmatprep.subr.bf16.mxu0 %v8612
  %8965 = vmatpush1.bf16.msra.mxu0 %v8611
  %8966 = vmatprep.subr.bf16.mxu0 %v8618
  %8967 = vmatpush1.bf16.msra.mxu0 %v8617
  %8968 = vmatprep.subr.bf16.mxu0 %v8624
  %8969 = vmatpush1.bf16.msra.mxu0 %v8623
  %8970 = vmatprep.subr.bf16.mxu0 %v8630
  %8971 = vmatpush1.bf16.msra.mxu0 %v8629
  %8972 = vmatprep.subr.bf16.mxu0 %v8636
  %8973 = vmatpush1.bf16.msra.mxu0 %v8635
  %8974 = vmatprep.subr.bf16.mxu0 %v8642
  %8975 = vmatpush1.bf16.msra.mxu0 %v8641
  %8976 = vmatprep.subr.bf16.mxu0 %v8648
  %8977 = vmatpush1.bf16.msra.mxu0 %v8647
  %8978 = vmatprep.subr.bf16.mxu0 %v8654
  %8979 = vmatpush1.bf16.msra.mxu0 %v8653
  %8980 = vmatprep.subr.bf16.mxu0 %v8660
  %8981 = vmatpush1.bf16.msra.mxu0 %v8659
  %8982 = vmatprep.subr.bf16.mxu0 %v8666
  %8983 = vmatpush1.bf16.msra.mxu0 %v8665
  %8984 = vmatprep.subr.bf16.mxu0 %v8672
  %8985 = vmatpush1.bf16.msra.mxu0 %v8671
  %8986 = vmatprep.subr.bf16.mxu0 %v8678
  %8987 = vmatpush1.bf16.msra.mxu0 %v8677
  %8988 = vmatprep.mubr.bf16.mxu0 %v7878
  %8989 = vmatmul.mubr.bf16.gmra.mrb[0].mxu0 %v7877
  %v8990 = vpop.f32.mrb[0].mxu0
  %v8991 = vadd.f32 %v8910, %v8990
  %v8992 = vpop.f32.mrb[0].mxu0
  %v8993 = vadd.f32 %v8912, %v8992
  %v8994 = vpop.f32.mrb[0].mxu0
  %v8995 = vadd.f32 %v8914, %v8994
  %v8996 = vpop.f32.mrb[0].mxu0
  %v8997 = vadd.f32 %v8916, %v8996
  %8998 = vmatprep.mubr.bf16.mxu0 %v7882
  %8999 = vmatmul.mubr.bf16.gmra.mrb[0].mxu0 %v7881
  %v9000 = vpop.f32.mrb[0].mxu0
  %v9001 = vadd.f32 %v8920, %v9000
  %v9002 = vpop.f32.mrb[0].mxu0
  %v9003 = vadd.f32 %v8922, %v9002
  %v9004 = vpop.f32.mrb[0].mxu0
  %v9005 = vadd.f32 %v8924, %v9004
  %v9006 = vpop.f32.mrb[0].mxu0
  %v9007 = vadd.f32 %v8926, %v9006
  %9008 = vmatprep.mubr.bf16.mxu0 %v7886
  %9009 = vmatmul.mubr.bf16.gmra.mrb[0].mxu0 %v7885
  %v9010 = vpop.f32.mrb[0].mxu0
  %v9011 = vadd.f32 %v8930, %v9010
  %v9012 = vpop.f32.mrb[0].mxu0
  %v9013 = vadd.f32 %v8932, %v9012
  %v9014 = vpop.f32.mrb[0].mxu0
  %v9015 = vadd.f32 %v8934, %v9014
  %v9016 = vpop.f32.mrb[0].mxu0
  %v9017 = vadd.f32 %v8936, %v9016
  %9018 = vmatprep.mubr.bf16.mxu0 %v7890
  %9019 = vmatmul.mubr.bf16.gmra.mrb[0].mxu0 %v7889
  %v9020 = vpop.f32.mrb[0].mxu0
  %v9021 = vadd.f32 %v8940, %v9020
  %v9022 = vpop.f32.mrb[0].mxu0
  %v9023 = vadd.f32 %v8942, %v9022
  %v9024 = vpop.f32.mrb[0].mxu0
  %v9025 = vadd.f32 %v8944, %v9024
  %v9026 = vpop.f32.mrb[0].mxu0
  %v9027 = vadd.f32 %v8946, %v9026
  %9028 = vmatprep.mubr.bf16.mxu0 %v7894
  %9029 = vmatmul.mubr.bf16.gmra.mrb[0].mxu0 %v7893
  %v9030 = vpop.f32.mrb[0].mxu0
  %v9031 = vadd.f32 %v8950, %v9030
  %v9032 = vpop.f32.mrb[0].mxu0
  %v9033 = vadd.f32 %v8952, %v9032
  %v9034 = vpop.f32.mrb[0].mxu0
  %v9035 = vpop.f32.mrb[0].mxu0
  %9036 = vdwg.mxu0
  %9037 = vmatprep.subr.bf16.mxu0 %v8494
  %9038 = vmatpush1.bf16.msra.mxu0 %v8493
  %9039 = vmatprep.subr.bf16.mxu0 %v8500
  %9040 = vmatpush1.bf16.msra.mxu0 %v8499
  %9041 = vmatprep.subr.bf16.mxu0 %v8506
  %9042 = vmatpush1.bf16.msra.mxu0 %v8505
  %9043 = vmatprep.subr.bf16.mxu0 %v8512
  %9044 = vmatpush1.bf16.msra.mxu0 %v8511
  %9045 = vmatprep.subr.bf16.mxu0 %v8518
  %9046 = vmatpush1.bf16.msra.mxu0 %v8517
  %9047 = vmatprep.subr.bf16.mxu0 %v8524
  %9048 = vmatpush1.bf16.msra.mxu0 %v8523
  %9049 = vmatprep.subr.bf16.mxu0 %v8530
  %9050 = vmatpush1.bf16.msra.mxu0 %v8529
  %9051 = vmatprep.subr.bf16.mxu0 %v8536
  %9052 = vmatpush1.bf16.msra.mxu0 %v8535
  %9053 = vmatprep.subr.bf16.mxu0 %v8542
  %9054 = vmatpush1.bf16.msra.mxu0 %v8541
  %9055 = vmatprep.subr.bf16.mxu0 %v8548
  %9056 = vmatpush1.bf16.msra.mxu0 %v8547
  %9057 = vmatprep.subr.bf16.mxu0 %v8554
  %9058 = vmatpush1.bf16.msra.mxu0 %v8553
  %9059 = vmatprep.subr.bf16.mxu0 %v8560
  %9060 = vmatpush1.bf16.msra.mxu0 %v8559
  %9061 = vmatprep.subr.bf16.mxu0 %v8566
  %9062 = vmatpush1.bf16.msra.mxu0 %v8565
  %9063 = vmatprep.subr.bf16.mxu0 %v8572
  %9064 = vmatpush1.bf16.msra.mxu0 %v8571
  %9065 = vmatprep.subr.bf16.mxu0 %v8578
  %9066 = vmatpush1.bf16.msra.mxu0 %v8577
  %9067 = vmatprep.subr.bf16.mxu0 %v8584
  %9068 = vmatpush1.bf16.msra.mxu0 %v8583
  %9069 = vmatprep.mubr.bf16.mxu0 %v7876
  %9070 = vmatmul.mubr.bf16.gmra.mrb[0].mxu0 %v7875
  %v9071 = vpop.f32.mrb[0].mxu0
  %v9072 = vadd.f32 0.0, %v9071
  %v9073 = vpop.f32.mrb[0].mxu0
  %v9074 = vadd.f32 0.0, %v9073
  %v9075 = vpop.f32.mrb[0].mxu0
  %v9076 = vadd.f32 0.0, %v9075
  %v9077 = vpop.f32.mrb[0].mxu0
  %v9078 = vadd.f32 0.0, %v9077
  %9079 = vmatprep.mubr.bf16.mxu0 %v7880
  %9080 = vmatmul.mubr.bf16.gmra.mrb[0].mxu0 %v7879
  %v9081 = vpop.f32.mrb[0].mxu0
  %v9082 = vadd.f32 0.0, %v9081
  %v9083 = vpop.f32.mrb[0].mxu0
  %v9084 = vadd.f32 0.0, %v9083
  %v9085 = vpop.f32.mrb[0].mxu0
  %v9086 = vadd.f32 0.0, %v9085
  %v9087 = vpop.f32.mrb[0].mxu0
  %v9088 = vadd.f32 0.0, %v9087
  %9089 = vmatprep.mubr.bf16.mxu0 %v7884
  %9090 = vmatmul.mubr.bf16.gmra.mrb[0].mxu0 %v7883
  %v9091 = vpop.f32.mrb[0].mxu0
  %v9092 = vadd.f32 0.0, %v9091
  %v9093 = vpop.f32.mrb[0].mxu0
  %v9094 = vadd.f32 0.0, %v9093
  %v9095 = vpop.f32.mrb[0].mxu0
  %v9096 = vadd.f32 0.0, %v9095
  %v9097 = vpop.f32.mrb[0].mxu0
  %v9098 = vadd.f32 0.0, %v9097
  %9099 = vmatprep.mubr.bf16.mxu0 %v7888
  %9100 = vmatmul.mubr.bf16.gmra.mrb[0].mxu0 %v7887
  %v9101 = vpop.f32.mrb[0].mxu0
  %v9102 = vadd.f32 0.0, %v9101
  %v9103 = vpop.f32.mrb[0].mxu0
  %v9104 = vadd.f32 0.0, %v9103
  %v9105 = vpop.f32.mrb[0].mxu0
  %v9106 = vadd.f32 0.0, %v9105
  %v9107 = vpop.f32.mrb[0].mxu0
  %v9108 = vadd.f32 0.0, %v9107
  %9109 = vmatprep.mubr.bf16.mxu0 %v7892
  %9110 = vmatmul.mubr.bf16.gmra.mrb[0].mxu0 %v7891
  %v9111 = vpop.f32.mrb[0].mxu0
  %v9112 = vadd.f32 0.0, %v9111
  %v9113 = vpop.f32.mrb[0].mxu0
  %v9114 = vadd.f32 0.0, %v9113
  %v9115 = vpop.f32.mrb[0].mxu0
  %v9116 = vpop.f32.mrb[0].mxu0
  %9117 = vdwg.mxu0
  %9118 = vmatprep.subr.bf16.mxu0 %v8590
  %9119 = vmatpush1.bf16.msra.mxu0 %v8589
  %9120 = vmatprep.subr.bf16.mxu0 %v8596
  %9121 = vmatpush1.bf16.msra.mxu0 %v8595
  %9122 = vmatprep.subr.bf16.mxu0 %v8602
  %9123 = vmatpush1.bf16.msra.mxu0 %v8601
  %9124 = vmatprep.subr.bf16.mxu0 %v8608
  %9125 = vmatpush1.bf16.msra.mxu0 %v8607
  %9126 = vmatprep.subr.bf16.mxu0 %v8614
  %9127 = vmatpush1.bf16.msra.mxu0 %v8613
  %9128 = vmatprep.subr.bf16.mxu0 %v8620
  %9129 = vmatpush1.bf16.msra.mxu0 %v8619
  %9130 = vmatprep.subr.bf16.mxu0 %v8626
  %9131 = vmatpush1.bf16.msra.mxu0 %v8625
  %9132 = vmatprep.subr.bf16.mxu0 %v8632
  %9133 = vmatpush1.bf16.msra.mxu0 %v8631
  %9134 = vmatprep.subr.bf16.mxu0 %v8638
  %9135 = vmatpush1.bf16.msra.mxu0 %v8637
  %9136 = vmatprep.subr.bf16.mxu0 %v8644
  %9137 = vmatpush1.bf16.msra.mxu0 %v8643
  %9138 = vmatprep.subr.bf16.mxu0 %v8650
  %9139 = vmatpush1.bf16.msra.mxu0 %v8649
  %9140 = vmatprep.subr.bf16.mxu0 %v8656
  %9141 = vmatpush1.bf16.msra.mxu0 %v8655
  %9142 = vmatprep.subr.bf16.mxu0 %v8662
  %9143 = vmatpush1.bf16.msra.mxu0 %v8661
  %9144 = vmatprep.subr.bf16.mxu0 %v8668
  %9145 = vmatpush1.bf16.msra.mxu0 %v8667
  %9146 = vmatprep.subr.bf16.mxu0 %v8674
  %9147 = vmatpush1.bf16.msra.mxu0 %v8673
  %9148 = vmatprep.subr.bf16.mxu0 %v8680
  %9149 = vmatpush1.bf16.msra.mxu0 %v8679
  %9150 = vmatprep.mubr.bf16.mxu0 %v7878
  %9151 = vmatmul.mubr.bf16.gmra.mrb[0].mxu0 %v7877
  %v9152 = vpop.f32.mrb[0].mxu0
  %v9153 = vadd.f32 %v9072, %v9152
  %v9154 = vpop.f32.mrb[0].mxu0
  %v9155 = vadd.f32 %v9074, %v9154
  %v9156 = vpop.f32.mrb[0].mxu0
  %v9157 = vadd.f32 %v9076, %v9156
  %v9158 = vpop.f32.mrb[0].mxu0
  %v9159 = vadd.f32 %v9078, %v9158
  %9160 = vmatprep.mubr.bf16.mxu0 %v7882
  %9161 = vmatmul.mubr.bf16.gmra.mrb[0].mxu0 %v7881
  %v9162 = vpop.f32.mrb[0].mxu0
  %v9163 = vadd.f32 %v9082, %v9162
  %v9164 = vpop.f32.mrb[0].mxu0
  %v9165 = vadd.f32 %v9084, %v9164
  %v9166 = vpop.f32.mrb[0].mxu0
  %v9167 = vadd.f32 %v9086, %v9166
  %v9168 = vpop.f32.mrb[0].mxu0
  %v9169 = vadd.f32 %v9088, %v9168
  %9170 = vmatprep.mubr.bf16.mxu0 %v7886
  %9171 = vmatmul.mubr.bf16.gmra.mrb[0].mxu0 %v7885
  %v9172 = vpop.f32.mrb[0].mxu0
  %v9173 = vadd.f32 %v9092, %v9172
  %v9174 = vpop.f32.mrb[0].mxu0
  %v9175 = vadd.f32 %v9094, %v9174
  %v9176 = vpop.f32.mrb[0].mxu0
  %v9177 = vadd.f32 %v9096, %v9176
  %v9178 = vpop.f32.mrb[0].mxu0
  %v9179 = vadd.f32 %v9098, %v9178
  %9180 = vmatprep.mubr.bf16.mxu0 %v7890
  %9181 = vmatmul.mubr.bf16.gmra.mrb[0].mxu0 %v7889
  %v9182 = vpop.f32.mrb[0].mxu0
  %v9183 = vadd.f32 %v9102, %v9182
  %v9184 = vpop.f32.mrb[0].mxu0
  %v9185 = vadd.f32 %v9104, %v9184
  %v9186 = vpop.f32.mrb[0].mxu0
  %v9187 = vadd.f32 %v9106, %v9186
  %v9188 = vpop.f32.mrb[0].mxu0
  %v9189 = vadd.f32 %v9108, %v9188
  %9190 = vmatprep.mubr.bf16.mxu0 %v7894
  %9191 = vmatmul.mubr.bf16.gmra.mrb[0].mxu0 %v7893
  %v9192 = vpop.f32.mrb[0].mxu0
  %v9193 = vadd.f32 %v9112, %v9192
  %v9194 = vpop.f32.mrb[0].mxu0
  %v9195 = vadd.f32 %v9114, %v9194
  %v9196 = vpop.f32.mrb[0].mxu0
  %v9197 = vpop.f32.mrb[0].mxu0
  %9198 = vdwg.mxu0
  %9199 = vmatprep.subr.bf16.mxu0 %v8496
  %9200 = vmatpush1.bf16.msra.mxu0 %v8495
  %9201 = vmatprep.subr.bf16.mxu0 %v8502
  %9202 = vmatpush1.bf16.msra.mxu0 %v8501
  %9203 = vmatprep.subr.bf16.mxu0 %v8508
  %9204 = vmatpush1.bf16.msra.mxu0 %v8507
  %9205 = vmatprep.subr.bf16.mxu0 %v8514
  %9206 = vmatpush1.bf16.msra.mxu0 %v8513
  %9207 = vmatprep.subr.bf16.mxu0 %v8520
  %9208 = vmatpush1.bf16.msra.mxu0 %v8519
  %9209 = vmatprep.subr.bf16.mxu0 %v8526
  %9210 = vmatpush1.bf16.msra.mxu0 %v8525
  %9211 = vmatprep.subr.bf16.mxu0 %v8532
  %9212 = vmatpush1.bf16.msra.mxu0 %v8531
  %9213 = vmatprep.subr.bf16.mxu0 %v8538
  %9214 = vmatpush1.bf16.msra.mxu0 %v8537
  %9215 = vmatprep.subr.bf16.mxu0 %v8544
  %9216 = vmatpush1.bf16.msra.mxu0 %v8543
  %9217 = vmatprep.subr.bf16.mxu0 %v8550
  %9218 = vmatpush1.bf16.msra.mxu0 %v8549
  %9219 = vmatprep.subr.bf16.mxu0 %v8556
  %9220 = vmatpush1.bf16.msra.mxu0 %v8555
  %9221 = vmatprep.subr.bf16.mxu0 %v8562
  %9222 = vmatpush1.bf16.msra.mxu0 %v8561
  %9223 = vmatprep.subr.bf16.mxu0 %v8568
  %9224 = vmatpush1.bf16.msra.mxu0 %v8567
  %9225 = vmatprep.subr.bf16.mxu0 %v8574
  %9226 = vmatpush1.bf16.msra.mxu0 %v8573
  %9227 = vmatprep.subr.bf16.mxu0 %v8580
  %9228 = vmatpush1.bf16.msra.mxu0 %v8579
  %9229 = vmatprep.subr.bf16.mxu0 %v8586
  %9230 = vmatpush1.bf16.msra.mxu0 %v8585
  %9231 = vmatprep.mubr.bf16.mxu0 %v7876
  %9232 = vmatmul.mubr.bf16.gmra.mrb[0].mxu0 %v7875
  %v9233 = vpop.f32.mrb[0].mxu0
  %v9234 = vadd.f32 0.0, %v9233
  %v9235 = vpop.f32.mrb[0].mxu0
  %v9236 = vadd.f32 0.0, %v9235
  %v9237 = vpop.f32.mrb[0].mxu0
  %v9238 = vadd.f32 0.0, %v9237
  %v9239 = vpop.f32.mrb[0].mxu0
  %v9240 = vadd.f32 0.0, %v9239
  %9241 = vmatprep.mubr.bf16.mxu0 %v7880
  %9242 = vmatmul.mubr.bf16.gmra.mrb[0].mxu0 %v7879
  %v9243 = vpop.f32.mrb[0].mxu0
  %v9244 = vadd.f32 0.0, %v9243
  %v9245 = vpop.f32.mrb[0].mxu0
  %v9246 = vadd.f32 0.0, %v9245
  %v9247 = vpop.f32.mrb[0].mxu0
  %v9248 = vadd.f32 0.0, %v9247
  %v9249 = vpop.f32.mrb[0].mxu0
  %v9250 = vadd.f32 0.0, %v9249
  %9251 = vmatprep.mubr.bf16.mxu0 %v7884
  %9252 = vmatmul.mubr.bf16.gmra.mrb[0].mxu0 %v7883
  %v9253 = vpop.f32.mrb[0].mxu0
  %v9254 = vadd.f32 0.0, %v9253
  %v9255 = vpop.f32.mrb[0].mxu0
  %v9256 = vadd.f32 0.0, %v9255
  %v9257 = vpop.f32.mrb[0].mxu0
  %v9258 = vadd.f32 0.0, %v9257
  %v9259 = vpop.f32.mrb[0].mxu0
  %v9260 = vadd.f32 0.0, %v9259
  %9261 = vmatprep.mubr.bf16.mxu0 %v7888
  %9262 = vmatmul.mubr.bf16.gmra.mrb[0].mxu0 %v7887
  %v9263 = vpop.f32.mrb[0].mxu0
  %v9264 = vadd.f32 0.0, %v9263
  %v9265 = vpop.f32.mrb[0].mxu0
  %v9266 = vadd.f32 0.0, %v9265
  %v9267 = vpop.f32.mrb[0].mxu0
  %v9268 = vadd.f32 0.0, %v9267
  %v9269 = vpop.f32.mrb[0].mxu0
  %v9270 = vadd.f32 0.0, %v9269
  %9271 = vmatprep.mubr.bf16.mxu0 %v7892
  %9272 = vmatmul.mubr.bf16.gmra.mrb[0].mxu0 %v7891
  %v9273 = vpop.f32.mrb[0].mxu0
  %v9274 = vadd.f32 0.0, %v9273
  %v9275 = vpop.f32.mrb[0].mxu0
  %v9276 = vadd.f32 0.0, %v9275
  %v9277 = vpop.f32.mrb[0].mxu0
  %v9278 = vpop.f32.mrb[0].mxu0
  %9279 = vdwg.mxu0
  %9280 = vmatprep.subr.bf16.mxu0 %v8592
  %9281 = vmatpush1.bf16.msra.mxu0 %v8591
  %9282 = vmatprep.subr.bf16.mxu0 %v8598
  %9283 = vmatpush1.bf16.msra.mxu0 %v8597
  %9284 = vmatprep.subr.bf16.mxu0 %v8604
  %9285 = vmatpush1.bf16.msra.mxu0 %v8603
  %9286 = vmatprep.subr.bf16.mxu0 %v8610
  %9287 = vmatpush1.bf16.msra.mxu0 %v8609
  %9288 = vmatprep.subr.bf16.mxu0 %v8616
  %9289 = vmatpush1.bf16.msra.mxu0 %v8615
  %9290 = vmatprep.subr.bf16.mxu0 %v8622
  %9291 = vmatpush1.bf16.msra.mxu0 %v8621
  %9292 = vmatprep.subr.bf16.mxu0 %v8628
  %9293 = vmatpush1.bf16.msra.mxu0 %v8627
  %9294 = vmatprep.subr.bf16.mxu0 %v8634
  %9295 = vmatpush1.bf16.msra.mxu0 %v8633
  %9296 = vmatprep.subr.bf16.mxu0 %v8640
  %9297 = vmatpush1.bf16.msra.mxu0 %v8639
  %9298 = vmatprep.subr.bf16.mxu0 %v8646
  %9299 = vmatpush1.bf16.msra.mxu0 %v8645
  %9300 = vmatprep.subr.bf16.mxu0 %v8652
  %9301 = vmatpush1.bf16.msra.mxu0 %v8651
  %9302 = vmatprep.subr.bf16.mxu0 %v8658
  %9303 = vmatpush1.bf16.msra.mxu0 %v8657
  %9304 = vmatprep.subr.bf16.mxu0 %v8664
  %9305 = vmatpush1.bf16.msra.mxu0 %v8663
  %9306 = vmatprep.subr.bf16.mxu0 %v8670
  %9307 = vmatpush1.bf16.msra.mxu0 %v8669
  %9308 = vmatprep.subr.bf16.mxu0 %v8676
  %9309 = vmatpush1.bf16.msra.mxu0 %v8675
  %9310 = vmatprep.subr.bf16.mxu0 %v8682
  %9311 = vmatpush1.bf16.msra.mxu0 %v8681
  %9312 = vmatprep.mubr.bf16.mxu0 %v7878
  %9313 = vmatmul.mubr.bf16.gmra.mrb[0].mxu0 %v7877
  %v9314 = vpop.f32.mrb[0].mxu0
  %v9315 = vadd.f32 %v9234, %v9314
  %v9316 = vpop.f32.mrb[0].mxu0
  %v9317 = vadd.f32 %v9236, %v9316
  %v9318 = vpop.f32.mrb[0].mxu0
  %v9319 = vadd.f32 %v9238, %v9318
  %v9320 = vpop.f32.mrb[0].mxu0
  %v9321 = vadd.f32 %v9240, %v9320
  %9322 = vmatprep.mubr.bf16.mxu0 %v7882
  %9323 = vmatmul.mubr.bf16.gmra.mrb[0].mxu0 %v7881
  %v9324 = vpop.f32.mrb[0].mxu0
  %v9325 = vadd.f32 %v9244, %v9324
  %v9326 = vpop.f32.mrb[0].mxu0
  %v9327 = vadd.f32 %v9246, %v9326
  %v9328 = vpop.f32.mrb[0].mxu0
  %v9329 = vadd.f32 %v9248, %v9328
  %v9330 = vpop.f32.mrb[0].mxu0
  %v9331 = vadd.f32 %v9250, %v9330
  %9332 = vmatprep.mubr.bf16.mxu0 %v7886
  %9333 = vmatmul.mubr.bf16.gmra.mrb[0].mxu0 %v7885
  %v9334 = vpop.f32.mrb[0].mxu0
  %v9335 = vadd.f32 %v9254, %v9334
  %v9336 = vpop.f32.mrb[0].mxu0
  %v9337 = vadd.f32 %v9256, %v9336
  %v9338 = vpop.f32.mrb[0].mxu0
  %v9339 = vadd.f32 %v9258, %v9338
  %v9340 = vpop.f32.mrb[0].mxu0
  %v9341 = vadd.f32 %v9260, %v9340
  %9342 = vmatprep.mubr.bf16.mxu0 %v7890
  %9343 = vmatmul.mubr.bf16.gmra.mrb[0].mxu0 %v7889
  %v9344 = vpop.f32.mrb[0].mxu0
  %v9345 = vadd.f32 %v9264, %v9344
  %v9346 = vpop.f32.mrb[0].mxu0
  %v9347 = vadd.f32 %v9266, %v9346
  %v9348 = vpop.f32.mrb[0].mxu0
  %v9349 = vadd.f32 %v9268, %v9348
  %v9350 = vpop.f32.mrb[0].mxu0
  %v9351 = vadd.f32 %v9270, %v9350
  %9352 = vmatprep.mubr.bf16.mxu0 %v7894
  %9353 = vmatmul.mubr.bf16.gmra.mrb[0].mxu0 %v7893
  %v9354 = vpop.f32.mrb[0].mxu0
  %v9355 = vadd.f32 %v9274, %v9354
  %v9356 = vpop.f32.mrb[0].mxu0
  %v9357 = vadd.f32 %v9276, %v9356
  %v9358 = vpop.f32.mrb[0].mxu0
  %v9359 = vpop.f32.mrb[0].mxu0
  %9360 = vdwg.mxu0
  %v9361 = vadd.f32 %v7556, %v8991
  %v9362 = vadd.f32 %v7557, %v8993
  %v9363 = vadd.f32 %v7558, %v9153
  %v9364 = vadd.f32 %v7559, %v9155
  %v9365 = vadd.f32 %v7560, %v9315
  %v9366 = vadd.f32 %v7561, %v9317
  %v9367 = vadd.f32 %v7562, %v8995
  %v9368 = vadd.f32 %v7563, %v8997
  %v9369 = vadd.f32 %v7564, %v9157
  %v9370 = vadd.f32 %v7565, %v9159
  %v9371 = vadd.f32 %v7566, %v9319
  %v9372 = vadd.f32 %v7567, %v9321
  %v9373 = vadd.f32 %v7568, %v9001
  %v9374 = vadd.f32 %v7569, %v9003
  %v9375 = vadd.f32 %v7570, %v9163
  %v9376 = vadd.f32 %v7571, %v9165
  %v9377 = vadd.f32 %v7572, %v9325
  %v9378 = vadd.f32 %v7573, %v9327
  %v9379 = vadd.f32 %v7574, %v9005
  %v9380 = vadd.f32 %v7575, %v9007
  %v9381 = vadd.f32 %v7576, %v9167
  %v9382 = vadd.f32 %v7577, %v9169
  %v9383 = vadd.f32 %v7578, %v9329
  %v9384 = vadd.f32 %v7579, %v9331
  %v9385 = vadd.f32 %v7580, %v9011
  %v9386 = vadd.f32 %v7581, %v9013
  %v9387 = vadd.f32 %v7582, %v9173
  %v9388 = vadd.f32 %v7583, %v9175
  %v9389 = vadd.f32 %v7584, %v9335
  %v9390 = vadd.f32 %v7585, %v9337
  %v9391 = vadd.f32 %v7586, %v9015
  %v9392 = vadd.f32 %v7587, %v9017
  %v9393 = vadd.f32 %v7588, %v9177
  %v9394 = vadd.f32 %v7589, %v9179
  %v9395 = vadd.f32 %v7590, %v9339
  %v9396 = vadd.f32 %v7591, %v9341
  %v9397 = vadd.f32 %v7592, %v9021
  %v9398 = vadd.f32 %v7593, %v9023
  %v9399 = vadd.f32 %v7594, %v9183
  %v9400 = vadd.f32 %v7595, %v9185
  %v9401 = vadd.f32 %v7596, %v9345
  %v9402 = vadd.f32 %v7597, %v9347
  %v9403 = vadd.f32 %v7598, %v9025
  %v9404 = vadd.f32 %v7599, %v9027
  %v9405 = vadd.f32 %v7600, %v9187
  %v9406 = vadd.f32 %v7601, %v9189
  %v9407 = vadd.f32 %v7602, %v9349
  %v9408 = vadd.f32 %v7603, %v9351
  %v9409 = vadd.f32 %v7604, %v9031
  %v9410 = vadd.f32 %v7605, %v9033
  %v9411 = vadd.f32 %v7606, %v9193
  %v9412 = vadd.f32 %v7607, %v9195
  %v9413 = vadd.f32 %v7608, %v9355
  %v9414 = vadd.f32 %v7609, %v9357
  %v9415 = vld [vmem:[#allocation2 + $0x40] sm:$0xff]
  %v9416 = vld [vmem:[#allocation2 + $0x48] sm:$0xff]
  %v9417 = vld [vmem:[#allocation2 + $0x50] sm:$0xff]
  %v9418 = vld [vmem:[#allocation2 + $0x58] sm:$0xff]
  %v9419 = vld [vmem:[#allocation2 + $0x60] sm:$0xff]
  %v9420 = vld [vmem:[#allocation2 + $0x68] sm:$0xff]
  %v9421 = vld [vmem:[#allocation2 + $0x70] sm:$0xff]
  %v9422 = vld [vmem:[#allocation2 + $0x78] sm:$0xff]
  %v9423 = vld [vmem:[#allocation2 + $0x80] sm:$0xff]
  %v9424 = vld [vmem:[#allocation2 + $0x88] sm:$0xff]
  %v9425 = vld [vmem:[#allocation2 + $0x90] sm:$0xff]
  %v9426 = vld [vmem:[#allocation2 + $0x98] sm:$0xff]
  %v9427 = vld [vmem:[#allocation2 + $0xa0] sm:$0xff]
  %v9428 = vld [vmem:[#allocation2 + $0xa8] sm:$0xff]
  %v9429 = vld [vmem:[#allocation2 + $0xb0] sm:$0xff]
  %v9430 = vld [vmem:[#allocation2 + $0xb8] sm:$0xff]
  %v9431 = vld [vmem:[#allocation2 + $0xc0] sm:$0xff]
  %v9432 = vld [vmem:[#allocation2 + $0xc8] sm:$0xff]
  %s9433 = scalar_lea.vmem %s3, 6144
  %v9434 = vld [vmem:[%s9433] sm:$0xff]
  %v9435 = vld [vmem:[%s9433 + $0x8] sm:$0xff]
  %v9436 = vld [vmem:[%s9433 + $0x10] sm:$0xff]
  %v9437 = vld [vmem:[%s9433 + $0x18] sm:$0xff]
  %v9438 = vld [vmem:[%s9433 + $0x20] sm:$0xff]
  %v9439 = vld [vmem:[%s9433 + $0x28] sm:$0xff]
  %v9440 = vld [vmem:[%s9433 + $0x30] sm:$0xff]
  %v9441 = vld [vmem:[%s9433 + $0x38] sm:$0xff]
  %v9442 = vld [vmem:[%s9433 + $0x40] sm:$0xff]
  %v9443 = vld [vmem:[%s9433 + $0x48] sm:$0xff]
  %v9444 = vld [vmem:[%s9433 + $0x50] sm:$0xff]
  %v9445 = vld [vmem:[%s9433 + $0x58] sm:$0xff]
  %v9446 = vld [vmem:[%s9433 + $0x60] sm:$0xff]
  %v9447 = vld [vmem:[%s9433 + $0x68] sm:$0xff]
  %v9448 = vld [vmem:[%s9433 + $0x70] sm:$0xff]
  %v9449 = vld [vmem:[%s9433 + $0x78] sm:$0xff]
  %v9450 = vld [vmem:[%s9433 + $0x80] sm:$0xff]
  %v9451 = vld [vmem:[%s9433 + $0x88] sm:$0xff]
  %v9452 = vld [vmem:[%s9433 + $0x90] sm:$0xff]
  %v9453 = vld [vmem:[%s9433 + $0x98] sm:$0xff]
  %v9454 = vld [vmem:[%s9433 + $0xa0] sm:$0xff]
  %v9455 = vld [vmem:[%s9433 + $0xa8] sm:$0xff]
  %v9456 = vld [vmem:[%s9433 + $0xb0] sm:$0xff]
  %v9457 = vld [vmem:[%s9433 + $0xb8] sm:$0xff]
  %v9458 = vld [vmem:[%s9433 + $0xc0] sm:$0xff]
  %v9459 = vld [vmem:[%s9433 + $0xc8] sm:$0xff]
  %v9460 = vld [vmem:[%s9433 + $0xd0] sm:$0xff]
  %v9461 = vld [vmem:[%s9433 + $0xd8] sm:$0xff]
  %v9462 = vld [vmem:[%s9433 + $0xe0] sm:$0xff]
  %v9463 = vld [vmem:[%s9433 + $0xe8] sm:$0xff]
  %v9464 = vld [vmem:[%s9433 + $0xf0] sm:$0xff]
  %v9465 = vld [vmem:[%s9433 + $0xf8] sm:$0xff]
  %v9466 = vld [vmem:[%s9433 + $0x100] sm:$0xff]
  %v9467 = vld [vmem:[%s9433 + $0x108] sm:$0xff]
  %v9468 = vld [vmem:[%s9433 + $0x110] sm:$0xff]
  %v9469 = vld [vmem:[%s9433 + $0x118] sm:$0xff]
  %v9470 = vld [vmem:[%s9433 + $0x120] sm:$0xff]
  %v9471 = vld [vmem:[%s9433 + $0x128] sm:$0xff]
  %v9472 = vld [vmem:[%s9433 + $0x130] sm:$0xff]
  %v9473 = vld [vmem:[%s9433 + $0x138] sm:$0xff]
  %v9474 = vld [vmem:[%s9433 + $0x140] sm:$0xff]
  %v9475 = vld [vmem:[%s9433 + $0x148] sm:$0xff]
  %v9476 = vld [vmem:[%s9433 + $0x150] sm:$0xff]
  %v9477 = vld [vmem:[%s9433 + $0x158] sm:$0xff]
  %v9478 = vld [vmem:[%s9433 + $0x160] sm:$0xff]
  %v9479 = vld [vmem:[%s9433 + $0x168] sm:$0xff]
  %v9480 = vld [vmem:[%s9433 + $0x170] sm:$0xff]
  %v9481 = vld [vmem:[%s9433 + $0x178] sm:$0xff]
  %v9482 = vld [vmem:[%s9433 + $0x180] sm:$0xff]
  %v9483 = vld [vmem:[%s9433 + $0x188] sm:$0xff]
  %v9484 = vld [vmem:[%s9433 + $0x190] sm:$0xff]
  %v9485 = vld [vmem:[%s9433 + $0x198] sm:$0xff]
  %v9486 = vld [vmem:[%s9433 + $0x1a0] sm:$0xff]
  %v9487 = vld [vmem:[%s9433 + $0x1a8] sm:$0xff]
  %v9488 = vld [vmem:[%s9433 + $0x1b0] sm:$0xff]
  %v9489 = vld [vmem:[%s9433 + $0x1b8] sm:$0xff]
  %v9490 = vld [vmem:[%s9433 + $0x1c0] sm:$0xff]
  %v9491 = vld [vmem:[%s9433 + $0x1c8] sm:$0xff]
  %v9492 = vld [vmem:[%s9433 + $0x1d0] sm:$0xff]
  %v9493 = vld [vmem:[%s9433 + $0x1d8] sm:$0xff]
  %v9494 = vld [vmem:[%s9433 + $0x1e0] sm:$0xff]
  %v9495 = vld [vmem:[%s9433 + $0x1e8] sm:$0xff]
  %v9496 = vld [vmem:[%s9433 + $0x1f0] sm:$0xff]
  %v9497 = vld [vmem:[%s9433 + $0x1f8] sm:$0xff]
  %v9498 = vld [vmem:[%s9433 + $0x200] sm:$0xff]
  %v9499 = vld [vmem:[%s9433 + $0x208] sm:$0xff]
  %v9500 = vld [vmem:[%s9433 + $0x210] sm:$0xff]
  %v9501 = vld [vmem:[%s9433 + $0x218] sm:$0xff]
  %v9502 = vld [vmem:[%s9433 + $0x220] sm:$0xff]
  %v9503 = vld [vmem:[%s9433 + $0x228] sm:$0xff]
  %v9504 = vld [vmem:[%s9433 + $0x230] sm:$0xff]
  %v9505 = vld [vmem:[%s9433 + $0x238] sm:$0xff]
  %v9506 = vld [vmem:[%s9433 + $0x240] sm:$0xff]
  %v9507 = vld [vmem:[%s9433 + $0x248] sm:$0xff]
  %v9508 = vld [vmem:[%s9433 + $0x250] sm:$0xff]
  %v9509 = vld [vmem:[%s9433 + $0x258] sm:$0xff]
  %v9510 = vld [vmem:[%s9433 + $0x260] sm:$0xff]
  %v9511 = vld [vmem:[%s9433 + $0x268] sm:$0xff]
  %v9512 = vld [vmem:[%s9433 + $0x270] sm:$0xff]
  %v9513 = vld [vmem:[%s9433 + $0x278] sm:$0xff]
  %v9514 = vld [vmem:[%s9433 + $0x280] sm:$0xff]
  %v9515 = vld [vmem:[%s9433 + $0x288] sm:$0xff]
  %v9516 = vld [vmem:[%s9433 + $0x290] sm:$0xff]
  %v9517 = vld [vmem:[%s9433 + $0x298] sm:$0xff]
  %v9518 = vld [vmem:[%s9433 + $0x2a0] sm:$0xff]
  %v9519 = vld [vmem:[%s9433 + $0x2a8] sm:$0xff]
  %v9520 = vld [vmem:[%s9433 + $0x2b0] sm:$0xff]
  %v9521 = vld [vmem:[%s9433 + $0x2b8] sm:$0xff]
  %v9522 = vld [vmem:[%s9433 + $0x2c0] sm:$0xff]
  %v9523 = vld [vmem:[%s9433 + $0x2c8] sm:$0xff]
  %v9524 = vld [vmem:[%s9433 + $0x2d0] sm:$0xff]
  %v9525 = vld [vmem:[%s9433 + $0x2d8] sm:$0xff]
  %v9526 = vld [vmem:[%s9433 + $0x2e0] sm:$0xff]
  %v9527 = vld [vmem:[%s9433 + $0x2e8] sm:$0xff]
  %v9528 = vld [vmem:[%s9433 + $0x2f0] sm:$0xff]
  %v9529 = vld [vmem:[%s9433 + $0x2f8] sm:$0xff]
  %v9530 = vld [vmem:[%s9433 + $0x300] sm:$0xff]
  %v9531 = vld [vmem:[%s9433 + $0x308] sm:$0xff]
  %v9532 = vld [vmem:[%s9433 + $0x310] sm:$0xff]
  %v9533 = vld [vmem:[%s9433 + $0x318] sm:$0xff]
  %v9534 = vld [vmem:[%s9433 + $0x320] sm:$0xff]
  %v9535 = vld [vmem:[%s9433 + $0x328] sm:$0xff]
  %v9536 = vld [vmem:[%s9433 + $0x330] sm:$0xff]
  %v9537 = vld [vmem:[%s9433 + $0x338] sm:$0xff]
  %v9538 = vld [vmem:[%s9433 + $0x340] sm:$0xff]
  %v9539 = vld [vmem:[%s9433 + $0x348] sm:$0xff]
  %v9540 = vld [vmem:[%s9433 + $0x350] sm:$0xff]
  %v9541 = vld [vmem:[%s9433 + $0x358] sm:$0xff]
  %v9542 = vld [vmem:[%s9433 + $0x360] sm:$0xff]
  %v9543 = vld [vmem:[%s9433 + $0x368] sm:$0xff]
  %v9544 = vld [vmem:[%s9433 + $0x370] sm:$0xff]
  %v9545 = vld [vmem:[%s9433 + $0x378] sm:$0xff]
  %v9546 = vld [vmem:[%s9433 + $0x380] sm:$0xff]
  %v9547 = vld [vmem:[%s9433 + $0x388] sm:$0xff]
  %v9548 = vld [vmem:[%s9433 + $0x390] sm:$0xff]
  %v9549 = vld [vmem:[%s9433 + $0x398] sm:$0xff]
  %v9550 = vld [vmem:[%s9433 + $0x3a0] sm:$0xff]
  %v9551 = vld [vmem:[%s9433 + $0x3a8] sm:$0xff]
  %v9552 = vld [vmem:[%s9433 + $0x3b0] sm:$0xff]
  %v9553 = vld [vmem:[%s9433 + $0x3b8] sm:$0xff]
  %v9554 = vld [vmem:[%s9433 + $0x3c0] sm:$0xff]
  %v9555 = vld [vmem:[%s9433 + $0x3c8] sm:$0xff]
  %v9556 = vld [vmem:[%s9433 + $0x3d0] sm:$0xff]
  %v9557 = vld [vmem:[%s9433 + $0x3d8] sm:$0xff]
  %v9558 = vld [vmem:[%s9433 + $0x3e0] sm:$0xff]
  %v9559 = vld [vmem:[%s9433 + $0x3e8] sm:$0xff]
  %v9560 = vld [vmem:[%s9433 + $0x3f0] sm:$0xff]
  %v9561 = vld [vmem:[%s9433 + $0x3f8] sm:$0xff]
  %v9562 = vld [vmem:[%s9433 + $0x400] sm:$0xff]
  %v9563 = vld [vmem:[%s9433 + $0x408] sm:$0xff]
  %v9564 = vld [vmem:[%s9433 + $0x410] sm:$0xff]
  %v9565 = vld [vmem:[%s9433 + $0x418] sm:$0xff]
  %v9566 = vld [vmem:[%s9433 + $0x420] sm:$0xff]
  %v9567 = vld [vmem:[%s9433 + $0x428] sm:$0xff]
  %v9568 = vld [vmem:[%s9433 + $0x430] sm:$0xff]
  %v9569 = vld [vmem:[%s9433 + $0x438] sm:$0xff]
  %v9570 = vld [vmem:[%s9433 + $0x440] sm:$0xff]
  %v9571 = vld [vmem:[%s9433 + $0x448] sm:$0xff]
  %v9572 = vld [vmem:[%s9433 + $0x450] sm:$0xff]
  %v9573 = vld [vmem:[%s9433 + $0x458] sm:$0xff]
  %v9574 = vld [vmem:[%s9433 + $0x460] sm:$0xff]
  %v9575 = vld [vmem:[%s9433 + $0x468] sm:$0xff]
  %v9576 = vld [vmem:[%s9433 + $0x470] sm:$0xff]
  %v9577 = vld [vmem:[%s9433 + $0x478] sm:$0xff]
  %v9578 = vld [vmem:[%s9433 + $0x480] sm:$0xff]
  %v9579 = vld [vmem:[%s9433 + $0x488] sm:$0xff]
  %v9580 = vld [vmem:[%s9433 + $0x490] sm:$0xff]
  %v9581 = vld [vmem:[%s9433 + $0x498] sm:$0xff]
  %v9582 = vld [vmem:[%s9433 + $0x4a0] sm:$0xff]
  %v9583 = vld [vmem:[%s9433 + $0x4a8] sm:$0xff]
  %v9584 = vld [vmem:[%s9433 + $0x4b0] sm:$0xff]
  %v9585 = vld [vmem:[%s9433 + $0x4b8] sm:$0xff]
  %v9586 = vld [vmem:[%s9433 + $0x4c0] sm:$0xff]
  %v9587 = vld [vmem:[%s9433 + $0x4c8] sm:$0xff]
  %v9588 = vld [vmem:[%s9433 + $0x4d0] sm:$0xff]
  %v9589 = vld [vmem:[%s9433 + $0x4d8] sm:$0xff]
  %v9590 = vld [vmem:[%s9433 + $0x4e0] sm:$0xff]
  %v9591 = vld [vmem:[%s9433 + $0x4e8] sm:$0xff]
  %v9592 = vld [vmem:[%s9433 + $0x4f0] sm:$0xff]
  %v9593 = vld [vmem:[%s9433 + $0x4f8] sm:$0xff]
  %v9594 = vld [vmem:[%s9433 + $0x500] sm:$0xff]
  %v9595 = vld [vmem:[%s9433 + $0x508] sm:$0xff]
  %v9596 = vld [vmem:[%s9433 + $0x510] sm:$0xff]
  %v9597 = vld [vmem:[%s9433 + $0x518] sm:$0xff]
  %v9598 = vld [vmem:[%s9433 + $0x520] sm:$0xff]
  %v9599 = vld [vmem:[%s9433 + $0x528] sm:$0xff]
  %v9600 = vld [vmem:[%s9433 + $0x530] sm:$0xff]
  %v9601 = vld [vmem:[%s9433 + $0x538] sm:$0xff]
  %v9602 = vld [vmem:[%s9433 + $0x540] sm:$0xff]
  %v9603 = vld [vmem:[%s9433 + $0x548] sm:$0xff]
  %v9604 = vld [vmem:[%s9433 + $0x550] sm:$0xff]
  %v9605 = vld [vmem:[%s9433 + $0x558] sm:$0xff]
  %v9606 = vld [vmem:[%s9433 + $0x560] sm:$0xff]
  %v9607 = vld [vmem:[%s9433 + $0x568] sm:$0xff]
  %v9608 = vld [vmem:[%s9433 + $0x570] sm:$0xff]
  %v9609 = vld [vmem:[%s9433 + $0x578] sm:$0xff]
  %v9610 = vld [vmem:[%s9433 + $0x580] sm:$0xff]
  %v9611 = vld [vmem:[%s9433 + $0x588] sm:$0xff]
  %v9612 = vld [vmem:[%s9433 + $0x590] sm:$0xff]
  %v9613 = vld [vmem:[%s9433 + $0x598] sm:$0xff]
  %v9614 = vld [vmem:[%s9433 + $0x5a0] sm:$0xff]
  %v9615 = vld [vmem:[%s9433 + $0x5a8] sm:$0xff]
  %v9616 = vld [vmem:[%s9433 + $0x5b0] sm:$0xff]
  %v9617 = vld [vmem:[%s9433 + $0x5b8] sm:$0xff]
  %v9618 = vld [vmem:[%s9433 + $0x5c0] sm:$0xff]
  %v9619 = vld [vmem:[%s9433 + $0x5c8] sm:$0xff]
  %v9620 = vld [vmem:[%s9433 + $0x5d0] sm:$0xff]
  %v9621 = vld [vmem:[%s9433 + $0x5d8] sm:$0xff]
  %v9622 = vld [vmem:[%s9433 + $0x5e0] sm:$0xff]
  %v9623 = vld [vmem:[%s9433 + $0x5e8] sm:$0xff]
  %v9624 = vld [vmem:[%s9433 + $0x5f0] sm:$0xff]
  %v9625 = vld [vmem:[%s9433 + $0x5f8] sm:$0xff]
  %v9644 = vunpack.c.l.b16 %v9415
  %v9645 = vunpack.c.h.b16 %v9415
  %v9646 = vunpack.c.l.b16 %v9416
  %v9647 = vunpack.c.h.b16 %v9416
  %v9648 = vunpack.c.l.b16 %v9417
  %v9649 = vunpack.c.h.b16 %v9417
  %v9650 = vunpack.c.l.b16 %v9418
  %v9651 = vunpack.c.h.b16 %v9418
  %v9652 = vunpack.c.l.b16 %v9419
  %v9653 = vunpack.c.h.b16 %v9419
  %v9654 = vunpack.c.l.b16 %v9420
  %v9655 = vunpack.c.h.b16 %v9420
  %v9656 = vunpack.c.l.b16 %v9421
  %v9657 = vunpack.c.h.b16 %v9421
  %v9658 = vunpack.c.l.b16 %v9422
  %v9659 = vunpack.c.h.b16 %v9422
  %v9660 = vunpack.c.l.b16 %v9423
  %v9661 = vunpack.c.h.b16 %v9423
  %v9662 = vunpack.c.l.b16 %v9424
  %v9663 = vunpack.c.h.b16 %v9424
  %v9664 = vunpack.c.l.b16 %v9425
  %v9665 = vunpack.c.h.b16 %v9425
  %v9666 = vunpack.c.l.b16 %v9426
  %v9667 = vunpack.c.h.b16 %v9426
  %v9668 = vunpack.c.l.b16 %v9427
  %v9669 = vunpack.c.h.b16 %v9427
  %v9670 = vunpack.c.l.b16 %v9428
  %v9671 = vunpack.c.h.b16 %v9428
  %v9672 = vunpack.c.l.b16 %v9429
  %v9673 = vunpack.c.h.b16 %v9429
  %v9674 = vunpack.c.l.b16 %v9430
  %v9675 = vunpack.c.h.b16 %v9430
  %v9676 = vunpack.c.l.b16 %v9431
  %v9677 = vunpack.c.h.b16 %v9431
  %v9678 = vunpack.c.l.b16 %v9432
  %v9679 = vunpack.c.h.b16 %v9432
  %v9680 = vpack.c.b16 %v9648, %v9644
  %v9681 = vpack.c.b16 %v9649, %v9645
  %v9682 = vpack.c.b16 %v9650, %v9646
  %v9683 = vpack.c.b16 %v9651, %v9647
  %v9684 = vpack.c.b16 %v9656, %v9652
  %v9685 = vpack.c.b16 %v9657, %v9653
  %v9686 = vpack.c.b16 %v9658, %v9654
  %v9687 = vpack.c.b16 %v9659, %v9655
  %v9688 = vpack.c.b16 %v9664, %v9660
  %v9689 = vpack.c.b16 %v9665, %v9661
  %v9690 = vpack.c.b16 %v9666, %v9662
  %v9691 = vpack.c.b16 %v9667, %v9663
  %v9692 = vpack.c.b16 %v9672, %v9668
  %v9693 = vpack.c.b16 %v9673, %v9669
  %v9694 = vpack.c.b16 %v9674, %v9670
  %v9695 = vpack.c.b16 %v9675, %v9671
  %v9696 = vpack.c.b16 %v9676, %v9676
  %v9697 = vpack.c.b16 %v9677, %v9677
  %v9698 = vpack.c.b16 %v9678, %v9678
  %v9699 = vpack.c.b16 %v9679, %v9679
  %v9912 = vunpack.c.l.b16 %v9434
  %v9913 = vunpack.c.h.b16 %v9434
  %v9914 = vunpack.c.l.b16 %v9435
  %v9915 = vunpack.c.h.b16 %v9435
  %v9916 = vunpack.c.l.b16 %v9436
  %v9917 = vunpack.c.h.b16 %v9436
  %v9918 = vunpack.c.l.b16 %v9437
  %v9919 = vunpack.c.h.b16 %v9437
  %v9920 = vunpack.c.l.b16 %v9438
  %v9921 = vunpack.c.h.b16 %v9438
  %v9922 = vunpack.c.l.b16 %v9439
  %v9923 = vunpack.c.h.b16 %v9439
  %v9924 = vunpack.c.l.b16 %v9440
  %v9925 = vunpack.c.h.b16 %v9440
  %v9926 = vunpack.c.l.b16 %v9441
  %v9927 = vunpack.c.h.b16 %v9441
  %v9928 = vunpack.c.l.b16 %v9442
  %v9929 = vunpack.c.h.b16 %v9442
  %v9930 = vunpack.c.l.b16 %v9443
  %v9931 = vunpack.c.h.b16 %v9443
  %v9932 = vunpack.c.l.b16 %v9444
  %v9933 = vunpack.c.h.b16 %v9444
  %v9934 = vunpack.c.l.b16 %v9445
  %v9935 = vunpack.c.h.b16 %v9445
  %v9936 = vunpack.c.l.b16 %v9446
  %v9937 = vunpack.c.h.b16 %v9446
  %v9938 = vunpack.c.l.b16 %v9447
  %v9939 = vunpack.c.h.b16 %v9447
  %v9940 = vunpack.c.l.b16 %v9448
  %v9941 = vunpack.c.h.b16 %v9448
  %v9942 = vunpack.c.l.b16 %v9449
  %v9943 = vunpack.c.h.b16 %v9449
  %v9944 = vunpack.c.l.b16 %v9450
  %v9945 = vunpack.c.h.b16 %v9450
  %v9946 = vunpack.c.l.b16 %v9451
  %v9947 = vunpack.c.h.b16 %v9451
  %v9948 = vunpack.c.l.b16 %v9452
  %v9949 = vunpack.c.h.b16 %v9452
  %v9950 = vunpack.c.l.b16 %v9453
  %v9951 = vunpack.c.h.b16 %v9453
  %v9952 = vunpack.c.l.b16 %v9454
  %v9953 = vunpack.c.h.b16 %v9454
  %v9954 = vunpack.c.l.b16 %v9455
  %v9955 = vunpack.c.h.b16 %v9455
  %v9956 = vunpack.c.l.b16 %v9456
  %v9957 = vunpack.c.h.b16 %v9456
  %v9958 = vunpack.c.l.b16 %v9457
  %v9959 = vunpack.c.h.b16 %v9457
  %v9960 = vunpack.c.l.b16 %v9458
  %v9961 = vunpack.c.h.b16 %v9458
  %v9962 = vunpack.c.l.b16 %v9459
  %v9963 = vunpack.c.h.b16 %v9459
  %v9964 = vunpack.c.l.b16 %v9460
  %v9965 = vunpack.c.h.b16 %v9460
  %v9966 = vunpack.c.l.b16 %v9461
  %v9967 = vunpack.c.h.b16 %v9461
  %v9968 = vunpack.c.l.b16 %v9462
  %v9969 = vunpack.c.h.b16 %v9462
  %v9970 = vunpack.c.l.b16 %v9463
  %v9971 = vunpack.c.h.b16 %v9463
  %v9972 = vunpack.c.l.b16 %v9464
  %v9973 = vunpack.c.h.b16 %v9464
  %v9974 = vunpack.c.l.b16 %v9465
  %v9975 = vunpack.c.h.b16 %v9465
  %v9976 = vunpack.c.l.b16 %v9466
  %v9977 = vunpack.c.h.b16 %v9466
  %v9978 = vunpack.c.l.b16 %v9467
  %v9979 = vunpack.c.h.b16 %v9467
  %v9980 = vunpack.c.l.b16 %v9468
  %v9981 = vunpack.c.h.b16 %v9468
  %v9982 = vunpack.c.l.b16 %v9469
  %v9983 = vunpack.c.h.b16 %v9469
  %v9984 = vunpack.c.l.b16 %v9470
  %v9985 = vunpack.c.h.b16 %v9470
  %v9986 = vunpack.c.l.b16 %v9471
  %v9987 = vunpack.c.h.b16 %v9471
  %v9988 = vunpack.c.l.b16 %v9472
  %v9989 = vunpack.c.h.b16 %v9472
  %v9990 = vunpack.c.l.b16 %v9473
  %v9991 = vunpack.c.h.b16 %v9473
  %v9992 = vunpack.c.l.b16 %v9474
  %v9993 = vunpack.c.h.b16 %v9474
  %v9994 = vunpack.c.l.b16 %v9475
  %v9995 = vunpack.c.h.b16 %v9475
  %v9996 = vunpack.c.l.b16 %v9476
  %v9997 = vunpack.c.h.b16 %v9476
  %v9998 = vunpack.c.l.b16 %v9477
  %v9999 = vunpack.c.h.b16 %v9477
  %v10000 = vunpack.c.l.b16 %v9478
  %v10001 = vunpack.c.h.b16 %v9478
  %v10002 = vunpack.c.l.b16 %v9479
  %v10003 = vunpack.c.h.b16 %v9479
  %v10004 = vunpack.c.l.b16 %v9480
  %v10005 = vunpack.c.h.b16 %v9480
  %v10006 = vunpack.c.l.b16 %v9481
  %v10007 = vunpack.c.h.b16 %v9481
  %v10008 = vunpack.c.l.b16 %v9482
  %v10009 = vunpack.c.h.b16 %v9482
  %v10010 = vunpack.c.l.b16 %v9483
  %v10011 = vunpack.c.h.b16 %v9483
  %v10012 = vunpack.c.l.b16 %v9484
  %v10013 = vunpack.c.h.b16 %v9484
  %v10014 = vunpack.c.l.b16 %v9485
  %v10015 = vunpack.c.h.b16 %v9485
  %v10016 = vunpack.c.l.b16 %v9486
  %v10017 = vunpack.c.h.b16 %v9486
  %v10018 = vunpack.c.l.b16 %v9487
  %v10019 = vunpack.c.h.b16 %v9487
  %v10020 = vunpack.c.l.b16 %v9488
  %v10021 = vunpack.c.h.b16 %v9488
  %v10022 = vunpack.c.l.b16 %v9489
  %v10023 = vunpack.c.h.b16 %v9489
  %v10024 = vunpack.c.l.b16 %v9490
  %v10025 = vunpack.c.h.b16 %v9490
  %v10026 = vunpack.c.l.b16 %v9491
  %v10027 = vunpack.c.h.b16 %v9491
  %v10028 = vunpack.c.l.b16 %v9492
  %v10029 = vunpack.c.h.b16 %v9492
  %v10030 = vunpack.c.l.b16 %v9493
  %v10031 = vunpack.c.h.b16 %v9493
  %v10032 = vunpack.c.l.b16 %v9494
  %v10033 = vunpack.c.h.b16 %v9494
  %v10034 = vunpack.c.l.b16 %v9495
  %v10035 = vunpack.c.h.b16 %v9495
  %v10036 = vunpack.c.l.b16 %v9496
  %v10037 = vunpack.c.h.b16 %v9496
  %v10038 = vunpack.c.l.b16 %v9497
  %v10039 = vunpack.c.h.b16 %v9497
  %v10040 = vunpack.c.l.b16 %v9498
  %v10041 = vunpack.c.h.b16 %v9498
  %v10042 = vunpack.c.l.b16 %v9499
  %v10043 = vunpack.c.h.b16 %v9499
  %v10044 = vunpack.c.l.b16 %v9500
  %v10045 = vunpack.c.h.b16 %v9500
  %v10046 = vunpack.c.l.b16 %v9501
  %v10047 = vunpack.c.h.b16 %v9501
  %v10048 = vunpack.c.l.b16 %v9502
  %v10049 = vunpack.c.h.b16 %v9502
  %v10050 = vunpack.c.l.b16 %v9503
  %v10051 = vunpack.c.h.b16 %v9503
  %v10052 = vunpack.c.l.b16 %v9504
  %v10053 = vunpack.c.h.b16 %v9504
  %v10054 = vunpack.c.l.b16 %v9505
  %v10055 = vunpack.c.h.b16 %v9505
  %v10056 = vunpack.c.l.b16 %v9506
  %v10057 = vunpack.c.h.b16 %v9506
  %v10058 = vunpack.c.l.b16 %v9507
  %v10059 = vunpack.c.h.b16 %v9507
  %v10060 = vunpack.c.l.b16 %v9508
  %v10061 = vunpack.c.h.b16 %v9508
  %v10062 = vunpack.c.l.b16 %v9509
  %v10063 = vunpack.c.h.b16 %v9509
  %v10064 = vunpack.c.l.b16 %v9510
  %v10065 = vunpack.c.h.b16 %v9510
  %v10066 = vunpack.c.l.b16 %v9511
  %v10067 = vunpack.c.h.b16 %v9511
  %v10068 = vunpack.c.l.b16 %v9512
  %v10069 = vunpack.c.h.b16 %v9512
  %v10070 = vunpack.c.l.b16 %v9513
  %v10071 = vunpack.c.h.b16 %v9513
  %v10072 = vunpack.c.l.b16 %v9514
  %v10073 = vunpack.c.h.b16 %v9514
  %v10074 = vunpack.c.l.b16 %v9515
  %v10075 = vunpack.c.h.b16 %v9515
  %v10076 = vunpack.c.l.b16 %v9516
  %v10077 = vunpack.c.h.b16 %v9516
  %v10078 = vunpack.c.l.b16 %v9517
  %v10079 = vunpack.c.h.b16 %v9517
  %v10080 = vunpack.c.l.b16 %v9518
  %v10081 = vunpack.c.h.b16 %v9518
  %v10082 = vunpack.c.l.b16 %v9519
  %v10083 = vunpack.c.h.b16 %v9519
  %v10084 = vunpack.c.l.b16 %v9520
  %v10085 = vunpack.c.h.b16 %v9520
  %v10086 = vunpack.c.l.b16 %v9521
  %v10087 = vunpack.c.h.b16 %v9521
  %v10088 = vunpack.c.l.b16 %v9522
  %v10089 = vunpack.c.h.b16 %v9522
  %v10090 = vunpack.c.l.b16 %v9523
  %v10091 = vunpack.c.h.b16 %v9523
  %v10092 = vunpack.c.l.b16 %v9524
  %v10093 = vunpack.c.h.b16 %v9524
  %v10094 = vunpack.c.l.b16 %v9525
  %v10095 = vunpack.c.h.b16 %v9525
  %v10096 = vunpack.c.l.b16 %v9526
  %v10097 = vunpack.c.h.b16 %v9526
  %v10098 = vunpack.c.l.b16 %v9527
  %v10099 = vunpack.c.h.b16 %v9527
  %v10100 = vunpack.c.l.b16 %v9528
  %v10101 = vunpack.c.h.b16 %v9528
  %v10102 = vunpack.c.l.b16 %v9529
  %v10103 = vunpack.c.h.b16 %v9529
  %v10104 = vunpack.c.l.b16 %v9530
  %v10105 = vunpack.c.h.b16 %v9530
  %v10106 = vunpack.c.l.b16 %v9531
  %v10107 = vunpack.c.h.b16 %v9531
  %v10108 = vunpack.c.l.b16 %v9532
  %v10109 = vunpack.c.h.b16 %v9532
  %v10110 = vunpack.c.l.b16 %v9533
  %v10111 = vunpack.c.h.b16 %v9533
  %v10112 = vunpack.c.l.b16 %v9534
  %v10113 = vunpack.c.h.b16 %v9534
  %v10114 = vunpack.c.l.b16 %v9535
  %v10115 = vunpack.c.h.b16 %v9535
  %v10116 = vunpack.c.l.b16 %v9536
  %v10117 = vunpack.c.h.b16 %v9536
  %v10118 = vunpack.c.l.b16 %v9537
  %v10119 = vunpack.c.h.b16 %v9537
  %v10120 = vunpack.c.l.b16 %v9538
  %v10121 = vunpack.c.h.b16 %v9538
  %v10122 = vunpack.c.l.b16 %v9539
  %v10123 = vunpack.c.h.b16 %v9539
  %v10124 = vunpack.c.l.b16 %v9540
  %v10125 = vunpack.c.h.b16 %v9540
  %v10126 = vunpack.c.l.b16 %v9541
  %v10127 = vunpack.c.h.b16 %v9541
  %v10128 = vunpack.c.l.b16 %v9542
  %v10129 = vunpack.c.h.b16 %v9542
  %v10130 = vunpack.c.l.b16 %v9543
  %v10131 = vunpack.c.h.b16 %v9543
  %v10132 = vunpack.c.l.b16 %v9544
  %v10133 = vunpack.c.h.b16 %v9544
  %v10134 = vunpack.c.l.b16 %v9545
  %v10135 = vunpack.c.h.b16 %v9545
  %v10136 = vunpack.c.l.b16 %v9546
  %v10137 = vunpack.c.h.b16 %v9546
  %v10138 = vunpack.c.l.b16 %v9547
  %v10139 = vunpack.c.h.b16 %v9547
  %v10140 = vunpack.c.l.b16 %v9548
  %v10141 = vunpack.c.h.b16 %v9548
  %v10142 = vunpack.c.l.b16 %v9549
  %v10143 = vunpack.c.h.b16 %v9549
  %v10144 = vunpack.c.l.b16 %v9550
  %v10145 = vunpack.c.h.b16 %v9550
  %v10146 = vunpack.c.l.b16 %v9551
  %v10147 = vunpack.c.h.b16 %v9551
  %v10148 = vunpack.c.l.b16 %v9552
  %v10149 = vunpack.c.h.b16 %v9552
  %v10150 = vunpack.c.l.b16 %v9553
  %v10151 = vunpack.c.h.b16 %v9553
  %v10152 = vunpack.c.l.b16 %v9554
  %v10153 = vunpack.c.h.b16 %v9554
  %v10154 = vunpack.c.l.b16 %v9555
  %v10155 = vunpack.c.h.b16 %v9555
  %v10156 = vunpack.c.l.b16 %v9556
  %v10157 = vunpack.c.h.b16 %v9556
  %v10158 = vunpack.c.l.b16 %v9557
  %v10159 = vunpack.c.h.b16 %v9557
  %v10160 = vunpack.c.l.b16 %v9558
  %v10161 = vunpack.c.h.b16 %v9558
  %v10162 = vunpack.c.l.b16 %v9559
  %v10163 = vunpack.c.h.b16 %v9559
  %v10164 = vunpack.c.l.b16 %v9560
  %v10165 = vunpack.c.h.b16 %v9560
  %v10166 = vunpack.c.l.b16 %v9561
  %v10167 = vunpack.c.h.b16 %v9561
  %v10168 = vunpack.c.l.b16 %v9562
  %v10169 = vunpack.c.h.b16 %v9562
  %v10170 = vunpack.c.l.b16 %v9563
  %v10171 = vunpack.c.h.b16 %v9563
  %v10172 = vunpack.c.l.b16 %v9564
  %v10173 = vunpack.c.h.b16 %v9564
  %v10174 = vunpack.c.l.b16 %v9565
  %v10175 = vunpack.c.h.b16 %v9565
  %v10176 = vunpack.c.l.b16 %v9566
  %v10177 = vunpack.c.h.b16 %v9566
  %v10178 = vunpack.c.l.b16 %v9567
  %v10179 = vunpack.c.h.b16 %v9567
  %v10180 = vunpack.c.l.b16 %v9568
  %v10181 = vunpack.c.h.b16 %v9568
  %v10182 = vunpack.c.l.b16 %v9569
  %v10183 = vunpack.c.h.b16 %v9569
  %v10184 = vunpack.c.l.b16 %v9570
  %v10185 = vunpack.c.h.b16 %v9570
  %v10186 = vunpack.c.l.b16 %v9571
  %v10187 = vunpack.c.h.b16 %v9571
  %v10188 = vunpack.c.l.b16 %v9572
  %v10189 = vunpack.c.h.b16 %v9572
  %v10190 = vunpack.c.l.b16 %v9573
  %v10191 = vunpack.c.h.b16 %v9573
  %v10192 = vunpack.c.l.b16 %v9574
  %v10193 = vunpack.c.h.b16 %v9574
  %v10194 = vunpack.c.l.b16 %v9575
  %v10195 = vunpack.c.h.b16 %v9575
  %v10196 = vunpack.c.l.b16 %v9576
  %v10197 = vunpack.c.h.b16 %v9576
  %v10198 = vunpack.c.l.b16 %v9577
  %v10199 = vunpack.c.h.b16 %v9577
  %v10200 = vunpack.c.l.b16 %v9578
  %v10201 = vunpack.c.h.b16 %v9578
  %v10202 = vunpack.c.l.b16 %v9579
  %v10203 = vunpack.c.h.b16 %v9579
  %v10204 = vunpack.c.l.b16 %v9580
  %v10205 = vunpack.c.h.b16 %v9580
  %v10206 = vunpack.c.l.b16 %v9581
  %v10207 = vunpack.c.h.b16 %v9581
  %v10208 = vunpack.c.l.b16 %v9582
  %v10209 = vunpack.c.h.b16 %v9582
  %v10210 = vunpack.c.l.b16 %v9583
  %v10211 = vunpack.c.h.b16 %v9583
  %v10212 = vunpack.c.l.b16 %v9584
  %v10213 = vunpack.c.h.b16 %v9584
  %v10214 = vunpack.c.l.b16 %v9585
  %v10215 = vunpack.c.h.b16 %v9585
  %v10216 = vunpack.c.l.b16 %v9586
  %v10217 = vunpack.c.h.b16 %v9586
  %v10218 = vunpack.c.l.b16 %v9587
  %v10219 = vunpack.c.h.b16 %v9587
  %v10220 = vunpack.c.l.b16 %v9588
  %v10221 = vunpack.c.h.b16 %v9588
  %v10222 = vunpack.c.l.b16 %v9589
  %v10223 = vunpack.c.h.b16 %v9589
  %v10224 = vunpack.c.l.b16 %v9590
  %v10225 = vunpack.c.h.b16 %v9590
  %v10226 = vunpack.c.l.b16 %v9591
  %v10227 = vunpack.c.h.b16 %v9591
  %v10228 = vunpack.c.l.b16 %v9592
  %v10229 = vunpack.c.h.b16 %v9592
  %v10230 = vunpack.c.l.b16 %v9593
  %v10231 = vunpack.c.h.b16 %v9593
  %v10232 = vunpack.c.l.b16 %v9594
  %v10233 = vunpack.c.h.b16 %v9594
  %v10234 = vunpack.c.l.b16 %v9595
  %v10235 = vunpack.c.h.b16 %v9595
  %v10236 = vunpack.c.l.b16 %v9596
  %v10237 = vunpack.c.h.b16 %v9596
  %v10238 = vunpack.c.l.b16 %v9597
  %v10239 = vunpack.c.h.b16 %v9597
  %v10240 = vunpack.c.l.b16 %v9598
  %v10241 = vunpack.c.h.b16 %v9598
  %v10242 = vunpack.c.l.b16 %v9599
  %v10243 = vunpack.c.h.b16 %v9599
  %v10244 = vunpack.c.l.b16 %v9600
  %v10245 = vunpack.c.h.b16 %v9600
  %v10246 = vunpack.c.l.b16 %v9601
  %v10247 = vunpack.c.h.b16 %v9601
  %v10248 = vunpack.c.l.b16 %v9602
  %v10249 = vunpack.c.h.b16 %v9602
  %v10250 = vunpack.c.l.b16 %v9603
  %v10251 = vunpack.c.h.b16 %v9603
  %v10252 = vunpack.c.l.b16 %v9604
  %v10253 = vunpack.c.h.b16 %v9604
  %v10254 = vunpack.c.l.b16 %v9605
  %v10255 = vunpack.c.h.b16 %v9605
  %v10256 = vunpack.c.l.b16 %v9606
  %v10257 = vunpack.c.h.b16 %v9606
  %v10258 = vunpack.c.l.b16 %v9607
  %v10259 = vunpack.c.h.b16 %v9607
  %v10260 = vunpack.c.l.b16 %v9608
  %v10261 = vunpack.c.h.b16 %v9608
  %v10262 = vunpack.c.l.b16 %v9609
  %v10263 = vunpack.c.h.b16 %v9609
  %v10264 = vunpack.c.l.b16 %v9610
  %v10265 = vunpack.c.h.b16 %v9610
  %v10266 = vunpack.c.l.b16 %v9611
  %v10267 = vunpack.c.h.b16 %v9611
  %v10268 = vunpack.c.l.b16 %v9612
  %v10269 = vunpack.c.h.b16 %v9612
  %v10270 = vunpack.c.l.b16 %v9613
  %v10271 = vunpack.c.h.b16 %v9613
  %v10272 = vunpack.c.l.b16 %v9614
  %v10273 = vunpack.c.h.b16 %v9614
  %v10274 = vunpack.c.l.b16 %v9615
  %v10275 = vunpack.c.h.b16 %v9615
  %v10276 = vunpack.c.l.b16 %v9616
  %v10277 = vunpack.c.h.b16 %v9616
  %v10278 = vunpack.c.l.b16 %v9617
  %v10279 = vunpack.c.h.b16 %v9617
  %v10280 = vunpack.c.l.b16 %v9618
  %v10281 = vunpack.c.h.b16 %v9618
  %v10282 = vunpack.c.l.b16 %v9619
  %v10283 = vunpack.c.h.b16 %v9619
  %v10284 = vunpack.c.l.b16 %v9620
  %v10285 = vunpack.c.h.b16 %v9620
  %v10286 = vunpack.c.l.b16 %v9621
  %v10287 = vunpack.c.h.b16 %v9621
  %v10288 = vunpack.c.l.b16 %v9622
  %v10289 = vunpack.c.h.b16 %v9622
  %v10290 = vunpack.c.l.b16 %v9623
  %v10291 = vunpack.c.h.b16 %v9623
  %v10292 = vunpack.c.l.b16 %v9624
  %v10293 = vunpack.c.h.b16 %v9624
  %v10294 = vunpack.c.l.b16 %v9625
  %v10295 = vunpack.c.h.b16 %v9625
  %v10296 = vpack.c.b16 %v9918, %v9912
  %v10297 = vpack.c.b16 %v9919, %v9913
  %v10298 = vpack.c.b16 %v9920, %v9914
  %v10299 = vpack.c.b16 %v9921, %v9915
  %v10300 = vpack.c.b16 %v9922, %v9916
  %v10301 = vpack.c.b16 %v9923, %v9917
  %v10302 = vpack.c.b16 %v9930, %v9924
  %v10303 = vpack.c.b16 %v9931, %v9925
  %v10304 = vpack.c.b16 %v9932, %v9926
  %v10305 = vpack.c.b16 %v9933, %v9927
  %v10306 = vpack.c.b16 %v9934, %v9928
  %v10307 = vpack.c.b16 %v9935, %v9929
  %v10308 = vpack.c.b16 %v9942, %v9936
  %v10309 = vpack.c.b16 %v9943, %v9937
  %v10310 = vpack.c.b16 %v9944, %v9938
  %v10311 = vpack.c.b16 %v9945, %v9939
  %v10312 = vpack.c.b16 %v9946, %v9940
  %v10313 = vpack.c.b16 %v9947, %v9941
  %v10314 = vpack.c.b16 %v9954, %v9948
  %v10315 = vpack.c.b16 %v9955, %v9949
  %v10316 = vpack.c.b16 %v9956, %v9950
  %v10317 = vpack.c.b16 %v9957, %v9951
  %v10318 = vpack.c.b16 %v9958, %v9952
  %v10319 = vpack.c.b16 %v9959, %v9953
  %v10320 = vpack.c.b16 %v9966, %v9960
  %v10321 = vpack.c.b16 %v9967, %v9961
  %v10322 = vpack.c.b16 %v9968, %v9962
  %v10323 = vpack.c.b16 %v9969, %v9963
  %v10324 = vpack.c.b16 %v9970, %v9964
  %v10325 = vpack.c.b16 %v9971, %v9965
  %v10326 = vpack.c.b16 %v9978, %v9972
  %v10327 = vpack.c.b16 %v9979, %v9973
  %v10328 = vpack.c.b16 %v9980, %v9974
  %v10329 = vpack.c.b16 %v9981, %v9975
  %v10330 = vpack.c.b16 %v9982, %v9976
  %v10331 = vpack.c.b16 %v9983, %v9977
  %v10332 = vpack.c.b16 %v9990, %v9984
  %v10333 = vpack.c.b16 %v9991, %v9985
  %v10334 = vpack.c.b16 %v9992, %v9986
  %v10335 = vpack.c.b16 %v9993, %v9987
  %v10336 = vpack.c.b16 %v9994, %v9988
  %v10337 = vpack.c.b16 %v9995, %v9989
  %v10338 = vpack.c.b16 %v10002, %v9996
  %v10339 = vpack.c.b16 %v10003, %v9997
  %v10340 = vpack.c.b16 %v10004, %v9998
  %v10341 = vpack.c.b16 %v10005, %v9999
  %v10342 = vpack.c.b16 %v10006, %v10000
  %v10343 = vpack.c.b16 %v10007, %v10001
  %v10344 = vpack.c.b16 %v10014, %v10008
  %v10345 = vpack.c.b16 %v10015, %v10009
  %v10346 = vpack.c.b16 %v10016, %v10010
  %v10347 = vpack.c.b16 %v10017, %v10011
  %v10348 = vpack.c.b16 %v10018, %v10012
  %v10349 = vpack.c.b16 %v10019, %v10013
  %v10350 = vpack.c.b16 %v10026, %v10020
  %v10351 = vpack.c.b16 %v10027, %v10021
  %v10352 = vpack.c.b16 %v10028, %v10022
  %v10353 = vpack.c.b16 %v10029, %v10023
  %v10354 = vpack.c.b16 %v10030, %v10024
  %v10355 = vpack.c.b16 %v10031, %v10025
  %v10356 = vpack.c.b16 %v10038, %v10032
  %v10357 = vpack.c.b16 %v10039, %v10033
  %v10358 = vpack.c.b16 %v10040, %v10034
  %v10359 = vpack.c.b16 %v10041, %v10035
  %v10360 = vpack.c.b16 %v10042, %v10036
  %v10361 = vpack.c.b16 %v10043, %v10037
  %v10362 = vpack.c.b16 %v10050, %v10044
  %v10363 = vpack.c.b16 %v10051, %v10045
  %v10364 = vpack.c.b16 %v10052, %v10046
  %v10365 = vpack.c.b16 %v10053, %v10047
  %v10366 = vpack.c.b16 %v10054, %v10048
  %v10367 = vpack.c.b16 %v10055, %v10049
  %v10368 = vpack.c.b16 %v10062, %v10056
  %v10369 = vpack.c.b16 %v10063, %v10057
  %v10370 = vpack.c.b16 %v10064, %v10058
  %v10371 = vpack.c.b16 %v10065, %v10059
  %v10372 = vpack.c.b16 %v10066, %v10060
  %v10373 = vpack.c.b16 %v10067, %v10061
  %v10374 = vpack.c.b16 %v10074, %v10068
  %v10375 = vpack.c.b16 %v10075, %v10069
  %v10376 = vpack.c.b16 %v10076, %v10070
  %v10377 = vpack.c.b16 %v10077, %v10071
  %v10378 = vpack.c.b16 %v10078, %v10072
  %v10379 = vpack.c.b16 %v10079, %v10073
  %v10380 = vpack.c.b16 %v10086, %v10080
  %v10381 = vpack.c.b16 %v10087, %v10081
  %v10382 = vpack.c.b16 %v10088, %v10082
  %v10383 = vpack.c.b16 %v10089, %v10083
  %v10384 = vpack.c.b16 %v10090, %v10084
  %v10385 = vpack.c.b16 %v10091, %v10085
  %v10386 = vpack.c.b16 %v10098, %v10092
  %v10387 = vpack.c.b16 %v10099, %v10093
  %v10388 = vpack.c.b16 %v10100, %v10094
  %v10389 = vpack.c.b16 %v10101, %v10095
  %v10390 = vpack.c.b16 %v10102, %v10096
  %v10391 = vpack.c.b16 %v10103, %v10097
  %v10392 = vpack.c.b16 %v10110, %v10104
  %v10393 = vpack.c.b16 %v10111, %v10105
  %v10394 = vpack.c.b16 %v10112, %v10106
  %v10395 = vpack.c.b16 %v10113, %v10107
  %v10396 = vpack.c.b16 %v10114, %v10108
  %v10397 = vpack.c.b16 %v10115, %v10109
  %v10398 = vpack.c.b16 %v10122, %v10116
  %v10399 = vpack.c.b16 %v10123, %v10117
  %v10400 = vpack.c.b16 %v10124, %v10118
  %v10401 = vpack.c.b16 %v10125, %v10119
  %v10402 = vpack.c.b16 %v10126, %v10120
  %v10403 = vpack.c.b16 %v10127, %v10121
  %v10404 = vpack.c.b16 %v10134, %v10128
  %v10405 = vpack.c.b16 %v10135, %v10129
  %v10406 = vpack.c.b16 %v10136, %v10130
  %v10407 = vpack.c.b16 %v10137, %v10131
  %v10408 = vpack.c.b16 %v10138, %v10132
  %v10409 = vpack.c.b16 %v10139, %v10133
  %v10410 = vpack.c.b16 %v10146, %v10140
  %v10411 = vpack.c.b16 %v10147, %v10141
  %v10412 = vpack.c.b16 %v10148, %v10142
  %v10413 = vpack.c.b16 %v10149, %v10143
  %v10414 = vpack.c.b16 %v10150, %v10144
  %v10415 = vpack.c.b16 %v10151, %v10145
  %v10416 = vpack.c.b16 %v10158, %v10152
  %v10417 = vpack.c.b16 %v10159, %v10153
  %v10418 = vpack.c.b16 %v10160, %v10154
  %v10419 = vpack.c.b16 %v10161, %v10155
  %v10420 = vpack.c.b16 %v10162, %v10156
  %v10421 = vpack.c.b16 %v10163, %v10157
  %v10422 = vpack.c.b16 %v10170, %v10164
  %v10423 = vpack.c.b16 %v10171, %v10165
  %v10424 = vpack.c.b16 %v10172, %v10166
  %v10425 = vpack.c.b16 %v10173, %v10167
  %v10426 = vpack.c.b16 %v10174, %v10168
  %v10427 = vpack.c.b16 %v10175, %v10169
  %v10428 = vpack.c.b16 %v10182, %v10176
  %v10429 = vpack.c.b16 %v10183, %v10177
  %v10430 = vpack.c.b16 %v10184, %v10178
  %v10431 = vpack.c.b16 %v10185, %v10179
  %v10432 = vpack.c.b16 %v10186, %v10180
  %v10433 = vpack.c.b16 %v10187, %v10181
  %v10434 = vpack.c.b16 %v10194, %v10188
  %v10435 = vpack.c.b16 %v10195, %v10189
  %v10436 = vpack.c.b16 %v10196, %v10190
  %v10437 = vpack.c.b16 %v10197, %v10191
  %v10438 = vpack.c.b16 %v10198, %v10192
  %v10439 = vpack.c.b16 %v10199, %v10193
  %v10440 = vpack.c.b16 %v10206, %v10200
  %v10441 = vpack.c.b16 %v10207, %v10201
  %v10442 = vpack.c.b16 %v10208, %v10202
  %v10443 = vpack.c.b16 %v10209, %v10203
  %v10444 = vpack.c.b16 %v10210, %v10204
  %v10445 = vpack.c.b16 %v10211, %v10205
  %v10446 = vpack.c.b16 %v10218, %v10212
  %v10447 = vpack.c.b16 %v10219, %v10213
  %v10448 = vpack.c.b16 %v10220, %v10214
  %v10449 = vpack.c.b16 %v10221, %v10215
  %v10450 = vpack.c.b16 %v10222, %v10216
  %v10451 = vpack.c.b16 %v10223, %v10217
  %v10452 = vpack.c.b16 %v10230, %v10224
  %v10453 = vpack.c.b16 %v10231, %v10225
  %v10454 = vpack.c.b16 %v10232, %v10226
  %v10455 = vpack.c.b16 %v10233, %v10227
  %v10456 = vpack.c.b16 %v10234, %v10228
  %v10457 = vpack.c.b16 %v10235, %v10229
  %v10458 = vpack.c.b16 %v10242, %v10236
  %v10459 = vpack.c.b16 %v10243, %v10237
  %v10460 = vpack.c.b16 %v10244, %v10238
  %v10461 = vpack.c.b16 %v10245, %v10239
  %v10462 = vpack.c.b16 %v10246, %v10240
  %v10463 = vpack.c.b16 %v10247, %v10241
  %v10464 = vpack.c.b16 %v10254, %v10248
  %v10465 = vpack.c.b16 %v10255, %v10249
  %v10466 = vpack.c.b16 %v10256, %v10250
  %v10467 = vpack.c.b16 %v10257, %v10251
  %v10468 = vpack.c.b16 %v10258, %v10252
  %v10469 = vpack.c.b16 %v10259, %v10253
  %v10470 = vpack.c.b16 %v10266, %v10260
  %v10471 = vpack.c.b16 %v10267, %v10261
  %v10472 = vpack.c.b16 %v10268, %v10262
  %v10473 = vpack.c.b16 %v10269, %v10263
  %v10474 = vpack.c.b16 %v10270, %v10264
  %v10475 = vpack.c.b16 %v10271, %v10265
  %v10476 = vpack.c.b16 %v10278, %v10272
  %v10477 = vpack.c.b16 %v10279, %v10273
  %v10478 = vpack.c.b16 %v10280, %v10274
  %v10479 = vpack.c.b16 %v10281, %v10275
  %v10480 = vpack.c.b16 %v10282, %v10276
  %v10481 = vpack.c.b16 %v10283, %v10277
  %v10482 = vpack.c.b16 %v10290, %v10284
  %v10483 = vpack.c.b16 %v10291, %v10285
  %v10484 = vpack.c.b16 %v10292, %v10286
  %v10485 = vpack.c.b16 %v10293, %v10287
  %v10486 = vpack.c.b16 %v10294, %v10288
  %v10487 = vpack.c.b16 %v10295, %v10289
  %10680 = vmatprep.subr.bf16.mxu0 %v10297
  %10681 = vmatpush1.bf16.msra.mxu0 %v10296
  %10682 = vmatprep.subr.bf16.mxu0 %v10303
  %10683 = vmatpush1.bf16.msra.mxu0 %v10302
  %10684 = vmatprep.subr.bf16.mxu0 %v10309
  %10685 = vmatpush1.bf16.msra.mxu0 %v10308
  %10686 = vmatprep.subr.bf16.mxu0 %v10315
  %10687 = vmatpush1.bf16.msra.mxu0 %v10314
  %10688 = vmatprep.subr.bf16.mxu0 %v10321
  %10689 = vmatpush1.bf16.msra.mxu0 %v10320
  %10690 = vmatprep.subr.bf16.mxu0 %v10327
  %10691 = vmatpush1.bf16.msra.mxu0 %v10326
  %10692 = vmatprep.subr.bf16.mxu0 %v10333
  %10693 = vmatpush1.bf16.msra.mxu0 %v10332
  %10694 = vmatprep.subr.bf16.mxu0 %v10339
  %10695 = vmatpush1.bf16.msra.mxu0 %v10338
  %10696 = vmatprep.subr.bf16.mxu0 %v10345
  %10697 = vmatpush1.bf16.msra.mxu0 %v10344
  %10698 = vmatprep.subr.bf16.mxu0 %v10351
  %10699 = vmatpush1.bf16.msra.mxu0 %v10350
  %10700 = vmatprep.subr.bf16.mxu0 %v10357
  %10701 = vmatpush1.bf16.msra.mxu0 %v10356
  %10702 = vmatprep.subr.bf16.mxu0 %v10363
  %10703 = vmatpush1.bf16.msra.mxu0 %v10362
  %10704 = vmatprep.subr.bf16.mxu0 %v10369
  %10705 = vmatpush1.bf16.msra.mxu0 %v10368
  %10706 = vmatprep.subr.bf16.mxu0 %v10375
  %10707 = vmatpush1.bf16.msra.mxu0 %v10374
  %10708 = vmatprep.subr.bf16.mxu0 %v10381
  %10709 = vmatpush1.bf16.msra.mxu0 %v10380
  %10710 = vmatprep.subr.bf16.mxu0 %v10387
  %10711 = vmatpush1.bf16.msra.mxu0 %v10386
  %10712 = vmatprep.mubr.bf16.mxu0 %v9681
  %10713 = vmatmul.mubr.bf16.gmra.mrb[0].mxu0 %v9680
  %v10714 = vpop.f32.mrb[0].mxu0
  %v10715 = vadd.f32 0.0, %v10714
  %v10716 = vpop.f32.mrb[0].mxu0
  %v10717 = vadd.f32 0.0, %v10716
  %v10718 = vpop.f32.mrb[0].mxu0
  %v10719 = vadd.f32 0.0, %v10718
  %v10720 = vpop.f32.mrb[0].mxu0
  %v10721 = vadd.f32 0.0, %v10720
  %10722 = vmatprep.mubr.bf16.mxu0 %v9685
  %10723 = vmatmul.mubr.bf16.gmra.mrb[0].mxu0 %v9684
  %v10724 = vpop.f32.mrb[0].mxu0
  %v10725 = vadd.f32 0.0, %v10724
  %v10726 = vpop.f32.mrb[0].mxu0
  %v10727 = vadd.f32 0.0, %v10726
  %v10728 = vpop.f32.mrb[0].mxu0
  %v10729 = vadd.f32 0.0, %v10728
  %v10730 = vpop.f32.mrb[0].mxu0
  %v10731 = vadd.f32 0.0, %v10730
  %10732 = vmatprep.mubr.bf16.mxu0 %v9689
  %10733 = vmatmul.mubr.bf16.gmra.mrb[0].mxu0 %v9688
  %v10734 = vpop.f32.mrb[0].mxu0
  %v10735 = vadd.f32 0.0, %v10734
  %v10736 = vpop.f32.mrb[0].mxu0
  %v10737 = vadd.f32 0.0, %v10736
  %v10738 = vpop.f32.mrb[0].mxu0
  %v10739 = vadd.f32 0.0, %v10738
  %v10740 = vpop.f32.mrb[0].mxu0
  %v10741 = vadd.f32 0.0, %v10740
  %10742 = vmatprep.mubr.bf16.mxu0 %v9693
  %10743 = vmatmul.mubr.bf16.gmra.mrb[0].mxu0 %v9692
  %v10744 = vpop.f32.mrb[0].mxu0
  %v10745 = vadd.f32 0.0, %v10744
  %v10746 = vpop.f32.mrb[0].mxu0
  %v10747 = vadd.f32 0.0, %v10746
  %v10748 = vpop.f32.mrb[0].mxu0
  %v10749 = vadd.f32 0.0, %v10748
  %v10750 = vpop.f32.mrb[0].mxu0
  %v10751 = vadd.f32 0.0, %v10750
  %10752 = vmatprep.mubr.bf16.mxu0 %v9697
  %10753 = vmatmul.mubr.bf16.gmra.mrb[0].mxu0 %v9696
  %v10754 = vpop.f32.mrb[0].mxu0
  %v10755 = vadd.f32 0.0, %v10754
  %v10756 = vpop.f32.mrb[0].mxu0
  %v10757 = vadd.f32 0.0, %v10756
  %v10758 = vpop.f32.mrb[0].mxu0
  %v10759 = vpop.f32.mrb[0].mxu0
  %10760 = vdwg.mxu0
  %10761 = vmatprep.subr.bf16.mxu0 %v10393
  %10762 = vmatpush1.bf16.msra.mxu0 %v10392
  %10763 = vmatprep.subr.bf16.mxu0 %v10399
  %10764 = vmatpush1.bf16.msra.mxu0 %v10398
  %10765 = vmatprep.subr.bf16.mxu0 %v10405
  %10766 = vmatpush1.bf16.msra.mxu0 %v10404
  %10767 = vmatprep.subr.bf16.mxu0 %v10411
  %10768 = vmatpush1.bf16.msra.mxu0 %v10410
  %10769 = vmatprep.subr.bf16.mxu0 %v10417
  %10770 = vmatpush1.bf16.msra.mxu0 %v10416
  %10771 = vmatprep.subr.bf16.mxu0 %v10423
  %10772 = vmatpush1.bf16.msra.mxu0 %v10422
  %10773 = vmatprep.subr.bf16.mxu0 %v10429
  %10774 = vmatpush1.bf16.msra.mxu0 %v10428
  %10775 = vmatprep.subr.bf16.mxu0 %v10435
  %10776 = vmatpush1.bf16.msra.mxu0 %v10434
  %10777 = vmatprep.subr.bf16.mxu0 %v10441
  %10778 = vmatpush1.bf16.msra.mxu0 %v10440
  %10779 = vmatprep.subr.bf16.mxu0 %v10447
  %10780 = vmatpush1.bf16.msra.mxu0 %v10446
  %10781 = vmatprep.subr.bf16.mxu0 %v10453
  %10782 = vmatpush1.bf16.msra.mxu0 %v10452
  %10783 = vmatprep.subr.bf16.mxu0 %v10459
  %10784 = vmatpush1.bf16.msra.mxu0 %v10458
  %10785 = vmatprep.subr.bf16.mxu0 %v10465
  %10786 = vmatpush1.bf16.msra.mxu0 %v10464
  %10787 = vmatprep.subr.bf16.mxu0 %v10471
  %10788 = vmatpush1.bf16.msra.mxu0 %v10470
  %10789 = vmatprep.subr.bf16.mxu0 %v10477
  %10790 = vmatpush1.bf16.msra.mxu0 %v10476
  %10791 = vmatprep.subr.bf16.mxu0 %v10483
  %10792 = vmatpush1.bf16.msra.mxu0 %v10482
  %10793 = vmatprep.mubr.bf16.mxu0 %v9683
  %10794 = vmatmul.mubr.bf16.gmra.mrb[0].mxu0 %v9682
  %v10795 = vpop.f32.mrb[0].mxu0
  %v10796 = vadd.f32 %v10715, %v10795
  %v10797 = vpop.f32.mrb[0].mxu0
  %v10798 = vadd.f32 %v10717, %v10797
  %v10799 = vpop.f32.mrb[0].mxu0
  %v10800 = vadd.f32 %v10719, %v10799
  %v10801 = vpop.f32.mrb[0].mxu0
  %v10802 = vadd.f32 %v10721, %v10801
  %10803 = vmatprep.mubr.bf16.mxu0 %v9687
  %10804 = vmatmul.mubr.bf16.gmra.mrb[0].mxu0 %v9686
  %v10805 = vpop.f32.mrb[0].mxu0
  %v10806 = vadd.f32 %v10725, %v10805
  %v10807 = vpop.f32.mrb[0].mxu0
  %v10808 = vadd.f32 %v10727, %v10807
  %v10809 = vpop.f32.mrb[0].mxu0
  %v10810 = vadd.f32 %v10729, %v10809
  %v10811 = vpop.f32.mrb[0].mxu0
  %v10812 = vadd.f32 %v10731, %v10811
  %10813 = vmatprep.mubr.bf16.mxu0 %v9691
  %10814 = vmatmul.mubr.bf16.gmra.mrb[0].mxu0 %v9690
  %v10815 = vpop.f32.mrb[0].mxu0
  %v10816 = vadd.f32 %v10735, %v10815
  %v10817 = vpop.f32.mrb[0].mxu0
  %v10818 = vadd.f32 %v10737, %v10817
  %v10819 = vpop.f32.mrb[0].mxu0
  %v10820 = vadd.f32 %v10739, %v10819
  %v10821 = vpop.f32.mrb[0].mxu0
  %v10822 = vadd.f32 %v10741, %v10821
  %10823 = vmatprep.mubr.bf16.mxu0 %v9695
  %10824 = vmatmul.mubr.bf16.gmra.mrb[0].mxu0 %v9694
  %v10825 = vpop.f32.mrb[0].mxu0
  %v10826 = vadd.f32 %v10745, %v10825
  %v10827 = vpop.f32.mrb[0].mxu0
  %v10828 = vadd.f32 %v10747, %v10827
  %v10829 = vpop.f32.mrb[0].mxu0
  %v10830 = vadd.f32 %v10749, %v10829
  %v10831 = vpop.f32.mrb[0].mxu0
  %v10832 = vadd.f32 %v10751, %v10831
  %10833 = vmatprep.mubr.bf16.mxu0 %v9699
  %10834 = vmatmul.mubr.bf16.gmra.mrb[0].mxu0 %v9698
  %v10835 = vpop.f32.mrb[0].mxu0
  %v10836 = vadd.f32 %v10755, %v10835
  %v10837 = vpop.f32.mrb[0].mxu0
  %v10838 = vadd.f32 %v10757, %v10837
  %v10839 = vpop.f32.mrb[0].mxu0
  %v10840 = vpop.f32.mrb[0].mxu0
  %10841 = vdwg.mxu0
  %10842 = vmatprep.subr.bf16.mxu0 %v10299
  %10843 = vmatpush1.bf16.msra.mxu0 %v10298
  %10844 = vmatprep.subr.bf16.mxu0 %v10305
  %10845 = vmatpush1.bf16.msra.mxu0 %v10304
  %10846 = vmatprep.subr.bf16.mxu0 %v10311
  %10847 = vmatpush1.bf16.msra.mxu0 %v10310
  %10848 = vmatprep.subr.bf16.mxu0 %v10317
  %10849 = vmatpush1.bf16.msra.mxu0 %v10316
  %10850 = vmatprep.subr.bf16.mxu0 %v10323
  %10851 = vmatpush1.bf16.msra.mxu0 %v10322
  %10852 = vmatprep.subr.bf16.mxu0 %v10329
  %10853 = vmatpush1.bf16.msra.mxu0 %v10328
  %10854 = vmatprep.subr.bf16.mxu0 %v10335
  %10855 = vmatpush1.bf16.msra.mxu0 %v10334
  %10856 = vmatprep.subr.bf16.mxu0 %v10341
  %10857 = vmatpush1.bf16.msra.mxu0 %v10340
  %10858 = vmatprep.subr.bf16.mxu0 %v10347
  %10859 = vmatpush1.bf16.msra.mxu0 %v10346
  %10860 = vmatprep.subr.bf16.mxu0 %v10353
  %10861 = vmatpush1.bf16.msra.mxu0 %v10352
  %10862 = vmatprep.subr.bf16.mxu0 %v10359
  %10863 = vmatpush1.bf16.msra.mxu0 %v10358
  %10864 = vmatprep.subr.bf16.mxu0 %v10365
  %10865 = vmatpush1.bf16.msra.mxu0 %v10364
  %10866 = vmatprep.subr.bf16.mxu0 %v10371
  %10867 = vmatpush1.bf16.msra.mxu0 %v10370
  %10868 = vmatprep.subr.bf16.mxu0 %v10377
  %10869 = vmatpush1.bf16.msra.mxu0 %v10376
  %10870 = vmatprep.subr.bf16.mxu0 %v10383
  %10871 = vmatpush1.bf16.msra.mxu0 %v10382
  %10872 = vmatprep.subr.bf16.mxu0 %v10389
  %10873 = vmatpush1.bf16.msra.mxu0 %v10388
  %10874 = vmatprep.mubr.bf16.mxu0 %v9681
  %10875 = vmatmul.mubr.bf16.gmra.mrb[0].mxu0 %v9680
  %v10876 = vpop.f32.mrb[0].mxu0
  %v10877 = vadd.f32 0.0, %v10876
  %v10878 = vpop.f32.mrb[0].mxu0
  %v10879 = vadd.f32 0.0, %v10878
  %v10880 = vpop.f32.mrb[0].mxu0
  %v10881 = vadd.f32 0.0, %v10880
  %v10882 = vpop.f32.mrb[0].mxu0
  %v10883 = vadd.f32 0.0, %v10882
  %10884 = vmatprep.mubr.bf16.mxu0 %v9685
  %10885 = vmatmul.mubr.bf16.gmra.mrb[0].mxu0 %v9684
  %v10886 = vpop.f32.mrb[0].mxu0
  %v10887 = vadd.f32 0.0, %v10886
  %v10888 = vpop.f32.mrb[0].mxu0
  %v10889 = vadd.f32 0.0, %v10888
  %v10890 = vpop.f32.mrb[0].mxu0
  %v10891 = vadd.f32 0.0, %v10890
  %v10892 = vpop.f32.mrb[0].mxu0
  %v10893 = vadd.f32 0.0, %v10892
  %10894 = vmatprep.mubr.bf16.mxu0 %v9689
  %10895 = vmatmul.mubr.bf16.gmra.mrb[0].mxu0 %v9688
  %v10896 = vpop.f32.mrb[0].mxu0
  %v10897 = vadd.f32 0.0, %v10896
  %v10898 = vpop.f32.mrb[0].mxu0
  %v10899 = vadd.f32 0.0, %v10898
  %v10900 = vpop.f32.mrb[0].mxu0
  %v10901 = vadd.f32 0.0, %v10900
  %v10902 = vpop.f32.mrb[0].mxu0
  %v10903 = vadd.f32 0.0, %v10902
  %10904 = vmatprep.mubr.bf16.mxu0 %v9693
  %10905 = vmatmul.mubr.bf16.gmra.mrb[0].mxu0 %v9692
  %v10906 = vpop.f32.mrb[0].mxu0
  %v10907 = vadd.f32 0.0, %v10906
  %v10908 = vpop.f32.mrb[0].mxu0
  %v10909 = vadd.f32 0.0, %v10908
  %v10910 = vpop.f32.mrb[0].mxu0
  %v10911 = vadd.f32 0.0, %v10910
  %v10912 = vpop.f32.mrb[0].mxu0
  %v10913 = vadd.f32 0.0, %v10912
  %10914 = vmatprep.mubr.bf16.mxu0 %v9697
  %10915 = vmatmul.mubr.bf16.gmra.mrb[0].mxu0 %v9696
  %v10916 = vpop.f32.mrb[0].mxu0
  %v10917 = vadd.f32 0.0, %v10916
  %v10918 = vpop.f32.mrb[0].mxu0
  %v10919 = vadd.f32 0.0, %v10918
  %v10920 = vpop.f32.mrb[0].mxu0
  %v10921 = vpop.f32.mrb[0].mxu0
  %10922 = vdwg.mxu0
  %10923 = vmatprep.subr.bf16.mxu0 %v10395
  %10924 = vmatpush1.bf16.msra.mxu0 %v10394
  %10925 = vmatprep.subr.bf16.mxu0 %v10401
  %10926 = vmatpush1.bf16.msra.mxu0 %v10400
  %10927 = vmatprep.subr.bf16.mxu0 %v10407
  %10928 = vmatpush1.bf16.msra.mxu0 %v10406
  %10929 = vmatprep.subr.bf16.mxu0 %v10413
  %10930 = vmatpush1.bf16.msra.mxu0 %v10412
  %10931 = vmatprep.subr.bf16.mxu0 %v10419
  %10932 = vmatpush1.bf16.msra.mxu0 %v10418
  %10933 = vmatprep.subr.bf16.mxu0 %v10425
  %10934 = vmatpush1.bf16.msra.mxu0 %v10424
  %10935 = vmatprep.subr.bf16.mxu0 %v10431
  %10936 = vmatpush1.bf16.msra.mxu0 %v10430
  %10937 = vmatprep.subr.bf16.mxu0 %v10437
  %10938 = vmatpush1.bf16.msra.mxu0 %v10436
  %10939 = vmatprep.subr.bf16.mxu0 %v10443
  %10940 = vmatpush1.bf16.msra.mxu0 %v10442
  %10941 = vmatprep.subr.bf16.mxu0 %v10449
  %10942 = vmatpush1.bf16.msra.mxu0 %v10448
  %10943 = vmatprep.subr.bf16.mxu0 %v10455
  %10944 = vmatpush1.bf16.msra.mxu0 %v10454
  %10945 = vmatprep.subr.bf16.mxu0 %v10461
  %10946 = vmatpush1.bf16.msra.mxu0 %v10460
  %10947 = vmatprep.subr.bf16.mxu0 %v10467
  %10948 = vmatpush1.bf16.msra.mxu0 %v10466
  %10949 = vmatprep.subr.bf16.mxu0 %v10473
  %10950 = vmatpush1.bf16.msra.mxu0 %v10472
  %10951 = vmatprep.subr.bf16.mxu0 %v10479
  %10952 = vmatpush1.bf16.msra.mxu0 %v10478
  %10953 = vmatprep.subr.bf16.mxu0 %v10485
  %10954 = vmatpush1.bf16.msra.mxu0 %v10484
  %10955 = vmatprep.mubr.bf16.mxu0 %v9683
  %10956 = vmatmul.mubr.bf16.gmra.mrb[0].mxu0 %v9682
  %v10957 = vpop.f32.mrb[0].mxu0
  %v10958 = vadd.f32 %v10877, %v10957
  %v10959 = vpop.f32.mrb[0].mxu0
  %v10960 = vadd.f32 %v10879, %v10959
  %v10961 = vpop.f32.mrb[0].mxu0
  %v10962 = vadd.f32 %v10881, %v10961
  %v10963 = vpop.f32.mrb[0].mxu0
  %v10964 = vadd.f32 %v10883, %v10963
  %10965 = vmatprep.mubr.bf16.mxu0 %v9687
  %10966 = vmatmul.mubr.bf16.gmra.mrb[0].mxu0 %v9686
  %v10967 = vpop.f32.mrb[0].mxu0
  %v10968 = vadd.f32 %v10887, %v10967
  %v10969 = vpop.f32.mrb[0].mxu0
  %v10970 = vadd.f32 %v10889, %v10969
  %v10971 = vpop.f32.mrb[0].mxu0
  %v10972 = vadd.f32 %v10891, %v10971
  %v10973 = vpop.f32.mrb[0].mxu0
  %v10974 = vadd.f32 %v10893, %v10973
  %10975 = vmatprep.mubr.bf16.mxu0 %v9691
  %10976 = vmatmul.mubr.bf16.gmra.mrb[0].mxu0 %v9690
  %v10977 = vpop.f32.mrb[0].mxu0
  %v10978 = vadd.f32 %v10897, %v10977
  %v10979 = vpop.f32.mrb[0].mxu0
  %v10980 = vadd.f32 %v10899, %v10979
  %v10981 = vpop.f32.mrb[0].mxu0
  %v10982 = vadd.f32 %v10901, %v10981
  %v10983 = vpop.f32.mrb[0].mxu0
  %v10984 = vadd.f32 %v10903, %v10983
  %10985 = vmatprep.mubr.bf16.mxu0 %v9695
  %10986 = vmatmul.mubr.bf16.gmra.mrb[0].mxu0 %v9694
  %v10987 = vpop.f32.mrb[0].mxu0
  %v10988 = vadd.f32 %v10907, %v10987
  %v10989 = vpop.f32.mrb[0].mxu0
  %v10990 = vadd.f32 %v10909, %v10989
  %v10991 = vpop.f32.mrb[0].mxu0
  %v10992 = vadd.f32 %v10911, %v10991
  %v10993 = vpop.f32.mrb[0].mxu0
  %v10994 = vadd.f32 %v10913, %v10993
  %10995 = vmatprep.mubr.bf16.mxu0 %v9699
  %10996 = vmatmul.mubr.bf16.gmra.mrb[0].mxu0 %v9698
  %v10997 = vpop.f32.mrb[0].mxu0
  %v10998 = vadd.f32 %v10917, %v10997
  %v10999 = vpop.f32.mrb[0].mxu0
  %v11000 = vadd.f32 %v10919, %v10999
  %v11001 = vpop.f32.mrb[0].mxu0
  %v11002 = vpop.f32.mrb[0].mxu0
  %11003 = vdwg.mxu0
  %11004 = vmatprep.subr.bf16.mxu0 %v10301
  %11005 = vmatpush1.bf16.msra.mxu0 %v10300
  %11006 = vmatprep.subr.bf16.mxu0 %v10307
  %11007 = vmatpush1.bf16.msra.mxu0 %v10306
  %11008 = vmatprep.subr.bf16.mxu0 %v10313
  %11009 = vmatpush1.bf16.msra.mxu0 %v10312
  %11010 = vmatprep.subr.bf16.mxu0 %v10319
  %11011 = vmatpush1.bf16.msra.mxu0 %v10318
  %11012 = vmatprep.subr.bf16.mxu0 %v10325
  %11013 = vmatpush1.bf16.msra.mxu0 %v10324
  %11014 = vmatprep.subr.bf16.mxu0 %v10331
  %11015 = vmatpush1.bf16.msra.mxu0 %v10330
  %11016 = vmatprep.subr.bf16.mxu0 %v10337
  %11017 = vmatpush1.bf16.msra.mxu0 %v10336
  %11018 = vmatprep.subr.bf16.mxu0 %v10343
  %11019 = vmatpush1.bf16.msra.mxu0 %v10342
  %11020 = vmatprep.subr.bf16.mxu0 %v10349
  %11021 = vmatpush1.bf16.msra.mxu0 %v10348
  %11022 = vmatprep.subr.bf16.mxu0 %v10355
  %11023 = vmatpush1.bf16.msra.mxu0 %v10354
  %11024 = vmatprep.subr.bf16.mxu0 %v10361
  %11025 = vmatpush1.bf16.msra.mxu0 %v10360
  %11026 = vmatprep.subr.bf16.mxu0 %v10367
  %11027 = vmatpush1.bf16.msra.mxu0 %v10366
  %11028 = vmatprep.subr.bf16.mxu0 %v10373
  %11029 = vmatpush1.bf16.msra.mxu0 %v10372
  %11030 = vmatprep.subr.bf16.mxu0 %v10379
  %11031 = vmatpush1.bf16.msra.mxu0 %v10378
  %11032 = vmatprep.subr.bf16.mxu0 %v10385
  %11033 = vmatpush1.bf16.msra.mxu0 %v10384
  %11034 = vmatprep.subr.bf16.mxu0 %v10391
  %11035 = vmatpush1.bf16.msra.mxu0 %v10390
  %11036 = vmatprep.mubr.bf16.mxu0 %v9681
  %11037 = vmatmul.mubr.bf16.gmra.mrb[0].mxu0 %v9680
  %v11038 = vpop.f32.mrb[0].mxu0
  %v11039 = vadd.f32 0.0, %v11038
  %v11040 = vpop.f32.mrb[0].mxu0
  %v11041 = vadd.f32 0.0, %v11040
  %v11042 = vpop.f32.mrb[0].mxu0
  %v11043 = vadd.f32 0.0, %v11042
  %v11044 = vpop.f32.mrb[0].mxu0
  %v11045 = vadd.f32 0.0, %v11044
  %11046 = vmatprep.mubr.bf16.mxu0 %v9685
  %11047 = vmatmul.mubr.bf16.gmra.mrb[0].mxu0 %v9684
  %v11048 = vpop.f32.mrb[0].mxu0
  %v11049 = vadd.f32 0.0, %v11048
  %v11050 = vpop.f32.mrb[0].mxu0
  %v11051 = vadd.f32 0.0, %v11050
  %v11052 = vpop.f32.mrb[0].mxu0
  %v11053 = vadd.f32 0.0, %v11052
  %v11054 = vpop.f32.mrb[0].mxu0
  %v11055 = vadd.f32 0.0, %v11054
  %11056 = vmatprep.mubr.bf16.mxu0 %v9689
  %11057 = vmatmul.mubr.bf16.gmra.mrb[0].mxu0 %v9688
  %v11058 = vpop.f32.mrb[0].mxu0
  %v11059 = vadd.f32 0.0, %v11058
  %v11060 = vpop.f32.mrb[0].mxu0
  %v11061 = vadd.f32 0.0, %v11060
  %v11062 = vpop.f32.mrb[0].mxu0
  %v11063 = vadd.f32 0.0, %v11062
  %v11064 = vpop.f32.mrb[0].mxu0
  %v11065 = vadd.f32 0.0, %v11064
  %11066 = vmatprep.mubr.bf16.mxu0 %v9693
  %11067 = vmatmul.mubr.bf16.gmra.mrb[0].mxu0 %v9692
  %v11068 = vpop.f32.mrb[0].mxu0
  %v11069 = vadd.f32 0.0, %v11068
  %v11070 = vpop.f32.mrb[0].mxu0
  %v11071 = vadd.f32 0.0, %v11070
  %v11072 = vpop.f32.mrb[0].mxu0
  %v11073 = vadd.f32 0.0, %v11072
  %v11074 = vpop.f32.mrb[0].mxu0
  %v11075 = vadd.f32 0.0, %v11074
  %11076 = vmatprep.mubr.bf16.mxu0 %v9697
  %11077 = vmatmul.mubr.bf16.gmra.mrb[0].mxu0 %v9696
  %v11078 = vpop.f32.mrb[0].mxu0
  %v11079 = vadd.f32 0.0, %v11078
  %v11080 = vpop.f32.mrb[0].mxu0
  %v11081 = vadd.f32 0.0, %v11080
  %v11082 = vpop.f32.mrb[0].mxu0
  %v11083 = vpop.f32.mrb[0].mxu0
  %11084 = vdwg.mxu0
  %11085 = vmatprep.subr.bf16.mxu0 %v10397
  %11086 = vmatpush1.bf16.msra.mxu0 %v10396
  %11087 = vmatprep.subr.bf16.mxu0 %v10403
  %11088 = vmatpush1.bf16.msra.mxu0 %v10402
  %11089 = vmatprep.subr.bf16.mxu0 %v10409
  %11090 = vmatpush1.bf16.msra.mxu0 %v10408
  %11091 = vmatprep.subr.bf16.mxu0 %v10415
  %11092 = vmatpush1.bf16.msra.mxu0 %v10414
  %11093 = vmatprep.subr.bf16.mxu0 %v10421
  %11094 = vmatpush1.bf16.msra.mxu0 %v10420
  %11095 = vmatprep.subr.bf16.mxu0 %v10427
  %11096 = vmatpush1.bf16.msra.mxu0 %v10426
  %11097 = vmatprep.subr.bf16.mxu0 %v10433
  %11098 = vmatpush1.bf16.msra.mxu0 %v10432
  %11099 = vmatprep.subr.bf16.mxu0 %v10439
  %11100 = vmatpush1.bf16.msra.mxu0 %v10438
  %11101 = vmatprep.subr.bf16.mxu0 %v10445
  %11102 = vmatpush1.bf16.msra.mxu0 %v10444
  %11103 = vmatprep.subr.bf16.mxu0 %v10451
  %11104 = vmatpush1.bf16.msra.mxu0 %v10450
  %11105 = vmatprep.subr.bf16.mxu0 %v10457
  %11106 = vmatpush1.bf16.msra.mxu0 %v10456
  %11107 = vmatprep.subr.bf16.mxu0 %v10463
  %11108 = vmatpush1.bf16.msra.mxu0 %v10462
  %11109 = vmatprep.subr.bf16.mxu0 %v10469
  %11110 = vmatpush1.bf16.msra.mxu0 %v10468
  %11111 = vmatprep.subr.bf16.mxu0 %v10475
  %11112 = vmatpush1.bf16.msra.mxu0 %v10474
  %11113 = vmatprep.subr.bf16.mxu0 %v10481
  %11114 = vmatpush1.bf16.msra.mxu0 %v10480
  %11115 = vmatprep.subr.bf16.mxu0 %v10487
  %11116 = vmatpush1.bf16.msra.mxu0 %v10486
  %11117 = vmatprep.mubr.bf16.mxu0 %v9683
  %11118 = vmatmul.mubr.bf16.gmra.mrb[0].mxu0 %v9682
  %v11119 = vpop.f32.mrb[0].mxu0
  %v11120 = vadd.f32 %v11039, %v11119
  %v11121 = vpop.f32.mrb[0].mxu0
  %v11122 = vadd.f32 %v11041, %v11121
  %v11123 = vpop.f32.mrb[0].mxu0
  %v11124 = vadd.f32 %v11043, %v11123
  %v11125 = vpop.f32.mrb[0].mxu0
  %v11126 = vadd.f32 %v11045, %v11125
  %11127 = vmatprep.mubr.bf16.mxu0 %v9687
  %11128 = vmatmul.mubr.bf16.gmra.mrb[0].mxu0 %v9686
  %v11129 = vpop.f32.mrb[0].mxu0
  %v11130 = vadd.f32 %v11049, %v11129
  %v11131 = vpop.f32.mrb[0].mxu0
  %v11132 = vadd.f32 %v11051, %v11131
  %v11133 = vpop.f32.mrb[0].mxu0
  %v11134 = vadd.f32 %v11053, %v11133
  %v11135 = vpop.f32.mrb[0].mxu0
  %v11136 = vadd.f32 %v11055, %v11135
  %11137 = vmatprep.mubr.bf16.mxu0 %v9691
  %11138 = vmatmul.mubr.bf16.gmra.mrb[0].mxu0 %v9690
  %v11139 = vpop.f32.mrb[0].mxu0
  %v11140 = vadd.f32 %v11059, %v11139
  %v11141 = vpop.f32.mrb[0].mxu0
  %v11142 = vadd.f32 %v11061, %v11141
  %v11143 = vpop.f32.mrb[0].mxu0
  %v11144 = vadd.f32 %v11063, %v11143
  %v11145 = vpop.f32.mrb[0].mxu0
  %v11146 = vadd.f32 %v11065, %v11145
  %11147 = vmatprep.mubr.bf16.mxu0 %v9695
  %11148 = vmatmul.mubr.bf16.gmra.mrb[0].mxu0 %v9694
  %v11149 = vpop.f32.mrb[0].mxu0
  %v11150 = vadd.f32 %v11069, %v11149
  %v11151 = vpop.f32.mrb[0].mxu0
  %v11152 = vadd.f32 %v11071, %v11151
  %v11153 = vpop.f32.mrb[0].mxu0
  %v11154 = vadd.f32 %v11073, %v11153
  %v11155 = vpop.f32.mrb[0].mxu0
  %v11156 = vadd.f32 %v11075, %v11155
  %11157 = vmatprep.mubr.bf16.mxu0 %v9699
  %11158 = vmatmul.mubr.bf16.gmra.mrb[0].mxu0 %v9698
  %v11159 = vpop.f32.mrb[0].mxu0
  %v11160 = vadd.f32 %v11079, %v11159
  %v11161 = vpop.f32.mrb[0].mxu0
  %v11162 = vadd.f32 %v11081, %v11161
  %v11163 = vpop.f32.mrb[0].mxu0
  %v11164 = vpop.f32.mrb[0].mxu0
  %11165 = vdwg.mxu0
  %v11166 = vadd.f32 %v9361, %v10796
  %v11167 = vadd.f32 %v9362, %v10798
  %v11168 = vadd.f32 %v9363, %v10958
  %v11169 = vadd.f32 %v9364, %v10960
  %v11170 = vadd.f32 %v9365, %v11120
  %v11171 = vadd.f32 %v9366, %v11122
  %v11172 = vadd.f32 %v9367, %v10800
  %v11173 = vadd.f32 %v9368, %v10802
  %v11174 = vadd.f32 %v9369, %v10962
  %v11175 = vadd.f32 %v9370, %v10964
  %v11176 = vadd.f32 %v9371, %v11124
  %v11177 = vadd.f32 %v9372, %v11126
  %v11178 = vadd.f32 %v9373, %v10806
  %v11179 = vadd.f32 %v9374, %v10808
  %v11180 = vadd.f32 %v9375, %v10968
  %v11181 = vadd.f32 %v9376, %v10970
  %v11182 = vadd.f32 %v9377, %v11130
  %v11183 = vadd.f32 %v9378, %v11132
  %v11184 = vadd.f32 %v9379, %v10810
  %v11185 = vadd.f32 %v9380, %v10812
  %v11186 = vadd.f32 %v9381, %v10972
  %v11187 = vadd.f32 %v9382, %v10974
  %v11188 = vadd.f32 %v9383, %v11134
  %v11189 = vadd.f32 %v9384, %v11136
  %v11190 = vadd.f32 %v9385, %v10816
  %v11191 = vadd.f32 %v9386, %v10818
  %v11192 = vadd.f32 %v9387, %v10978
  %v11193 = vadd.f32 %v9388, %v10980
  %v11194 = vadd.f32 %v9389, %v11140
  %v11195 = vadd.f32 %v9390, %v11142
  %v11196 = vadd.f32 %v9391, %v10820
  %v11197 = vadd.f32 %v9392, %v10822
  %v11198 = vadd.f32 %v9393, %v10982
  %v11199 = vadd.f32 %v9394, %v10984
  %v11200 = vadd.f32 %v9395, %v11144
  %v11201 = vadd.f32 %v9396, %v11146
  %v11202 = vadd.f32 %v9397, %v10826
  %v11203 = vadd.f32 %v9398, %v10828
  %v11204 = vadd.f32 %v9399, %v10988
  %v11205 = vadd.f32 %v9400, %v10990
  %v11206 = vadd.f32 %v9401, %v11150
  %v11207 = vadd.f32 %v9402, %v11152
  %v11208 = vadd.f32 %v9403, %v10830
  %v11209 = vadd.f32 %v9404, %v10832
  %v11210 = vadd.f32 %v9405, %v10992
  %v11211 = vadd.f32 %v9406, %v10994
  %v11212 = vadd.f32 %v9407, %v11154
  %v11213 = vadd.f32 %v9408, %v11156
  %v11214 = vadd.f32 %v9409, %v10836
  %v11215 = vadd.f32 %v9410, %v10838
  %v11216 = vadd.f32 %v9411, %v10998
  %v11217 = vadd.f32 %v9412, %v11000
  %v11218 = vadd.f32 %v9413, %v11160
  %v11219 = vadd.f32 %v9414, %v11162
  %v11220 = vld [vmem:[%s7] sm:$0x3f]
  %v11222 = vlaneseq
  %v11223 = vshrl.u32 %v11222, 7
  %v11224 = vsub.s32 0, %v11223
  %v11225 = vrot.slane %v11220, %v11224
  %v11226 = vlaneseq
  %v11227 = vshrl.u32 %v11226, 7
  %v11228 = vsub.s32 1, %v11227
  %v11229 = vrot.slane %v11220, %v11228
  %v11230 = vlaneseq
  %v11231 = vshrl.u32 %v11230, 7
  %v11232 = vsub.s32 2, %v11231
  %v11233 = vrot.slane %v11220, %v11232
  %v11234 = vlaneseq
  %v11235 = vshrl.u32 %v11234, 7
  %v11236 = vsub.s32 3, %v11235
  %v11237 = vrot.slane %v11220, %v11236
  %v11238 = vlaneseq
  %v11239 = vshrl.u32 %v11238, 7
  %v11240 = vsub.s32 4, %v11239
  %v11241 = vrot.slane %v11220, %v11240
  %v11242 = vlaneseq
  %v11243 = vshrl.u32 %v11242, 7
  %v11244 = vsub.s32 5, %v11243
  %v11245 = vrot.slane %v11220, %v11244
  %v11252 = vadd.f32 %v11166, %v11225
  %v11253 = vadd.f32 %v11167, %v11229
  %v11254 = vadd.f32 %v11168, %v11233
  %v11255 = vadd.f32 %v11169, %v11237
  %v11256 = vadd.f32 %v11170, %v11241
  %v11257 = vadd.f32 %v11171, %v11245
  %v11258 = vadd.f32 %v11172, %v11225
  %v11259 = vadd.f32 %v11173, %v11229
  %v11260 = vadd.f32 %v11174, %v11233
  %v11261 = vadd.f32 %v11175, %v11237
  %v11262 = vadd.f32 %v11176, %v11241
  %v11263 = vadd.f32 %v11177, %v11245
  %v11264 = vadd.f32 %v11178, %v11225
  %v11265 = vadd.f32 %v11179, %v11229
  %v11266 = vadd.f32 %v11180, %v11233
  %v11267 = vadd.f32 %v11181, %v11237
  %v11268 = vadd.f32 %v11182, %v11241
  %v11269 = vadd.f32 %v11183, %v11245
  %v11270 = vadd.f32 %v11184, %v11225
  %v11271 = vadd.f32 %v11185, %v11229
  %v11272 = vadd.f32 %v11186, %v11233
  %v11273 = vadd.f32 %v11187, %v11237
  %v11274 = vadd.f32 %v11188, %v11241
  %v11275 = vadd.f32 %v11189, %v11245
  %v11276 = vadd.f32 %v11190, %v11225
  %v11277 = vadd.f32 %v11191, %v11229
  %v11278 = vadd.f32 %v11192, %v11233
  %v11279 = vadd.f32 %v11193, %v11237
  %v11280 = vadd.f32 %v11194, %v11241
  %v11281 = vadd.f32 %v11195, %v11245
  %v11282 = vadd.f32 %v11196, %v11225
  %v11283 = vadd.f32 %v11197, %v11229
  %v11284 = vadd.f32 %v11198, %v11233
  %v11285 = vadd.f32 %v11199, %v11237
  %v11286 = vadd.f32 %v11200, %v11241
  %v11287 = vadd.f32 %v11201, %v11245
  %v11288 = vadd.f32 %v11202, %v11225
  %v11289 = vadd.f32 %v11203, %v11229
  %v11290 = vadd.f32 %v11204, %v11233
  %v11291 = vadd.f32 %v11205, %v11237
  %v11292 = vadd.f32 %v11206, %v11241
  %v11293 = vadd.f32 %v11207, %v11245
  %v11294 = vadd.f32 %v11208, %v11225
  %v11295 = vadd.f32 %v11209, %v11229
  %v11296 = vadd.f32 %v11210, %v11233
  %v11297 = vadd.f32 %v11211, %v11237
  %v11298 = vadd.f32 %v11212, %v11241
  %v11299 = vadd.f32 %v11213, %v11245
  %v11300 = vadd.f32 %v11214, %v11225
  %v11301 = vadd.f32 %v11215, %v11229
  %v11302 = vadd.f32 %v11216, %v11233
  %v11303 = vadd.f32 %v11217, %v11237
  %v11304 = vadd.f32 %v11218, %v11241
  %v11305 = vadd.f32 %v11219, %v11245
  %v11306 = vmax.f32 %v11252, 0.0
  %v11307 = vmax.f32 %v11253, 0.0
  %v11308 = vmax.f32 %v11254, 0.0
  %v11309 = vmax.f32 %v11255, 0.0
  %v11310 = vmax.f32 %v11256, 0.0
  %v11311 = vmax.f32 %v11257, 0.0
  %v11312 = vmax.f32 %v11258, 0.0
  %v11313 = vmax.f32 %v11259, 0.0
  %v11314 = vmax.f32 %v11260, 0.0
  %v11315 = vmax.f32 %v11261, 0.0
  %v11316 = vmax.f32 %v11262, 0.0
  %v11317 = vmax.f32 %v11263, 0.0
  %v11318 = vmax.f32 %v11264, 0.0
  %v11319 = vmax.f32 %v11265, 0.0
  %v11320 = vmax.f32 %v11266, 0.0
  %v11321 = vmax.f32 %v11267, 0.0
  %v11322 = vmax.f32 %v11268, 0.0
  %v11323 = vmax.f32 %v11269, 0.0
  %v11324 = vmax.f32 %v11270, 0.0
  %v11325 = vmax.f32 %v11271, 0.0
  %v11326 = vmax.f32 %v11272, 0.0
  %v11327 = vmax.f32 %v11273, 0.0
  %v11328 = vmax.f32 %v11274, 0.0
  %v11329 = vmax.f32 %v11275, 0.0
  %v11330 = vmax.f32 %v11276, 0.0
  %v11331 = vmax.f32 %v11277, 0.0
  %v11332 = vmax.f32 %v11278, 0.0
  %v11333 = vmax.f32 %v11279, 0.0
  %v11334 = vmax.f32 %v11280, 0.0
  %v11335 = vmax.f32 %v11281, 0.0
  %v11336 = vmax.f32 %v11282, 0.0
  %v11337 = vmax.f32 %v11283, 0.0
  %v11338 = vmax.f32 %v11284, 0.0
  %v11339 = vmax.f32 %v11285, 0.0
  %v11340 = vmax.f32 %v11286, 0.0
  %v11341 = vmax.f32 %v11287, 0.0
  %v11342 = vmax.f32 %v11288, 0.0
  %v11343 = vmax.f32 %v11289, 0.0
  %v11344 = vmax.f32 %v11290, 0.0
  %v11345 = vmax.f32 %v11291, 0.0
  %v11346 = vmax.f32 %v11292, 0.0
  %v11347 = vmax.f32 %v11293, 0.0
  %v11348 = vmax.f32 %v11294, 0.0
  %v11349 = vmax.f32 %v11295, 0.0
  %v11350 = vmax.f32 %v11296, 0.0
  %v11351 = vmax.f32 %v11297, 0.0
  %v11352 = vmax.f32 %v11298, 0.0
  %v11353 = vmax.f32 %v11299, 0.0
  %v11354 = vmax.f32 %v11300, 0.0
  %v11355 = vmax.f32 %v11301, 0.0
  %v11356 = vmax.f32 %v11302, 0.0
  %v11357 = vmax.f32 %v11303, 0.0
  %v11358 = vmax.f32 %v11304, 0.0
  %v11359 = vmax.f32 %v11305, 0.0
  %v11360 = vmax.f32 %v11306, %v11308
  %v11361 = vmax.f32 %v11307, %v11309
  %v11362 = vmax.f32 %v11312, %v11314
  %v11363 = vmax.f32 %v11313, %v11315
  %v11364 = vmax.f32 %v11318, %v11320
  %v11365 = vmax.f32 %v11319, %v11321
  %v11366 = vmax.f32 %v11324, %v11326
  %v11367 = vmax.f32 %v11325, %v11327
  %v11368 = vmax.f32 %v11330, %v11332
  %v11369 = vmax.f32 %v11331, %v11333
  %v11370 = vmax.f32 %v11336, %v11338
  %v11371 = vmax.f32 %v11337, %v11339
  %v11372 = vmax.f32 %v11342, %v11344
  %v11373 = vmax.f32 %v11343, %v11345
  %v11374 = vmax.f32 %v11348, %v11350
  %v11375 = vmax.f32 %v11349, %v11351
  %v11376 = vmax.f32 %v11354, %v11356
  %v11377 = vmax.f32 %v11355, %v11357
  %v11378 = vmax.f32 %v11360, %v11310
  %v11379 = vmax.f32 %v11361, %v11311
  %v11380 = vmax.f32 %v11362, %v11316
  %v11381 = vmax.f32 %v11363, %v11317
  %v11382 = vmax.f32 %v11364, %v11322
  %v11383 = vmax.f32 %v11365, %v11323
  %v11384 = vmax.f32 %v11366, %v11328
  %v11385 = vmax.f32 %v11367, %v11329
  %v11386 = vmax.f32 %v11368, %v11334
  %v11387 = vmax.f32 %v11369, %v11335
  %v11388 = vmax.f32 %v11370, %v11340
  %v11389 = vmax.f32 %v11371, %v11341
  %v11390 = vmax.f32 %v11372, %v11346
  %v11391 = vmax.f32 %v11373, %v11347
  %v11392 = vmax.f32 %v11374, %v11352
  %v11393 = vmax.f32 %v11375, %v11353
  %v11394 = vmax.f32 %v11376, %v11358
  %v11395 = vmax.f32 %v11377, %v11359
  %v11396 = vmax.f32 %v11378, %v11380
  %v11397 = vmax.f32 %v11379, %v11381
  %v11398 = vmax.f32 %v11396, %v11382
  %v11399 = vmax.f32 %v11397, %v11383
  %v11400 = vmax.f32 %v11384, %v11386
  %v11401 = vmax.f32 %v11385, %v11387
  %v11402 = vmax.f32 %v11400, %v11388
  %v11403 = vmax.f32 %v11401, %v11389
  %v11404 = vmax.f32 %v11390, %v11392
  %v11405 = vmax.f32 %v11391, %v11393
  %v11406 = vmax.f32 %v11404, %v11394
  %v11407 = vmax.f32 %v11405, %v11395
  %v11408 = vpack.c.bf16 %v11398, %v11398
  %v11409 = vpack.c.bf16 %v11399, %v11399
  %v11410 = vpack.c.bf16 %v11402, %v11402
  %v11411 = vpack.c.bf16 %v11403, %v11403
  %v11412 = vpack.c.bf16 %v11406, %v11406
  %v11413 = vpack.c.bf16 %v11407, %v11407
  %v11414 = vld [vmem:[%s4] sm:$0xff]
  %v11415 = vld [vmem:[%s4 + $0x8] sm:$0xff]
  %v11416 = vld [vmem:[%s4 + $0x10] sm:$0xff]
  %v11417 = vld [vmem:[%s4 + $0x18] sm:$0xff]
  %v11418 = vld [vmem:[%s4 + $0x20] sm:$0xff]
  %v11419 = vld [vmem:[%s4 + $0x28] sm:$0xff]
  %v11420 = vld [vmem:[%s4 + $0x30] sm:$0xff]
  %v11421 = vld [vmem:[%s4 + $0x38] sm:$0xff]
  %v11422 = vld [vmem:[%s4 + $0x40] sm:$0xff]
  %v11423 = vld [vmem:[%s4 + $0x48] sm:$0xff]
  %v11424 = vld [vmem:[%s4 + $0x50] sm:$0xff]
  %v11425 = vld [vmem:[%s4 + $0x58] sm:$0xff]
  %v11426 = vld [vmem:[%s4 + $0x60] sm:$0xff]
  %v11427 = vld [vmem:[%s4 + $0x68] sm:$0xff]
  %v11428 = vld [vmem:[%s4 + $0x70] sm:$0xff]
  %v11429 = vld [vmem:[%s4 + $0x78] sm:$0xff]
  %v11430 = vld [vmem:[%s4 + $0x80] sm:$0xff]
  %v11431 = vld [vmem:[%s4 + $0x88] sm:$0xff]
  %v11432 = vld [vmem:[%s4 + $0x90] sm:$0xff]
  %v11433 = vld [vmem:[%s4 + $0x98] sm:$0xff]
  %v11434 = vld [vmem:[%s4 + $0xa0] sm:$0xff]
  %v11435 = vld [vmem:[%s4 + $0xa8] sm:$0xff]
  %v11436 = vld [vmem:[%s4 + $0xb0] sm:$0xff]
  %v11437 = vld [vmem:[%s4 + $0xb8] sm:$0xff]
  %v11438 = vld [vmem:[%s4 + $0xc0] sm:$0xff]
  %v11439 = vld [vmem:[%s4 + $0xc8] sm:$0xff]
  %v11440 = vld [vmem:[%s4 + $0xd0] sm:$0xff]
  %v11441 = vld [vmem:[%s4 + $0xd8] sm:$0xff]
  %v11442 = vld [vmem:[%s4 + $0xe0] sm:$0xff]
  %v11443 = vld [vmem:[%s4 + $0xe8] sm:$0xff]
  %v11444 = vld [vmem:[%s4 + $0xf0] sm:$0xff]
  %v11445 = vld [vmem:[%s4 + $0xf8] sm:$0xff]
  %v11446 = vld [vmem:[%s4 + $0x100] sm:$0xff]
  %v11447 = vld [vmem:[%s4 + $0x108] sm:$0xff]
  %v11448 = vld [vmem:[%s4 + $0x110] sm:$0xff]
  %v11449 = vld [vmem:[%s4 + $0x118] sm:$0xff]
  %v11450 = vld [vmem:[%s4 + $0x120] sm:$0xff]
  %v11451 = vld [vmem:[%s4 + $0x128] sm:$0xff]
  %v11452 = vld [vmem:[%s4 + $0x130] sm:$0xff]
  %v11453 = vld [vmem:[%s4 + $0x138] sm:$0xff]
  %v11454 = vld [vmem:[%s4 + $0x140] sm:$0xff]
  %v11455 = vld [vmem:[%s4 + $0x148] sm:$0xff]
  %v11456 = vld [vmem:[%s4 + $0x150] sm:$0xff]
  %v11457 = vld [vmem:[%s4 + $0x158] sm:$0xff]
  %v11458 = vld [vmem:[%s4 + $0x160] sm:$0xff]
  %v11459 = vld [vmem:[%s4 + $0x168] sm:$0xff]
  %v11460 = vld [vmem:[%s4 + $0x170] sm:$0xff]
  %v11461 = vld [vmem:[%s4 + $0x178] sm:$0xff]
  %v11462 = vld [vmem:[%s4 + $0x180] sm:$0xff]
  %v11463 = vld [vmem:[%s4 + $0x188] sm:$0xff]
  %v11464 = vld [vmem:[%s4 + $0x190] sm:$0xff]
  %v11465 = vld [vmem:[%s4 + $0x198] sm:$0xff]
  %v11466 = vld [vmem:[%s4 + $0x1a0] sm:$0xff]
  %v11467 = vld [vmem:[%s4 + $0x1a8] sm:$0xff]
  %v11468 = vld [vmem:[%s4 + $0x1b0] sm:$0xff]
  %v11469 = vld [vmem:[%s4 + $0x1b8] sm:$0xff]
  %v11470 = vld [vmem:[%s4 + $0x1c0] sm:$0xff]
  %v11471 = vld [vmem:[%s4 + $0x1c8] sm:$0xff]
  %v11472 = vld [vmem:[%s4 + $0x1d0] sm:$0xff]
  %v11473 = vld [vmem:[%s4 + $0x1d8] sm:$0xff]
  %v11474 = vld [vmem:[%s4 + $0x1e0] sm:$0xff]
  %v11475 = vld [vmem:[%s4 + $0x1e8] sm:$0xff]
  %v11476 = vld [vmem:[%s4 + $0x1f0] sm:$0xff]
  %v11477 = vld [vmem:[%s4 + $0x1f8] sm:$0xff]
  %v11478 = vld [vmem:[%s4 + $0x200] sm:$0xff]
  %v11479 = vld [vmem:[%s4 + $0x208] sm:$0xff]
  %v11480 = vld [vmem:[%s4 + $0x210] sm:$0xff]
  %v11481 = vld [vmem:[%s4 + $0x218] sm:$0xff]
  %v11482 = vld [vmem:[%s4 + $0x220] sm:$0xff]
  %v11483 = vld [vmem:[%s4 + $0x228] sm:$0xff]
  %v11484 = vld [vmem:[%s4 + $0x230] sm:$0xff]
  %v11485 = vld [vmem:[%s4 + $0x238] sm:$0xff]
  %v11486 = vld [vmem:[%s4 + $0x240] sm:$0xff]
  %v11487 = vld [vmem:[%s4 + $0x248] sm:$0xff]
  %v11488 = vld [vmem:[%s4 + $0x250] sm:$0xff]
  %v11489 = vld [vmem:[%s4 + $0x258] sm:$0xff]
  %v11490 = vld [vmem:[%s4 + $0x260] sm:$0xff]
  %v11491 = vld [vmem:[%s4 + $0x268] sm:$0xff]
  %v11492 = vld [vmem:[%s4 + $0x270] sm:$0xff]
  %v11493 = vld [vmem:[%s4 + $0x278] sm:$0xff]
  %v11494 = vld [vmem:[%s4 + $0x280] sm:$0xff]
  %v11495 = vld [vmem:[%s4 + $0x288] sm:$0xff]
  %v11496 = vld [vmem:[%s4 + $0x290] sm:$0xff]
  %v11497 = vld [vmem:[%s4 + $0x298] sm:$0xff]
  %v11498 = vld [vmem:[%s4 + $0x2a0] sm:$0xff]
  %v11499 = vld [vmem:[%s4 + $0x2a8] sm:$0xff]
  %v11500 = vld [vmem:[%s4 + $0x2b0] sm:$0xff]
  %v11501 = vld [vmem:[%s4 + $0x2b8] sm:$0xff]
  %v11502 = vld [vmem:[%s4 + $0x2c0] sm:$0xff]
  %v11503 = vld [vmem:[%s4 + $0x2c8] sm:$0xff]
  %v11504 = vld [vmem:[%s4 + $0x2d0] sm:$0xff]
  %v11505 = vld [vmem:[%s4 + $0x2d8] sm:$0xff]
  %v11506 = vld [vmem:[%s4 + $0x2e0] sm:$0xff]
  %v11507 = vld [vmem:[%s4 + $0x2e8] sm:$0xff]
  %v11508 = vld [vmem:[%s4 + $0x2f0] sm:$0xff]
  %v11509 = vld [vmem:[%s4 + $0x2f8] sm:$0xff]
  %v11510 = vld [vmem:[%s8] sm:$0x3]
  %v11512 = vlaneseq
  %v11513 = vshrl.u32 %v11512, 7
  %v11514 = vsub.s32 0, %v11513
  %v11515 = vrot.slane %v11510, %v11514
  %v11516 = vlaneseq
  %v11517 = vshrl.u32 %v11516, 7
  %v11518 = vsub.s32 1, %v11517
  %v11519 = vrot.slane %v11510, %v11518
  %v11618 = vunpack.c.l.b16 %v11414
  %v11619 = vunpack.c.h.b16 %v11414
  %v11620 = vunpack.c.l.b16 %v11415
  %v11621 = vunpack.c.h.b16 %v11415
  %v11622 = vunpack.c.l.b16 %v11416
  %v11623 = vunpack.c.h.b16 %v11416
  %v11624 = vunpack.c.l.b16 %v11417
  %v11625 = vunpack.c.h.b16 %v11417
  %v11626 = vunpack.c.l.b16 %v11418
  %v11627 = vunpack.c.h.b16 %v11418
  %v11628 = vunpack.c.l.b16 %v11419
  %v11629 = vunpack.c.h.b16 %v11419
  %v11630 = vunpack.c.l.b16 %v11420
  %v11631 = vunpack.c.h.b16 %v11420
  %v11632 = vunpack.c.l.b16 %v11421
  %v11633 = vunpack.c.h.b16 %v11421
  %v11634 = vunpack.c.l.b16 %v11422
  %v11635 = vunpack.c.h.b16 %v11422
  %v11636 = vunpack.c.l.b16 %v11423
  %v11637 = vunpack.c.h.b16 %v11423
  %v11638 = vunpack.c.l.b16 %v11424
  %v11639 = vunpack.c.h.b16 %v11424
  %v11640 = vunpack.c.l.b16 %v11425
  %v11641 = vunpack.c.h.b16 %v11425
  %v11642 = vunpack.c.l.b16 %v11426
  %v11643 = vunpack.c.h.b16 %v11426
  %v11644 = vunpack.c.l.b16 %v11427
  %v11645 = vunpack.c.h.b16 %v11427
  %v11646 = vunpack.c.l.b16 %v11428
  %v11647 = vunpack.c.h.b16 %v11428
  %v11648 = vunpack.c.l.b16 %v11429
  %v11649 = vunpack.c.h.b16 %v11429
  %v11650 = vunpack.c.l.b16 %v11430
  %v11651 = vunpack.c.h.b16 %v11430
  %v11652 = vunpack.c.l.b16 %v11431
  %v11653 = vunpack.c.h.b16 %v11431
  %v11654 = vunpack.c.l.b16 %v11432
  %v11655 = vunpack.c.h.b16 %v11432
  %v11656 = vunpack.c.l.b16 %v11433
  %v11657 = vunpack.c.h.b16 %v11433
  %v11658 = vunpack.c.l.b16 %v11434
  %v11659 = vunpack.c.h.b16 %v11434
  %v11660 = vunpack.c.l.b16 %v11435
  %v11661 = vunpack.c.h.b16 %v11435
  %v11662 = vunpack.c.l.b16 %v11436
  %v11663 = vunpack.c.h.b16 %v11436
  %v11664 = vunpack.c.l.b16 %v11437
  %v11665 = vunpack.c.h.b16 %v11437
  %v11666 = vunpack.c.l.b16 %v11438
  %v11667 = vunpack.c.h.b16 %v11438
  %v11668 = vunpack.c.l.b16 %v11439
  %v11669 = vunpack.c.h.b16 %v11439
  %v11670 = vunpack.c.l.b16 %v11440
  %v11671 = vunpack.c.h.b16 %v11440
  %v11672 = vunpack.c.l.b16 %v11441
  %v11673 = vunpack.c.h.b16 %v11441
  %v11674 = vunpack.c.l.b16 %v11442
  %v11675 = vunpack.c.h.b16 %v11442
  %v11676 = vunpack.c.l.b16 %v11443
  %v11677 = vunpack.c.h.b16 %v11443
  %v11678 = vunpack.c.l.b16 %v11444
  %v11679 = vunpack.c.h.b16 %v11444
  %v11680 = vunpack.c.l.b16 %v11445
  %v11681 = vunpack.c.h.b16 %v11445
  %v11682 = vunpack.c.l.b16 %v11446
  %v11683 = vunpack.c.h.b16 %v11446
  %v11684 = vunpack.c.l.b16 %v11447
  %v11685 = vunpack.c.h.b16 %v11447
  %v11686 = vunpack.c.l.b16 %v11448
  %v11687 = vunpack.c.h.b16 %v11448
  %v11688 = vunpack.c.l.b16 %v11449
  %v11689 = vunpack.c.h.b16 %v11449
  %v11690 = vunpack.c.l.b16 %v11450
  %v11691 = vunpack.c.h.b16 %v11450
  %v11692 = vunpack.c.l.b16 %v11451
  %v11693 = vunpack.c.h.b16 %v11451
  %v11694 = vunpack.c.l.b16 %v11452
  %v11695 = vunpack.c.h.b16 %v11452
  %v11696 = vunpack.c.l.b16 %v11453
  %v11697 = vunpack.c.h.b16 %v11453
  %v11698 = vunpack.c.l.b16 %v11454
  %v11699 = vunpack.c.h.b16 %v11454
  %v11700 = vunpack.c.l.b16 %v11455
  %v11701 = vunpack.c.h.b16 %v11455
  %v11702 = vunpack.c.l.b16 %v11456
  %v11703 = vunpack.c.h.b16 %v11456
  %v11704 = vunpack.c.l.b16 %v11457
  %v11705 = vunpack.c.h.b16 %v11457
  %v11706 = vunpack.c.l.b16 %v11458
  %v11707 = vunpack.c.h.b16 %v11458
  %v11708 = vunpack.c.l.b16 %v11459
  %v11709 = vunpack.c.h.b16 %v11459
  %v11710 = vunpack.c.l.b16 %v11460
  %v11711 = vunpack.c.h.b16 %v11460
  %v11712 = vunpack.c.l.b16 %v11461
  %v11713 = vunpack.c.h.b16 %v11461
  %v11714 = vunpack.c.l.b16 %v11462
  %v11715 = vunpack.c.h.b16 %v11462
  %v11716 = vunpack.c.l.b16 %v11463
  %v11717 = vunpack.c.h.b16 %v11463
  %v11718 = vunpack.c.l.b16 %v11464
  %v11719 = vunpack.c.h.b16 %v11464
  %v11720 = vunpack.c.l.b16 %v11465
  %v11721 = vunpack.c.h.b16 %v11465
  %v11722 = vunpack.c.l.b16 %v11466
  %v11723 = vunpack.c.h.b16 %v11466
  %v11724 = vunpack.c.l.b16 %v11467
  %v11725 = vunpack.c.h.b16 %v11467
  %v11726 = vunpack.c.l.b16 %v11468
  %v11727 = vunpack.c.h.b16 %v11468
  %v11728 = vunpack.c.l.b16 %v11469
  %v11729 = vunpack.c.h.b16 %v11469
  %v11730 = vunpack.c.l.b16 %v11470
  %v11731 = vunpack.c.h.b16 %v11470
  %v11732 = vunpack.c.l.b16 %v11471
  %v11733 = vunpack.c.h.b16 %v11471
  %v11734 = vunpack.c.l.b16 %v11472
  %v11735 = vunpack.c.h.b16 %v11472
  %v11736 = vunpack.c.l.b16 %v11473
  %v11737 = vunpack.c.h.b16 %v11473
  %v11738 = vunpack.c.l.b16 %v11474
  %v11739 = vunpack.c.h.b16 %v11474
  %v11740 = vunpack.c.l.b16 %v11475
  %v11741 = vunpack.c.h.b16 %v11475
  %v11742 = vunpack.c.l.b16 %v11476
  %v11743 = vunpack.c.h.b16 %v11476
  %v11744 = vunpack.c.l.b16 %v11477
  %v11745 = vunpack.c.h.b16 %v11477
  %v11746 = vunpack.c.l.b16 %v11478
  %v11747 = vunpack.c.h.b16 %v11478
  %v11748 = vunpack.c.l.b16 %v11479
  %v11749 = vunpack.c.h.b16 %v11479
  %v11750 = vunpack.c.l.b16 %v11480
  %v11751 = vunpack.c.h.b16 %v11480
  %v11752 = vunpack.c.l.b16 %v11481
  %v11753 = vunpack.c.h.b16 %v11481
  %v11754 = vunpack.c.l.b16 %v11482
  %v11755 = vunpack.c.h.b16 %v11482
  %v11756 = vunpack.c.l.b16 %v11483
  %v11757 = vunpack.c.h.b16 %v11483
  %v11758 = vunpack.c.l.b16 %v11484
  %v11759 = vunpack.c.h.b16 %v11484
  %v11760 = vunpack.c.l.b16 %v11485
  %v11761 = vunpack.c.h.b16 %v11485
  %v11762 = vunpack.c.l.b16 %v11486
  %v11763 = vunpack.c.h.b16 %v11486
  %v11764 = vunpack.c.l.b16 %v11487
  %v11765 = vunpack.c.h.b16 %v11487
  %v11766 = vunpack.c.l.b16 %v11488
  %v11767 = vunpack.c.h.b16 %v11488
  %v11768 = vunpack.c.l.b16 %v11489
  %v11769 = vunpack.c.h.b16 %v11489
  %v11770 = vunpack.c.l.b16 %v11490
  %v11771 = vunpack.c.h.b16 %v11490
  %v11772 = vunpack.c.l.b16 %v11491
  %v11773 = vunpack.c.h.b16 %v11491
  %v11774 = vunpack.c.l.b16 %v11492
  %v11775 = vunpack.c.h.b16 %v11492
  %v11776 = vunpack.c.l.b16 %v11493
  %v11777 = vunpack.c.h.b16 %v11493
  %v11778 = vunpack.c.l.b16 %v11494
  %v11779 = vunpack.c.h.b16 %v11494
  %v11780 = vunpack.c.l.b16 %v11495
  %v11781 = vunpack.c.h.b16 %v11495
  %v11782 = vunpack.c.l.b16 %v11496
  %v11783 = vunpack.c.h.b16 %v11496
  %v11784 = vunpack.c.l.b16 %v11497
  %v11785 = vunpack.c.h.b16 %v11497
  %v11786 = vunpack.c.l.b16 %v11498
  %v11787 = vunpack.c.h.b16 %v11498
  %v11788 = vunpack.c.l.b16 %v11499
  %v11789 = vunpack.c.h.b16 %v11499
  %v11790 = vunpack.c.l.b16 %v11500
  %v11791 = vunpack.c.h.b16 %v11500
  %v11792 = vunpack.c.l.b16 %v11501
  %v11793 = vunpack.c.h.b16 %v11501
  %v11794 = vunpack.c.l.b16 %v11502
  %v11795 = vunpack.c.h.b16 %v11502
  %v11796 = vunpack.c.l.b16 %v11503
  %v11797 = vunpack.c.h.b16 %v11503
  %v11798 = vunpack.c.l.b16 %v11504
  %v11799 = vunpack.c.h.b16 %v11504
  %v11800 = vunpack.c.l.b16 %v11505
  %v11801 = vunpack.c.h.b16 %v11505
  %v11802 = vunpack.c.l.b16 %v11506
  %v11803 = vunpack.c.h.b16 %v11506
  %v11804 = vunpack.c.l.b16 %v11507
  %v11805 = vunpack.c.h.b16 %v11507
  %v11806 = vunpack.c.l.b16 %v11508
  %v11807 = vunpack.c.h.b16 %v11508
  %v11808 = vunpack.c.l.b16 %v11509
  %v11809 = vunpack.c.h.b16 %v11509
  %v11810 = vpack.c.b16 %v11620, %v11618
  %v11811 = vpack.c.b16 %v11621, %v11619
  %v11812 = vpack.c.b16 %v11624, %v11622
  %v11813 = vpack.c.b16 %v11625, %v11623
  %v11814 = vpack.c.b16 %v11628, %v11626
  %v11815 = vpack.c.b16 %v11629, %v11627
  %v11816 = vpack.c.b16 %v11632, %v11630
  %v11817 = vpack.c.b16 %v11633, %v11631
  %v11818 = vpack.c.b16 %v11636, %v11634
  %v11819 = vpack.c.b16 %v11637, %v11635
  %v11820 = vpack.c.b16 %v11640, %v11638
  %v11821 = vpack.c.b16 %v11641, %v11639
  %v11822 = vpack.c.b16 %v11644, %v11642
  %v11823 = vpack.c.b16 %v11645, %v11643
  %v11824 = vpack.c.b16 %v11648, %v11646
  %v11825 = vpack.c.b16 %v11649, %v11647
  %v11826 = vpack.c.b16 %v11652, %v11650
  %v11827 = vpack.c.b16 %v11653, %v11651
  %v11828 = vpack.c.b16 %v11656, %v11654
  %v11829 = vpack.c.b16 %v11657, %v11655
  %v11830 = vpack.c.b16 %v11660, %v11658
  %v11831 = vpack.c.b16 %v11661, %v11659
  %v11832 = vpack.c.b16 %v11664, %v11662
  %v11833 = vpack.c.b16 %v11665, %v11663
  %v11834 = vpack.c.b16 %v11668, %v11666
  %v11835 = vpack.c.b16 %v11669, %v11667
  %v11836 = vpack.c.b16 %v11672, %v11670
  %v11837 = vpack.c.b16 %v11673, %v11671
  %v11838 = vpack.c.b16 %v11676, %v11674
  %v11839 = vpack.c.b16 %v11677, %v11675
  %v11840 = vpack.c.b16 %v11680, %v11678
  %v11841 = vpack.c.b16 %v11681, %v11679
  %v11842 = vpack.c.b16 %v11684, %v11682
  %v11843 = vpack.c.b16 %v11685, %v11683
  %v11844 = vpack.c.b16 %v11688, %v11686
  %v11845 = vpack.c.b16 %v11689, %v11687
  %v11846 = vpack.c.b16 %v11692, %v11690
  %v11847 = vpack.c.b16 %v11693, %v11691
  %v11848 = vpack.c.b16 %v11696, %v11694
  %v11849 = vpack.c.b16 %v11697, %v11695
  %v11850 = vpack.c.b16 %v11700, %v11698
  %v11851 = vpack.c.b16 %v11701, %v11699
  %v11852 = vpack.c.b16 %v11704, %v11702
  %v11853 = vpack.c.b16 %v11705, %v11703
  %v11854 = vpack.c.b16 %v11708, %v11706
  %v11855 = vpack.c.b16 %v11709, %v11707
  %v11856 = vpack.c.b16 %v11712, %v11710
  %v11857 = vpack.c.b16 %v11713, %v11711
  %v11858 = vpack.c.b16 %v11716, %v11714
  %v11859 = vpack.c.b16 %v11717, %v11715
  %v11860 = vpack.c.b16 %v11720, %v11718
  %v11861 = vpack.c.b16 %v11721, %v11719
  %v11862 = vpack.c.b16 %v11724, %v11722
  %v11863 = vpack.c.b16 %v11725, %v11723
  %v11864 = vpack.c.b16 %v11728, %v11726
  %v11865 = vpack.c.b16 %v11729, %v11727
  %v11866 = vpack.c.b16 %v11732, %v11730
  %v11867 = vpack.c.b16 %v11733, %v11731
  %v11868 = vpack.c.b16 %v11736, %v11734
  %v11869 = vpack.c.b16 %v11737, %v11735
  %v11870 = vpack.c.b16 %v11740, %v11738
  %v11871 = vpack.c.b16 %v11741, %v11739
  %v11872 = vpack.c.b16 %v11744, %v11742
  %v11873 = vpack.c.b16 %v11745, %v11743
  %v11874 = vpack.c.b16 %v11748, %v11746
  %v11875 = vpack.c.b16 %v11749, %v11747
  %v11876 = vpack.c.b16 %v11752, %v11750
  %v11877 = vpack.c.b16 %v11753, %v11751
  %v11878 = vpack.c.b16 %v11756, %v11754
  %v11879 = vpack.c.b16 %v11757, %v11755
  %v11880 = vpack.c.b16 %v11760, %v11758
  %v11881 = vpack.c.b16 %v11761, %v11759
  %v11882 = vpack.c.b16 %v11764, %v11762
  %v11883 = vpack.c.b16 %v11765, %v11763
  %v11884 = vpack.c.b16 %v11768, %v11766
  %v11885 = vpack.c.b16 %v11769, %v11767
  %v11886 = vpack.c.b16 %v11772, %v11770
  %v11887 = vpack.c.b16 %v11773, %v11771
  %v11888 = vpack.c.b16 %v11776, %v11774
  %v11889 = vpack.c.b16 %v11777, %v11775
  %v11890 = vpack.c.b16 %v11780, %v11778
  %v11891 = vpack.c.b16 %v11781, %v11779
  %v11892 = vpack.c.b16 %v11784, %v11782
  %v11893 = vpack.c.b16 %v11785, %v11783
  %v11894 = vpack.c.b16 %v11788, %v11786
  %v11895 = vpack.c.b16 %v11789, %v11787
  %v11896 = vpack.c.b16 %v11792, %v11790
  %v11897 = vpack.c.b16 %v11793, %v11791
  %v11898 = vpack.c.b16 %v11796, %v11794
  %v11899 = vpack.c.b16 %v11797, %v11795
  %v11900 = vpack.c.b16 %v11800, %v11798
  %v11901 = vpack.c.b16 %v11801, %v11799
  %v11902 = vpack.c.b16 %v11804, %v11802
  %v11903 = vpack.c.b16 %v11805, %v11803
  %v11904 = vpack.c.b16 %v11808, %v11806
  %v11905 = vpack.c.b16 %v11809, %v11807
  %12002 = vmatprep.subr.bf16.mxu0 %v11811
  %12003 = vmatpush1.bf16.msra.mxu0 %v11810
  %12004 = vmatprep.subr.bf16.mxu0 %v11813
  %12005 = vmatpush1.bf16.msra.mxu0 %v11812
  %12006 = vmatprep.subr.bf16.mxu0 %v11815
  %12007 = vmatpush1.bf16.msra.mxu0 %v11814
  %12008 = vmatprep.subr.bf16.mxu0 %v11817
  %12009 = vmatpush1.bf16.msra.mxu0 %v11816
  %12010 = vmatprep.subr.bf16.mxu0 %v11819
  %12011 = vmatpush1.bf16.msra.mxu0 %v11818
  %12012 = vmatprep.subr.bf16.mxu0 %v11821
  %12013 = vmatpush1.bf16.msra.mxu0 %v11820
  %12014 = vmatprep.subr.bf16.mxu0 %v11823
  %12015 = vmatpush1.bf16.msra.mxu0 %v11822
  %12016 = vmatprep.subr.bf16.mxu0 %v11825
  %12017 = vmatpush1.bf16.msra.mxu0 %v11824
  %12018 = vmatprep.subr.bf16.mxu0 %v11827
  %12019 = vmatpush1.bf16.msra.mxu0 %v11826
  %12020 = vmatprep.subr.bf16.mxu0 %v11829
  %12021 = vmatpush1.bf16.msra.mxu0 %v11828
  %12022 = vmatprep.subr.bf16.mxu0 %v11831
  %12023 = vmatpush1.bf16.msra.mxu0 %v11830
  %12024 = vmatprep.subr.bf16.mxu0 %v11833
  %12025 = vmatpush1.bf16.msra.mxu0 %v11832
  %12026 = vmatprep.subr.bf16.mxu0 %v11835
  %12027 = vmatpush1.bf16.msra.mxu0 %v11834
  %12028 = vmatprep.subr.bf16.mxu0 %v11837
  %12029 = vmatpush1.bf16.msra.mxu0 %v11836
  %12030 = vmatprep.subr.bf16.mxu0 %v11839
  %12031 = vmatpush1.bf16.msra.mxu0 %v11838
  %12032 = vmatprep.subr.bf16.mxu0 %v11841
  %12033 = vmatpush1.bf16.msra.mxu0 %v11840
  %12034 = vmatprep.mubr.bf16.mxu0 %v11409
  %12035 = vmatmul.mubr.bf16.gmra.mrb[0].mxu0 %v11408
  %v12036 = vpop.f32.mrb[0].mxu0
  %v12037 = vadd.f32 %v11515, %v12036
  %v12038 = vpop.f32.mrb[0].mxu0
  %v12039 = vadd.f32 %v11519, %v12038
  %v12040 = vpop.f32.mrb[0].mxu0
  %v12041 = vpop.f32.mrb[0].mxu0
  %12042 = vdwg.mxu0
  %12043 = vmatprep.subr.bf16.mxu0 %v11843
  %12044 = vmatpush1.bf16.msra.mxu0 %v11842
  %12045 = vmatprep.subr.bf16.mxu0 %v11845
  %12046 = vmatpush1.bf16.msra.mxu0 %v11844
  %12047 = vmatprep.subr.bf16.mxu0 %v11847
  %12048 = vmatpush1.bf16.msra.mxu0 %v11846
  %12049 = vmatprep.subr.bf16.mxu0 %v11849
  %12050 = vmatpush1.bf16.msra.mxu0 %v11848
  %12051 = vmatprep.subr.bf16.mxu0 %v11851
  %12052 = vmatpush1.bf16.msra.mxu0 %v11850
  %12053 = vmatprep.subr.bf16.mxu0 %v11853
  %12054 = vmatpush1.bf16.msra.mxu0 %v11852
  %12055 = vmatprep.subr.bf16.mxu0 %v11855
  %12056 = vmatpush1.bf16.msra.mxu0 %v11854
  %12057 = vmatprep.subr.bf16.mxu0 %v11857
  %12058 = vmatpush1.bf16.msra.mxu0 %v11856
  %12059 = vmatprep.subr.bf16.mxu0 %v11859
  %12060 = vmatpush1.bf16.msra.mxu0 %v11858
  %12061 = vmatprep.subr.bf16.mxu0 %v11861
  %12062 = vmatpush1.bf16.msra.mxu0 %v11860
  %12063 = vmatprep.subr.bf16.mxu0 %v11863
  %12064 = vmatpush1.bf16.msra.mxu0 %v11862
  %12065 = vmatprep.subr.bf16.mxu0 %v11865
  %12066 = vmatpush1.bf16.msra.mxu0 %v11864
  %12067 = vmatprep.subr.bf16.mxu0 %v11867
  %12068 = vmatpush1.bf16.msra.mxu0 %v11866
  %12069 = vmatprep.subr.bf16.mxu0 %v11869
  %12070 = vmatpush1.bf16.msra.mxu0 %v11868
  %12071 = vmatprep.subr.bf16.mxu0 %v11871
  %12072 = vmatpush1.bf16.msra.mxu0 %v11870
  %12073 = vmatprep.subr.bf16.mxu0 %v11873
  %12074 = vmatpush1.bf16.msra.mxu0 %v11872
  %12075 = vmatprep.mubr.bf16.mxu0 %v11411
  %12076 = vmatmul.mubr.bf16.gmra.mrb[0].mxu0 %v11410
  %v12077 = vpop.f32.mrb[0].mxu0
  %v12078 = vadd.f32 %v12037, %v12077
  %v12079 = vpop.f32.mrb[0].mxu0
  %v12080 = vadd.f32 %v12039, %v12079
  %v12081 = vpop.f32.mrb[0].mxu0
  %v12082 = vpop.f32.mrb[0].mxu0
  %12083 = vdwg.mxu0
  %12084 = vmatprep.subr.bf16.mxu0 %v11875
  %12085 = vmatpush1.bf16.msra.mxu0 %v11874
  %12086 = vmatprep.subr.bf16.mxu0 %v11877
  %12087 = vmatpush1.bf16.msra.mxu0 %v11876
  %12088 = vmatprep.subr.bf16.mxu0 %v11879
  %12089 = vmatpush1.bf16.msra.mxu0 %v11878
  %12090 = vmatprep.subr.bf16.mxu0 %v11881
  %12091 = vmatpush1.bf16.msra.mxu0 %v11880
  %12092 = vmatprep.subr.bf16.mxu0 %v11883
  %12093 = vmatpush1.bf16.msra.mxu0 %v11882
  %12094 = vmatprep.subr.bf16.mxu0 %v11885
  %12095 = vmatpush1.bf16.msra.mxu0 %v11884
  %12096 = vmatprep.subr.bf16.mxu0 %v11887
  %12097 = vmatpush1.bf16.msra.mxu0 %v11886
  %12098 = vmatprep.subr.bf16.mxu0 %v11889
  %12099 = vmatpush1.bf16.msra.mxu0 %v11888
  %12100 = vmatprep.subr.bf16.mxu0 %v11891
  %12101 = vmatpush1.bf16.msra.mxu0 %v11890
  %12102 = vmatprep.subr.bf16.mxu0 %v11893
  %12103 = vmatpush1.bf16.msra.mxu0 %v11892
  %12104 = vmatprep.subr.bf16.mxu0 %v11895
  %12105 = vmatpush1.bf16.msra.mxu0 %v11894
  %12106 = vmatprep.subr.bf16.mxu0 %v11897
  %12107 = vmatpush1.bf16.msra.mxu0 %v11896
  %12108 = vmatprep.subr.bf16.mxu0 %v11899
  %12109 = vmatpush1.bf16.msra.mxu0 %v11898
  %12110 = vmatprep.subr.bf16.mxu0 %v11901
  %12111 = vmatpush1.bf16.msra.mxu0 %v11900
  %12112 = vmatprep.subr.bf16.mxu0 %v11903
  %12113 = vmatpush1.bf16.msra.mxu0 %v11902
  %12114 = vmatprep.subr.bf16.mxu0 %v11905
  %12115 = vmatpush1.bf16.msra.mxu0 %v11904
  %12116 = vmatprep.mubr.bf16.mxu0 %v11413
  %12117 = vmatmul.mubr.bf16.gmra.mrb[0].mxu0 %v11412
  %v12118 = vpop.f32.mrb[0].mxu0
  %v12119 = vadd.f32 %v12078, %v12118
  %v12120 = vpop.f32.mrb[0].mxu0
  %v12121 = vadd.f32 %v12080, %v12120
  %v12122 = vpop.f32.mrb[0].mxu0
  %v12123 = vpop.f32.mrb[0].mxu0
  %12124 = vdwg.mxu0
  %v12125 = vmax.f32 %v12119, 0.0
  %v12126 = vmax.f32 %v12121, 0.0
  %v12127 = vpack.c.bf16 %v12125, %v12125
  %v12128 = vpack.c.bf16 %v12126, %v12126
  %v12129 = vld [vmem:[%s5] sm:$0xf]
  %v12130 = vld [vmem:[%s5 + $0x4] sm:$0xf]
  %v12131 = vld [vmem:[%s5 + $0x8] sm:$0xf]
  %v12132 = vld [vmem:[%s5 + $0xc] sm:$0xf]
  %v12133 = vld [vmem:[%s5 + $0x10] sm:$0xf]
  %v12134 = vld [vmem:[%s5 + $0x14] sm:$0xf]
  %v12135 = vld [vmem:[%s5 + $0x18] sm:$0xf]
  %v12136 = vld [vmem:[%s5 + $0x1c] sm:$0xf]
  %v12137 = vld [vmem:[%s5 + $0x20] sm:$0xf]
  %v12138 = vld [vmem:[%s5 + $0x24] sm:$0xf]
  %v12139 = vld [vmem:[%s5 + $0x28] sm:$0xf]
  %v12140 = vld [vmem:[%s5 + $0x2c] sm:$0xf]
  %v12141 = vld [vmem:[%s5 + $0x30] sm:$0xf]
  %v12142 = vld [vmem:[%s5 + $0x34] sm:$0xf]
  %v12143 = vld [vmem:[%s5 + $0x38] sm:$0xf]
  %v12144 = vld [vmem:[%s5 + $0x3c] sm:$0xf]
  %v12145 = vld [vmem:[%s5 + $0x40] sm:$0xf]
  %v12146 = vld [vmem:[%s5 + $0x44] sm:$0xf]
  %v12147 = vld [vmem:[%s5 + $0x48] sm:$0xf]
  %v12148 = vld [vmem:[%s5 + $0x4c] sm:$0xf]
  %v12149 = vld [vmem:[%s5 + $0x50] sm:$0xf]
  %v12150 = vld [vmem:[%s5 + $0x54] sm:$0xf]
  %v12151 = vld [vmem:[%s5 + $0x58] sm:$0xf]
  %v12152 = vld [vmem:[%s5 + $0x5c] sm:$0xf]
  %v12153 = vld [vmem:[%s5 + $0x60] sm:$0xf]
  %v12154 = vld [vmem:[%s5 + $0x64] sm:$0xf]
  %v12155 = vld [vmem:[%s5 + $0x68] sm:$0xf]
  %v12156 = vld [vmem:[%s5 + $0x6c] sm:$0xf]
  %v12157 = vld [vmem:[%s5 + $0x70] sm:$0xf]
  %v12158 = vld [vmem:[%s5 + $0x74] sm:$0xf]
  %v12159 = vld [vmem:[%s5 + $0x78] sm:$0xf]
  %v12160 = vld [vmem:[%s5 + $0x7c] sm:$0xf]
  %v12161 = vld [vmem:[%s9] sm:$0x1]
  %v12163 = vlaneseq
  %v12164 = vshrl.u32 %v12163, 7
  %v12165 = vsub.s32 0, %v12164
  %v12166 = vrot.slane %v12161, %v12165
  %v12200 = vunpack.c.l.b16 %v12129
  %v12201 = vunpack.c.l.b16 %v12130
  %v12202 = vunpack.c.l.b16 %v12131
  %v12203 = vunpack.c.l.b16 %v12132
  %v12204 = vunpack.c.l.b16 %v12133
  %v12205 = vunpack.c.l.b16 %v12134
  %v12206 = vunpack.c.l.b16 %v12135
  %v12207 = vunpack.c.l.b16 %v12136
  %v12208 = vunpack.c.l.b16 %v12137
  %v12209 = vunpack.c.l.b16 %v12138
  %v12210 = vunpack.c.l.b16 %v12139
  %v12211 = vunpack.c.l.b16 %v12140
  %v12212 = vunpack.c.l.b16 %v12141
  %v12213 = vunpack.c.l.b16 %v12142
  %v12214 = vunpack.c.l.b16 %v12143
  %v12215 = vunpack.c.l.b16 %v12144
  %v12216 = vunpack.c.l.b16 %v12145
  %v12217 = vunpack.c.l.b16 %v12146
  %v12218 = vunpack.c.l.b16 %v12147
  %v12219 = vunpack.c.l.b16 %v12148
  %v12220 = vunpack.c.l.b16 %v12149
  %v12221 = vunpack.c.l.b16 %v12150
  %v12222 = vunpack.c.l.b16 %v12151
  %v12223 = vunpack.c.l.b16 %v12152
  %v12224 = vunpack.c.l.b16 %v12153
  %v12225 = vunpack.c.l.b16 %v12154
  %v12226 = vunpack.c.l.b16 %v12155
  %v12227 = vunpack.c.l.b16 %v12156
  %v12228 = vunpack.c.l.b16 %v12157
  %v12229 = vunpack.c.l.b16 %v12158
  %v12230 = vunpack.c.l.b16 %v12159
  %v12231 = vunpack.c.l.b16 %v12160
  %v12232 = vpack.c.b16 %v12201, %v12200
  %v12233 = vpack.c.b16 %v12203, %v12202
  %v12234 = vpack.c.b16 %v12205, %v12204
  %v12235 = vpack.c.b16 %v12207, %v12206
  %v12236 = vpack.c.b16 %v12209, %v12208
  %v12237 = vpack.c.b16 %v12211, %v12210
  %v12238 = vpack.c.b16 %v12213, %v12212
  %v12239 = vpack.c.b16 %v12215, %v12214
  %v12240 = vpack.c.b16 %v12217, %v12216
  %v12241 = vpack.c.b16 %v12219, %v12218
  %v12242 = vpack.c.b16 %v12221, %v12220
  %v12243 = vpack.c.b16 %v12223, %v12222
  %v12244 = vpack.c.b16 %v12225, %v12224
  %v12245 = vpack.c.b16 %v12227, %v12226
  %v12246 = vpack.c.b16 %v12229, %v12228
  %v12247 = vpack.c.b16 %v12231, %v12230
  %12264 = vmatprep.subr.bf16.mxu0 0
  %12265 = vmatpush1.bf16.msra.mxu0 %v12232
  %12266 = vmatprep.subr.bf16.mxu0 0
  %12267 = vmatpush1.bf16.msra.mxu0 %v12233
  %12268 = vmatprep.subr.bf16.mxu0 0
  %12269 = vmatpush1.bf16.msra.mxu0 %v12234
  %12270 = vmatprep.subr.bf16.mxu0 0
  %12271 = vmatpush1.bf16.msra.mxu0 %v12235
  %12272 = vmatprep.subr.bf16.mxu0 0
  %12273 = vmatpush1.bf16.msra.mxu0 %v12236
  %12274 = vmatprep.subr.bf16.mxu0 0
  %12275 = vmatpush1.bf16.msra.mxu0 %v12237
  %12276 = vmatprep.subr.bf16.mxu0 0
  %12277 = vmatpush1.bf16.msra.mxu0 %v12238
  %12278 = vmatprep.subr.bf16.mxu0 0
  %12279 = vmatpush1.bf16.msra.mxu0 %v12239
  %12280 = vmatprep.subr.bf16.mxu0 0
  %12281 = vmatpush1.bf16.msra.mxu0 %v12240
  %12282 = vmatprep.subr.bf16.mxu0 0
  %12283 = vmatpush1.bf16.msra.mxu0 %v12241
  %12284 = vmatprep.subr.bf16.mxu0 0
  %12285 = vmatpush1.bf16.msra.mxu0 %v12242
  %12286 = vmatprep.subr.bf16.mxu0 0
  %12287 = vmatpush1.bf16.msra.mxu0 %v12243
  %12288 = vmatprep.subr.bf16.mxu0 0
  %12289 = vmatpush1.bf16.msra.mxu0 %v12244
  %12290 = vmatprep.subr.bf16.mxu0 0
  %12291 = vmatpush1.bf16.msra.mxu0 %v12245
  %12292 = vmatprep.subr.bf16.mxu0 0
  %12293 = vmatpush1.bf16.msra.mxu0 %v12246
  %12294 = vmatprep.subr.bf16.mxu0 0
  %12295 = vmatpush1.bf16.msra.mxu0 %v12247
  %12296 = vmatprep.mubr.bf16.mxu0 %v12128
  %12297 = vmatmul.mubr.bf16.gmra.mrb[0].mxu0 %v12127
  %v12298 = vpop.f32.mrb[0].mxu0
  %v12299 = vadd.f32 %v12166, %v12298
  %v12300 = vpop.f32.mrb[0].mxu0
  %v12301 = vpop.f32.mrb[0].mxu0
  %v12302 = vpop.f32.mrb[0].mxu0
  %12303 = vdwg.mxu0
  %12304 = vmax.xlane.f32.xlu0 %v12299
  %v12305 = vpop.xlane.xlu0 %12304
  %v12306 = vsub.f32 %v12299, %v12305
  %v12307 = vmul.f32 %v12306, 1.442695
  %v12308 = vpow.pop %v12307
  %12309 = vadd.xlane.f32.xlu0 %v12308
  %v12310 = vpop.xlane.xlu0 %12309
  %v12311 = vrcp.pop %v12310
  %v12312 = vmul.f32 %v12308, %v12311
  %12313 = vst [vmem:[%s10] sm:$0xff] %v12312
  // Predicated region
  $region42: #{forward.1} parent=0 // pred_check
    _
  $region43: #{forward.1} parent=0 // pred_check_branch
    %12315 = sbr.rel (0) target = $region45
  $region44: #{forward.1} parent=0 // pred_region
    _
  $region45: #{forward.1} parent=0 // pred_fallthru
    _
  // Predicated region
  $region46: #{forward.1} parent=0 // pred_check
    _
  $region47: #{forward.1} parent=0 // pred_check_branch
    %12317 = sbr.rel (0) target = $region49
  $region48: #{forward.1} parent=0 // pred_region
    _
  $region49: #{forward.1} parent=0 // pred_fallthru
    _

</llo_original>
